<compile_context>
chip_gen: v6e
topology: v6e:2x2x1
jax: 0.10.0
libtpu: 0.0.40
codegen_flags: <defaults>
</compile_context>

<pallas_src>
import functools

import numpy as np
import jax
import jax.numpy as jnp
from jax.experimental import pallas as pl
from jax.experimental.pallas import tpu as pltpu

_VMEM_LIMIT = 48 * 1024 * 1024  # leaves headroom on v7x's 64 MiB per-TC VMEM


def _round_up(v, m):
    return ((v + m - 1) // m) * m


# --------------------------------------------------------------------------- #
# In-kernel exact GELU (erf via Abramowitz-Stegun 7.1.26, ~1.5e-7 abs err).
# The divide rides the EUP via pl.reciprocal(approx=True); the extra ~1e-4
# relative error is far below the bf16 matmul path's error.
# --------------------------------------------------------------------------- #
def _gelu(x):
    z = x * 0.7071067811865476
    az = jnp.abs(z)
    t = pl.reciprocal(1.0 + 0.3275911 * az, approx=True)
    poly = t * (0.254829592 + t * (-0.284496736 + t * (1.421413741
               + t * (-1.453152027 + t * 1.061405429))))
    erf_abs = 1.0 - poly * jnp.exp(-az * az)
    erf = jnp.where(z >= 0, erf_abs, -erf_abs)
    return 0.5 * x * (1.0 + erf)


# --------------------------------------------------------------------------- #
# Fused per-period kernel (grid over batch, "parallel"):
#   in-VMEM zero-pad -> im2col -> conv1 (one MXU matmul) -> GELU
#   -> im2col -> conv2 (one MXU matmul) -> drop pad pixels
#   -> out[b] = prev[b] + softmax_weight[b] * result   (residual + mixing fused)
# The image is flattened row-major with padded row width Wp so a conv tap
# (dy,dx) is a contiguous row slice at static offset dy*Wp+dx.  Row wrap-around
# only touches junk columns, which are masked to exact zero.
# --------------------------------------------------------------------------- #
def _fused_period_kernel(x_ref, prev_ref, w1_ref, b1_ref, w2_ref, b2_ref,
                         pw_ref, mask_ref, o_ref,
                         xpad_ref, mid_ref, col1_ref, col2_ref,
                         *, H, W, Wp, K, T):
    P = K // 2
    M = H * Wp
    Cin = x_ref.shape[-1]
    Cff = w1_ref.shape[-1]
    R = xpad_ref.shape[0]
    start = P * Wp + P

    # ---- build the zero-padded bf16 input image in VMEM (no HBM pad pass) ----
    xpad_ref[...] = jnp.zeros((R, Cin), xpad_ref.dtype)
    for r in range(H):                                   # static loop
        vw = min(W, T - r * W)                           # tail row may be partial
        dst = (r + P) * Wp + P
        xpad_ref[dst:dst + vw, :] = x_ref[0, r * W:r * W + vw, :]

    # ---- conv #1: im2col slab + ONE deep-contraction (K*K*Cin) MXU matmul ----
    for dy in range(K):
        for dx in range(K):
            t = dy * K + dx
            off = dy * Wp + dx
            col1_ref[:, t * Cin:(t + 1) * Cin] = xpad_ref[off:off + M, :]
    acc1 = jnp.dot(col1_ref[...], w1_ref[...], preferred_element_type=jnp.float32)

    g = _gelu(acc1 + b1_ref[...]) * mask_ref[...]        # junk/wrap columns -> 0

    # ---- stage GELU output (bf16) as a padded image; zero ONLY the halo -----
    if start > 0:
        mid_ref[0:start, :] = jnp.zeros((start, Cff), mid_ref.dtype)
    mid_ref[start + M:R, :] = jnp.zeros((R - start - M, Cff), mid_ref.dtype)
    mid_ref[start:start + M, :] = g.astype(mid_ref.dtype)

    # ---- conv #2: same im2col trick + ONE MXU matmul -------------------------
    for dy in range(K):
        for dx in range(K):
            t = dy * K + dx
            off = dy * Wp + dx
            col2_ref[:, t * Cff:(t + 1) * Cff] = mid_ref[off:off + M, :]
    acc2 = jnp.dot(col2_ref[...], w2_ref[...], preferred_element_type=jnp.float32)
    acc2 = acc2 + b2_ref[...]

    # ---- epilogue: drop pad columns, fuse softmax mixing + residual ---------
    rows = [acc2[r * Wp:r * Wp + W, :] for r in range(H)]
    res = jnp.concatenate(rows, axis=0)[:T, :]           # [T, d_model]
    o_ref[0] = (prev_ref[0] + pw_ref[0] * res).astype(o_ref.dtype)


def _fused_period_block(x_bf16, prev, w1, b1, w2, b2, pw_col, *, period, T, K):
    """One period branch: conv->GELU->conv and in-place mixing into `prev`."""
    B, _, Cin = x_bf16.shape
    Cff = w1.shape[-1]
    Cout = w2.shape[-1]
    P = K // 2
    W = period
    H = -(-T // W)                                   # ceil(T / period)
    Wp = _round_up(W + 2 * P, 8)                     # sublane-aligned padded row
    M = H * Wp
    R = (H + 2 * P + 1) * Wp                         # +1 row keeps tap slices in-bounds

    colv = np.arange(M) % Wp
    mask = jnp.asarray((colv < W).astype(np.float32)).reshape(M, 1)
    pw3 = pw_col.astype(jnp.float32).reshape(B, 1, 1)

    kernel = functools.partial(_fused_period_kernel, H=H, W=W, Wp=Wp, K=K, T=T)
    return pl.pallas_call(
        kernel,
        out_shape=jax.ShapeDtypeStruct((B, T, Cout), jnp.float32),
        grid_spec=pltpu.PrefetchScalarGridSpec(
            num_scalar_prefetch=0,
            grid=(B,),
            in_specs=[
                pl.BlockSpec((1, T, Cin), lambda b: (b, 0, 0)),        # x (bf16)
                pl.BlockSpec((1, T, Cout), lambda b: (b, 0, 0)),       # running residual acc
                pl.BlockSpec((K * K * Cin, Cff), lambda b: (0, 0)),    # folded conv1 weight
                pl.BlockSpec((1, Cff), lambda b: (0, 0)),
                pl.BlockSpec((K * K * Cff, Cout), lambda b: (0, 0)),   # folded conv2 weight
                pl.BlockSpec((1, Cout), lambda b: (0, 0)),
                pl.BlockSpec((1, 1, 1), lambda b: (b, 0, 0)),          # softmax weight
                pl.BlockSpec((M, 1), lambda b: (0, 0)),                # junk-column mask
            ],
            out_specs=pl.BlockSpec((1, T, Cout), lambda b: (b, 0, 0)),
            scratch_shapes=[
                pltpu.VMEM((R, Cin), jnp.bfloat16),            # padded input image
                pltpu.VMEM((R, Cff), jnp.bfloat16),            # padded GELU image
                pltpu.VMEM((M, K * K * Cin), jnp.bfloat16),    # im2col slab, conv 1
                pltpu.VMEM((M, K * K * Cff), jnp.bfloat16),    # im2col slab, conv 2
            ],
        ),
        input_output_aliases={1: 0},   # mixing accumulates in place across periods
        compiler_params=pltpu.CompilerParams(
            dimension_semantics=("parallel",),
            vmem_limit_bytes=_VMEM_LIMIT,
        ),
    )(x_bf16, prev, w1, b1, w2, b2, pw3, mask)


# --------------------------------------------------------------------------- #
# FFT_for_Period (XLA fft + host top-k -> static periods)
# --------------------------------------------------------------------------- #
def fft_for_period(x, k):
    xf = jnp.fft.rfft(x.astype(jnp.float32), axis=1)
    amp = jnp.abs(xf)                                   # [B, F, N]
    freq = amp.mean(axis=0).mean(axis=-1)               # [F]
    freq = freq.at[0].set(0.0)
    # TODO(synk): host-side top-k forces a sync and retraces per distinct period
    # set; a static bucketed-period scheme would avoid both.
    top = np.asarray(jax.device_get(jax.lax.top_k(freq, k)[1]))
    T = x.shape[1]
    periods = tuple(max(min(int(T // max(int(i), 1)), T), 1) for i in top)
    pw = amp.mean(axis=-1)[:, top]                      # [B, k]
    return periods, pw


# --------------------------------------------------------------------------- #
# TimesBlock forward
# --------------------------------------------------------------------------- #
@functools.partial(jax.jit, static_argnums=(3, 4))
def _times_block_core(x, pw, params, periods, K):
    pw_soft = jax.nn.softmax(pw.astype(jnp.float32), axis=1)   # [B, k]
    x_bf16 = x.astype(jnp.bfloat16)
    T = x.shape[1]
    acc = x                                                    # residual init
    for i, period in enumerate(periods):
        acc = _fused_period_block(
            x_bf16, acc,
            params['w1'], params['b1'], params['w2'], params['b2'],
            pw_soft[:, i], period=period, T=T, K=K)
    return acc


def times_block(x, params, cfg):
    K = 2 * cfg['num_kernels'] - 1
    periods, pw = fft_for_period(x, cfg['top_k'])
    return _times_block_core(x, pw, params, periods, K)


# --------------------------------------------------------------------------- #
# Parameter construction (Inception branch weights folded into one KxK conv,
# then reshaped for the deep-contraction im2col matmul)
# --------------------------------------------------------------------------- #
def fold_inception(ws, bs):
    # mean_i conv_same(x, w_i) + b_i  ==  conv_same(x, W_eff) + b_eff  (exact)
    nk = len(ws)
    K = 2 * nk - 1
    Cin, Cout = ws[0].shape[2], ws[0].shape[3]
    w_eff = jnp.zeros((K, K, Cin, Cout), jnp.float32)
    for i, w in enumerate(ws):
        k_ = 2 * i + 1
        off = (K - k_) // 2
        w_eff = w_eff.at[off:off + k_, off:off + k_, :, :].add(w)
    w_eff = w_eff / nk
    b_eff = sum(b.astype(jnp.float32) for b in bs) / nk
    return w_eff, b_eff


def init_timesblock_params(cfg, key):
    D, dff, nk = cfg['d_model'], cfg['d_ff'], cfg['num_kernels']
    ks = [2 * i + 1 for i in range(nk)]
    K = 2 * nk - 1
    keys = iter(jax.random.split(key, 4 * nk))

    def nrm(shape, scale=0.1):
        return scale * jax.random.normal(next(keys), shape, jnp.float32)

    w1 = [nrm((k_, k_, D, dff)) for k_ in ks]           # HWIO conv weights
    b1 = [nrm((dff,), 0.02) for _ in ks]
    w2 = [nrm((k_, k_, dff, D)) for k_ in ks]
    b2 = [nrm((D,), 0.02) for _ in ks]
    w1_eff, b1_eff = fold_inception(w1, b1)
    w2_eff, b2_eff = fold_inception(w2, b2)
    return dict(
        w1=w1_eff.reshape(K * K * D, dff).astype(jnp.bfloat16),
        b1=b1_eff.reshape(1, dff).astype(jnp.float32),
        w2=w2_eff.reshape(K * K * dff, D).astype(jnp.bfloat16),
        b2=b2_eff.reshape(1, D).astype(jnp.float32),
    )


# ----------------------------------- main ----------------------------------- #
if __name__ == "__main__":
    cfg = dict(seq_len=16, pred_len=8, top_k=2,
               d_model=16, d_ff=32, num_kernels=3)

    key = jax.random.PRNGKey(0)
    kx, kp = jax.random.split(key)
    B = 2
    T = cfg['seq_len'] + cfg['pred_len']
    x = jax.random.normal(kx, (B, T, cfg['d_model']), jnp.float32)

    params = init_timesblock_params(cfg, kp)

    out = times_block(x, params, cfg)
    out = jax.block_until_ready(out)
    assert out.shape == (B, T, cfg['d_model'])
    assert bool(jnp.all(jnp.isfinite(out)))
    print("KERNEL_OK")
</pallas_src>

<mosaic_0001>
module attributes {stable_mosaic.version = 11 : i64} {
  func.func @_fused_period_kernel(%arg0: i32, %arg1: memref<1x24x16xbf16, #tpu.memory_space<vmem>>, %arg2: memref<1x24x16xf32, #tpu.memory_space<vmem>>, %arg3: memref<400x32xbf16, #tpu.memory_space<vmem>>, %arg4: memref<1x32xf32, #tpu.memory_space<vmem>>, %arg5: memref<800x16xbf16, #tpu.memory_space<vmem>>, %arg6: memref<1x16xf32, #tpu.memory_space<vmem>>, %arg7: memref<1x1x1xf32, #tpu.memory_space<vmem>>, %arg8: memref<32x1xf32, #tpu.memory_space<vmem>>, %arg9: memref<1x24x16xf32, #tpu.memory_space<vmem>>, %arg10: memref<112x16xbf16, #tpu.memory_space<vmem>>, %arg11: memref<112x32xbf16, #tpu.memory_space<vmem>>, %arg12: memref<32x400xbf16, #tpu.memory_space<vmem>>, %arg13: memref<32x800xbf16, #tpu.memory_space<vmem>>) attributes {dimension_semantics = [#tpu.dimension_semantics<parallel>], iteration_bounds = array<i64: 2>, scalar_prefetch = 0 : i64, scratch_operands = 4 : i64, tpu.core_type = #tpu.core_type<tc>, window_params = [{transform_indices = @transform_0, window_bounds = array<i64: 1, 24, 16>}, {transform_indices = @transform_1, window_bounds = array<i64: 1, 24, 16>}, {pipeline_mode = #tpu.pipeline_mode<synchronous>, transform_indices = @transform_2, window_bounds = array<i64: 400, 32>}, {pipeline_mode = #tpu.pipeline_mode<synchronous>, transform_indices = @transform_3, window_bounds = array<i64: 1, 32>}, {pipeline_mode = #tpu.pipeline_mode<synchronous>, transform_indices = @transform_4, window_bounds = array<i64: 800, 16>}, {pipeline_mode = #tpu.pipeline_mode<synchronous>, transform_indices = @transform_5, window_bounds = array<i64: 1, 16>}, {transform_indices = @transform_6, window_bounds = array<i64: 1, 1, 1>}, {pipeline_mode = #tpu.pipeline_mode<synchronous>, transform_indices = @transform_7, window_bounds = array<i64: 32, 1>}, {transform_indices = @transform_8, window_bounds = array<i64: 1, 24, 16>}]} {
    %cst = arith.constant 0.000000e+00 : bf16
    %0 = vector.broadcast %cst : bf16 to vector<112x16xbf16>
    %c0 = arith.constant 0 : index
    %c0_0 = arith.constant 0 : index
    %1 = vector.load %arg10[%c0, %c0_0] : memref<112x16xbf16, #tpu.memory_space<vmem>>, vector<112x16xbf16>
    tpu.vector_store %arg10[%c0, %c0_0], %0 {strides = array<i32>} : memref<112x16xbf16, #tpu.memory_space<vmem>>, vector<112x16xbf16>,
    %c0_1 = arith.constant 0 : index
    %c0_2 = arith.constant 0 : index
    %c0_3 = arith.constant 0 : index
    %2 = vector.load %arg1[%c0_1, %c0_2, %c0_3] : memref<1x24x16xbf16, #tpu.memory_space<vmem>>, vector<1x12x16xbf16>
    %3 = vector.shape_cast %2 : vector<1x12x16xbf16> to vector<12x16xbf16>
    %c34 = arith.constant 34 : index
    %c0_4 = arith.constant 0 : index
    %4 = vector.load %arg10[%c34, %c0_4] : memref<112x16xbf16, #tpu.memory_space<vmem>>, vector<12x16xbf16>
    tpu.vector_store %arg10[%c34, %c0_4], %3 {strides = array<i32>} : memref<112x16xbf16, #tpu.memory_space<vmem>>, vector<12x16xbf16>,
    %c0_5 = arith.constant 0 : index
    %c12 = arith.constant 12 : index
    %c0_6 = arith.constant 0 : index
    %5 = vector.load %arg1[%c0_5, %c12, %c0_6] : memref<1x24x16xbf16, #tpu.memory_space<vmem>>, vector<1x12x16xbf16>
    %6 = vector.shape_cast %5 : vector<1x12x16xbf16> to vector<12x16xbf16>
    %c50 = arith.constant 50 : index
    %c0_7 = arith.constant 0 : index
    %7 = vector.load %arg10[%c50, %c0_7] : memref<112x16xbf16, #tpu.memory_space<vmem>>, vector<12x16xbf16>
    tpu.vector_store %arg10[%c50, %c0_7], %6 {strides = array<i32>} : memref<112x16xbf16, #tpu.memory_space<vmem>>, vector<12x16xbf16>,
    %c0_8 = arith.constant 0 : index
    %c0_9 = arith.constant 0 : index
    %8 = vector.load %arg10[%c0_8, %c0_9] : memref<112x16xbf16, #tpu.memory_space<vmem>>, vector<32x16xbf16>
    %c0_10 = arith.constant 0 : index
    %c0_11 = arith.constant 0 : index
    %9 = vector.load %arg12[%c0_10, %c0_11] : memref<32x400xbf16, #tpu.memory_space<vmem>>, vector<32x16xbf16>
    tpu.vector_store %arg12[%c0_10, %c0_11], %8 {strides = array<i32>} : memref<32x400xbf16, #tpu.memory_space<vmem>>, vector<32x16xbf16>,
    %c1 = arith.constant 1 : index
    %c0_12 = arith.constant 0 : index
    %10 = vector.load %arg10[%c1, %c0_12] : memref<112x16xbf16, #tpu.memory_space<vmem>>, vector<32x16xbf16>
    %c0_13 = arith.constant 0 : index
    %c16 = arith.constant 16 : index
    %11 = vector.load %arg12[%c0_13, %c16] : memref<32x400xbf16, #tpu.memory_space<vmem>>, vector<32x16xbf16>
    tpu.vector_store %arg12[%c0_13, %c16], %10 {strides = array<i32>} : memref<32x400xbf16, #tpu.memory_space<vmem>>, vector<32x16xbf16>,
    %c2 = arith.constant 2 : index
    %c0_14 = arith.constant 0 : index
    %12 = vector.load %arg10[%c2, %c0_14] : memref<112x16xbf16, #tpu.memory_space<vmem>>, vector<32x16xbf16>
    %c0_15 = arith.constant 0 : index
    %c32 = arith.constant 32 : index
    %13 = vector.load %arg12[%c0_15, %c32] : memref<32x400xbf16, #tpu.memory_space<vmem>>, vector<32x16xbf16>
    tpu.vector_store %arg12[%c0_15, %c32], %12 {strides = array<i32>} : memref<32x400xbf16, #tpu.memory_space<vmem>>, vector<32x16xbf16>,
    %c3 = arith.constant 3 : index
    %c0_16 = arith.constant 0 : index
    %14 = vector.load %arg10[%c3, %c0_16] : memref<112x16xbf16, #tpu.memory_space<vmem>>, vector<32x16xbf16>
    %c0_17 = arith.constant 0 : index
    %c48 = arith.constant 48 : index
    %15 = vector.load %arg12[%c0_17, %c48] : memref<32x400xbf16, #tpu.memory_space<vmem>>, vector<32x16xbf16>
    tpu.vector_store %arg12[%c0_17, %c48], %14 {strides = array<i32>} : memref<32x400xbf16, #tpu.memory_space<vmem>>, vector<32x16xbf16>,
    %c4 = arith.constant 4 : index
    %c0_18 = arith.constant 0 : index
    %16 = vector.load %arg10[%c4, %c0_18] : memref<112x16xbf16, #tpu.memory_space<vmem>>, vector<32x16xbf16>
    %c0_19 = arith.constant 0 : index
    %c64 = arith.constant 64 : index
    %17 = vector.load %arg12[%c0_19, %c64] : memref<32x400xbf16, #tpu.memory_space<vmem>>, vector<32x16xbf16>
    tpu.vector_store %arg12[%c0_19, %c64], %16 {strides = array<i32>} : memref<32x400xbf16, #tpu.memory_space<vmem>>, vector<32x16xbf16>,
    %c16_20 = arith.constant 16 : index
    %c0_21 = arith.constant 0 : index
    %18 = vector.load %arg10[%c16_20, %c0_21] : memref<112x16xbf16, #tpu.memory_space<vmem>>, vector<32x16xbf16>
    %c0_22 = arith.constant 0 : index
    %c80 = arith.constant 80 : index
    %19 = vector.load %arg12[%c0_22, %c80] : memref<32x400xbf16, #tpu.memory_space<vmem>>, vector<32x16xbf16>
    tpu.vector_store %arg12[%c0_22, %c80], %18 {strides = array<i32>} : memref<32x400xbf16, #tpu.memory_space<vmem>>, vector<32x16xbf16>,
    %c17 = arith.constant 17 : index
    %c0_23 = arith.constant 0 : index
    %20 = vector.load %arg10[%c17, %c0_23] : memref<112x16xbf16, #tpu.memory_space<vmem>>, vector<32x16xbf16>
    %c0_24 = arith.constant 0 : index
    %c96 = arith.constant 96 : index
    %21 = vector.load %arg12[%c0_24, %c96] : memref<32x400xbf16, #tpu.memory_space<vmem>>, vector<32x16xbf16>
    tpu.vector_store %arg12[%c0_24, %c96], %20 {strides = array<i32>} : memref<32x400xbf16, #tpu.memory_space<vmem>>, vector<32x16xbf16>,
    %c18 = arith.constant 18 : index
    %c0_25 = arith.constant 0 : index
    %22 = vector.load %arg10[%c18, %c0_25] : memref<112x16xbf16, #tpu.memory_space<vmem>>, vector<32x16xbf16>
    %c0_26 = arith.constant 0 : index
    %c112 = arith.constant 112 : index
    %23 = vector.load %arg12[%c0_26, %c112] : memref<32x400xbf16, #tpu.memory_space<vmem>>, vector<32x16xbf16>
    tpu.vector_store %arg12[%c0_26, %c112], %22 {strides = array<i32>} : memref<32x400xbf16, #tpu.memory_space<vmem>>, vector<32x16xbf16>,
    %c19 = arith.constant 19 : index
    %c0_27 = arith.constant 0 : index
    %24 = vector.load %arg10[%c19, %c0_27] : memref<112x16xbf16, #tpu.memory_space<vmem>>, vector<32x16xbf16>
    %c0_28 = arith.constant 0 : index
    %c128 = arith.constant 128 : index
    %25 = vector.load %arg12[%c0_28, %c128] : memref<32x400xbf16, #tpu.memory_space<vmem>>, vector<32x16xbf16>
    tpu.vector_store %arg12[%c0_28, %c128], %24 {strides = array<i32>} : memref<32x400xbf16, #tpu.memory_space<vmem>>, vector<32x16xbf16>,
    %c20 = arith.constant 20 : index
    %c0_29 = arith.constant 0 : index
    %26 = vector.load %arg10[%c20, %c0_29] : memref<112x16xbf16, #tpu.memory_space<vmem>>, vector<32x16xbf16>
    %c0_30 = arith.constant 0 : index
    %c144 = arith.constant 144 : index
    %27 = vector.load %arg12[%c0_30, %c144] : memref<32x400xbf16, #tpu.memory_space<vmem>>, vector<32x16xbf16>
    tpu.vector_store %arg12[%c0_30, %c144], %26 {strides = array<i32>} : memref<32x400xbf16, #tpu.memory_space<vmem>>, vector<32x16xbf16>,
    %c32_31 = arith.constant 32 : index
    %c0_32 = arith.constant 0 : index
    %28 = vector.load %arg10[%c32_31, %c0_32] : memref<112x16xbf16, #tpu.memory_space<vmem>>, vector<32x16xbf16>
    %c0_33 = arith.constant 0 : index
    %c160 = arith.constant 160 : index
    %29 = vector.load %arg12[%c0_33, %c160] : memref<32x400xbf16, #tpu.memory_space<vmem>>, vector<32x16xbf16>
    tpu.vector_store %arg12[%c0_33, %c160], %28 {strides = array<i32>} : memref<32x400xbf16, #tpu.memory_space<vmem>>, vector<32x16xbf16>,
    %c33 = arith.constant 33 : index
    %c0_34 = arith.constant 0 : index
    %30 = vector.load %arg10[%c33, %c0_34] : memref<112x16xbf16, #tpu.memory_space<vmem>>, vector<32x16xbf16>
    %c0_35 = arith.constant 0 : index
    %c176 = arith.constant 176 : index
    %31 = vector.load %arg12[%c0_35, %c176] : memref<32x400xbf16, #tpu.memory_space<vmem>>, vector<32x16xbf16>
    tpu.vector_store %arg12[%c0_35, %c176], %30 {strides = array<i32>} : memref<32x400xbf16, #tpu.memory_space<vmem>>, vector<32x16xbf16>,
    %c34_36 = arith.constant 34 : index
    %c0_37 = arith.constant 0 : index
    %32 = vector.load %arg10[%c34_36, %c0_37] : memref<112x16xbf16, #tpu.memory_space<vmem>>, vector<32x16xbf16>
    %c0_38 = arith.constant 0 : index
    %c192 = arith.constant 192 : index
    %33 = vector.load %arg12[%c0_38, %c192] : memref<32x400xbf16, #tpu.memory_space<vmem>>, vector<32x16xbf16>
    tpu.vector_store %arg12[%c0_38, %c192], %32 {strides = array<i32>} : memref<32x400xbf16, #tpu.memory_space<vmem>>, vector<32x16xbf16>,
    %c35 = arith.constant 35 : index
    %c0_39 = arith.constant 0 : index
    %34 = vector.load %arg10[%c35, %c0_39] : memref<112x16xbf16, #tpu.memory_space<vmem>>, vector<32x16xbf16>
    %c0_40 = arith.constant 0 : index
    %c208 = arith.constant 208 : index
    %35 = vector.load %arg12[%c0_40, %c208] : memref<32x400xbf16, #tpu.memory_space<vmem>>, vector<32x16xbf16>
    tpu.vector_store %arg12[%c0_40, %c208], %34 {strides = array<i32>} : memref<32x400xbf16, #tpu.memory_space<vmem>>, vector<32x16xbf16>,
    %c36 = arith.constant 36 : index
    %c0_41 = arith.constant 0 : index
    %36 = vector.load %arg10[%c36, %c0_41] : memref<112x16xbf16, #tpu.memory_space<vmem>>, vector<32x16xbf16>
    %c0_42 = arith.constant 0 : index
    %c224 = arith.constant 224 : index
    %37 = vector.load %arg12[%c0_42, %c224] : memref<32x400xbf16, #tpu.memory_space<vmem>>, vector<32x16xbf16>
    tpu.vector_store %arg12[%c0_42, %c224], %36 {strides = array<i32>} : memref<32x400xbf16, #tpu.memory_space<vmem>>, vector<32x16xbf16>,
    %c48_43 = arith.constant 48 : index
    %c0_44 = arith.constant 0 : index
    %38 = vector.load %arg10[%c48_43, %c0_44] : memref<112x16xbf16, #tpu.memory_space<vmem>>, vector<32x16xbf16>
    %c0_45 = arith.constant 0 : index
    %c240 = arith.constant 240 : index
    %39 = vector.load %arg12[%c0_45, %c240] : memref<32x400xbf16, #tpu.memory_space<vmem>>, vector<32x16xbf16>
    tpu.vector_store %arg12[%c0_45, %c240], %38 {strides = array<i32>} : memref<32x400xbf16, #tpu.memory_space<vmem>>, vector<32x16xbf16>,
    %c49 = arith.constant 49 : index
    %c0_46 = arith.constant 0 : index
    %40 = vector.load %arg10[%c49, %c0_46] : memref<112x16xbf16, #tpu.memory_space<vmem>>, vector<32x16xbf16>
    %c0_47 = arith.constant 0 : index
    %c256 = arith.constant 256 : index
    %41 = vector.load %arg12[%c0_47, %c256] : memref<32x400xbf16, #tpu.memory_space<vmem>>, vector<32x16xbf16>
    tpu.vector_store %arg12[%c0_47, %c256], %40 {strides = array<i32>} : memref<32x400xbf16, #tpu.memory_space<vmem>>, vector<32x16xbf16>,
    %c50_48 = arith.constant 50 : index
    %c0_49 = arith.constant 0 : index
    %42 = vector.load %arg10[%c50_48, %c0_49] : memref<112x16xbf16, #tpu.memory_space<vmem>>, vector<32x16xbf16>
    %c0_50 = arith.constant 0 : index
    %c272 = arith.constant 272 : index
    %43 = vector.load %arg12[%c0_50, %c272] : memref<32x400xbf16, #tpu.memory_space<vmem>>, vector<32x16xbf16>
    tpu.vector_store %arg12[%c0_50, %c272], %42 {strides = array<i32>} : memref<32x400xbf16, #tpu.memory_space<vmem>>, vector<32x16xbf16>,
    %c51 = arith.constant 51 : index
    %c0_51 = arith.constant 0 : index
    %44 = vector.load %arg10[%c51, %c0_51] : memref<112x16xbf16, #tpu.memory_space<vmem>>, vector<32x16xbf16>
    %c0_52 = arith.constant 0 : index
    %c288 = arith.constant 288 : index
    %45 = vector.load %arg12[%c0_52, %c288] : memref<32x400xbf16, #tpu.memory_space<vmem>>, vector<32x16xbf16>
    tpu.vector_store %arg12[%c0_52, %c288], %44 {strides = array<i32>} : memref<32x400xbf16, #tpu.memory_space<vmem>>, vector<32x16xbf16>,
    %c52 = arith.constant 52 : index
    %c0_53 = arith.constant 0 : index
    %46 = vector.load %arg10[%c52, %c0_53] : memref<112x16xbf16, #tpu.memory_space<vmem>>, vector<32x16xbf16>
    %c0_54 = arith.constant 0 : index
    %c304 = arith.constant 304 : index
    %47 = vector.load %arg12[%c0_54, %c304] : memref<32x400xbf16, #tpu.memory_space<vmem>>, vector<32x16xbf16>
    tpu.vector_store %arg12[%c0_54, %c304], %46 {strides = array<i32>} : memref<32x400xbf16, #tpu.memory_space<vmem>>, vector<32x16xbf16>,
    %c64_55 = arith.constant 64 : index
    %c0_56 = arith.constant 0 : index
    %48 = vector.load %arg10[%c64_55, %c0_56] : memref<112x16xbf16, #tpu.memory_space<vmem>>, vector<32x16xbf16>
    %c0_57 = arith.constant 0 : index
    %c320 = arith.constant 320 : index
    %49 = vector.load %arg12[%c0_57, %c320] : memref<32x400xbf16, #tpu.memory_space<vmem>>, vector<32x16xbf16>
    tpu.vector_store %arg12[%c0_57, %c320], %48 {strides = array<i32>} : memref<32x400xbf16, #tpu.memory_space<vmem>>, vector<32x16xbf16>,
    %c65 = arith.constant 65 : index
    %c0_58 = arith.constant 0 : index
    %50 = vector.load %arg10[%c65, %c0_58] : memref<112x16xbf16, #tpu.memory_space<vmem>>, vector<32x16xbf16>
    %c0_59 = arith.constant 0 : index
    %c336 = arith.constant 336 : index
    %51 = vector.load %arg12[%c0_59, %c336] : memref<32x400xbf16, #tpu.memory_space<vmem>>, vector<32x16xbf16>
    tpu.vector_store %arg12[%c0_59, %c336], %50 {strides = array<i32>} : memref<32x400xbf16, #tpu.memory_space<vmem>>, vector<32x16xbf16>,
    %c66 = arith.constant 66 : index
    %c0_60 = arith.constant 0 : index
    %52 = vector.load %arg10[%c66, %c0_60] : memref<112x16xbf16, #tpu.memory_space<vmem>>, vector<32x16xbf16>
    %c0_61 = arith.constant 0 : index
    %c352 = arith.constant 352 : index
    %53 = vector.load %arg12[%c0_61, %c352] : memref<32x400xbf16, #tpu.memory_space<vmem>>, vector<32x16xbf16>
    tpu.vector_store %arg12[%c0_61, %c352], %52 {strides = array<i32>} : memref<32x400xbf16, #tpu.memory_space<vmem>>, vector<32x16xbf16>,
    %c67 = arith.constant 67 : index
    %c0_62 = arith.constant 0 : index
    %54 = vector.load %arg10[%c67, %c0_62] : memref<112x16xbf16, #tpu.memory_space<vmem>>, vector<32x16xbf16>
    %c0_63 = arith.constant 0 : index
    %c368 = arith.constant 368 : index
    %55 = vector.load %arg12[%c0_63, %c368] : memref<32x400xbf16, #tpu.memory_space<vmem>>, vector<32x16xbf16>
    tpu.vector_store %arg12[%c0_63, %c368], %54 {strides = array<i32>} : memref<32x400xbf16, #tpu.memory_space<vmem>>, vector<32x16xbf16>,
    %c68 = arith.constant 68 : index
    %c0_64 = arith.constant 0 : index
    %56 = vector.load %arg10[%c68, %c0_64] : memref<112x16xbf16, #tpu.memory_space<vmem>>, vector<32x16xbf16>
    %c0_65 = arith.constant 0 : index
    %c384 = arith.constant 384 : index
    %57 = vector.load %arg12[%c0_65, %c384] : memref<32x400xbf16, #tpu.memory_space<vmem>>, vector<32x16xbf16>
    tpu.vector_store %arg12[%c0_65, %c384], %56 {strides = array<i32>} : memref<32x400xbf16, #tpu.memory_space<vmem>>, vector<32x16xbf16>,
    %c0_66 = arith.constant 0 : index
    %c0_67 = arith.constant 0 : index
    %58 = vector.load %arg12[%c0_66, %c0_67] : memref<32x400xbf16, #tpu.memory_space<vmem>>, vector<32x400xbf16>
    %c0_68 = arith.constant 0 : index
    %c0_69 = arith.constant 0 : index
    %59 = vector.load %arg3[%c0_68, %c0_69] : memref<400x32xbf16, #tpu.memory_space<vmem>>, vector<400x32xbf16>
    %cst_70 = arith.constant dense<0.000000e+00> : vector<32x32xf32>
    %60 = tpu.matmul %58, %59, %cst_70 {dimension_numbers = #tpu.dot_dimension_numbers<[1], [0], [0], [1], [0, 0, 1, 1], [], []>} : vector<32x400xbf16>, vector<400x32xbf16>, vector<32x32xf32> -> vector<32x32xf32>
    %c0_71 = arith.constant 0 : index
    %c0_72 = arith.constant 0 : index
    %61 = vector.load %arg4[%c0_71, %c0_72] : memref<1x32xf32, #tpu.memory_space<vmem>>, vector<1x32xf32>
    %62 = vector.broadcast %61 : vector<1x32xf32> to vector<32x32xf32>
    %63 = arith.addf %60, %62 : vector<32x32xf32>
    %cst_73 = arith.constant 0.707106769 : f32
    %64 = vector.broadcast %cst_73 : f32 to vector<32x32xf32>
    %65 = arith.mulf %63, %64 : vector<32x32xf32>
    %66 = math.absf %65 : vector<32x32xf32>
    %cst_74 = arith.constant 0.327591091 : f32
    %67 = vector.broadcast %cst_74 : f32 to vector<32x32xf32>
    %68 = arith.mulf %67, %66 : vector<32x32xf32>
    %cst_75 = arith.constant 1.000000e+00 : f32
    %69 = vector.broadcast %cst_75 : f32 to vector<32x32xf32>
    %70 = arith.addf %69, %68 : vector<32x32xf32>
    %71 = tpu.reciprocal %70 {approx = true} : vector<32x32xf32> -> vector<32x32xf32>
    %cst_76 = arith.constant 1.06140542 : f32
    %72 = vector.broadcast %cst_76 : f32 to vector<32x32xf32>
    %73 = arith.mulf %71, %72 : vector<32x32xf32>
    %cst_77 = arith.constant -1.45315206 : f32
    %74 = vector.broadcast %cst_77 : f32 to vector<32x32xf32>
    %75 = arith.addf %74, %73 : vector<32x32xf32>
    %76 = arith.mulf %71, %75 : vector<32x32xf32>
    %cst_78 = arith.constant 1.42141378 : f32
    %77 = vector.broadcast %cst_78 : f32 to vector<32x32xf32>
    %78 = arith.addf %77, %76 : vector<32x32xf32>
    %79 = arith.mulf %71, %78 : vector<32x32xf32>
    %cst_79 = arith.constant -0.284496725 : f32
    %80 = vector.broadcast %cst_79 : f32 to vector<32x32xf32>
    %81 = arith.addf %80, %79 : vector<32x32xf32>
    %82 = arith.mulf %71, %81 : vector<32x32xf32>
    %cst_80 = arith.constant 0.254829586 : f32
    %83 = vector.broadcast %cst_80 : f32 to vector<32x32xf32>
    %84 = arith.addf %83, %82 : vector<32x32xf32>
    %85 = arith.mulf %71, %84 : vector<32x32xf32>
    %cst_81 = arith.constant 0.000000e+00 : f32
    %86 = vector.broadcast %cst_81 : f32 to vector<32x32xf32>
    %87 = arith.subf %86, %66 : vector<32x32xf32>
    %88 = arith.mulf %87, %66 : vector<32x32xf32>
    %89 = math.exp %88 : vector<32x32xf32>
    %90 = arith.mulf %85, %89 : vector<32x32xf32>
    %cst_82 = arith.constant 1.000000e+00 : f32
    %91 = vector.broadcast %cst_82 : f32 to vector<32x32xf32>
    %92 = arith.subf %91, %90 : vector<32x32xf32>
    %cst_83 = arith.constant 0.000000e+00 : f32
    %93 = vector.broadcast %cst_83 : f32 to vector<32x32xf32>
    %94 = arith.cmpf oge, %65, %93 : vector<32x32xf32>
    %cst_84 = arith.constant 0.000000e+00 : f32
    %95 = vector.broadcast %cst_84 : f32 to vector<32x32xf32>
    %96 = arith.subf %95, %92 : vector<32x32xf32>
    %97 = arith.select %94, %92, %96 : vector<32x32xi1>, vector<32x32xf32>
    %cst_85 = arith.constant 5.000000e-01 : f32
    %98 = vector.broadcast %cst_85 : f32 to vector<32x32xf32>
    %99 = arith.mulf %98, %63 : vector<32x32xf32>
    %cst_86 = arith.constant 1.000000e+00 : f32
    %100 = vector.broadcast %cst_86 : f32 to vector<32x32xf32>
    %101 = arith.addf %100, %97 : vector<32x32xf32>
    %102 = arith.mulf %99, %101 : vector<32x32xf32>
    %c0_87 = arith.constant 0 : index
    %c0_88 = arith.constant 0 : index
    %103 = vector.load %arg8[%c0_87, %c0_88] : memref<32x1xf32, #tpu.memory_space<vmem>>, vector<32x1xf32>
    %104 = vector.broadcast %103 : vector<32x1xf32> to vector<32x32xf32>
    %105 = arith.mulf %102, %104 : vector<32x32xf32>
    %cst_89 = arith.constant 0.000000e+00 : bf16
    %106 = vector.broadcast %cst_89 : bf16 to vector<34x32xbf16>
    %c0_90 = arith.constant 0 : index
    %c0_91 = arith.constant 0 : index
    %107 = vector.load %arg11[%c0_90, %c0_91] : memref<112x32xbf16, #tpu.memory_space<vmem>>, vector<34x32xbf16>
    tpu.vector_store %arg11[%c0_90, %c0_91], %106 {strides = array<i32>} : memref<112x32xbf16, #tpu.memory_space<vmem>>, vector<34x32xbf16>,
    %cst_92 = arith.constant 0.000000e+00 : bf16
    %108 = vector.broadcast %cst_92 : bf16 to vector<46x32xbf16>
    %c66_93 = arith.constant 66 : index
    %c0_94 = arith.constant 0 : index
    %109 = vector.load %arg11[%c66_93, %c0_94] : memref<112x32xbf16, #tpu.memory_space<vmem>>, vector<46x32xbf16>
    tpu.vector_store %arg11[%c66_93, %c0_94], %108 {strides = array<i32>} : memref<112x32xbf16, #tpu.memory_space<vmem>>, vector<46x32xbf16>,
    %110 = arith.truncf %105 : vector<32x32xf32> to vector<32x32xbf16>
    %c34_95 = arith.constant 34 : index
    %c0_96 = arith.constant 0 : index
    %111 = vector.load %arg11[%c34_95, %c0_96] : memref<112x32xbf16, #tpu.memory_space<vmem>>, vector<32x32xbf16>
    tpu.vector_store %arg11[%c34_95, %c0_96], %110 {strides = array<i32>} : memref<112x32xbf16, #tpu.memory_space<vmem>>, vector<32x32xbf16>,
    %c0_97 = arith.constant 0 : index
    %c0_98 = arith.constant 0 : index
    %112 = vector.load %arg11[%c0_97, %c0_98] : memref<112x32xbf16, #tpu.memory_space<vmem>>, vector<32x32xbf16>
    %c0_99 = arith.constant 0 : index
    %c0_100 = arith.constant 0 : index
    %113 = vector.load %arg13[%c0_99, %c0_100] : memref<32x800xbf16, #tpu.memory_space<vmem>>, vector<32x32xbf16>
    tpu.vector_store %arg13[%c0_99, %c0_100], %112 {strides = array<i32>} : memref<32x800xbf16, #tpu.memory_space<vmem>>, vector<32x32xbf16>,
    %c1_101 = arith.constant 1 : index
    %c0_102 = arith.constant 0 : index
    %114 = vector.load %arg11[%c1_101, %c0_102] : memref<112x32xbf16, #tpu.memory_space<vmem>>, vector<32x32xbf16>
    %c0_103 = arith.constant 0 : index
    %c32_104 = arith.constant 32 : index
    %115 = vector.load %arg13[%c0_103, %c32_104] : memref<32x800xbf16, #tpu.memory_space<vmem>>, vector<32x32xbf16>
    tpu.vector_store %arg13[%c0_103, %c32_104], %114 {strides = array<i32>} : memref<32x800xbf16, #tpu.memory_space<vmem>>, vector<32x32xbf16>,
    %c2_105 = arith.constant 2 : index
    %c0_106 = arith.constant 0 : index
    %116 = vector.load %arg11[%c2_105, %c0_106] : memref<112x32xbf16, #tpu.memory_space<vmem>>, vector<32x32xbf16>
    %c0_107 = arith.constant 0 : index
    %c64_108 = arith.constant 64 : index
    %117 = vector.load %arg13[%c0_107, %c64_108] : memref<32x800xbf16, #tpu.memory_space<vmem>>, vector<32x32xbf16>
    tpu.vector_store %arg13[%c0_107, %c64_108], %116 {strides = array<i32>} : memref<32x800xbf16, #tpu.memory_space<vmem>>, vector<32x32xbf16>,
    %c3_109 = arith.constant 3 : index
    %c0_110 = arith.constant 0 : index
    %118 = vector.load %arg11[%c3_109, %c0_110] : memref<112x32xbf16, #tpu.memory_space<vmem>>, vector<32x32xbf16>
    %c0_111 = arith.constant 0 : index
    %c96_112 = arith.constant 96 : index
    %119 = vector.load %arg13[%c0_111, %c96_112] : memref<32x800xbf16, #tpu.memory_space<vmem>>, vector<32x32xbf16>
    tpu.vector_store %arg13[%c0_111, %c96_112], %118 {strides = array<i32>} : memref<32x800xbf16, #tpu.memory_space<vmem>>, vector<32x32xbf16>,
    %c4_113 = arith.constant 4 : index
    %c0_114 = arith.constant 0 : index
    %120 = vector.load %arg11[%c4_113, %c0_114] : memref<112x32xbf16, #tpu.memory_space<vmem>>, vector<32x32xbf16>
    %c0_115 = arith.constant 0 : index
    %c128_116 = arith.constant 128 : index
    %121 = vector.load %arg13[%c0_115, %c128_116] : memref<32x800xbf16, #tpu.memory_space<vmem>>, vector<32x32xbf16>
    tpu.vector_store %arg13[%c0_115, %c128_116], %120 {strides = array<i32>} : memref<32x800xbf16, #tpu.memory_space<vmem>>, vector<32x32xbf16>,
    %c16_117 = arith.constant 16 : index
    %c0_118 = arith.constant 0 : index
    %122 = vector.load %arg11[%c16_117, %c0_118] : memref<112x32xbf16, #tpu.memory_space<vmem>>, vector<32x32xbf16>
    %c0_119 = arith.constant 0 : index
    %c160_120 = arith.constant 160 : index
    %123 = vector.load %arg13[%c0_119, %c160_120] : memref<32x800xbf16, #tpu.memory_space<vmem>>, vector<32x32xbf16>
    tpu.vector_store %arg13[%c0_119, %c160_120], %122 {strides = array<i32>} : memref<32x800xbf16, #tpu.memory_space<vmem>>, vector<32x32xbf16>,
    %c17_121 = arith.constant 17 : index
    %c0_122 = arith.constant 0 : index
    %124 = vector.load %arg11[%c17_121, %c0_122] : memref<112x32xbf16, #tpu.memory_space<vmem>>, vector<32x32xbf16>
    %c0_123 = arith.constant 0 : index
    %c192_124 = arith.constant 192 : index
    %125 = vector.load %arg13[%c0_123, %c192_124] : memref<32x800xbf16, #tpu.memory_space<vmem>>, vector<32x32xbf16>
    tpu.vector_store %arg13[%c0_123, %c192_124], %124 {strides = array<i32>} : memref<32x800xbf16, #tpu.memory_space<vmem>>, vector<32x32xbf16>,
    %c18_125 = arith.constant 18 : index
    %c0_126 = arith.constant 0 : index
    %126 = vector.load %arg11[%c18_125, %c0_126] : memref<112x32xbf16, #tpu.memory_space<vmem>>, vector<32x32xbf16>
    %c0_127 = arith.constant 0 : index
    %c224_128 = arith.constant 224 : index
    %127 = vector.load %arg13[%c0_127, %c224_128] : memref<32x800xbf16, #tpu.memory_space<vmem>>, vector<32x32xbf16>
    tpu.vector_store %arg13[%c0_127, %c224_128], %126 {strides = array<i32>} : memref<32x800xbf16, #tpu.memory_space<vmem>>, vector<32x32xbf16>,
    %c19_129 = arith.constant 19 : index
    %c0_130 = arith.constant 0 : index
    %128 = vector.load %arg11[%c19_129, %c0_130] : memref<112x32xbf16, #tpu.memory_space<vmem>>, vector<32x32xbf16>
    %c0_131 = arith.constant 0 : index
    %c256_132 = arith.constant 256 : index
    %129 = vector.load %arg13[%c0_131, %c256_132] : memref<32x800xbf16, #tpu.memory_space<vmem>>, vector<32x32xbf16>
    tpu.vector_store %arg13[%c0_131, %c256_132], %128 {strides = array<i32>} : memref<32x800xbf16, #tpu.memory_space<vmem>>, vector<32x32xbf16>,
    %c20_133 = arith.constant 20 : index
    %c0_134 = arith.constant 0 : index
    %130 = vector.load %arg11[%c20_133, %c0_134] : memref<112x32xbf16, #tpu.memory_space<vmem>>, vector<32x32xbf16>
    %c0_135 = arith.constant 0 : index
    %c288_136 = arith.constant 288 : index
    %131 = vector.load %arg13[%c0_135, %c288_136] : memref<32x800xbf16, #tpu.memory_space<vmem>>, vector<32x32xbf16>
    tpu.vector_store %arg13[%c0_135, %c288_136], %130 {strides = array<i32>} : memref<32x800xbf16, #tpu.memory_space<vmem>>, vector<32x32xbf16>,
    %c32_137 = arith.constant 32 : index
    %c0_138 = arith.constant 0 : index
    %132 = vector.load %arg11[%c32_137, %c0_138] : memref<112x32xbf16, #tpu.memory_space<vmem>>, vector<32x32xbf16>
    %c0_139 = arith.constant 0 : index
    %c320_140 = arith.constant 320 : index
    %133 = vector.load %arg13[%c0_139, %c320_140] : memref<32x800xbf16, #tpu.memory_space<vmem>>, vector<32x32xbf16>
    tpu.vector_store %arg13[%c0_139, %c320_140], %132 {strides = array<i32>} : memref<32x800xbf16, #tpu.memory_space<vmem>>, vector<32x32xbf16>,
    %c33_141 = arith.constant 33 : index
    %c0_142 = arith.constant 0 : index
    %134 = vector.load %arg11[%c33_141, %c0_142] : memref<112x32xbf16, #tpu.memory_space<vmem>>, vector<32x32xbf16>
    %c0_143 = arith.constant 0 : index
    %c352_144 = arith.constant 352 : index
    %135 = vector.load %arg13[%c0_143, %c352_144] : memref<32x800xbf16, #tpu.memory_space<vmem>>, vector<32x32xbf16>
    tpu.vector_store %arg13[%c0_143, %c352_144], %134 {strides = array<i32>} : memref<32x800xbf16, #tpu.memory_space<vmem>>, vector<32x32xbf16>,
    %c34_145 = arith.constant 34 : index
    %c0_146 = arith.constant 0 : index
    %136 = vector.load %arg11[%c34_145, %c0_146] : memref<112x32xbf16, #tpu.memory_space<vmem>>, vector<32x32xbf16>
    %c0_147 = arith.constant 0 : index
    %c384_148 = arith.constant 384 : index
    %137 = vector.load %arg13[%c0_147, %c384_148] : memref<32x800xbf16, #tpu.memory_space<vmem>>, vector<32x32xbf16>
    tpu.vector_store %arg13[%c0_147, %c384_148], %136 {strides = array<i32>} : memref<32x800xbf16, #tpu.memory_space<vmem>>, vector<32x32xbf16>,
    %c35_149 = arith.constant 35 : index
    %c0_150 = arith.constant 0 : index
    %138 = vector.load %arg11[%c35_149, %c0_150] : memref<112x32xbf16, #tpu.memory_space<vmem>>, vector<32x32xbf16>
    %c0_151 = arith.constant 0 : index
    %c416 = arith.constant 416 : index
    %139 = vector.load %arg13[%c0_151, %c416] : memref<32x800xbf16, #tpu.memory_space<vmem>>, vector<32x32xbf16>
    tpu.vector_store %arg13[%c0_151, %c416], %138 {strides = array<i32>} : memref<32x800xbf16, #tpu.memory_space<vmem>>, vector<32x32xbf16>,
    %c36_152 = arith.constant 36 : index
    %c0_153 = arith.constant 0 : index
    %140 = vector.load %arg11[%c36_152, %c0_153] : memref<112x32xbf16, #tpu.memory_space<vmem>>, vector<32x32xbf16>
    %c0_154 = arith.constant 0 : index
    %c448 = arith.constant 448 : index
    %141 = vector.load %arg13[%c0_154, %c448] : memref<32x800xbf16, #tpu.memory_space<vmem>>, vector<32x32xbf16>
    tpu.vector_store %arg13[%c0_154, %c448], %140 {strides = array<i32>} : memref<32x800xbf16, #tpu.memory_space<vmem>>, vector<32x32xbf16>,
    %c48_155 = arith.constant 48 : index
    %c0_156 = arith.constant 0 : index
    %142 = vector.load %arg11[%c48_155, %c0_156] : memref<112x32xbf16, #tpu.memory_space<vmem>>, vector<32x32xbf16>
    %c0_157 = arith.constant 0 : index
    %c480 = arith.constant 480 : index
    %143 = vector.load %arg13[%c0_157, %c480] : memref<32x800xbf16, #tpu.memory_space<vmem>>, vector<32x32xbf16>
    tpu.vector_store %arg13[%c0_157, %c480], %142 {strides = array<i32>} : memref<32x800xbf16, #tpu.memory_space<vmem>>, vector<32x32xbf16>,
    %c49_158 = arith.constant 49 : index
    %c0_159 = arith.constant 0 : index
    %144 = vector.load %arg11[%c49_158, %c0_159] : memref<112x32xbf16, #tpu.memory_space<vmem>>, vector<32x32xbf16>
    %c0_160 = arith.constant 0 : index
    %c512 = arith.constant 512 : index
    %145 = vector.load %arg13[%c0_160, %c512] : memref<32x800xbf16, #tpu.memory_space<vmem>>, vector<32x32xbf16>
    tpu.vector_store %arg13[%c0_160, %c512], %144 {strides = array<i32>} : memref<32x800xbf16, #tpu.memory_space<vmem>>, vector<32x32xbf16>,
    %c50_161 = arith.constant 50 : index
    %c0_162 = arith.constant 0 : index
    %146 = vector.load %arg11[%c50_161, %c0_162] : memref<112x32xbf16, #tpu.memory_space<vmem>>, vector<32x32xbf16>
    %c0_163 = arith.constant 0 : index
    %c544 = arith.constant 544 : index
    %147 = vector.load %arg13[%c0_163, %c544] : memref<32x800xbf16, #tpu.memory_space<vmem>>, vector<32x32xbf16>
    tpu.vector_store %arg13[%c0_163, %c544], %146 {strides = array<i32>} : memref<32x800xbf16, #tpu.memory_space<vmem>>, vector<32x32xbf16>,
    %c51_164 = arith.constant 51 : index
    %c0_165 = arith.constant 0 : index
    %148 = vector.load %arg11[%c51_164, %c0_165] : memref<112x32xbf16, #tpu.memory_space<vmem>>, vector<32x32xbf16>
    %c0_166 = arith.constant 0 : index
    %c576 = arith.constant 576 : index
    %149 = vector.load %arg13[%c0_166, %c576] : memref<32x800xbf16, #tpu.memory_space<vmem>>, vector<32x32xbf16>
    tpu.vector_store %arg13[%c0_166, %c576], %148 {strides = array<i32>} : memref<32x800xbf16, #tpu.memory_space<vmem>>, vector<32x32xbf16>,
    %c52_167 = arith.constant 52 : index
    %c0_168 = arith.constant 0 : index
    %150 = vector.load %arg11[%c52_167, %c0_168] : memref<112x32xbf16, #tpu.memory_space<vmem>>, vector<32x32xbf16>
    %c0_169 = arith.constant 0 : index
    %c608 = arith.constant 608 : index
    %151 = vector.load %arg13[%c0_169, %c608] : memref<32x800xbf16, #tpu.memory_space<vmem>>, vector<32x32xbf16>
    tpu.vector_store %arg13[%c0_169, %c608], %150 {strides = array<i32>} : memref<32x800xbf16, #tpu.memory_space<vmem>>, vector<32x32xbf16>,
    %c64_170 = arith.constant 64 : index
    %c0_171 = arith.constant 0 : index
    %152 = vector.load %arg11[%c64_170, %c0_171] : memref<112x32xbf16, #tpu.memory_space<vmem>>, vector<32x32xbf16>
    %c0_172 = arith.constant 0 : index
    %c640 = arith.constant 640 : index
    %153 = vector.load %arg13[%c0_172, %c640] : memref<32x800xbf16, #tpu.memory_space<vmem>>, vector<32x32xbf16>
    tpu.vector_store %arg13[%c0_172, %c640], %152 {strides = array<i32>} : memref<32x800xbf16, #tpu.memory_space<vmem>>, vector<32x32xbf16>,
    %c65_173 = arith.constant 65 : index
    %c0_174 = arith.constant 0 : index
    %154 = vector.load %arg11[%c65_173, %c0_174] : memref<112x32xbf16, #tpu.memory_space<vmem>>, vector<32x32xbf16>
    %c0_175 = arith.constant 0 : index
    %c672 = arith.constant 672 : index
    %155 = vector.load %arg13[%c0_175, %c672] : memref<32x800xbf16, #tpu.memory_space<vmem>>, vector<32x32xbf16>
    tpu.vector_store %arg13[%c0_175, %c672], %154 {strides = array<i32>} : memref<32x800xbf16, #tpu.memory_space<vmem>>, vector<32x32xbf16>,
    %c66_176 = arith.constant 66 : index
    %c0_177 = arith.constant 0 : index
    %156 = vector.load %arg11[%c66_176, %c0_177] : memref<112x32xbf16, #tpu.memory_space<vmem>>, vector<32x32xbf16>
    %c0_178 = arith.constant 0 : index
    %c704 = arith.constant 704 : index
    %157 = vector.load %arg13[%c0_178, %c704] : memref<32x800xbf16, #tpu.memory_space<vmem>>, vector<32x32xbf16>
    tpu.vector_store %arg13[%c0_178, %c704], %156 {strides = array<i32>} : memref<32x800xbf16, #tpu.memory_space<vmem>>, vector<32x32xbf16>,
    %c67_179 = arith.constant 67 : index
    %c0_180 = arith.constant 0 : index
    %158 = vector.load %arg11[%c67_179, %c0_180] : memref<112x32xbf16, #tpu.memory_space<vmem>>, vector<32x32xbf16>
    %c0_181 = arith.constant 0 : index
    %c736 = arith.constant 736 : index
    %159 = vector.load %arg13[%c0_181, %c736] : memref<32x800xbf16, #tpu.memory_space<vmem>>, vector<32x32xbf16>
    tpu.vector_store %arg13[%c0_181, %c736], %158 {strides = array<i32>} : memref<32x800xbf16, #tpu.memory_space<vmem>>, vector<32x32xbf16>,
    %c68_182 = arith.constant 68 : index
    %c0_183 = arith.constant 0 : index
    %160 = vector.load %arg11[%c68_182, %c0_183] : memref<112x32xbf16, #tpu.memory_space<vmem>>, vector<32x32xbf16>
    %c0_184 = arith.constant 0 : index
    %c768 = arith.constant 768 : index
    %161 = vector.load %arg13[%c0_184, %c768] : memref<32x800xbf16, #tpu.memory_space<vmem>>, vector<32x32xbf16>
    tpu.vector_store %arg13[%c0_184, %c768], %160 {strides = array<i32>} : memref<32x800xbf16, #tpu.memory_space<vmem>>, vector<32x32xbf16>,
    %c0_185 = arith.constant 0 : index
    %c0_186 = arith.constant 0 : index
    %162 = vector.load %arg13[%c0_185, %c0_186] : memref<32x800xbf16, #tpu.memory_space<vmem>>, vector<32x800xbf16>
    %c0_187 = arith.constant 0 : index
    %c0_188 = arith.constant 0 : index
    %163 = vector.load %arg5[%c0_187, %c0_188] : memref<800x16xbf16, #tpu.memory_space<vmem>>, vector<800x16xbf16>
    %cst_189 = arith.constant dense<0.000000e+00> : vector<32x16xf32>
    %164 = tpu.matmul %162, %163, %cst_189 {dimension_numbers = #tpu.dot_dimension_numbers<[1], [0], [0], [1], [0, 0, 1, 1], [], []>} : vector<32x800xbf16>, vector<800x16xbf16>, vector<32x16xf32> -> vector<32x16xf32>
    %c0_190 = arith.constant 0 : index
    %c0_191 = arith.constant 0 : index
    %165 = vector.load %arg6[%c0_190, %c0_191] : memref<1x16xf32, #tpu.memory_space<vmem>>, vector<1x16xf32>
    %166 = vector.broadcast %165 : vector<1x16xf32> to vector<32x16xf32>
    %167 = arith.addf %164, %166 : vector<32x16xf32>
    %168 = vector.extract_strided_slice %167 {offsets = [0, 0], sizes = [12, 16], strides = [1, 1]} : vector<32x16xf32> to vector<12x16xf32>
    %169 = vector.extract_strided_slice %167 {offsets = [16, 0], sizes = [12, 16], strides = [1, 1]} : vector<32x16xf32> to vector<12x16xf32>
    %170 = tpu.concatenate %168, %169 in 0 : vector<12x16xf32>, vector<12x16xf32> -> vector<24x16xf32>
    %c0_192 = arith.constant 0 : index
    %c0_193 = arith.constant 0 : index
    %c0_194 = arith.constant 0 : index
    %171 = vector.load %arg2[%c0_192, %c0_193, %c0_194] : memref<1x24x16xf32, #tpu.memory_space<vmem>>, vector<1x24x16xf32>
    %172 = vector.shape_cast %171 : vector<1x24x16xf32> to vector<24x16xf32>
    %c0_195 = arith.constant 0 : index
    %c0_196 = arith.constant 0 : index
    %c0_197 = arith.constant 0 : index
    %173 = vector.load %arg7[%c0_195, %c0_196, %c0_197] : memref<1x1x1xf32, #tpu.memory_space<vmem>>, vector<1x1x1xf32>
    %174 = vector.shape_cast %173 : vector<1x1x1xf32> to vector<1x1xf32>
    %175 = vector.broadcast %174 : vector<1x1xf32> to vector<24x16xf32>
    %176 = arith.mulf %175, %170 : vector<24x16xf32>
    %177 = arith.addf %172, %176 : vector<24x16xf32>
    %c0_198 = arith.constant 0 : index
    %c0_199 = arith.constant 0 : index
    %c0_200 = arith.constant 0 : index
    %178 = vector.load %arg9[%c0_198, %c0_199, %c0_200] : memref<1x24x16xf32, #tpu.memory_space<vmem>>, vector<1x24x16xf32>
    %179 = vector.shape_cast %178 : vector<1x24x16xf32> to vector<24x16xf32>
    %180 = vector.shape_cast %177 : vector<24x16xf32> to vector<1x24x16xf32>
    tpu.vector_store %arg9[%c0_198, %c0_199, %c0_200], %180 {strides = array<i32>} : memref<1x24x16xf32, #tpu.memory_space<vmem>>, vector<1x24x16xf32>,
    return
  }
  func.func @transform_0(%arg0: i32) -> (i32, i32, i32) {
    %c0_i32 = arith.constant 0 : i32
    %c0_i32_0 = arith.constant 0 : i32
    %c0_i32_1 = arith.constant 0 : i32
    return %arg0, %c0_i32, %c0_i32_0 : i32, i32, i32
  }
  func.func @transform_1(%arg0: i32) -> (i32, i32, i32) {
    %c0_i32 = arith.constant 0 : i32
    %c0_i32_0 = arith.constant 0 : i32
    %c0_i32_1 = arith.constant 0 : i32
    return %arg0, %c0_i32, %c0_i32_0 : i32, i32, i32
  }
  func.func @transform_2(%arg0: i32) -> (i32, i32) {
    %c0_i32 = arith.constant 0 : i32
    %c0_i32_0 = arith.constant 0 : i32
    %c0_i32_1 = arith.constant 0 : i32
    return %c0_i32, %c0_i32_0 : i32, i32
  }
  func.func @transform_3(%arg0: i32) -> (i32, i32) {
    %c0_i32 = arith.constant 0 : i32
    %c0_i32_0 = arith.constant 0 : i32
    %c0_i32_1 = arith.constant 0 : i32
    return %c0_i32, %c0_i32_0 : i32, i32
  }
  func.func @transform_4(%arg0: i32) -> (i32, i32) {
    %c0_i32 = arith.constant 0 : i32
    %c0_i32_0 = arith.constant 0 : i32
    %c0_i32_1 = arith.constant 0 : i32
    return %c0_i32, %c0_i32_0 : i32, i32
  }
  func.func @transform_5(%arg0: i32) -> (i32, i32) {
    %c0_i32 = arith.constant 0 : i32
    %c0_i32_0 = arith.constant 0 : i32
    %c0_i32_1 = arith.constant 0 : i32
    return %c0_i32, %c0_i32_0 : i32, i32
  }
  func.func @transform_6(%arg0: i32) -> (i32, i32, i32) {
    %c0_i32 = arith.constant 0 : i32
    %c0_i32_0 = arith.constant 0 : i32
    %c0_i32_1 = arith.constant 0 : i32
    return %arg0, %c0_i32, %c0_i32_0 : i32, i32, i32
  }
  func.func @transform_7(%arg0: i32) -> (i32, i32) {
    %c0_i32 = arith.constant 0 : i32
    %c0_i32_0 = arith.constant 0 : i32
    %c0_i32_1 = arith.constant 0 : i32
    return %c0_i32, %c0_i32_0 : i32, i32
  }
  func.func @transform_8(%arg0: i32) -> (i32, i32, i32) {
    %c0_i32 = arith.constant 0 : i32
    %c0_i32_0 = arith.constant 0 : i32
    %c0_i32_1 = arith.constant 0 : i32
    return %arg0, %c0_i32, %c0_i32_0 : i32, i32, i32
  }
}

module attributes {stable_mosaic.version = 11 : i64} {
  func.func @_fused_period_kernel(%arg0: i32, %arg1: memref<1x24x16xbf16, #tpu.memory_space<vmem>>, %arg2: memref<1x24x16xf32, #tpu.memory_space<vmem>>, %arg3: memref<400x32xbf16, #tpu.memory_space<vmem>>, %arg4: memref<1x32xf32, #tpu.memory_space<vmem>>, %arg5: memref<800x16xbf16, #tpu.memory_space<vmem>>, %arg6: memref<1x16xf32, #tpu.memory_space<vmem>>, %arg7: memref<1x1x1xf32, #tpu.memory_space<vmem>>, %arg8: memref<64x1xf32, #tpu.memory_space<vmem>>, %arg9: memref<1x24x16xf32, #tpu.memory_space<vmem>>, %arg10: memref<104x16xbf16, #tpu.memory_space<vmem>>, %arg11: memref<104x32xbf16, #tpu.memory_space<vmem>>, %arg12: memref<64x400xbf16, #tpu.memory_space<vmem>>, %arg13: memref<64x800xbf16, #tpu.memory_space<vmem>>) attributes {dimension_semantics = [#tpu.dimension_semantics<parallel>], iteration_bounds = array<i64: 2>, scalar_prefetch = 0 : i64, scratch_operands = 4 : i64, tpu.core_type = #tpu.core_type<tc>, window_params = [{transform_indices = @transform_0, window_bounds = array<i64: 1, 24, 16>}, {transform_indices = @transform_1, window_bounds = array<i64: 1, 24, 16>}, {pipeline_mode = #tpu.pipeline_mode<synchronous>, transform_indices = @transform_2, window_bounds = array<i64: 400, 32>}, {pipeline_mode = #tpu.pipeline_mode<synchronous>, transform_indices = @transform_3, window_bounds = array<i64: 1, 32>}, {pipeline_mode = #tpu.pipeline_mode<synchronous>, transform_indices = @transform_4, window_bounds = array<i64: 800, 16>}, {pipeline_mode = #tpu.pipeline_mode<synchronous>, transform_indices = @transform_5, window_bounds = array<i64: 1, 16>}, {transform_indices = @transform_6, window_bounds = array<i64: 1, 1, 1>}, {pipeline_mode = #tpu.pipeline_mode<synchronous>, transform_indices = @transform_7, window_bounds = array<i64: 64, 1>}, {transform_indices = @transform_8, window_bounds = array<i64: 1, 24, 16>}]} {
    %cst = arith.constant 0.000000e+00 : bf16
    %0 = vector.broadcast %cst : bf16 to vector<104x16xbf16>
    %c0 = arith.constant 0 : index
    %c0_0 = arith.constant 0 : index
    %1 = vector.load %arg10[%c0, %c0_0] : memref<104x16xbf16, #tpu.memory_space<vmem>>, vector<104x16xbf16>
    tpu.vector_store %arg10[%c0, %c0_0], %0 {strides = array<i32>} : memref<104x16xbf16, #tpu.memory_space<vmem>>, vector<104x16xbf16>,
    %c0_1 = arith.constant 0 : index
    %c0_2 = arith.constant 0 : index
    %c0_3 = arith.constant 0 : index
    %2 = vector.load %arg1[%c0_1, %c0_2, %c0_3] : memref<1x24x16xbf16, #tpu.memory_space<vmem>>, vector<1x3x16xbf16>
    %3 = vector.shape_cast %2 : vector<1x3x16xbf16> to vector<3x16xbf16>
    %c18 = arith.constant 18 : index
    %c0_4 = arith.constant 0 : index
    %4 = vector.load %arg10[%c18, %c0_4] : memref<104x16xbf16, #tpu.memory_space<vmem>>, vector<3x16xbf16>
    tpu.vector_store %arg10[%c18, %c0_4], %3 {strides = array<i32>} : memref<104x16xbf16, #tpu.memory_space<vmem>>, vector<3x16xbf16>,
    %c0_5 = arith.constant 0 : index
    %c3 = arith.constant 3 : index
    %c0_6 = arith.constant 0 : index
    %5 = vector.load %arg1[%c0_5, %c3, %c0_6] : memref<1x24x16xbf16, #tpu.memory_space<vmem>>, vector<1x3x16xbf16>
    %6 = vector.shape_cast %5 : vector<1x3x16xbf16> to vector<3x16xbf16>
    %c26 = arith.constant 26 : index
    %c0_7 = arith.constant 0 : index
    %7 = vector.load %arg10[%c26, %c0_7] : memref<104x16xbf16, #tpu.memory_space<vmem>>, vector<3x16xbf16>
    tpu.vector_store %arg10[%c26, %c0_7], %6 {strides = array<i32>} : memref<104x16xbf16, #tpu.memory_space<vmem>>, vector<3x16xbf16>,
    %c0_8 = arith.constant 0 : index
    %c6 = arith.constant 6 : index
    %c0_9 = arith.constant 0 : index
    %8 = vector.load %arg1[%c0_8, %c6, %c0_9] : memref<1x24x16xbf16, #tpu.memory_space<vmem>>, vector<1x3x16xbf16>
    %9 = vector.shape_cast %8 : vector<1x3x16xbf16> to vector<3x16xbf16>
    %c34 = arith.constant 34 : index
    %c0_10 = arith.constant 0 : index
    %10 = vector.load %arg10[%c34, %c0_10] : memref<104x16xbf16, #tpu.memory_space<vmem>>, vector<3x16xbf16>
    tpu.vector_store %arg10[%c34, %c0_10], %9 {strides = array<i32>} : memref<104x16xbf16, #tpu.memory_space<vmem>>, vector<3x16xbf16>,
    %c0_11 = arith.constant 0 : index
    %c9 = arith.constant 9 : index
    %c0_12 = arith.constant 0 : index
    %11 = vector.load %arg1[%c0_11, %c9, %c0_12] : memref<1x24x16xbf16, #tpu.memory_space<vmem>>, vector<1x3x16xbf16>
    %12 = vector.shape_cast %11 : vector<1x3x16xbf16> to vector<3x16xbf16>
    %c42 = arith.constant 42 : index
    %c0_13 = arith.constant 0 : index
    %13 = vector.load %arg10[%c42, %c0_13] : memref<104x16xbf16, #tpu.memory_space<vmem>>, vector<3x16xbf16>
    tpu.vector_store %arg10[%c42, %c0_13], %12 {strides = array<i32>} : memref<104x16xbf16, #tpu.memory_space<vmem>>, vector<3x16xbf16>,
    %c0_14 = arith.constant 0 : index
    %c12 = arith.constant 12 : index
    %c0_15 = arith.constant 0 : index
    %14 = vector.load %arg1[%c0_14, %c12, %c0_15] : memref<1x24x16xbf16, #tpu.memory_space<vmem>>, vector<1x3x16xbf16>
    %15 = vector.shape_cast %14 : vector<1x3x16xbf16> to vector<3x16xbf16>
    %c50 = arith.constant 50 : index
    %c0_16 = arith.constant 0 : index
    %16 = vector.load %arg10[%c50, %c0_16] : memref<104x16xbf16, #tpu.memory_space<vmem>>, vector<3x16xbf16>
    tpu.vector_store %arg10[%c50, %c0_16], %15 {strides = array<i32>} : memref<104x16xbf16, #tpu.memory_space<vmem>>, vector<3x16xbf16>,
    %c0_17 = arith.constant 0 : index
    %c15 = arith.constant 15 : index
    %c0_18 = arith.constant 0 : index
    %17 = vector.load %arg1[%c0_17, %c15, %c0_18] : memref<1x24x16xbf16, #tpu.memory_space<vmem>>, vector<1x3x16xbf16>
    %18 = vector.shape_cast %17 : vector<1x3x16xbf16> to vector<3x16xbf16>
    %c58 = arith.constant 58 : index
    %c0_19 = arith.constant 0 : index
    %19 = vector.load %arg10[%c58, %c0_19] : memref<104x16xbf16, #tpu.memory_space<vmem>>, vector<3x16xbf16>
    tpu.vector_store %arg10[%c58, %c0_19], %18 {strides = array<i32>} : memref<104x16xbf16, #tpu.memory_space<vmem>>, vector<3x16xbf16>,
    %c0_20 = arith.constant 0 : index
    %c18_21 = arith.constant 18 : index
    %c0_22 = arith.constant 0 : index
    %20 = vector.load %arg1[%c0_20, %c18_21, %c0_22] : memref<1x24x16xbf16, #tpu.memory_space<vmem>>, vector<1x3x16xbf16>
    %21 = vector.shape_cast %20 : vector<1x3x16xbf16> to vector<3x16xbf16>
    %c66 = arith.constant 66 : index
    %c0_23 = arith.constant 0 : index
    %22 = vector.load %arg10[%c66, %c0_23] : memref<104x16xbf16, #tpu.memory_space<vmem>>, vector<3x16xbf16>
    tpu.vector_store %arg10[%c66, %c0_23], %21 {strides = array<i32>} : memref<104x16xbf16, #tpu.memory_space<vmem>>, vector<3x16xbf16>,
    %c0_24 = arith.constant 0 : index
    %c21 = arith.constant 21 : index
    %c0_25 = arith.constant 0 : index
    %23 = vector.load %arg1[%c0_24, %c21, %c0_25] : memref<1x24x16xbf16, #tpu.memory_space<vmem>>, vector<1x3x16xbf16>
    %24 = vector.shape_cast %23 : vector<1x3x16xbf16> to vector<3x16xbf16>
    %c74 = arith.constant 74 : index
    %c0_26 = arith.constant 0 : index
    %25 = vector.load %arg10[%c74, %c0_26] : memref<104x16xbf16, #tpu.memory_space<vmem>>, vector<3x16xbf16>
    tpu.vector_store %arg10[%c74, %c0_26], %24 {strides = array<i32>} : memref<104x16xbf16, #tpu.memory_space<vmem>>, vector<3x16xbf16>,
    %c0_27 = arith.constant 0 : index
    %c0_28 = arith.constant 0 : index
    %26 = vector.load %arg10[%c0_27, %c0_28] : memref<104x16xbf16, #tpu.memory_space<vmem>>, vector<64x16xbf16>
    %c0_29 = arith.constant 0 : index
    %c0_30 = arith.constant 0 : index
    %27 = vector.load %arg12[%c0_29, %c0_30] : memref<64x400xbf16, #tpu.memory_space<vmem>>, vector<64x16xbf16>
    tpu.vector_store %arg12[%c0_29, %c0_30], %26 {strides = array<i32>} : memref<64x400xbf16, #tpu.memory_space<vmem>>, vector<64x16xbf16>,
    %c1 = arith.constant 1 : index
    %c0_31 = arith.constant 0 : index
    %28 = vector.load %arg10[%c1, %c0_31] : memref<104x16xbf16, #tpu.memory_space<vmem>>, vector<64x16xbf16>
    %c0_32 = arith.constant 0 : index
    %c16 = arith.constant 16 : index
    %29 = vector.load %arg12[%c0_32, %c16] : memref<64x400xbf16, #tpu.memory_space<vmem>>, vector<64x16xbf16>
    tpu.vector_store %arg12[%c0_32, %c16], %28 {strides = array<i32>} : memref<64x400xbf16, #tpu.memory_space<vmem>>, vector<64x16xbf16>,
    %c2 = arith.constant 2 : index
    %c0_33 = arith.constant 0 : index
    %30 = vector.load %arg10[%c2, %c0_33] : memref<104x16xbf16, #tpu.memory_space<vmem>>, vector<64x16xbf16>
    %c0_34 = arith.constant 0 : index
    %c32 = arith.constant 32 : index
    %31 = vector.load %arg12[%c0_34, %c32] : memref<64x400xbf16, #tpu.memory_space<vmem>>, vector<64x16xbf16>
    tpu.vector_store %arg12[%c0_34, %c32], %30 {strides = array<i32>} : memref<64x400xbf16, #tpu.memory_space<vmem>>, vector<64x16xbf16>,
    %c3_35 = arith.constant 3 : index
    %c0_36 = arith.constant 0 : index
    %32 = vector.load %arg10[%c3_35, %c0_36] : memref<104x16xbf16, #tpu.memory_space<vmem>>, vector<64x16xbf16>
    %c0_37 = arith.constant 0 : index
    %c48 = arith.constant 48 : index
    %33 = vector.load %arg12[%c0_37, %c48] : memref<64x400xbf16, #tpu.memory_space<vmem>>, vector<64x16xbf16>
    tpu.vector_store %arg12[%c0_37, %c48], %32 {strides = array<i32>} : memref<64x400xbf16, #tpu.memory_space<vmem>>, vector<64x16xbf16>,
    %c4 = arith.constant 4 : index
    %c0_38 = arith.constant 0 : index
    %34 = vector.load %arg10[%c4, %c0_38] : memref<104x16xbf16, #tpu.memory_space<vmem>>, vector<64x16xbf16>
    %c0_39 = arith.constant 0 : index
    %c64 = arith.constant 64 : index
    %35 = vector.load %arg12[%c0_39, %c64] : memref<64x400xbf16, #tpu.memory_space<vmem>>, vector<64x16xbf16>
    tpu.vector_store %arg12[%c0_39, %c64], %34 {strides = array<i32>} : memref<64x400xbf16, #tpu.memory_space<vmem>>, vector<64x16xbf16>,
    %c8 = arith.constant 8 : index
    %c0_40 = arith.constant 0 : index
    %36 = vector.load %arg10[%c8, %c0_40] : memref<104x16xbf16, #tpu.memory_space<vmem>>, vector<64x16xbf16>
    %c0_41 = arith.constant 0 : index
    %c80 = arith.constant 80 : index
    %37 = vector.load %arg12[%c0_41, %c80] : memref<64x400xbf16, #tpu.memory_space<vmem>>, vector<64x16xbf16>
    tpu.vector_store %arg12[%c0_41, %c80], %36 {strides = array<i32>} : memref<64x400xbf16, #tpu.memory_space<vmem>>, vector<64x16xbf16>,
    %c9_42 = arith.constant 9 : index
    %c0_43 = arith.constant 0 : index
    %38 = vector.load %arg10[%c9_42, %c0_43] : memref<104x16xbf16, #tpu.memory_space<vmem>>, vector<64x16xbf16>
    %c0_44 = arith.constant 0 : index
    %c96 = arith.constant 96 : index
    %39 = vector.load %arg12[%c0_44, %c96] : memref<64x400xbf16, #tpu.memory_space<vmem>>, vector<64x16xbf16>
    tpu.vector_store %arg12[%c0_44, %c96], %38 {strides = array<i32>} : memref<64x400xbf16, #tpu.memory_space<vmem>>, vector<64x16xbf16>,
    %c10 = arith.constant 10 : index
    %c0_45 = arith.constant 0 : index
    %40 = vector.load %arg10[%c10, %c0_45] : memref<104x16xbf16, #tpu.memory_space<vmem>>, vector<64x16xbf16>
    %c0_46 = arith.constant 0 : index
    %c112 = arith.constant 112 : index
    %41 = vector.load %arg12[%c0_46, %c112] : memref<64x400xbf16, #tpu.memory_space<vmem>>, vector<64x16xbf16>
    tpu.vector_store %arg12[%c0_46, %c112], %40 {strides = array<i32>} : memref<64x400xbf16, #tpu.memory_space<vmem>>, vector<64x16xbf16>,
    %c11 = arith.constant 11 : index
    %c0_47 = arith.constant 0 : index
    %42 = vector.load %arg10[%c11, %c0_47] : memref<104x16xbf16, #tpu.memory_space<vmem>>, vector<64x16xbf16>
    %c0_48 = arith.constant 0 : index
    %c128 = arith.constant 128 : index
    %43 = vector.load %arg12[%c0_48, %c128] : memref<64x400xbf16, #tpu.memory_space<vmem>>, vector<64x16xbf16>
    tpu.vector_store %arg12[%c0_48, %c128], %42 {strides = array<i32>} : memref<64x400xbf16, #tpu.memory_space<vmem>>, vector<64x16xbf16>,
    %c12_49 = arith.constant 12 : index
    %c0_50 = arith.constant 0 : index
    %44 = vector.load %arg10[%c12_49, %c0_50] : memref<104x16xbf16, #tpu.memory_space<vmem>>, vector<64x16xbf16>
    %c0_51 = arith.constant 0 : index
    %c144 = arith.constant 144 : index
    %45 = vector.load %arg12[%c0_51, %c144] : memref<64x400xbf16, #tpu.memory_space<vmem>>, vector<64x16xbf16>
    tpu.vector_store %arg12[%c0_51, %c144], %44 {strides = array<i32>} : memref<64x400xbf16, #tpu.memory_space<vmem>>, vector<64x16xbf16>,
    %c16_52 = arith.constant 16 : index
    %c0_53 = arith.constant 0 : index
    %46 = vector.load %arg10[%c16_52, %c0_53] : memref<104x16xbf16, #tpu.memory_space<vmem>>, vector<64x16xbf16>
    %c0_54 = arith.constant 0 : index
    %c160 = arith.constant 160 : index
    %47 = vector.load %arg12[%c0_54, %c160] : memref<64x400xbf16, #tpu.memory_space<vmem>>, vector<64x16xbf16>
    tpu.vector_store %arg12[%c0_54, %c160], %46 {strides = array<i32>} : memref<64x400xbf16, #tpu.memory_space<vmem>>, vector<64x16xbf16>,
    %c17 = arith.constant 17 : index
    %c0_55 = arith.constant 0 : index
    %48 = vector.load %arg10[%c17, %c0_55] : memref<104x16xbf16, #tpu.memory_space<vmem>>, vector<64x16xbf16>
    %c0_56 = arith.constant 0 : index
    %c176 = arith.constant 176 : index
    %49 = vector.load %arg12[%c0_56, %c176] : memref<64x400xbf16, #tpu.memory_space<vmem>>, vector<64x16xbf16>
    tpu.vector_store %arg12[%c0_56, %c176], %48 {strides = array<i32>} : memref<64x400xbf16, #tpu.memory_space<vmem>>, vector<64x16xbf16>,
    %c18_57 = arith.constant 18 : index
    %c0_58 = arith.constant 0 : index
    %50 = vector.load %arg10[%c18_57, %c0_58] : memref<104x16xbf16, #tpu.memory_space<vmem>>, vector<64x16xbf16>
    %c0_59 = arith.constant 0 : index
    %c192 = arith.constant 192 : index
    %51 = vector.load %arg12[%c0_59, %c192] : memref<64x400xbf16, #tpu.memory_space<vmem>>, vector<64x16xbf16>
    tpu.vector_store %arg12[%c0_59, %c192], %50 {strides = array<i32>} : memref<64x400xbf16, #tpu.memory_space<vmem>>, vector<64x16xbf16>,
    %c19 = arith.constant 19 : index
    %c0_60 = arith.constant 0 : index
    %52 = vector.load %arg10[%c19, %c0_60] : memref<104x16xbf16, #tpu.memory_space<vmem>>, vector<64x16xbf16>
    %c0_61 = arith.constant 0 : index
    %c208 = arith.constant 208 : index
    %53 = vector.load %arg12[%c0_61, %c208] : memref<64x400xbf16, #tpu.memory_space<vmem>>, vector<64x16xbf16>
    tpu.vector_store %arg12[%c0_61, %c208], %52 {strides = array<i32>} : memref<64x400xbf16, #tpu.memory_space<vmem>>, vector<64x16xbf16>,
    %c20 = arith.constant 20 : index
    %c0_62 = arith.constant 0 : index
    %54 = vector.load %arg10[%c20, %c0_62] : memref<104x16xbf16, #tpu.memory_space<vmem>>, vector<64x16xbf16>
    %c0_63 = arith.constant 0 : index
    %c224 = arith.constant 224 : index
    %55 = vector.load %arg12[%c0_63, %c224] : memref<64x400xbf16, #tpu.memory_space<vmem>>, vector<64x16xbf16>
    tpu.vector_store %arg12[%c0_63, %c224], %54 {strides = array<i32>} : memref<64x400xbf16, #tpu.memory_space<vmem>>, vector<64x16xbf16>,
    %c24 = arith.constant 24 : index
    %c0_64 = arith.constant 0 : index
    %56 = vector.load %arg10[%c24, %c0_64] : memref<104x16xbf16, #tpu.memory_space<vmem>>, vector<64x16xbf16>
    %c0_65 = arith.constant 0 : index
    %c240 = arith.constant 240 : index
    %57 = vector.load %arg12[%c0_65, %c240] : memref<64x400xbf16, #tpu.memory_space<vmem>>, vector<64x16xbf16>
    tpu.vector_store %arg12[%c0_65, %c240], %56 {strides = array<i32>} : memref<64x400xbf16, #tpu.memory_space<vmem>>, vector<64x16xbf16>,
    %c25 = arith.constant 25 : index
    %c0_66 = arith.constant 0 : index
    %58 = vector.load %arg10[%c25, %c0_66] : memref<104x16xbf16, #tpu.memory_space<vmem>>, vector<64x16xbf16>
    %c0_67 = arith.constant 0 : index
    %c256 = arith.constant 256 : index
    %59 = vector.load %arg12[%c0_67, %c256] : memref<64x400xbf16, #tpu.memory_space<vmem>>, vector<64x16xbf16>
    tpu.vector_store %arg12[%c0_67, %c256], %58 {strides = array<i32>} : memref<64x400xbf16, #tpu.memory_space<vmem>>, vector<64x16xbf16>,
    %c26_68 = arith.constant 26 : index
    %c0_69 = arith.constant 0 : index
    %60 = vector.load %arg10[%c26_68, %c0_69] : memref<104x16xbf16, #tpu.memory_space<vmem>>, vector<64x16xbf16>
    %c0_70 = arith.constant 0 : index
    %c272 = arith.constant 272 : index
    %61 = vector.load %arg12[%c0_70, %c272] : memref<64x400xbf16, #tpu.memory_space<vmem>>, vector<64x16xbf16>
    tpu.vector_store %arg12[%c0_70, %c272], %60 {strides = array<i32>} : memref<64x400xbf16, #tpu.memory_space<vmem>>, vector<64x16xbf16>,
    %c27 = arith.constant 27 : index
    %c0_71 = arith.constant 0 : index
    %62 = vector.load %arg10[%c27, %c0_71] : memref<104x16xbf16, #tpu.memory_space<vmem>>, vector<64x16xbf16>
    %c0_72 = arith.constant 0 : index
    %c288 = arith.constant 288 : index
    %63 = vector.load %arg12[%c0_72, %c288] : memref<64x400xbf16, #tpu.memory_space<vmem>>, vector<64x16xbf16>
    tpu.vector_store %arg12[%c0_72, %c288], %62 {strides = array<i32>} : memref<64x400xbf16, #tpu.memory_space<vmem>>, vector<64x16xbf16>,
    %c28 = arith.constant 28 : index
    %c0_73 = arith.constant 0 : index
    %64 = vector.load %arg10[%c28, %c0_73] : memref<104x16xbf16, #tpu.memory_space<vmem>>, vector<64x16xbf16>
    %c0_74 = arith.constant 0 : index
    %c304 = arith.constant 304 : index
    %65 = vector.load %arg12[%c0_74, %c304] : memref<64x400xbf16, #tpu.memory_space<vmem>>, vector<64x16xbf16>
    tpu.vector_store %arg12[%c0_74, %c304], %64 {strides = array<i32>} : memref<64x400xbf16, #tpu.memory_space<vmem>>, vector<64x16xbf16>,
    %c32_75 = arith.constant 32 : index
    %c0_76 = arith.constant 0 : index
    %66 = vector.load %arg10[%c32_75, %c0_76] : memref<104x16xbf16, #tpu.memory_space<vmem>>, vector<64x16xbf16>
    %c0_77 = arith.constant 0 : index
    %c320 = arith.constant 320 : index
    %67 = vector.load %arg12[%c0_77, %c320] : memref<64x400xbf16, #tpu.memory_space<vmem>>, vector<64x16xbf16>
    tpu.vector_store %arg12[%c0_77, %c320], %66 {strides = array<i32>} : memref<64x400xbf16, #tpu.memory_space<vmem>>, vector<64x16xbf16>,
    %c33 = arith.constant 33 : index
    %c0_78 = arith.constant 0 : index
    %68 = vector.load %arg10[%c33, %c0_78] : memref<104x16xbf16, #tpu.memory_space<vmem>>, vector<64x16xbf16>
    %c0_79 = arith.constant 0 : index
    %c336 = arith.constant 336 : index
    %69 = vector.load %arg12[%c0_79, %c336] : memref<64x400xbf16, #tpu.memory_space<vmem>>, vector<64x16xbf16>
    tpu.vector_store %arg12[%c0_79, %c336], %68 {strides = array<i32>} : memref<64x400xbf16, #tpu.memory_space<vmem>>, vector<64x16xbf16>,
    %c34_80 = arith.constant 34 : index
    %c0_81 = arith.constant 0 : index
    %70 = vector.load %arg10[%c34_80, %c0_81] : memref<104x16xbf16, #tpu.memory_space<vmem>>, vector<64x16xbf16>
    %c0_82 = arith.constant 0 : index
    %c352 = arith.constant 352 : index
    %71 = vector.load %arg12[%c0_82, %c352] : memref<64x400xbf16, #tpu.memory_space<vmem>>, vector<64x16xbf16>
    tpu.vector_store %arg12[%c0_82, %c352], %70 {strides = array<i32>} : memref<64x400xbf16, #tpu.memory_space<vmem>>, vector<64x16xbf16>,
    %c35 = arith.constant 35 : index
    %c0_83 = arith.constant 0 : index
    %72 = vector.load %arg10[%c35, %c0_83] : memref<104x16xbf16, #tpu.memory_space<vmem>>, vector<64x16xbf16>
    %c0_84 = arith.constant 0 : index
    %c368 = arith.constant 368 : index
    %73 = vector.load %arg12[%c0_84, %c368] : memref<64x400xbf16, #tpu.memory_space<vmem>>, vector<64x16xbf16>
    tpu.vector_store %arg12[%c0_84, %c368], %72 {strides = array<i32>} : memref<64x400xbf16, #tpu.memory_space<vmem>>, vector<64x16xbf16>,
    %c36 = arith.constant 36 : index
    %c0_85 = arith.constant 0 : index
    %74 = vector.load %arg10[%c36, %c0_85] : memref<104x16xbf16, #tpu.memory_space<vmem>>, vector<64x16xbf16>
    %c0_86 = arith.constant 0 : index
    %c384 = arith.constant 384 : index
    %75 = vector.load %arg12[%c0_86, %c384] : memref<64x400xbf16, #tpu.memory_space<vmem>>, vector<64x16xbf16>
    tpu.vector_store %arg12[%c0_86, %c384], %74 {strides = array<i32>} : memref<64x400xbf16, #tpu.memory_space<vmem>>, vector<64x16xbf16>,
    %c0_87 = arith.constant 0 : index
    %c0_88 = arith.constant 0 : index
    %76 = vector.load %arg12[%c0_87, %c0_88] : memref<64x400xbf16, #tpu.memory_space<vmem>>, vector<64x400xbf16>
    %c0_89 = arith.constant 0 : index
    %c0_90 = arith.constant 0 : index
    %77 = vector.load %arg3[%c0_89, %c0_90] : memref<400x32xbf16, #tpu.memory_space<vmem>>, vector<400x32xbf16>
    %cst_91 = arith.constant dense<0.000000e+00> : vector<64x32xf32>
    %78 = tpu.matmul %76, %77, %cst_91 {dimension_numbers = #tpu.dot_dimension_numbers<[1], [0], [0], [1], [0, 0, 1, 1], [], []>} : vector<64x400xbf16>, vector<400x32xbf16>, vector<64x32xf32> -> vector<64x32xf32>
    %c0_92 = arith.constant 0 : index
    %c0_93 = arith.constant 0 : index
    %79 = vector.load %arg4[%c0_92, %c0_93] : memref<1x32xf32, #tpu.memory_space<vmem>>, vector<1x32xf32>
    %80 = vector.broadcast %79 : vector<1x32xf32> to vector<64x32xf32>
    %81 = arith.addf %78, %80 : vector<64x32xf32>
    %cst_94 = arith.constant 0.707106769 : f32
    %82 = vector.broadcast %cst_94 : f32 to vector<64x32xf32>
    %83 = arith.mulf %81, %82 : vector<64x32xf32>
    %84 = math.absf %83 : vector<64x32xf32>
    %cst_95 = arith.constant 0.327591091 : f32
    %85 = vector.broadcast %cst_95 : f32 to vector<64x32xf32>
    %86 = arith.mulf %85, %84 : vector<64x32xf32>
    %cst_96 = arith.constant 1.000000e+00 : f32
    %87 = vector.broadcast %cst_96 : f32 to vector<64x32xf32>
    %88 = arith.addf %87, %86 : vector<64x32xf32>
    %89 = tpu.reciprocal %88 {approx = true} : vector<64x32xf32> -> vector<64x32xf32>
    %cst_97 = arith.constant 1.06140542 : f32
    %90 = vector.broadcast %cst_97 : f32 to vector<64x32xf32>
    %91 = arith.mulf %89, %90 : vector<64x32xf32>
    %cst_98 = arith.constant -1.45315206 : f32
    %92 = vector.broadcast %cst_98 : f32 to vector<64x32xf32>
    %93 = arith.addf %92, %91 : vector<64x32xf32>
    %94 = arith.mulf %89, %93 : vector<64x32xf32>
    %cst_99 = arith.constant 1.42141378 : f32
    %95 = vector.broadcast %cst_99 : f32 to vector<64x32xf32>
    %96 = arith.addf %95, %94 : vector<64x32xf32>
    %97 = arith.mulf %89, %96 : vector<64x32xf32>
    %cst_100 = arith.constant -0.284496725 : f32
    %98 = vector.broadcast %cst_100 : f32 to vector<64x32xf32>
    %99 = arith.addf %98, %97 : vector<64x32xf32>
    %100 = arith.mulf %89, %99 : vector<64x32xf32>
    %cst_101 = arith.constant 0.254829586 : f32
    %101 = vector.broadcast %cst_101 : f32 to vector<64x32xf32>
    %102 = arith.addf %101, %100 : vector<64x32xf32>
    %103 = arith.mulf %89, %102 : vector<64x32xf32>
    %cst_102 = arith.constant 0.000000e+00 : f32
    %104 = vector.broadcast %cst_102 : f32 to vector<64x32xf32>
    %105 = arith.subf %104, %84 : vector<64x32xf32>
    %106 = arith.mulf %105, %84 : vector<64x32xf32>
    %107 = math.exp %106 : vector<64x32xf32>
    %108 = arith.mulf %103, %107 : vector<64x32xf32>
    %cst_103 = arith.constant 1.000000e+00 : f32
    %109 = vector.broadcast %cst_103 : f32 to vector<64x32xf32>
    %110 = arith.subf %109, %108 : vector<64x32xf32>
    %cst_104 = arith.constant 0.000000e+00 : f32
    %111 = vector.broadcast %cst_104 : f32 to vector<64x32xf32>
    %112 = arith.cmpf oge, %83, %111 : vector<64x32xf32>
    %cst_105 = arith.constant 0.000000e+00 : f32
    %113 = vector.broadcast %cst_105 : f32 to vector<64x32xf32>
    %114 = arith.subf %113, %110 : vector<64x32xf32>
    %115 = arith.select %112, %110, %114 : vector<64x32xi1>, vector<64x32xf32>
    %cst_106 = arith.constant 5.000000e-01 : f32
    %116 = vector.broadcast %cst_106 : f32 to vector<64x32xf32>
    %117 = arith.mulf %116, %81 : vector<64x32xf32>
    %cst_107 = arith.constant 1.000000e+00 : f32
    %118 = vector.broadcast %cst_107 : f32 to vector<64x32xf32>
    %119 = arith.addf %118, %115 : vector<64x32xf32>
    %120 = arith.mulf %117, %119 : vector<64x32xf32>
    %c0_108 = arith.constant 0 : index
    %c0_109 = arith.constant 0 : index
    %121 = vector.load %arg8[%c0_108, %c0_109] : memref<64x1xf32, #tpu.memory_space<vmem>>, vector<64x1xf32>
    %122 = vector.broadcast %121 : vector<64x1xf32> to vector<64x32xf32>
    %123 = arith.mulf %120, %122 : vector<64x32xf32>
    %cst_110 = arith.constant 0.000000e+00 : bf16
    %124 = vector.broadcast %cst_110 : bf16 to vector<18x32xbf16>
    %c0_111 = arith.constant 0 : index
    %c0_112 = arith.constant 0 : index
    %125 = vector.load %arg11[%c0_111, %c0_112] : memref<104x32xbf16, #tpu.memory_space<vmem>>, vector<18x32xbf16>
    tpu.vector_store %arg11[%c0_111, %c0_112], %124 {strides = array<i32>} : memref<104x32xbf16, #tpu.memory_space<vmem>>, vector<18x32xbf16>,
    %cst_113 = arith.constant 0.000000e+00 : bf16
    %126 = vector.broadcast %cst_113 : bf16 to vector<22x32xbf16>
    %c82 = arith.constant 82 : index
    %c0_114 = arith.constant 0 : index
    %127 = vector.load %arg11[%c82, %c0_114] : memref<104x32xbf16, #tpu.memory_space<vmem>>, vector<22x32xbf16>
    tpu.vector_store %arg11[%c82, %c0_114], %126 {strides = array<i32>} : memref<104x32xbf16, #tpu.memory_space<vmem>>, vector<22x32xbf16>,
    %128 = arith.truncf %123 : vector<64x32xf32> to vector<64x32xbf16>
    %c18_115 = arith.constant 18 : index
    %c0_116 = arith.constant 0 : index
    %129 = vector.load %arg11[%c18_115, %c0_116] : memref<104x32xbf16, #tpu.memory_space<vmem>>, vector<64x32xbf16>
    tpu.vector_store %arg11[%c18_115, %c0_116], %128 {strides = array<i32>} : memref<104x32xbf16, #tpu.memory_space<vmem>>, vector<64x32xbf16>,
    %c0_117 = arith.constant 0 : index
    %c0_118 = arith.constant 0 : index
    %130 = vector.load %arg11[%c0_117, %c0_118] : memref<104x32xbf16, #tpu.memory_space<vmem>>, vector<64x32xbf16>
    %c0_119 = arith.constant 0 : index
    %c0_120 = arith.constant 0 : index
    %131 = vector.load %arg13[%c0_119, %c0_120] : memref<64x800xbf16, #tpu.memory_space<vmem>>, vector<64x32xbf16>
    tpu.vector_store %arg13[%c0_119, %c0_120], %130 {strides = array<i32>} : memref<64x800xbf16, #tpu.memory_space<vmem>>, vector<64x32xbf16>,
    %c1_121 = arith.constant 1 : index
    %c0_122 = arith.constant 0 : index
    %132 = vector.load %arg11[%c1_121, %c0_122] : memref<104x32xbf16, #tpu.memory_space<vmem>>, vector<64x32xbf16>
    %c0_123 = arith.constant 0 : index
    %c32_124 = arith.constant 32 : index
    %133 = vector.load %arg13[%c0_123, %c32_124] : memref<64x800xbf16, #tpu.memory_space<vmem>>, vector<64x32xbf16>
    tpu.vector_store %arg13[%c0_123, %c32_124], %132 {strides = array<i32>} : memref<64x800xbf16, #tpu.memory_space<vmem>>, vector<64x32xbf16>,
    %c2_125 = arith.constant 2 : index
    %c0_126 = arith.constant 0 : index
    %134 = vector.load %arg11[%c2_125, %c0_126] : memref<104x32xbf16, #tpu.memory_space<vmem>>, vector<64x32xbf16>
    %c0_127 = arith.constant 0 : index
    %c64_128 = arith.constant 64 : index
    %135 = vector.load %arg13[%c0_127, %c64_128] : memref<64x800xbf16, #tpu.memory_space<vmem>>, vector<64x32xbf16>
    tpu.vector_store %arg13[%c0_127, %c64_128], %134 {strides = array<i32>} : memref<64x800xbf16, #tpu.memory_space<vmem>>, vector<64x32xbf16>,
    %c3_129 = arith.constant 3 : index
    %c0_130 = arith.constant 0 : index
    %136 = vector.load %arg11[%c3_129, %c0_130] : memref<104x32xbf16, #tpu.memory_space<vmem>>, vector<64x32xbf16>
    %c0_131 = arith.constant 0 : index
    %c96_132 = arith.constant 96 : index
    %137 = vector.load %arg13[%c0_131, %c96_132] : memref<64x800xbf16, #tpu.memory_space<vmem>>, vector<64x32xbf16>
    tpu.vector_store %arg13[%c0_131, %c96_132], %136 {strides = array<i32>} : memref<64x800xbf16, #tpu.memory_space<vmem>>, vector<64x32xbf16>,
    %c4_133 = arith.constant 4 : index
    %c0_134 = arith.constant 0 : index
    %138 = vector.load %arg11[%c4_133, %c0_134] : memref<104x32xbf16, #tpu.memory_space<vmem>>, vector<64x32xbf16>
    %c0_135 = arith.constant 0 : index
    %c128_136 = arith.constant 128 : index
    %139 = vector.load %arg13[%c0_135, %c128_136] : memref<64x800xbf16, #tpu.memory_space<vmem>>, vector<64x32xbf16>
    tpu.vector_store %arg13[%c0_135, %c128_136], %138 {strides = array<i32>} : memref<64x800xbf16, #tpu.memory_space<vmem>>, vector<64x32xbf16>,
    %c8_137 = arith.constant 8 : index
    %c0_138 = arith.constant 0 : index
    %140 = vector.load %arg11[%c8_137, %c0_138] : memref<104x32xbf16, #tpu.memory_space<vmem>>, vector<64x32xbf16>
    %c0_139 = arith.constant 0 : index
    %c160_140 = arith.constant 160 : index
    %141 = vector.load %arg13[%c0_139, %c160_140] : memref<64x800xbf16, #tpu.memory_space<vmem>>, vector<64x32xbf16>
    tpu.vector_store %arg13[%c0_139, %c160_140], %140 {strides = array<i32>} : memref<64x800xbf16, #tpu.memory_space<vmem>>, vector<64x32xbf16>,
    %c9_141 = arith.constant 9 : index
    %c0_142 = arith.constant 0 : index
    %142 = vector.load %arg11[%c9_141, %c0_142] : memref<104x32xbf16, #tpu.memory_space<vmem>>, vector<64x32xbf16>
    %c0_143 = arith.constant 0 : index
    %c192_144 = arith.constant 192 : index
    %143 = vector.load %arg13[%c0_143, %c192_144] : memref<64x800xbf16, #tpu.memory_space<vmem>>, vector<64x32xbf16>
    tpu.vector_store %arg13[%c0_143, %c192_144], %142 {strides = array<i32>} : memref<64x800xbf16, #tpu.memory_space<vmem>>, vector<64x32xbf16>,
    %c10_145 = arith.constant 10 : index
    %c0_146 = arith.constant 0 : index
    %144 = vector.load %arg11[%c10_145, %c0_146] : memref<104x32xbf16, #tpu.memory_space<vmem>>, vector<64x32xbf16>
    %c0_147 = arith.constant 0 : index
    %c224_148 = arith.constant 224 : index
    %145 = vector.load %arg13[%c0_147, %c224_148] : memref<64x800xbf16, #tpu.memory_space<vmem>>, vector<64x32xbf16>
    tpu.vector_store %arg13[%c0_147, %c224_148], %144 {strides = array<i32>} : memref<64x800xbf16, #tpu.memory_space<vmem>>, vector<64x32xbf16>,
    %c11_149 = arith.constant 11 : index
    %c0_150 = arith.constant 0 : index
    %146 = vector.load %arg11[%c11_149, %c0_150] : memref<104x32xbf16, #tpu.memory_space<vmem>>, vector<64x32xbf16>
    %c0_151 = arith.constant 0 : index
    %c256_152 = arith.constant 256 : index
    %147 = vector.load %arg13[%c0_151, %c256_152] : memref<64x800xbf16, #tpu.memory_space<vmem>>, vector<64x32xbf16>
    tpu.vector_store %arg13[%c0_151, %c256_152], %146 {strides = array<i32>} : memref<64x800xbf16, #tpu.memory_space<vmem>>, vector<64x32xbf16>,
    %c12_153 = arith.constant 12 : index
    %c0_154 = arith.constant 0 : index
    %148 = vector.load %arg11[%c12_153, %c0_154] : memref<104x32xbf16, #tpu.memory_space<vmem>>, vector<64x32xbf16>
    %c0_155 = arith.constant 0 : index
    %c288_156 = arith.constant 288 : index
    %149 = vector.load %arg13[%c0_155, %c288_156] : memref<64x800xbf16, #tpu.memory_space<vmem>>, vector<64x32xbf16>
    tpu.vector_store %arg13[%c0_155, %c288_156], %148 {strides = array<i32>} : memref<64x800xbf16, #tpu.memory_space<vmem>>, vector<64x32xbf16>,
    %c16_157 = arith.constant 16 : index
    %c0_158 = arith.constant 0 : index
    %150 = vector.load %arg11[%c16_157, %c0_158] : memref<104x32xbf16, #tpu.memory_space<vmem>>, vector<64x32xbf16>
    %c0_159 = arith.constant 0 : index
    %c320_160 = arith.constant 320 : index
    %151 = vector.load %arg13[%c0_159, %c320_160] : memref<64x800xbf16, #tpu.memory_space<vmem>>, vector<64x32xbf16>
    tpu.vector_store %arg13[%c0_159, %c320_160], %150 {strides = array<i32>} : memref<64x800xbf16, #tpu.memory_space<vmem>>, vector<64x32xbf16>,
    %c17_161 = arith.constant 17 : index
    %c0_162 = arith.constant 0 : index
    %152 = vector.load %arg11[%c17_161, %c0_162] : memref<104x32xbf16, #tpu.memory_space<vmem>>, vector<64x32xbf16>
    %c0_163 = arith.constant 0 : index
    %c352_164 = arith.constant 352 : index
    %153 = vector.load %arg13[%c0_163, %c352_164] : memref<64x800xbf16, #tpu.memory_space<vmem>>, vector<64x32xbf16>
    tpu.vector_store %arg13[%c0_163, %c352_164], %152 {strides = array<i32>} : memref<64x800xbf16, #tpu.memory_space<vmem>>, vector<64x32xbf16>,
    %c18_165 = arith.constant 18 : index
    %c0_166 = arith.constant 0 : index
    %154 = vector.load %arg11[%c18_165, %c0_166] : memref<104x32xbf16, #tpu.memory_space<vmem>>, vector<64x32xbf16>
    %c0_167 = arith.constant 0 : index
    %c384_168 = arith.constant 384 : index
    %155 = vector.load %arg13[%c0_167, %c384_168] : memref<64x800xbf16, #tpu.memory_space<vmem>>, vector<64x32xbf16>
    tpu.vector_store %arg13[%c0_167, %c384_168], %154 {strides = array<i32>} : memref<64x800xbf16, #tpu.memory_space<vmem>>, vector<64x32xbf16>,
    %c19_169 = arith.constant 19 : index
    %c0_170 = arith.constant 0 : index
    %156 = vector.load %arg11[%c19_169, %c0_170] : memref<104x32xbf16, #tpu.memory_space<vmem>>, vector<64x32xbf16>
    %c0_171 = arith.constant 0 : index
    %c416 = arith.constant 416 : index
    %157 = vector.load %arg13[%c0_171, %c416] : memref<64x800xbf16, #tpu.memory_space<vmem>>, vector<64x32xbf16>
    tpu.vector_store %arg13[%c0_171, %c416], %156 {strides = array<i32>} : memref<64x800xbf16, #tpu.memory_space<vmem>>, vector<64x32xbf16>,
    %c20_172 = arith.constant 20 : index
    %c0_173 = arith.constant 0 : index
    %158 = vector.load %arg11[%c20_172, %c0_173] : memref<104x32xbf16, #tpu.memory_space<vmem>>, vector<64x32xbf16>
    %c0_174 = arith.constant 0 : index
    %c448 = arith.constant 448 : index
    %159 = vector.load %arg13[%c0_174, %c448] : memref<64x800xbf16, #tpu.memory_space<vmem>>, vector<64x32xbf16>
    tpu.vector_store %arg13[%c0_174, %c448], %158 {strides = array<i32>} : memref<64x800xbf16, #tpu.memory_space<vmem>>, vector<64x32xbf16>,
    %c24_175 = arith.constant 24 : index
    %c0_176 = arith.constant 0 : index
    %160 = vector.load %arg11[%c24_175, %c0_176] : memref<104x32xbf16, #tpu.memory_space<vmem>>, vector<64x32xbf16>
    %c0_177 = arith.constant 0 : index
    %c480 = arith.constant 480 : index
    %161 = vector.load %arg13[%c0_177, %c480] : memref<64x800xbf16, #tpu.memory_space<vmem>>, vector<64x32xbf16>
    tpu.vector_store %arg13[%c0_177, %c480], %160 {strides = array<i32>} : memref<64x800xbf16, #tpu.memory_space<vmem>>, vector<64x32xbf16>,
    %c25_178 = arith.constant 25 : index
    %c0_179 = arith.constant 0 : index
    %162 = vector.load %arg11[%c25_178, %c0_179] : memref<104x32xbf16, #tpu.memory_space<vmem>>, vector<64x32xbf16>
    %c0_180 = arith.constant 0 : index
    %c512 = arith.constant 512 : index
    %163 = vector.load %arg13[%c0_180, %c512] : memref<64x800xbf16, #tpu.memory_space<vmem>>, vector<64x32xbf16>
    tpu.vector_store %arg13[%c0_180, %c512], %162 {strides = array<i32>} : memref<64x800xbf16, #tpu.memory_space<vmem>>, vector<64x32xbf16>,
    %c26_181 = arith.constant 26 : index
    %c0_182 = arith.constant 0 : index
    %164 = vector.load %arg11[%c26_181, %c0_182] : memref<104x32xbf16, #tpu.memory_space<vmem>>, vector<64x32xbf16>
    %c0_183 = arith.constant 0 : index
    %c544 = arith.constant 544 : index
    %165 = vector.load %arg13[%c0_183, %c544] : memref<64x800xbf16, #tpu.memory_space<vmem>>, vector<64x32xbf16>
    tpu.vector_store %arg13[%c0_183, %c544], %164 {strides = array<i32>} : memref<64x800xbf16, #tpu.memory_space<vmem>>, vector<64x32xbf16>,
    %c27_184 = arith.constant 27 : index
    %c0_185 = arith.constant 0 : index
    %166 = vector.load %arg11[%c27_184, %c0_185] : memref<104x32xbf16, #tpu.memory_space<vmem>>, vector<64x32xbf16>
    %c0_186 = arith.constant 0 : index
    %c576 = arith.constant 576 : index
    %167 = vector.load %arg13[%c0_186, %c576] : memref<64x800xbf16, #tpu.memory_space<vmem>>, vector<64x32xbf16>
    tpu.vector_store %arg13[%c0_186, %c576], %166 {strides = array<i32>} : memref<64x800xbf16, #tpu.memory_space<vmem>>, vector<64x32xbf16>,
    %c28_187 = arith.constant 28 : index
    %c0_188 = arith.constant 0 : index
    %168 = vector.load %arg11[%c28_187, %c0_188] : memref<104x32xbf16, #tpu.memory_space<vmem>>, vector<64x32xbf16>
    %c0_189 = arith.constant 0 : index
    %c608 = arith.constant 608 : index
    %169 = vector.load %arg13[%c0_189, %c608] : memref<64x800xbf16, #tpu.memory_space<vmem>>, vector<64x32xbf16>
    tpu.vector_store %arg13[%c0_189, %c608], %168 {strides = array<i32>} : memref<64x800xbf16, #tpu.memory_space<vmem>>, vector<64x32xbf16>,
    %c32_190 = arith.constant 32 : index
    %c0_191 = arith.constant 0 : index
    %170 = vector.load %arg11[%c32_190, %c0_191] : memref<104x32xbf16, #tpu.memory_space<vmem>>, vector<64x32xbf16>
    %c0_192 = arith.constant 0 : index
    %c640 = arith.constant 640 : index
    %171 = vector.load %arg13[%c0_192, %c640] : memref<64x800xbf16, #tpu.memory_space<vmem>>, vector<64x32xbf16>
    tpu.vector_store %arg13[%c0_192, %c640], %170 {strides = array<i32>} : memref<64x800xbf16, #tpu.memory_space<vmem>>, vector<64x32xbf16>,
    %c33_193 = arith.constant 33 : index
    %c0_194 = arith.constant 0 : index
    %172 = vector.load %arg11[%c33_193, %c0_194] : memref<104x32xbf16, #tpu.memory_space<vmem>>, vector<64x32xbf16>
    %c0_195 = arith.constant 0 : index
    %c672 = arith.constant 672 : index
    %173 = vector.load %arg13[%c0_195, %c672] : memref<64x800xbf16, #tpu.memory_space<vmem>>, vector<64x32xbf16>
    tpu.vector_store %arg13[%c0_195, %c672], %172 {strides = array<i32>} : memref<64x800xbf16, #tpu.memory_space<vmem>>, vector<64x32xbf16>,
    %c34_196 = arith.constant 34 : index
    %c0_197 = arith.constant 0 : index
    %174 = vector.load %arg11[%c34_196, %c0_197] : memref<104x32xbf16, #tpu.memory_space<vmem>>, vector<64x32xbf16>
    %c0_198 = arith.constant 0 : index
    %c704 = arith.constant 704 : index
    %175 = vector.load %arg13[%c0_198, %c704] : memref<64x800xbf16, #tpu.memory_space<vmem>>, vector<64x32xbf16>
    tpu.vector_store %arg13[%c0_198, %c704], %174 {strides = array<i32>} : memref<64x800xbf16, #tpu.memory_space<vmem>>, vector<64x32xbf16>,
    %c35_199 = arith.constant 35 : index
    %c0_200 = arith.constant 0 : index
    %176 = vector.load %arg11[%c35_199, %c0_200] : memref<104x32xbf16, #tpu.memory_space<vmem>>, vector<64x32xbf16>
    %c0_201 = arith.constant 0 : index
    %c736 = arith.constant 736 : index
    %177 = vector.load %arg13[%c0_201, %c736] : memref<64x800xbf16, #tpu.memory_space<vmem>>, vector<64x32xbf16>
    tpu.vector_store %arg13[%c0_201, %c736], %176 {strides = array<i32>} : memref<64x800xbf16, #tpu.memory_space<vmem>>, vector<64x32xbf16>,
    %c36_202 = arith.constant 36 : index
    %c0_203 = arith.constant 0 : index
    %178 = vector.load %arg11[%c36_202, %c0_203] : memref<104x32xbf16, #tpu.memory_space<vmem>>, vector<64x32xbf16>
    %c0_204 = arith.constant 0 : index
    %c768 = arith.constant 768 : index
    %179 = vector.load %arg13[%c0_204, %c768] : memref<64x800xbf16, #tpu.memory_space<vmem>>, vector<64x32xbf16>
    tpu.vector_store %arg13[%c0_204, %c768], %178 {strides = array<i32>} : memref<64x800xbf16, #tpu.memory_space<vmem>>, vector<64x32xbf16>,
    %c0_205 = arith.constant 0 : index
    %c0_206 = arith.constant 0 : index
    %180 = vector.load %arg13[%c0_205, %c0_206] : memref<64x800xbf16, #tpu.memory_space<vmem>>, vector<64x800xbf16>
    %c0_207 = arith.constant 0 : index
    %c0_208 = arith.constant 0 : index
    %181 = vector.load %arg5[%c0_207, %c0_208] : memref<800x16xbf16, #tpu.memory_space<vmem>>, vector<800x16xbf16>
    %cst_209 = arith.constant dense<0.000000e+00> : vector<64x16xf32>
    %182 = tpu.matmul %180, %181, %cst_209 {dimension_numbers = #tpu.dot_dimension_numbers<[1], [0], [0], [1], [0, 0, 1, 1], [], []>} : vector<64x800xbf16>, vector<800x16xbf16>, vector<64x16xf32> -> vector<64x16xf32>
    %c0_210 = arith.constant 0 : index
    %c0_211 = arith.constant 0 : index
    %183 = vector.load %arg6[%c0_210, %c0_211] : memref<1x16xf32, #tpu.memory_space<vmem>>, vector<1x16xf32>
    %184 = vector.broadcast %183 : vector<1x16xf32> to vector<64x16xf32>
    %185 = arith.addf %182, %184 : vector<64x16xf32>
    %186 = vector.extract_strided_slice %185 {offsets = [0, 0], sizes = [3, 16], strides = [1, 1]} : vector<64x16xf32> to vector<3x16xf32>
    %187 = vector.extract_strided_slice %185 {offsets = [8, 0], sizes = [3, 16], strides = [1, 1]} : vector<64x16xf32> to vector<3x16xf32>
    %188 = vector.extract_strided_slice %185 {offsets = [16, 0], sizes = [3, 16], strides = [1, 1]} : vector<64x16xf32> to vector<3x16xf32>
    %189 = vector.extract_strided_slice %185 {offsets = [24, 0], sizes = [3, 16], strides = [1, 1]} : vector<64x16xf32> to vector<3x16xf32>
    %190 = vector.extract_strided_slice %185 {offsets = [32, 0], sizes = [3, 16], strides = [1, 1]} : vector<64x16xf32> to vector<3x16xf32>
    %191 = vector.extract_strided_slice %185 {offsets = [40, 0], sizes = [3, 16], strides = [1, 1]} : vector<64x16xf32> to vector<3x16xf32>
    %192 = vector.extract_strided_slice %185 {offsets = [48, 0], sizes = [3, 16], strides = [1, 1]} : vector<64x16xf32> to vector<3x16xf32>
    %193 = vector.extract_strided_slice %185 {offsets = [56, 0], sizes = [3, 16], strides = [1, 1]} : vector<64x16xf32> to vector<3x16xf32>
    %194 = tpu.concatenate %186, %187, %188, %189, %190, %191, %192, %193 in 0 : vector<3x16xf32>, vector<3x16xf32>, vector<3x16xf32>, vector<3x16xf32>, vector<3x16xf32>, vector<3x16xf32>, vector<3x16xf32>, vector<3x16xf32> -> vector<24x16xf32>
    %c0_212 = arith.constant 0 : index
    %c0_213 = arith.constant 0 : index
    %c0_214 = arith.constant 0 : index
    %195 = vector.load %arg2[%c0_212, %c0_213, %c0_214] : memref<1x24x16xf32, #tpu.memory_space<vmem>>, vector<1x24x16xf32>
    %196 = vector.shape_cast %195 : vector<1x24x16xf32> to vector<24x16xf32>
    %c0_215 = arith.constant 0 : index
    %c0_216 = arith.constant 0 : index
    %c0_217 = arith.constant 0 : index
    %197 = vector.load %arg7[%c0_215, %c0_216, %c0_217] : memref<1x1x1xf32, #tpu.memory_space<vmem>>, vector<1x1x1xf32>
    %198 = vector.shape_cast %197 : vector<1x1x1xf32> to vector<1x1xf32>
    %199 = vector.broadcast %198 : vector<1x1xf32> to vector<24x16xf32>
    %200 = arith.mulf %199, %194 : vector<24x16xf32>
    %201 = arith.addf %196, %200 : vector<24x16xf32>
    %c0_218 = arith.constant 0 : index
    %c0_219 = arith.constant 0 : index
    %c0_220 = arith.constant 0 : index
    %202 = vector.load %arg9[%c0_218, %c0_219, %c0_220] : memref<1x24x16xf32, #tpu.memory_space<vmem>>, vector<1x24x16xf32>
    %203 = vector.shape_cast %202 : vector<1x24x16xf32> to vector<24x16xf32>
    %204 = vector.shape_cast %201 : vector<24x16xf32> to vector<1x24x16xf32>
    tpu.vector_store %arg9[%c0_218, %c0_219, %c0_220], %204 {strides = array<i32>} : memref<1x24x16xf32, #tpu.memory_space<vmem>>, vector<1x24x16xf32>,
    return
  }
  func.func @transform_0(%arg0: i32) -> (i32, i32, i32) {
    %c0_i32 = arith.constant 0 : i32
    %c0_i32_0 = arith.constant 0 : i32
    %c0_i32_1 = arith.constant 0 : i32
    return %arg0, %c0_i32, %c0_i32_0 : i32, i32, i32
  }
  func.func @transform_1(%arg0: i32) -> (i32, i32, i32) {
    %c0_i32 = arith.constant 0 : i32
    %c0_i32_0 = arith.constant 0 : i32
    %c0_i32_1 = arith.constant 0 : i32
    return %arg0, %c0_i32, %c0_i32_0 : i32, i32, i32
  }
  func.func @transform_2(%arg0: i32) -> (i32, i32) {
    %c0_i32 = arith.constant 0 : i32
    %c0_i32_0 = arith.constant 0 : i32
    %c0_i32_1 = arith.constant 0 : i32
    return %c0_i32, %c0_i32_0 : i32, i32
  }
  func.func @transform_3(%arg0: i32) -> (i32, i32) {
    %c0_i32 = arith.constant 0 : i32
    %c0_i32_0 = arith.constant 0 : i32
    %c0_i32_1 = arith.constant 0 : i32
    return %c0_i32, %c0_i32_0 : i32, i32
  }
  func.func @transform_4(%arg0: i32) -> (i32, i32) {
    %c0_i32 = arith.constant 0 : i32
    %c0_i32_0 = arith.constant 0 : i32
    %c0_i32_1 = arith.constant 0 : i32
    return %c0_i32, %c0_i32_0 : i32, i32
  }
  func.func @transform_5(%arg0: i32) -> (i32, i32) {
    %c0_i32 = arith.constant 0 : i32
    %c0_i32_0 = arith.constant 0 : i32
    %c0_i32_1 = arith.constant 0 : i32
    return %c0_i32, %c0_i32_0 : i32, i32
  }
  func.func @transform_6(%arg0: i32) -> (i32, i32, i32) {
    %c0_i32 = arith.constant 0 : i32
    %c0_i32_0 = arith.constant 0 : i32
    %c0_i32_1 = arith.constant 0 : i32
    return %arg0, %c0_i32, %c0_i32_0 : i32, i32, i32
  }
  func.func @transform_7(%arg0: i32) -> (i32, i32) {
    %c0_i32 = arith.constant 0 : i32
    %c0_i32_0 = arith.constant 0 : i32
    %c0_i32_1 = arith.constant 0 : i32
    return %c0_i32, %c0_i32_0 : i32, i32
  }
  func.func @transform_8(%arg0: i32) -> (i32, i32, i32) {
    %c0_i32 = arith.constant 0 : i32
    %c0_i32_0 = arith.constant 0 : i32
    %c0_i32_1 = arith.constant 0 : i32
    return %arg0, %c0_i32, %c0_i32_0 : i32, i32, i32
  }
}

</mosaic_0001>

<llo_original>
// kernel: _times_block_core.2
$region0: #{_times_block_core.2}
  #allocation0 [shape = 'u32[]', space=smem, size = 0x4, offset = 0x4, fixed_abs, tag = 'smem constant byte address 0x4 - core index']
  #allocation1 [shape = 'u32[144,128]{1,0:T(1,128)}', space=vmem, size = 0x12000, scoped, tag = 'internal scratch']
  #allocation2 [shape = 'bf16[112,16]{1,0:T(8,128)(2,1)}', space=vmem, size = 0x7000, scoped, tag = 'scratch operand']
  #allocation3 [shape = 'bf16[112,32]{1,0:T(8,128)(2,1)}', space=vmem, size = 0x7000, scoped, tag = 'scratch operand']
  #allocation4 [shape = 'bf16[32,400]{1,0:T(8,128)(2,1)}', space=vmem, size = 0x8000, scoped, tag = 'scratch operand']
  #allocation5 [shape = 'bf16[32,800]{1,0:T(8,128)(2,1)}', space=vmem, size = 0xe000, scoped, tag = 'scratch operand']
  %s0 = inlined_call_operand.vmem [shape: bf16[2,24,16], index: 0, kind: input, shape index: {}]
  %s1 = inlined_call_operand.vmem [shape: f32[2,24,16], index: 1, kind: input, shape index: {}, may-alias: {1,8}]
  %s2 = inlined_call_operand.vmem [shape: bf16[400,32], index: 2, kind: input, shape index: {}]
  %s3 = inlined_call_operand.vmem [shape: f32[1,32], index: 3, kind: input, shape index: {}]
  %s4 = inlined_call_operand.vmem [shape: bf16[800,16], index: 4, kind: input, shape index: {}]
  %s5 = inlined_call_operand.vmem [shape: f32[1,16], index: 5, kind: input, shape index: {}]
  %s6 = inlined_call_operand.vmem [shape: f32[2,1,1], index: 6, kind: input, shape index: {}]
  %s7 = inlined_call_operand.vmem [shape: f32[32,1], index: 7, kind: input, shape index: {}]
  %s8 = inlined_call_operand.vmem [shape: f32[2,24,16], index: 8, kind: output, shape index: {}, may-alias: {1,8}]
  %s9 = sld [smem:[#allocation0]]
  $region65: #{_times_block_core.2} parent=0
    _
  %s11 = ssub.s32 1, %s9
  %s12 = scalar_select 0, %s11, %s9
  loop: start=0, step=1, limit=4
  $region2: #{_times_block_core.2} parent=0 // loop_pre_header
    _
  $region3: #{_times_block_core.2} parent=0 // loop_header
    %s14 = sphi 0, %s18
    %p15 = scmp.ge.s32.totalorder %s14, 4
    %s24 = sphi 0, %s26
    %s27 = sphi 0, %s24
    %s28 = sphi 0, %s27
    %s44 = sphi 0, %s28
    %s50 = sphi 0, %s52
    %s53 = sphi 0, %s50
    %s54 = sphi 0, %s53
    %s70 = sphi 0, %s54
    %s74 = sphi 0, %s74
    %s76 = sphi 0, %s74
    %s77 = sphi 0, %s76
    %s91 = sphi 0, %s77
    %s95 = sphi 0, %s95
    %s97 = sphi 0, %s95
    %s98 = sphi 0, %s97
    %s112 = sphi 0, %s98
    %s116 = sphi 0, %s116
    %s118 = sphi 0, %s116
    %s119 = sphi 0, %s118
    %s133 = sphi 0, %s119
    %s137 = sphi 0, %s137
    %s139 = sphi 0, %s137
    %s140 = sphi 0, %s139
    %s154 = sphi 0, %s140
    %s160 = sphi 0, %s162
    %s163 = sphi 0, %s160
    %s164 = sphi 0, %s163
    %s180 = sphi 0, %s164
    %s184 = sphi 0, %s184
    %s186 = sphi 0, %s184
    %s187 = sphi 0, %s186
    %s201 = sphi 0, %s187
    %s207 = sphi 0, %s209
    %s210 = sphi 0, %s207
    %s211 = sphi 0, %s210
    %s227 = sphi 0, %s211
  $region4: #{_times_block_core.2} parent=0 // loop_header_branch
    %17 = sbr.rel (%p15) target = $region8
  $region5: #{_times_block_core.2} parent=0 // loop_body
    %s19 = ssub.s32 %s14, 1
    %s20 = ssub.s32 %s14, 2
    %s21 = sadd.s32 %s14, 1
    %s22 = ssub.s32 %s14, %s21
    %p23 = scmp.eq.s32.totalorder %s22, 0
    %s25 = sadd.s32 %s24, 1
    %s26 = scalar_select %p23, %s24, %s25
    %p29 = pneg %p23
    %p30 = scmp.eq.s32.totalorder %s14, 1
    %p31 = por %p29, %p30
    %p32 = scmp.ne.s32.totalorder %s24, %s27
    %p33 = scmp.eq.s32.totalorder %s14, 0
    %p34 = por %p32, %p33
    %p35 = scmp.ne.s32.totalorder %s24, %s27
    %p36 = scmp.eq.s32.totalorder %s19, 1
    %p37 = por %p35, %p36
    %p38 = scmp.ne.s32.totalorder %s27, %s28
    %p39 = scmp.eq.s32.totalorder %s19, 0
    %p40 = por %p38, %p39
    %p41 = scmp.ne.s32.totalorder %s27, %s28
    %p42 = scmp.eq.s32.totalorder %s20, 1
    %p43 = por %p41, %p42
    %p45 = scmp.ne.s32.totalorder %s28, %s44
    %p46 = scmp.eq.s32.totalorder %s20, 0
    %p47 = por %p45, %p46
    %s48 = ssub.s32 %s14, %s21
    %p49 = scmp.eq.s32.totalorder %s48, 0
    %s51 = sadd.s32 %s50, 1
    %s52 = scalar_select %p49, %s50, %s51
    %p55 = pneg %p49
    %p56 = scmp.eq.s32.totalorder %s14, 1
    %p57 = por %p55, %p56
    %p58 = scmp.ne.s32.totalorder %s50, %s53
    %p59 = scmp.eq.s32.totalorder %s14, 0
    %p60 = por %p58, %p59
    %p61 = scmp.ne.s32.totalorder %s50, %s53
    %p62 = scmp.eq.s32.totalorder %s19, 1
    %p63 = por %p61, %p62
    %p64 = scmp.ne.s32.totalorder %s53, %s54
    %p65 = scmp.eq.s32.totalorder %s19, 0
    %p66 = por %p64, %p65
    %p67 = scmp.ne.s32.totalorder %s53, %s54
    %p68 = scmp.eq.s32.totalorder %s20, 1
    %p69 = por %p67, %p68
    %p71 = scmp.ne.s32.totalorder %s54, %s70
    %p72 = scmp.eq.s32.totalorder %s20, 0
    %p73 = por %p71, %p72
    %s75 = sadd.s32 %s74, 1
    %p78 = scmp.eq.s32.totalorder %s14, 1
    %p79 = scmp.ne.s32.totalorder %s74, %s76
    %p80 = scmp.eq.s32.totalorder %s14, 0
    %p81 = por %p79, %p80
    %p82 = scmp.ne.s32.totalorder %s74, %s76
    %p83 = scmp.eq.s32.totalorder %s19, 1
    %p84 = por %p82, %p83
    %p85 = scmp.ne.s32.totalorder %s76, %s77
    %p86 = scmp.eq.s32.totalorder %s19, 0
    %p87 = por %p85, %p86
    %p88 = scmp.ne.s32.totalorder %s76, %s77
    %p89 = scmp.eq.s32.totalorder %s20, 1
    %p90 = por %p88, %p89
    %p92 = scmp.ne.s32.totalorder %s77, %s91
    %p93 = scmp.eq.s32.totalorder %s20, 0
    %p94 = por %p92, %p93
    %s96 = sadd.s32 %s95, 1
    %p99 = scmp.eq.s32.totalorder %s14, 1
    %p100 = scmp.ne.s32.totalorder %s95, %s97
    %p101 = scmp.eq.s32.totalorder %s14, 0
    %p102 = por %p100, %p101
    %p103 = scmp.ne.s32.totalorder %s95, %s97
    %p104 = scmp.eq.s32.totalorder %s19, 1
    %p105 = por %p103, %p104
    %p106 = scmp.ne.s32.totalorder %s97, %s98
    %p107 = scmp.eq.s32.totalorder %s19, 0
    %p108 = por %p106, %p107
    %p109 = scmp.ne.s32.totalorder %s97, %s98
    %p110 = scmp.eq.s32.totalorder %s20, 1
    %p111 = por %p109, %p110
    %p113 = scmp.ne.s32.totalorder %s98, %s112
    %p114 = scmp.eq.s32.totalorder %s20, 0
    %p115 = por %p113, %p114
    %s117 = sadd.s32 %s116, 1
    %p120 = scmp.eq.s32.totalorder %s14, 1
    %p121 = scmp.ne.s32.totalorder %s116, %s118
    %p122 = scmp.eq.s32.totalorder %s14, 0
    %p123 = por %p121, %p122
    %p124 = scmp.ne.s32.totalorder %s116, %s118
    %p125 = scmp.eq.s32.totalorder %s19, 1
    %p126 = por %p124, %p125
    %p127 = scmp.ne.s32.totalorder %s118, %s119
    %p128 = scmp.eq.s32.totalorder %s19, 0
    %p129 = por %p127, %p128
    %p130 = scmp.ne.s32.totalorder %s118, %s119
    %p131 = scmp.eq.s32.totalorder %s20, 1
    %p132 = por %p130, %p131
    %p134 = scmp.ne.s32.totalorder %s119, %s133
    %p135 = scmp.eq.s32.totalorder %s20, 0
    %p136 = por %p134, %p135
    %s138 = sadd.s32 %s137, 1
    %p141 = scmp.eq.s32.totalorder %s14, 1
    %p142 = scmp.ne.s32.totalorder %s137, %s139
    %p143 = scmp.eq.s32.totalorder %s14, 0
    %p144 = por %p142, %p143
    %p145 = scmp.ne.s32.totalorder %s137, %s139
    %p146 = scmp.eq.s32.totalorder %s19, 1
    %p147 = por %p145, %p146
    %p148 = scmp.ne.s32.totalorder %s139, %s140
    %p149 = scmp.eq.s32.totalorder %s19, 0
    %p150 = por %p148, %p149
    %p151 = scmp.ne.s32.totalorder %s139, %s140
    %p152 = scmp.eq.s32.totalorder %s20, 1
    %p153 = por %p151, %p152
    %p155 = scmp.ne.s32.totalorder %s140, %s154
    %p156 = scmp.eq.s32.totalorder %s20, 0
    %p157 = por %p155, %p156
    %s158 = ssub.s32 %s14, %s21
    %p159 = scmp.eq.s32.totalorder %s158, 0
    %s161 = sadd.s32 %s160, 1
    %s162 = scalar_select %p159, %s160, %s161
    %p165 = pneg %p159
    %p166 = scmp.eq.s32.totalorder %s14, 1
    %p167 = por %p165, %p166
    %p168 = scmp.ne.s32.totalorder %s160, %s163
    %p169 = scmp.eq.s32.totalorder %s14, 0
    %p170 = por %p168, %p169
    %p171 = scmp.ne.s32.totalorder %s160, %s163
    %p172 = scmp.eq.s32.totalorder %s19, 1
    %p173 = por %p171, %p172
    %p174 = scmp.ne.s32.totalorder %s163, %s164
    %p175 = scmp.eq.s32.totalorder %s19, 0
    %p176 = por %p174, %p175
    %p177 = scmp.ne.s32.totalorder %s163, %s164
    %p178 = scmp.eq.s32.totalorder %s20, 1
    %p179 = por %p177, %p178
    %p181 = scmp.ne.s32.totalorder %s164, %s180
    %p182 = scmp.eq.s32.totalorder %s20, 0
    %p183 = por %p181, %p182
    %s185 = sadd.s32 %s184, 1
    %p188 = scmp.eq.s32.totalorder %s14, 1
    %p189 = scmp.ne.s32.totalorder %s184, %s186
    %p190 = scmp.eq.s32.totalorder %s14, 0
    %p191 = por %p189, %p190
    %p192 = scmp.ne.s32.totalorder %s184, %s186
    %p193 = scmp.eq.s32.totalorder %s19, 1
    %p194 = por %p192, %p193
    %p195 = scmp.ne.s32.totalorder %s186, %s187
    %p196 = scmp.eq.s32.totalorder %s19, 0
    %p197 = por %p195, %p196
    %p198 = scmp.ne.s32.totalorder %s186, %s187
    %p199 = scmp.eq.s32.totalorder %s20, 1
    %p200 = por %p198, %p199
    %p202 = scmp.ne.s32.totalorder %s187, %s201
    %p203 = scmp.eq.s32.totalorder %s20, 0
    %p204 = por %p202, %p203
    %s205 = ssub.s32 %s14, %s21
    %p206 = scmp.eq.s32.totalorder %s205, 0
    %s208 = sadd.s32 %s207, 1
    %s209 = scalar_select %p206, %s207, %s208
    %p212 = pneg %p206
    %p213 = scmp.eq.s32.totalorder %s14, 1
    %p214 = por %p212, %p213
    %p215 = scmp.ne.s32.totalorder %s207, %s210
    %p216 = scmp.eq.s32.totalorder %s14, 0
    %p217 = por %p215, %p216
    %p218 = scmp.ne.s32.totalorder %s207, %s210
    %p219 = scmp.eq.s32.totalorder %s19, 1
    %p220 = por %p218, %p219
    %p221 = scmp.ne.s32.totalorder %s210, %s211
    %p222 = scmp.eq.s32.totalorder %s19, 0
    %p223 = por %p221, %p222
    %p224 = scmp.ne.s32.totalorder %s210, %s211
    %p225 = scmp.eq.s32.totalorder %s20, 1
    %p226 = por %p224, %p225
    %p228 = scmp.ne.s32.totalorder %s211, %s227
    %p229 = scmp.eq.s32.totalorder %s20, 0
    %p230 = por %p228, %p229
    %p231 = scmp.le.s32.totalorder 1, %s14
    %p232 = scmp.lt.s32.totalorder %s14, 3
    %p233 = pnand %p231, %p232
    %p234 = pneg %p233
    // Predicated region
    $region9: #{_times_block_core.2} parent=5 // pred_check
      _
    $region10: #{_times_block_core.2} parent=5 // pred_check_branch
      %236 = sbr.rel (%p233) target = $region12
    $region11: #{_times_block_core.2} parent=5 // pred_region
      %s237 = ssub.s32 %s14, 1
      // Predicated region
      $region13: #{_times_block_core.2} parent=11 // pred_check
        %p238 = pneg %p87
      $region14: #{_times_block_core.2} parent=11 // pred_check_branch
        %240 = sbr.rel (%p238) target = $region16
      $region15: #{_times_block_core.2} parent=11 // pred_region
        _
      $region16: #{_times_block_core.2} parent=11 // pred_fallthru
        _
      // Predicated region
      $region17: #{_times_block_core.2} parent=11 // pred_check
        %p241 = pneg %p108
      $region18: #{_times_block_core.2} parent=11 // pred_check_branch
        %243 = sbr.rel (%p241) target = $region20
      $region19: #{_times_block_core.2} parent=11 // pred_region
        _
      $region20: #{_times_block_core.2} parent=11 // pred_fallthru
        _
      // Predicated region
      $region21: #{_times_block_core.2} parent=11 // pred_check
        %p244 = pneg %p129
      $region22: #{_times_block_core.2} parent=11 // pred_check_branch
        %246 = sbr.rel (%p244) target = $region24
      $region23: #{_times_block_core.2} parent=11 // pred_region
        _
      $region24: #{_times_block_core.2} parent=11 // pred_fallthru
        _
      // Predicated region
      $region25: #{_times_block_core.2} parent=11 // pred_check
        %p247 = pneg %p150
      $region26: #{_times_block_core.2} parent=11 // pred_check_branch
        %249 = sbr.rel (%p247) target = $region28
      $region27: #{_times_block_core.2} parent=11 // pred_region
        _
      $region28: #{_times_block_core.2} parent=11 // pred_fallthru
        _
      // Predicated region
      $region29: #{_times_block_core.2} parent=11 // pred_check
        %p250 = pneg %p197
      $region30: #{_times_block_core.2} parent=11 // pred_check_branch
        %252 = sbr.rel (%p250) target = $region32
      $region31: #{_times_block_core.2} parent=11 // pred_region
        _
      $region32: #{_times_block_core.2} parent=11 // pred_fallthru
        _
    $region12: #{_times_block_core.2} parent=5 // pred_fallthru
      _
    %p253 = scmp.lt.s32.totalorder %s14, 2
    // Predicated region
    $region33: #{_times_block_core.2} parent=5 // pred_check
      %p254 = pneg %p253
    $region34: #{_times_block_core.2} parent=5 // pred_check_branch
      %256 = sbr.rel (%p254) target = $region36
    $region35: #{_times_block_core.2} parent=5 // pred_region
      // Predicated region
      $region37: #{_times_block_core.2} parent=35 // pred_check
        %p257 = pneg %p34
      $region38: #{_times_block_core.2} parent=35 // pred_check_branch
        %259 = sbr.rel (%p257) target = $region40
      $region39: #{_times_block_core.2} parent=35 // pred_region
        %p260 = scmp.lt.s32.totalorder %s14, 1
        %s261 = scalar_select %p260, %s14, 1
        %s262 = smul.addr %s261, 3
        %s263 = smul.addr %s262, 4
        %s264 = scalar_lea.vmem %s0, %s263
      $region40: #{_times_block_core.2} parent=35 // pred_fallthru
        _
      // Predicated region
      $region41: #{_times_block_core.2} parent=35 // pred_check
        %p265 = pneg %p60
      $region42: #{_times_block_core.2} parent=35 // pred_check_branch
        %267 = sbr.rel (%p265) target = $region44
      $region43: #{_times_block_core.2} parent=35 // pred_region
        %p268 = scmp.lt.s32.totalorder %s14, 1
        %s269 = scalar_select %p268, %s14, 1
        %s270 = smul.addr %s269, 3
        %s271 = smul.addr %s270, 8
        %s272 = scalar_lea.vmem %s1, %s271
      $region44: #{_times_block_core.2} parent=35 // pred_fallthru
        _
      // Predicated region
      $region45: #{_times_block_core.2} parent=35 // pred_check
        %p273 = pneg %p170
      $region46: #{_times_block_core.2} parent=35 // pred_check_branch
        %275 = sbr.rel (%p273) target = $region48
      $region47: #{_times_block_core.2} parent=35 // pred_region
        %p276 = scmp.lt.s32.totalorder %s14, 1
        %s277 = scalar_select %p276, %s14, 1
        %s278 = scalar_lea.vmem %s6, %s277
      $region48: #{_times_block_core.2} parent=35 // pred_fallthru
        _
    $region36: #{_times_block_core.2} parent=5 // pred_fallthru
      _
    %p279 = scmp.le.s32.totalorder 1, %s14
    %p280 = scmp.lt.s32.totalorder %s14, 3
    %p281 = pnand %p279, %p280
    %p282 = pneg %p281
    // Predicated region
    $region49: #{_times_block_core.2} parent=5 // pred_check
      _
    $region50: #{_times_block_core.2} parent=5 // pred_check_branch
      %284 = sbr.rel (%p281) target = $region52
    $region51: #{_times_block_core.2} parent=5 // pred_region
      %s285 = ssub.s32 %s14, 1
      %p286 = scmp.lt.s32.totalorder %s19, 1
      %s287 = scalar_select %p286, %s19, 1
      %s288 = smul.addr %s287, 3
      %s289 = smul.addr %s288, 4
      %s290 = scalar_lea.vmem %s0, %s289
      %p291 = pneg %p40
      %p292 = pneg %p37
      %p293 = scmp.lt.s32.totalorder %s19, 1
      %s294 = scalar_select %p293, %s19, 1
      %s295 = smul.addr %s294, 3
      %s296 = smul.addr %s295, 8
      %s297 = scalar_lea.vmem %s1, %s296
      %p298 = pneg %p66
      %p299 = pneg %p63
      %p300 = pneg %p87
      %p301 = pneg %p84
      %p302 = pneg %p108
      %p303 = pneg %p105
      %p304 = pneg %p129
      %p305 = pneg %p126
      %p306 = pneg %p150
      %p307 = pneg %p147
      %p308 = scmp.lt.s32.totalorder %s19, 1
      %s309 = scalar_select %p308, %s19, 1
      %s310 = scalar_lea.vmem %s6, %s309
      %p311 = pneg %p176
      %p312 = pneg %p173
      %p313 = pneg %p197
      %p314 = pneg %p194
      %p315 = pneg %p223
      %p316 = pneg %p220
      %p317 = scmp.lt.s32.totalorder %s19, 1
      %s318 = scalar_select %p317, %s19, 1
      %s319 = smul.addr %s318, 3
      %s320 = smul.addr %s319, 8
      %s321 = scalar_lea.vmem %s8, %s320
      %p322 = scmp.lt.s32.totalorder %s19, 1
      %s323 = scalar_select %p322, %s19, 1
      %s324 = smul.addr %s323, 3
      %s325 = smul.addr %s324, 4
      %s326 = scalar_lea.vmem %s0, %s325
      %p327 = scmp.lt.s32.totalorder %s19, 1
      %s328 = scalar_select %p327, %s19, 1
      %s329 = smul.addr %s328, 3
      %s330 = smul.addr %s329, 8
      %s331 = scalar_lea.vmem %s1, %s330
      %p332 = scmp.lt.s32.totalorder %s19, 1
      %s333 = scalar_select %p332, %s19, 1
      %s334 = scalar_lea.vmem %s6, %s333
      %p335 = scmp.lt.s32.totalorder %s19, 1
      %s336 = scalar_select %p335, %s19, 1
      %s337 = smul.addr %s336, 3
      %s338 = smul.addr %s337, 8
      %s339 = scalar_lea.vmem %s8, %s338
      %vm341 = vcmask 125952
      %342 = vst.msk [vmem:[#allocation2] sm:$0xf] %vm341, 0
      %343 = vst.msk [vmem:[#allocation2 + $0x4] sm:$0xf] %vm341, 0
      %344 = vst.msk [vmem:[#allocation2 + $0x8] sm:$0xf] %vm341, 0
      %345 = vst.msk [vmem:[#allocation2 + $0xc] sm:$0xf] %vm341, 0
      %346 = vst.msk [vmem:[#allocation2 + $0x10] sm:$0xf] %vm341, 0
      %347 = vst.msk [vmem:[#allocation2 + $0x14] sm:$0xf] %vm341, 0
      %348 = vst.msk [vmem:[#allocation2 + $0x18] sm:$0xf] %vm341, 0
      %349 = vst.msk [vmem:[#allocation2 + $0x1c] sm:$0xf] %vm341, 0
      %350 = vst.msk [vmem:[#allocation2 + $0x20] sm:$0xf] %vm341, 0
      %351 = vst.msk [vmem:[#allocation2 + $0x24] sm:$0xf] %vm341, 0
      %352 = vst.msk [vmem:[#allocation2 + $0x28] sm:$0xf] %vm341, 0
      %353 = vst.msk [vmem:[#allocation2 + $0x2c] sm:$0xf] %vm341, 0
      %354 = vst.msk [vmem:[#allocation2 + $0x30] sm:$0xf] %vm341, 0
      %355 = vst.msk [vmem:[#allocation2 + $0x34] sm:$0xf] %vm341, 0
      %v356 = vld [vmem:[%s326] sm:$0xf]
      %v357 = vld [vmem:[%s326 + $0x4] sm:$0x3]
      %vm360 = vcmask 1040384
      %vm361 = vcmask 1044484
      %vm362 = vmor %vm360, %vm361
      %v363 = vrot.slane %v356, 7
      %v364 = vrot.slane %v363, 4
      %v365 = vrot.slane %v357, 7
      %v366 = vsel %vm362, %v364, %v365
      %vm369 = vcmask 125953
      %370 = vst.msk [vmem:[#allocation2 + $0x10] sm:$0xe] %vm369, %v363
      %vm371 = vcmask 124928
      %372 = vst.msk [vmem:[#allocation2 + $0x14] sm:$0x7] %vm371, %v366
      %v373 = vld [vmem:[%s326 + $0x4] sm:$0xc]
      %v374 = vld [vmem:[%s326 + $0x8] sm:$0xf]
      %vm377 = vcmask 1042432
      %vm378 = vcmask 1046532
      %vm379 = vmor %vm377, %vm378
      %v380 = vrot.slane %v373, 5
      %v381 = vrot.slane %v380, 4
      %v382 = vrot.slane %v374, 5
      %v383 = vsel %vm379, %v381, %v382
      %v384 = vrot.slane %v382, 4
      %387 = vst.msk [vmem:[#allocation2 + $0x18] sm:$0xe] %vm369, %v383
      %388 = vst.msk [vmem:[#allocation2 + $0x1c] sm:$0x7] %vm371, %v384
      %v389 = vld [vmem:[#allocation2] sm:$0xf]
      %v390 = vld [vmem:[#allocation2 + $0x4] sm:$0xf]
      %v391 = vld [vmem:[#allocation2 + $0x8] sm:$0xf]
      %v392 = vld [vmem:[#allocation2 + $0xc] sm:$0xf]
      %393 = vst.msk [vmem:[#allocation4] sm:$0xf] %vm341, %v389
      %394 = vst.msk [vmem:[#allocation4 + $0x10] sm:$0xf] %vm341, %v390
      %395 = vst.msk [vmem:[#allocation4 + $0x20] sm:$0xf] %vm341, %v391
      %396 = vst.msk [vmem:[#allocation4 + $0x30] sm:$0xf] %vm341, %v392
      %v397 = vld [vmem:[#allocation2] sm:$0xf]
      %v398 = vld [vmem:[#allocation2 + $0x4] sm:$0xf]
      %v399 = vld [vmem:[#allocation2 + $0x8] sm:$0xf]
      %v400 = vld [vmem:[#allocation2 + $0xc] sm:$0xf]
      %v401 = vld [vmem:[#allocation2 + $0x10] sm:$0x1]
      %vm402 = vsmask.f32 3328
      %vm403 = vsmask.f32 7440
      %vm404 = vmor %vm402, %vm403
      %v406 = vshrl.u32 %v397, 16
      %v408 = vrot.slane %v406, 4
      %v409 = vshll.u32 %v397, 16
      %v411 = vrot.slane %v409, 5
      %v412 = vor.u32 %v408, %v411
      %v413 = vrot.slane %v412, 4
      %v415 = vshll.u32 %v398, 16
      %v417 = vrot.slane %v415, 5
      %v418 = vsel %vm404, %v413, %v417
      %v419 = vshrl.u32 %v398, 16
      %v421 = vrot.slane %v419, 4
      %v422 = vor.u32 %v421, %v417
      %v423 = vrot.slane %v422, 4
      %v425 = vshll.u32 %v399, 16
      %v427 = vrot.slane %v425, 5
      %v428 = vsel %vm404, %v423, %v427
      %v429 = vshrl.u32 %v399, 16
      %v431 = vrot.slane %v429, 4
      %v432 = vor.u32 %v431, %v427
      %v433 = vrot.slane %v432, 4
      %v435 = vshll.u32 %v400, 16
      %v437 = vrot.slane %v435, 5
      %v438 = vsel %vm404, %v433, %v437
      %v439 = vshrl.u32 %v400, 16
      %v441 = vrot.slane %v439, 4
      %v442 = vor.u32 %v441, %v437
      %v443 = vrot.slane %v442, 4
      %v445 = vshll.u32 %v401, 16
      %v447 = vrot.slane %v445, 5
      %v448 = vsel %vm404, %v443, %v447
      %449 = vrot.lane.b32.xlu0 %v418, 16
      %v450 = vpop.permute.xlu0 %449
      %451 = vrot.lane.b32.xlu0 %v428, 16
      %v452 = vpop.permute.xlu0 %451
      %453 = vrot.lane.b32.xlu0 %v438, 16
      %v454 = vpop.permute.xlu0 %453
      %455 = vrot.lane.b32.xlu0 %v448, 16
      %v456 = vpop.permute.xlu0 %455
      %vm461 = vcmask 257152
      %462 = vst.msk [vmem:[#allocation4] sm:$0xf] %vm461, %v450
      %463 = vst.msk [vmem:[#allocation4 + $0x10] sm:$0xf] %vm461, %v452
      %464 = vst.msk [vmem:[#allocation4 + $0x20] sm:$0xf] %vm461, %v454
      %465 = vst.msk [vmem:[#allocation4 + $0x30] sm:$0xf] %vm461, %v456
      %v466 = vld [vmem:[#allocation2] sm:$0xe]
      %v467 = vld [vmem:[#allocation2 + $0x4] sm:$0xf]
      %v468 = vld [vmem:[#allocation2 + $0x8] sm:$0xf]
      %v469 = vld [vmem:[#allocation2 + $0xc] sm:$0xf]
      %v470 = vld [vmem:[#allocation2 + $0x10] sm:$0x1]
      %v476 = vrot.slane %v466, 5
      %v477 = vrot.slane %v476, 4
      %v478 = vrot.slane %v467, 5
      %v479 = vsel %vm379, %v477, %v478
      %v480 = vrot.slane %v478, 4
      %v481 = vrot.slane %v468, 5
      %v482 = vsel %vm379, %v480, %v481
      %v483 = vrot.slane %v481, 4
      %v484 = vrot.slane %v469, 5
      %v485 = vsel %vm379, %v483, %v484
      %v486 = vrot.slane %v484, 4
      %v487 = vrot.slane %v470, 5
      %v488 = vsel %vm379, %v486, %v487
      %489 = vrot.lane.b32.xlu0 %v479, 32
      %v490 = vpop.permute.xlu0 %489
      %491 = vrot.lane.b32.xlu0 %v482, 32
      %v492 = vpop.permute.xlu0 %491
      %493 = vrot.lane.b32.xlu0 %v485, 32
      %v494 = vpop.permute.xlu0 %493
      %495 = vrot.lane.b32.xlu0 %v488, 32
      %v496 = vpop.permute.xlu0 %495
      %vm501 = vcmask 388352
      %502 = vst.msk [vmem:[#allocation4] sm:$0xf] %vm501, %v490
      %503 = vst.msk [vmem:[#allocation4 + $0x10] sm:$0xf] %vm501, %v492
      %504 = vst.msk [vmem:[#allocation4 + $0x20] sm:$0xf] %vm501, %v494
      %505 = vst.msk [vmem:[#allocation4 + $0x30] sm:$0xf] %vm501, %v496
      %v506 = vld [vmem:[#allocation2] sm:$0xe]
      %v507 = vld [vmem:[#allocation2 + $0x4] sm:$0xf]
      %v508 = vld [vmem:[#allocation2 + $0x8] sm:$0xf]
      %v509 = vld [vmem:[#allocation2 + $0xc] sm:$0xf]
      %v510 = vld [vmem:[#allocation2 + $0x10] sm:$0x3]
      %vm511 = vsmask.f32 2304
      %vm512 = vsmask.f32 6416
      %vm513 = vmor %vm511, %vm512
      %v515 = vshrl.u32 %v506, 16
      %v517 = vrot.slane %v515, 5
      %v518 = vshll.u32 %v506, 16
      %v520 = vrot.slane %v518, 6
      %v521 = vor.u32 %v517, %v520
      %v522 = vrot.slane %v521, 4
      %v524 = vshrl.u32 %v507, 16
      %v526 = vrot.slane %v524, 5
      %v527 = vshll.u32 %v507, 16
      %v529 = vrot.slane %v527, 6
      %v530 = vor.u32 %v526, %v529
      %v531 = vsel %vm513, %v522, %v530
      %v532 = vrot.slane %v530, 4
      %v534 = vshrl.u32 %v508, 16
      %v536 = vrot.slane %v534, 5
      %v537 = vshll.u32 %v508, 16
      %v539 = vrot.slane %v537, 6
      %v540 = vor.u32 %v536, %v539
      %v541 = vsel %vm513, %v532, %v540
      %v542 = vrot.slane %v540, 4
      %v544 = vshrl.u32 %v509, 16
      %v546 = vrot.slane %v544, 5
      %v547 = vshll.u32 %v509, 16
      %v549 = vrot.slane %v547, 6
      %v550 = vor.u32 %v546, %v549
      %v551 = vsel %vm513, %v542, %v550
      %v552 = vrot.slane %v550, 4
      %v554 = vshrl.u32 %v510, 16
      %v556 = vrot.slane %v554, 5
      %v557 = vshll.u32 %v510, 16
      %v559 = vrot.slane %v557, 6
      %v560 = vor.u32 %v556, %v559
      %v561 = vsel %vm513, %v552, %v560
      %562 = vrot.lane.b32.xlu0 %v531, 48
      %v563 = vpop.permute.xlu0 %562
      %564 = vrot.lane.b32.xlu0 %v541, 48
      %v565 = vpop.permute.xlu0 %564
      %566 = vrot.lane.b32.xlu0 %v551, 48
      %v567 = vpop.permute.xlu0 %566
      %568 = vrot.lane.b32.xlu0 %v561, 48
      %v569 = vpop.permute.xlu0 %568
      %vm574 = vcmask 519552
      %575 = vst.msk [vmem:[#allocation4] sm:$0xf] %vm574, %v563
      %576 = vst.msk [vmem:[#allocation4 + $0x10] sm:$0xf] %vm574, %v565
      %577 = vst.msk [vmem:[#allocation4 + $0x20] sm:$0xf] %vm574, %v567
      %578 = vst.msk [vmem:[#allocation4 + $0x30] sm:$0xf] %vm574, %v569
      %v579 = vld [vmem:[#allocation2] sm:$0xc]
      %v580 = vld [vmem:[#allocation2 + $0x4] sm:$0xf]
      %v581 = vld [vmem:[#allocation2 + $0x8] sm:$0xf]
      %v582 = vld [vmem:[#allocation2 + $0xc] sm:$0xf]
      %v583 = vld [vmem:[#allocation2 + $0x10] sm:$0x3]
      %vm589 = vcmask 1041408
      %vm590 = vcmask 1045508
      %vm591 = vmor %vm589, %vm590
      %v592 = vrot.slane %v579, 6
      %v593 = vrot.slane %v592, 4
      %v594 = vrot.slane %v580, 6
      %v595 = vsel %vm591, %v593, %v594
      %v596 = vrot.slane %v594, 4
      %v597 = vrot.slane %v581, 6
      %v598 = vsel %vm591, %v596, %v597
      %v599 = vrot.slane %v597, 4
      %v600 = vrot.slane %v582, 6
      %v601 = vsel %vm591, %v599, %v600
      %v602 = vrot.slane %v600, 4
      %v603 = vrot.slane %v583, 6
      %v604 = vsel %vm591, %v602, %v603
      %605 = vrot.lane.b32.xlu0 %v595, 64
      %v606 = vpop.permute.xlu0 %605
      %607 = vrot.lane.b32.xlu0 %v598, 64
      %v608 = vpop.permute.xlu0 %607
      %609 = vrot.lane.b32.xlu0 %v601, 64
      %v610 = vpop.permute.xlu0 %609
      %611 = vrot.lane.b32.xlu0 %v604, 64
      %v612 = vpop.permute.xlu0 %611
      %vm617 = vcmask 650752
      %618 = vst.msk [vmem:[#allocation4] sm:$0xf] %vm617, %v606
      %619 = vst.msk [vmem:[#allocation4 + $0x10] sm:$0xf] %vm617, %v608
      %620 = vst.msk [vmem:[#allocation4 + $0x20] sm:$0xf] %vm617, %v610
      %621 = vst.msk [vmem:[#allocation4 + $0x30] sm:$0xf] %vm617, %v612
      %v622 = vld [vmem:[#allocation2 + $0x8] sm:$0xf]
      %v623 = vld [vmem:[#allocation2 + $0xc] sm:$0xf]
      %v624 = vld [vmem:[#allocation2 + $0x10] sm:$0xf]
      %v625 = vld [vmem:[#allocation2 + $0x14] sm:$0xf]
      %630 = vrot.lane.b32.xlu0 %v622, 80
      %v631 = vpop.permute.xlu0 %630
      %632 = vrot.lane.b32.xlu0 %v623, 80
      %v633 = vpop.permute.xlu0 %632
      %634 = vrot.lane.b32.xlu0 %v624, 80
      %v635 = vpop.permute.xlu0 %634
      %636 = vrot.lane.b32.xlu0 %v625, 80
      %v637 = vpop.permute.xlu0 %636
      %vm642 = vcmask 781952
      %643 = vst.msk [vmem:[#allocation4] sm:$0xf] %vm642, %v631
      %644 = vst.msk [vmem:[#allocation4 + $0x10] sm:$0xf] %vm642, %v633
      %645 = vst.msk [vmem:[#allocation4 + $0x20] sm:$0xf] %vm642, %v635
      %646 = vst.msk [vmem:[#allocation4 + $0x30] sm:$0xf] %vm642, %v637
      %v647 = vld [vmem:[#allocation2 + $0x8] sm:$0xf]
      %v648 = vld [vmem:[#allocation2 + $0xc] sm:$0xf]
      %v649 = vld [vmem:[#allocation2 + $0x10] sm:$0xf]
      %v650 = vld [vmem:[#allocation2 + $0x14] sm:$0xf]
      %v651 = vld [vmem:[#allocation2 + $0x18] sm:$0x1]
      %v653 = vshrl.u32 %v647, 16
      %v655 = vrot.slane %v653, 4
      %v656 = vshll.u32 %v647, 16
      %v658 = vrot.slane %v656, 5
      %v659 = vor.u32 %v655, %v658
      %v660 = vrot.slane %v659, 4
      %v662 = vshll.u32 %v648, 16
      %v664 = vrot.slane %v662, 5
      %v665 = vsel %vm404, %v660, %v664
      %v666 = vshrl.u32 %v648, 16
      %v668 = vrot.slane %v666, 4
      %v669 = vor.u32 %v668, %v664
      %v670 = vrot.slane %v669, 4
      %v672 = vshll.u32 %v649, 16
      %v674 = vrot.slane %v672, 5
      %v675 = vsel %vm404, %v670, %v674
      %v676 = vshrl.u32 %v649, 16
      %v678 = vrot.slane %v676, 4
      %v679 = vor.u32 %v678, %v674
      %v680 = vrot.slane %v679, 4
      %v682 = vshll.u32 %v650, 16
      %v684 = vrot.slane %v682, 5
      %v685 = vsel %vm404, %v680, %v684
      %v686 = vshrl.u32 %v650, 16
      %v688 = vrot.slane %v686, 4
      %v689 = vor.u32 %v688, %v684
      %v690 = vrot.slane %v689, 4
      %v692 = vshll.u32 %v651, 16
      %v694 = vrot.slane %v692, 5
      %v695 = vsel %vm404, %v690, %v694
      %696 = vrot.lane.b32.xlu0 %v665, 96
      %v697 = vpop.permute.xlu0 %696
      %698 = vrot.lane.b32.xlu0 %v675, 96
      %v699 = vpop.permute.xlu0 %698
      %700 = vrot.lane.b32.xlu0 %v685, 96
      %v701 = vpop.permute.xlu0 %700
      %702 = vrot.lane.b32.xlu0 %v695, 96
      %v703 = vpop.permute.xlu0 %702
      %vm708 = vcmask 913152
      %709 = vst.msk [vmem:[#allocation4] sm:$0xf] %vm708, %v697
      %710 = vst.msk [vmem:[#allocation4 + $0x10] sm:$0xf] %vm708, %v699
      %711 = vst.msk [vmem:[#allocation4 + $0x20] sm:$0xf] %vm708, %v701
      %712 = vst.msk [vmem:[#allocation4 + $0x30] sm:$0xf] %vm708, %v703
      %v713 = vld [vmem:[#allocation2 + $0x8] sm:$0xe]
      %v714 = vld [vmem:[#allocation2 + $0xc] sm:$0xf]
      %v715 = vld [vmem:[#allocation2 + $0x10] sm:$0xf]
      %v716 = vld [vmem:[#allocation2 + $0x14] sm:$0xf]
      %v717 = vld [vmem:[#allocation2 + $0x18] sm:$0x1]
      %v723 = vrot.slane %v713, 5
      %v724 = vrot.slane %v723, 4
      %v725 = vrot.slane %v714, 5
      %v726 = vsel %vm379, %v724, %v725
      %v727 = vrot.slane %v725, 4
      %v728 = vrot.slane %v715, 5
      %v729 = vsel %vm379, %v727, %v728
      %v730 = vrot.slane %v728, 4
      %v731 = vrot.slane %v716, 5
      %v732 = vsel %vm379, %v730, %v731
      %v733 = vrot.slane %v731, 4
      %v734 = vrot.slane %v717, 5
      %v735 = vsel %vm379, %v733, %v734
      %736 = vrot.lane.b32.xlu0 %v726, 112
      %v737 = vpop.permute.xlu0 %736
      %738 = vrot.lane.b32.xlu0 %v729, 112
      %v739 = vpop.permute.xlu0 %738
      %740 = vrot.lane.b32.xlu0 %v732, 112
      %v741 = vpop.permute.xlu0 %740
      %742 = vrot.lane.b32.xlu0 %v735, 112
      %v743 = vpop.permute.xlu0 %742
      %vm748 = vcmask 1044352
      %749 = vst.msk [vmem:[#allocation4] sm:$0xf] %vm748, %v737
      %750 = vst.msk [vmem:[#allocation4 + $0x10] sm:$0xf] %vm748, %v739
      %751 = vst.msk [vmem:[#allocation4 + $0x20] sm:$0xf] %vm748, %v741
      %752 = vst.msk [vmem:[#allocation4 + $0x30] sm:$0xf] %vm748, %v743
      %v753 = vld [vmem:[#allocation2 + $0x8] sm:$0xe]
      %v754 = vld [vmem:[#allocation2 + $0xc] sm:$0xf]
      %v755 = vld [vmem:[#allocation2 + $0x10] sm:$0xf]
      %v756 = vld [vmem:[#allocation2 + $0x14] sm:$0xf]
      %v757 = vld [vmem:[#allocation2 + $0x18] sm:$0x3]
      %v759 = vshrl.u32 %v753, 16
      %v761 = vrot.slane %v759, 5
      %v762 = vshll.u32 %v753, 16
      %v764 = vrot.slane %v762, 6
      %v765 = vor.u32 %v761, %v764
      %v766 = vrot.slane %v765, 4
      %v768 = vshrl.u32 %v754, 16
      %v770 = vrot.slane %v768, 5
      %v771 = vshll.u32 %v754, 16
      %v773 = vrot.slane %v771, 6
      %v774 = vor.u32 %v770, %v773
      %v775 = vsel %vm513, %v766, %v774
      %v776 = vrot.slane %v774, 4
      %v778 = vshrl.u32 %v755, 16
      %v780 = vrot.slane %v778, 5
      %v781 = vshll.u32 %v755, 16
      %v783 = vrot.slane %v781, 6
      %v784 = vor.u32 %v780, %v783
      %v785 = vsel %vm513, %v776, %v784
      %v786 = vrot.slane %v784, 4
      %v788 = vshrl.u32 %v756, 16
      %v790 = vrot.slane %v788, 5
      %v791 = vshll.u32 %v756, 16
      %v793 = vrot.slane %v791, 6
      %v794 = vor.u32 %v790, %v793
      %v795 = vsel %vm513, %v786, %v794
      %v796 = vrot.slane %v794, 4
      %v798 = vshrl.u32 %v757, 16
      %v800 = vrot.slane %v798, 5
      %v801 = vshll.u32 %v757, 16
      %v803 = vrot.slane %v801, 6
      %v804 = vor.u32 %v800, %v803
      %v805 = vsel %vm513, %v796, %v804
      %810 = vst.msk [vmem:[#allocation4 + $0x4] sm:$0xf] %vm341, %v775
      %811 = vst.msk [vmem:[#allocation4 + $0x14] sm:$0xf] %vm341, %v785
      %812 = vst.msk [vmem:[#allocation4 + $0x24] sm:$0xf] %vm341, %v795
      %813 = vst.msk [vmem:[#allocation4 + $0x34] sm:$0xf] %vm341, %v805
      %v814 = vld [vmem:[#allocation2 + $0x8] sm:$0xc]
      %v815 = vld [vmem:[#allocation2 + $0xc] sm:$0xf]
      %v816 = vld [vmem:[#allocation2 + $0x10] sm:$0xf]
      %v817 = vld [vmem:[#allocation2 + $0x14] sm:$0xf]
      %v818 = vld [vmem:[#allocation2 + $0x18] sm:$0x3]
      %v824 = vrot.slane %v814, 6
      %v825 = vrot.slane %v824, 4
      %v826 = vrot.slane %v815, 6
      %v827 = vsel %vm591, %v825, %v826
      %v828 = vrot.slane %v826, 4
      %v829 = vrot.slane %v816, 6
      %v830 = vsel %vm591, %v828, %v829
      %v831 = vrot.slane %v829, 4
      %v832 = vrot.slane %v817, 6
      %v833 = vsel %vm591, %v831, %v832
      %v834 = vrot.slane %v832, 4
      %v835 = vrot.slane %v818, 6
      %v836 = vsel %vm591, %v834, %v835
      %837 = vrot.lane.b32.xlu0 %v827, 16
      %v838 = vpop.permute.xlu0 %837
      %839 = vrot.lane.b32.xlu0 %v830, 16
      %v840 = vpop.permute.xlu0 %839
      %841 = vrot.lane.b32.xlu0 %v833, 16
      %v842 = vpop.permute.xlu0 %841
      %843 = vrot.lane.b32.xlu0 %v836, 16
      %v844 = vpop.permute.xlu0 %843
      %849 = vst.msk [vmem:[#allocation4 + $0x4] sm:$0xf] %vm461, %v838
      %850 = vst.msk [vmem:[#allocation4 + $0x14] sm:$0xf] %vm461, %v840
      %851 = vst.msk [vmem:[#allocation4 + $0x24] sm:$0xf] %vm461, %v842
      %852 = vst.msk [vmem:[#allocation4 + $0x34] sm:$0xf] %vm461, %v844
      %v853 = vld [vmem:[#allocation2 + $0x10] sm:$0xf]
      %v854 = vld [vmem:[#allocation2 + $0x14] sm:$0xf]
      %v855 = vld [vmem:[#allocation2 + $0x18] sm:$0xf]
      %v856 = vld [vmem:[#allocation2 + $0x1c] sm:$0xf]
      %861 = vrot.lane.b32.xlu0 %v853, 32
      %v862 = vpop.permute.xlu0 %861
      %863 = vrot.lane.b32.xlu0 %v854, 32
      %v864 = vpop.permute.xlu0 %863
      %865 = vrot.lane.b32.xlu0 %v855, 32
      %v866 = vpop.permute.xlu0 %865
      %867 = vrot.lane.b32.xlu0 %v856, 32
      %v868 = vpop.permute.xlu0 %867
      %873 = vst.msk [vmem:[#allocation4 + $0x4] sm:$0xf] %vm501, %v862
      %874 = vst.msk [vmem:[#allocation4 + $0x14] sm:$0xf] %vm501, %v864
      %875 = vst.msk [vmem:[#allocation4 + $0x24] sm:$0xf] %vm501, %v866
      %876 = vst.msk [vmem:[#allocation4 + $0x34] sm:$0xf] %vm501, %v868
      %v877 = vld [vmem:[#allocation2 + $0x10] sm:$0xf]
      %v878 = vld [vmem:[#allocation2 + $0x14] sm:$0xf]
      %v879 = vld [vmem:[#allocation2 + $0x18] sm:$0xf]
      %v880 = vld [vmem:[#allocation2 + $0x1c] sm:$0xf]
      %v881 = vld [vmem:[#allocation2 + $0x20] sm:$0x1]
      %v883 = vshrl.u32 %v877, 16
      %v885 = vrot.slane %v883, 4
      %v886 = vshll.u32 %v877, 16
      %v888 = vrot.slane %v886, 5
      %v889 = vor.u32 %v885, %v888
      %v890 = vrot.slane %v889, 4
      %v892 = vshll.u32 %v878, 16
      %v894 = vrot.slane %v892, 5
      %v895 = vsel %vm404, %v890, %v894
      %v896 = vshrl.u32 %v878, 16
      %v898 = vrot.slane %v896, 4
      %v899 = vor.u32 %v898, %v894
      %v900 = vrot.slane %v899, 4
      %v902 = vshll.u32 %v879, 16
      %v904 = vrot.slane %v902, 5
      %v905 = vsel %vm404, %v900, %v904
      %v906 = vshrl.u32 %v879, 16
      %v908 = vrot.slane %v906, 4
      %v909 = vor.u32 %v908, %v904
      %v910 = vrot.slane %v909, 4
      %v912 = vshll.u32 %v880, 16
      %v914 = vrot.slane %v912, 5
      %v915 = vsel %vm404, %v910, %v914
      %v916 = vshrl.u32 %v880, 16
      %v918 = vrot.slane %v916, 4
      %v919 = vor.u32 %v918, %v914
      %v920 = vrot.slane %v919, 4
      %v922 = vshll.u32 %v881, 16
      %v924 = vrot.slane %v922, 5
      %v925 = vsel %vm404, %v920, %v924
      %926 = vrot.lane.b32.xlu0 %v895, 48
      %v927 = vpop.permute.xlu0 %926
      %928 = vrot.lane.b32.xlu0 %v905, 48
      %v929 = vpop.permute.xlu0 %928
      %930 = vrot.lane.b32.xlu0 %v915, 48
      %v931 = vpop.permute.xlu0 %930
      %932 = vrot.lane.b32.xlu0 %v925, 48
      %v933 = vpop.permute.xlu0 %932
      %938 = vst.msk [vmem:[#allocation4 + $0x4] sm:$0xf] %vm574, %v927
      %939 = vst.msk [vmem:[#allocation4 + $0x14] sm:$0xf] %vm574, %v929
      %940 = vst.msk [vmem:[#allocation4 + $0x24] sm:$0xf] %vm574, %v931
      %941 = vst.msk [vmem:[#allocation4 + $0x34] sm:$0xf] %vm574, %v933
      %v942 = vld [vmem:[#allocation2 + $0x10] sm:$0xe]
      %v943 = vld [vmem:[#allocation2 + $0x14] sm:$0xf]
      %v944 = vld [vmem:[#allocation2 + $0x18] sm:$0xf]
      %v945 = vld [vmem:[#allocation2 + $0x1c] sm:$0xf]
      %v946 = vld [vmem:[#allocation2 + $0x20] sm:$0x1]
      %v952 = vrot.slane %v942, 5
      %v953 = vrot.slane %v952, 4
      %v954 = vrot.slane %v943, 5
      %v955 = vsel %vm379, %v953, %v954
      %v956 = vrot.slane %v954, 4
      %v957 = vrot.slane %v944, 5
      %v958 = vsel %vm379, %v956, %v957
      %v959 = vrot.slane %v957, 4
      %v960 = vrot.slane %v945, 5
      %v961 = vsel %vm379, %v959, %v960
      %v962 = vrot.slane %v960, 4
      %v963 = vrot.slane %v946, 5
      %v964 = vsel %vm379, %v962, %v963
      %965 = vrot.lane.b32.xlu0 %v955, 64
      %v966 = vpop.permute.xlu0 %965
      %967 = vrot.lane.b32.xlu0 %v958, 64
      %v968 = vpop.permute.xlu0 %967
      %969 = vrot.lane.b32.xlu0 %v961, 64
      %v970 = vpop.permute.xlu0 %969
      %971 = vrot.lane.b32.xlu0 %v964, 64
      %v972 = vpop.permute.xlu0 %971
      %977 = vst.msk [vmem:[#allocation4 + $0x4] sm:$0xf] %vm617, %v966
      %978 = vst.msk [vmem:[#allocation4 + $0x14] sm:$0xf] %vm617, %v968
      %979 = vst.msk [vmem:[#allocation4 + $0x24] sm:$0xf] %vm617, %v970
      %980 = vst.msk [vmem:[#allocation4 + $0x34] sm:$0xf] %vm617, %v972
      %v981 = vld [vmem:[#allocation2 + $0x10] sm:$0xe]
      %v982 = vld [vmem:[#allocation2 + $0x14] sm:$0xf]
      %v983 = vld [vmem:[#allocation2 + $0x18] sm:$0xf]
      %v984 = vld [vmem:[#allocation2 + $0x1c] sm:$0xf]
      %v985 = vld [vmem:[#allocation2 + $0x20] sm:$0x3]
      %v987 = vshrl.u32 %v981, 16
      %v989 = vrot.slane %v987, 5
      %v990 = vshll.u32 %v981, 16
      %v992 = vrot.slane %v990, 6
      %v993 = vor.u32 %v989, %v992
      %v994 = vrot.slane %v993, 4
      %v996 = vshrl.u32 %v982, 16
      %v998 = vrot.slane %v996, 5
      %v999 = vshll.u32 %v982, 16
      %v1001 = vrot.slane %v999, 6
      %v1002 = vor.u32 %v998, %v1001
      %v1003 = vsel %vm513, %v994, %v1002
      %v1004 = vrot.slane %v1002, 4
      %v1006 = vshrl.u32 %v983, 16
      %v1008 = vrot.slane %v1006, 5
      %v1009 = vshll.u32 %v983, 16
      %v1011 = vrot.slane %v1009, 6
      %v1012 = vor.u32 %v1008, %v1011
      %v1013 = vsel %vm513, %v1004, %v1012
      %v1014 = vrot.slane %v1012, 4
      %v1016 = vshrl.u32 %v984, 16
      %v1018 = vrot.slane %v1016, 5
      %v1019 = vshll.u32 %v984, 16
      %v1021 = vrot.slane %v1019, 6
      %v1022 = vor.u32 %v1018, %v1021
      %v1023 = vsel %vm513, %v1014, %v1022
      %v1024 = vrot.slane %v1022, 4
      %v1026 = vshrl.u32 %v985, 16
      %v1028 = vrot.slane %v1026, 5
      %v1029 = vshll.u32 %v985, 16
      %v1031 = vrot.slane %v1029, 6
      %v1032 = vor.u32 %v1028, %v1031
      %v1033 = vsel %vm513, %v1024, %v1032
      %1034 = vrot.lane.b32.xlu0 %v1003, 80
      %v1035 = vpop.permute.xlu0 %1034
      %1036 = vrot.lane.b32.xlu0 %v1013, 80
      %v1037 = vpop.permute.xlu0 %1036
      %1038 = vrot.lane.b32.xlu0 %v1023, 80
      %v1039 = vpop.permute.xlu0 %1038
      %1040 = vrot.lane.b32.xlu0 %v1033, 80
      %v1041 = vpop.permute.xlu0 %1040
      %1046 = vst.msk [vmem:[#allocation4 + $0x4] sm:$0xf] %vm642, %v1035
      %1047 = vst.msk [vmem:[#allocation4 + $0x14] sm:$0xf] %vm642, %v1037
      %1048 = vst.msk [vmem:[#allocation4 + $0x24] sm:$0xf] %vm642, %v1039
      %1049 = vst.msk [vmem:[#allocation4 + $0x34] sm:$0xf] %vm642, %v1041
      %v1050 = vld [vmem:[#allocation2 + $0x10] sm:$0xc]
      %v1051 = vld [vmem:[#allocation2 + $0x14] sm:$0xf]
      %v1052 = vld [vmem:[#allocation2 + $0x18] sm:$0xf]
      %v1053 = vld [vmem:[#allocation2 + $0x1c] sm:$0xf]
      %v1054 = vld [vmem:[#allocation2 + $0x20] sm:$0x3]
      %v1060 = vrot.slane %v1050, 6
      %v1061 = vrot.slane %v1060, 4
      %v1062 = vrot.slane %v1051, 6
      %v1063 = vsel %vm591, %v1061, %v1062
      %v1064 = vrot.slane %v1062, 4
      %v1065 = vrot.slane %v1052, 6
      %v1066 = vsel %vm591, %v1064, %v1065
      %v1067 = vrot.slane %v1065, 4
      %v1068 = vrot.slane %v1053, 6
      %v1069 = vsel %vm591, %v1067, %v1068
      %v1070 = vrot.slane %v1068, 4
      %v1071 = vrot.slane %v1054, 6
      %v1072 = vsel %vm591, %v1070, %v1071
      %1073 = vrot.lane.b32.xlu0 %v1063, 96
      %v1074 = vpop.permute.xlu0 %1073
      %1075 = vrot.lane.b32.xlu0 %v1066, 96
      %v1076 = vpop.permute.xlu0 %1075
      %1077 = vrot.lane.b32.xlu0 %v1069, 96
      %v1078 = vpop.permute.xlu0 %1077
      %1079 = vrot.lane.b32.xlu0 %v1072, 96
      %v1080 = vpop.permute.xlu0 %1079
      %1085 = vst.msk [vmem:[#allocation4 + $0x4] sm:$0xf] %vm708, %v1074
      %1086 = vst.msk [vmem:[#allocation4 + $0x14] sm:$0xf] %vm708, %v1076
      %1087 = vst.msk [vmem:[#allocation4 + $0x24] sm:$0xf] %vm708, %v1078
      %1088 = vst.msk [vmem:[#allocation4 + $0x34] sm:$0xf] %vm708, %v1080
      %v1089 = vld [vmem:[#allocation2 + $0x18] sm:$0xf]
      %v1090 = vld [vmem:[#allocation2 + $0x1c] sm:$0xf]
      %v1091 = vld [vmem:[#allocation2 + $0x20] sm:$0xf]
      %v1092 = vld [vmem:[#allocation2 + $0x24] sm:$0xf]
      %1097 = vrot.lane.b32.xlu0 %v1089, 112
      %v1098 = vpop.permute.xlu0 %1097
      %1099 = vrot.lane.b32.xlu0 %v1090, 112
      %v1100 = vpop.permute.xlu0 %1099
      %1101 = vrot.lane.b32.xlu0 %v1091, 112
      %v1102 = vpop.permute.xlu0 %1101
      %1103 = vrot.lane.b32.xlu0 %v1092, 112
      %v1104 = vpop.permute.xlu0 %1103
      %1109 = vst.msk [vmem:[#allocation4 + $0x4] sm:$0xf] %vm748, %v1098
      %1110 = vst.msk [vmem:[#allocation4 + $0x14] sm:$0xf] %vm748, %v1100
      %1111 = vst.msk [vmem:[#allocation4 + $0x24] sm:$0xf] %vm748, %v1102
      %1112 = vst.msk [vmem:[#allocation4 + $0x34] sm:$0xf] %vm748, %v1104
      %v1113 = vld [vmem:[#allocation2 + $0x18] sm:$0xf]
      %v1114 = vld [vmem:[#allocation2 + $0x1c] sm:$0xf]
      %v1115 = vld [vmem:[#allocation2 + $0x20] sm:$0xf]
      %v1116 = vld [vmem:[#allocation2 + $0x24] sm:$0xf]
      %v1117 = vld [vmem:[#allocation2 + $0x28] sm:$0x1]
      %v1119 = vshrl.u32 %v1113, 16
      %v1121 = vrot.slane %v1119, 4
      %v1122 = vshll.u32 %v1113, 16
      %v1124 = vrot.slane %v1122, 5
      %v1125 = vor.u32 %v1121, %v1124
      %v1126 = vrot.slane %v1125, 4
      %v1128 = vshll.u32 %v1114, 16
      %v1130 = vrot.slane %v1128, 5
      %v1131 = vsel %vm404, %v1126, %v1130
      %v1132 = vshrl.u32 %v1114, 16
      %v1134 = vrot.slane %v1132, 4
      %v1135 = vor.u32 %v1134, %v1130
      %v1136 = vrot.slane %v1135, 4
      %v1138 = vshll.u32 %v1115, 16
      %v1140 = vrot.slane %v1138, 5
      %v1141 = vsel %vm404, %v1136, %v1140
      %v1142 = vshrl.u32 %v1115, 16
      %v1144 = vrot.slane %v1142, 4
      %v1145 = vor.u32 %v1144, %v1140
      %v1146 = vrot.slane %v1145, 4
      %v1148 = vshll.u32 %v1116, 16
      %v1150 = vrot.slane %v1148, 5
      %v1151 = vsel %vm404, %v1146, %v1150
      %v1152 = vshrl.u32 %v1116, 16
      %v1154 = vrot.slane %v1152, 4
      %v1155 = vor.u32 %v1154, %v1150
      %v1156 = vrot.slane %v1155, 4
      %v1158 = vshll.u32 %v1117, 16
      %v1160 = vrot.slane %v1158, 5
      %v1161 = vsel %vm404, %v1156, %v1160
      %1166 = vst.msk [vmem:[#allocation4 + $0x8] sm:$0xf] %vm341, %v1131
      %1167 = vst.msk [vmem:[#allocation4 + $0x18] sm:$0xf] %vm341, %v1141
      %1168 = vst.msk [vmem:[#allocation4 + $0x28] sm:$0xf] %vm341, %v1151
      %1169 = vst.msk [vmem:[#allocation4 + $0x38] sm:$0xf] %vm341, %v1161
      %v1170 = vld [vmem:[#allocation2 + $0x18] sm:$0xe]
      %v1171 = vld [vmem:[#allocation2 + $0x1c] sm:$0xf]
      %v1172 = vld [vmem:[#allocation2 + $0x20] sm:$0xf]
      %v1173 = vld [vmem:[#allocation2 + $0x24] sm:$0xf]
      %v1174 = vld [vmem:[#allocation2 + $0x28] sm:$0x1]
      %v1180 = vrot.slane %v1170, 5
      %v1181 = vrot.slane %v1180, 4
      %v1182 = vrot.slane %v1171, 5
      %v1183 = vsel %vm379, %v1181, %v1182
      %v1184 = vrot.slane %v1182, 4
      %v1185 = vrot.slane %v1172, 5
      %v1186 = vsel %vm379, %v1184, %v1185
      %v1187 = vrot.slane %v1185, 4
      %v1188 = vrot.slane %v1173, 5
      %v1189 = vsel %vm379, %v1187, %v1188
      %v1190 = vrot.slane %v1188, 4
      %v1191 = vrot.slane %v1174, 5
      %v1192 = vsel %vm379, %v1190, %v1191
      %1193 = vrot.lane.b32.xlu0 %v1183, 16
      %v1194 = vpop.permute.xlu0 %1193
      %1195 = vrot.lane.b32.xlu0 %v1186, 16
      %v1196 = vpop.permute.xlu0 %1195
      %1197 = vrot.lane.b32.xlu0 %v1189, 16
      %v1198 = vpop.permute.xlu0 %1197
      %1199 = vrot.lane.b32.xlu0 %v1192, 16
      %v1200 = vpop.permute.xlu0 %1199
      %1205 = vst.msk [vmem:[#allocation4 + $0x8] sm:$0xf] %vm461, %v1194
      %1206 = vst.msk [vmem:[#allocation4 + $0x18] sm:$0xf] %vm461, %v1196
      %1207 = vst.msk [vmem:[#allocation4 + $0x28] sm:$0xf] %vm461, %v1198
      %1208 = vst.msk [vmem:[#allocation4 + $0x38] sm:$0xf] %vm461, %v1200
      %v1209 = vld [vmem:[#allocation2 + $0x18] sm:$0xe]
      %v1210 = vld [vmem:[#allocation2 + $0x1c] sm:$0xf]
      %v1211 = vld [vmem:[#allocation2 + $0x20] sm:$0xf]
      %v1212 = vld [vmem:[#allocation2 + $0x24] sm:$0xf]
      %v1213 = vld [vmem:[#allocation2 + $0x28] sm:$0x3]
      %v1215 = vshrl.u32 %v1209, 16
      %v1217 = vrot.slane %v1215, 5
      %v1218 = vshll.u32 %v1209, 16
      %v1220 = vrot.slane %v1218, 6
      %v1221 = vor.u32 %v1217, %v1220
      %v1222 = vrot.slane %v1221, 4
      %v1224 = vshrl.u32 %v1210, 16
      %v1226 = vrot.slane %v1224, 5
      %v1227 = vshll.u32 %v1210, 16
      %v1229 = vrot.slane %v1227, 6
      %v1230 = vor.u32 %v1226, %v1229
      %v1231 = vsel %vm513, %v1222, %v1230
      %v1232 = vrot.slane %v1230, 4
      %v1234 = vshrl.u32 %v1211, 16
      %v1236 = vrot.slane %v1234, 5
      %v1237 = vshll.u32 %v1211, 16
      %v1239 = vrot.slane %v1237, 6
      %v1240 = vor.u32 %v1236, %v1239
      %v1241 = vsel %vm513, %v1232, %v1240
      %v1242 = vrot.slane %v1240, 4
      %v1244 = vshrl.u32 %v1212, 16
      %v1246 = vrot.slane %v1244, 5
      %v1247 = vshll.u32 %v1212, 16
      %v1249 = vrot.slane %v1247, 6
      %v1250 = vor.u32 %v1246, %v1249
      %v1251 = vsel %vm513, %v1242, %v1250
      %v1252 = vrot.slane %v1250, 4
      %v1254 = vshrl.u32 %v1213, 16
      %v1256 = vrot.slane %v1254, 5
      %v1257 = vshll.u32 %v1213, 16
      %v1259 = vrot.slane %v1257, 6
      %v1260 = vor.u32 %v1256, %v1259
      %v1261 = vsel %vm513, %v1252, %v1260
      %1262 = vrot.lane.b32.xlu0 %v1231, 32
      %v1263 = vpop.permute.xlu0 %1262
      %1264 = vrot.lane.b32.xlu0 %v1241, 32
      %v1265 = vpop.permute.xlu0 %1264
      %1266 = vrot.lane.b32.xlu0 %v1251, 32
      %v1267 = vpop.permute.xlu0 %1266
      %1268 = vrot.lane.b32.xlu0 %v1261, 32
      %v1269 = vpop.permute.xlu0 %1268
      %1274 = vst.msk [vmem:[#allocation4 + $0x8] sm:$0xf] %vm501, %v1263
      %1275 = vst.msk [vmem:[#allocation4 + $0x18] sm:$0xf] %vm501, %v1265
      %1276 = vst.msk [vmem:[#allocation4 + $0x28] sm:$0xf] %vm501, %v1267
      %1277 = vst.msk [vmem:[#allocation4 + $0x38] sm:$0xf] %vm501, %v1269
      %v1278 = vld [vmem:[#allocation2 + $0x18] sm:$0xc]
      %v1279 = vld [vmem:[#allocation2 + $0x1c] sm:$0xf]
      %v1280 = vld [vmem:[#allocation2 + $0x20] sm:$0xf]
      %v1281 = vld [vmem:[#allocation2 + $0x24] sm:$0xf]
      %v1282 = vld [vmem:[#allocation2 + $0x28] sm:$0x3]
      %v1288 = vrot.slane %v1278, 6
      %v1289 = vrot.slane %v1288, 4
      %v1290 = vrot.slane %v1279, 6
      %v1291 = vsel %vm591, %v1289, %v1290
      %v1292 = vrot.slane %v1290, 4
      %v1293 = vrot.slane %v1280, 6
      %v1294 = vsel %vm591, %v1292, %v1293
      %v1295 = vrot.slane %v1293, 4
      %v1296 = vrot.slane %v1281, 6
      %v1297 = vsel %vm591, %v1295, %v1296
      %v1298 = vrot.slane %v1296, 4
      %v1299 = vrot.slane %v1282, 6
      %v1300 = vsel %vm591, %v1298, %v1299
      %1301 = vrot.lane.b32.xlu0 %v1291, 48
      %v1302 = vpop.permute.xlu0 %1301
      %1303 = vrot.lane.b32.xlu0 %v1294, 48
      %v1304 = vpop.permute.xlu0 %1303
      %1305 = vrot.lane.b32.xlu0 %v1297, 48
      %v1306 = vpop.permute.xlu0 %1305
      %1307 = vrot.lane.b32.xlu0 %v1300, 48
      %v1308 = vpop.permute.xlu0 %1307
      %1313 = vst.msk [vmem:[#allocation4 + $0x8] sm:$0xf] %vm574, %v1302
      %1314 = vst.msk [vmem:[#allocation4 + $0x18] sm:$0xf] %vm574, %v1304
      %1315 = vst.msk [vmem:[#allocation4 + $0x28] sm:$0xf] %vm574, %v1306
      %1316 = vst.msk [vmem:[#allocation4 + $0x38] sm:$0xf] %vm574, %v1308
      %v1317 = vld [vmem:[#allocation2 + $0x20] sm:$0xf]
      %v1318 = vld [vmem:[#allocation2 + $0x24] sm:$0xf]
      %v1319 = vld [vmem:[#allocation2 + $0x28] sm:$0xf]
      %v1320 = vld [vmem:[#allocation2 + $0x2c] sm:$0xf]
      %1325 = vrot.lane.b32.xlu0 %v1317, 64
      %v1326 = vpop.permute.xlu0 %1325
      %1327 = vrot.lane.b32.xlu0 %v1318, 64
      %v1328 = vpop.permute.xlu0 %1327
      %1329 = vrot.lane.b32.xlu0 %v1319, 64
      %v1330 = vpop.permute.xlu0 %1329
      %1331 = vrot.lane.b32.xlu0 %v1320, 64
      %v1332 = vpop.permute.xlu0 %1331
      %1337 = vst.msk [vmem:[#allocation4 + $0x8] sm:$0xf] %vm617, %v1326
      %1338 = vst.msk [vmem:[#allocation4 + $0x18] sm:$0xf] %vm617, %v1328
      %1339 = vst.msk [vmem:[#allocation4 + $0x28] sm:$0xf] %vm617, %v1330
      %1340 = vst.msk [vmem:[#allocation4 + $0x38] sm:$0xf] %vm617, %v1332
      %v1341 = vld [vmem:[#allocation2 + $0x20] sm:$0xf]
      %v1342 = vld [vmem:[#allocation2 + $0x24] sm:$0xf]
      %v1343 = vld [vmem:[#allocation2 + $0x28] sm:$0xf]
      %v1344 = vld [vmem:[#allocation2 + $0x2c] sm:$0xf]
      %v1345 = vld [vmem:[#allocation2 + $0x30] sm:$0x1]
      %v1347 = vshrl.u32 %v1341, 16
      %v1349 = vrot.slane %v1347, 4
      %v1350 = vshll.u32 %v1341, 16
      %v1352 = vrot.slane %v1350, 5
      %v1353 = vor.u32 %v1349, %v1352
      %v1354 = vrot.slane %v1353, 4
      %v1356 = vshll.u32 %v1342, 16
      %v1358 = vrot.slane %v1356, 5
      %v1359 = vsel %vm404, %v1354, %v1358
      %v1360 = vshrl.u32 %v1342, 16
      %v1362 = vrot.slane %v1360, 4
      %v1363 = vor.u32 %v1362, %v1358
      %v1364 = vrot.slane %v1363, 4
      %v1366 = vshll.u32 %v1343, 16
      %v1368 = vrot.slane %v1366, 5
      %v1369 = vsel %vm404, %v1364, %v1368
      %v1370 = vshrl.u32 %v1343, 16
      %v1372 = vrot.slane %v1370, 4
      %v1373 = vor.u32 %v1372, %v1368
      %v1374 = vrot.slane %v1373, 4
      %v1376 = vshll.u32 %v1344, 16
      %v1378 = vrot.slane %v1376, 5
      %v1379 = vsel %vm404, %v1374, %v1378
      %v1380 = vshrl.u32 %v1344, 16
      %v1382 = vrot.slane %v1380, 4
      %v1383 = vor.u32 %v1382, %v1378
      %v1384 = vrot.slane %v1383, 4
      %v1386 = vshll.u32 %v1345, 16
      %v1388 = vrot.slane %v1386, 5
      %v1389 = vsel %vm404, %v1384, %v1388
      %1390 = vrot.lane.b32.xlu0 %v1359, 80
      %v1391 = vpop.permute.xlu0 %1390
      %1392 = vrot.lane.b32.xlu0 %v1369, 80
      %v1393 = vpop.permute.xlu0 %1392
      %1394 = vrot.lane.b32.xlu0 %v1379, 80
      %v1395 = vpop.permute.xlu0 %1394
      %1396 = vrot.lane.b32.xlu0 %v1389, 80
      %v1397 = vpop.permute.xlu0 %1396
      %1402 = vst.msk [vmem:[#allocation4 + $0x8] sm:$0xf] %vm642, %v1391
      %1403 = vst.msk [vmem:[#allocation4 + $0x18] sm:$0xf] %vm642, %v1393
      %1404 = vst.msk [vmem:[#allocation4 + $0x28] sm:$0xf] %vm642, %v1395
      %1405 = vst.msk [vmem:[#allocation4 + $0x38] sm:$0xf] %vm642, %v1397
      %v1406 = vld [vmem:[#allocation2 + $0x20] sm:$0xe]
      %v1407 = vld [vmem:[#allocation2 + $0x24] sm:$0xf]
      %v1408 = vld [vmem:[#allocation2 + $0x28] sm:$0xf]
      %v1409 = vld [vmem:[#allocation2 + $0x2c] sm:$0xf]
      %v1410 = vld [vmem:[#allocation2 + $0x30] sm:$0x1]
      %v1416 = vrot.slane %v1406, 5
      %v1417 = vrot.slane %v1416, 4
      %v1418 = vrot.slane %v1407, 5
      %v1419 = vsel %vm379, %v1417, %v1418
      %v1420 = vrot.slane %v1418, 4
      %v1421 = vrot.slane %v1408, 5
      %v1422 = vsel %vm379, %v1420, %v1421
      %v1423 = vrot.slane %v1421, 4
      %v1424 = vrot.slane %v1409, 5
      %v1425 = vsel %vm379, %v1423, %v1424
      %v1426 = vrot.slane %v1424, 4
      %v1427 = vrot.slane %v1410, 5
      %v1428 = vsel %vm379, %v1426, %v1427
      %1429 = vrot.lane.b32.xlu0 %v1419, 96
      %v1430 = vpop.permute.xlu0 %1429
      %1431 = vrot.lane.b32.xlu0 %v1422, 96
      %v1432 = vpop.permute.xlu0 %1431
      %1433 = vrot.lane.b32.xlu0 %v1425, 96
      %v1434 = vpop.permute.xlu0 %1433
      %1435 = vrot.lane.b32.xlu0 %v1428, 96
      %v1436 = vpop.permute.xlu0 %1435
      %1441 = vst.msk [vmem:[#allocation4 + $0x8] sm:$0xf] %vm708, %v1430
      %1442 = vst.msk [vmem:[#allocation4 + $0x18] sm:$0xf] %vm708, %v1432
      %1443 = vst.msk [vmem:[#allocation4 + $0x28] sm:$0xf] %vm708, %v1434
      %1444 = vst.msk [vmem:[#allocation4 + $0x38] sm:$0xf] %vm708, %v1436
      %v1445 = vld [vmem:[#allocation2 + $0x20] sm:$0xe]
      %v1446 = vld [vmem:[#allocation2 + $0x24] sm:$0xf]
      %v1447 = vld [vmem:[#allocation2 + $0x28] sm:$0xf]
      %v1448 = vld [vmem:[#allocation2 + $0x2c] sm:$0xf]
      %v1449 = vld [vmem:[#allocation2 + $0x30] sm:$0x3]
      %v1451 = vshrl.u32 %v1445, 16
      %v1453 = vrot.slane %v1451, 5
      %v1454 = vshll.u32 %v1445, 16
      %v1456 = vrot.slane %v1454, 6
      %v1457 = vor.u32 %v1453, %v1456
      %v1458 = vrot.slane %v1457, 4
      %v1460 = vshrl.u32 %v1446, 16
      %v1462 = vrot.slane %v1460, 5
      %v1463 = vshll.u32 %v1446, 16
      %v1465 = vrot.slane %v1463, 6
      %v1466 = vor.u32 %v1462, %v1465
      %v1467 = vsel %vm513, %v1458, %v1466
      %v1468 = vrot.slane %v1466, 4
      %v1470 = vshrl.u32 %v1447, 16
      %v1472 = vrot.slane %v1470, 5
      %v1473 = vshll.u32 %v1447, 16
      %v1475 = vrot.slane %v1473, 6
      %v1476 = vor.u32 %v1472, %v1475
      %v1477 = vsel %vm513, %v1468, %v1476
      %v1478 = vrot.slane %v1476, 4
      %v1480 = vshrl.u32 %v1448, 16
      %v1482 = vrot.slane %v1480, 5
      %v1483 = vshll.u32 %v1448, 16
      %v1485 = vrot.slane %v1483, 6
      %v1486 = vor.u32 %v1482, %v1485
      %v1487 = vsel %vm513, %v1478, %v1486
      %v1488 = vrot.slane %v1486, 4
      %v1490 = vshrl.u32 %v1449, 16
      %v1492 = vrot.slane %v1490, 5
      %v1493 = vshll.u32 %v1449, 16
      %v1495 = vrot.slane %v1493, 6
      %v1496 = vor.u32 %v1492, %v1495
      %v1497 = vsel %vm513, %v1488, %v1496
      %1498 = vrot.lane.b32.xlu0 %v1467, 112
      %v1499 = vpop.permute.xlu0 %1498
      %1500 = vrot.lane.b32.xlu0 %v1477, 112
      %v1501 = vpop.permute.xlu0 %1500
      %1502 = vrot.lane.b32.xlu0 %v1487, 112
      %v1503 = vpop.permute.xlu0 %1502
      %1504 = vrot.lane.b32.xlu0 %v1497, 112
      %v1505 = vpop.permute.xlu0 %1504
      %1510 = vst.msk [vmem:[#allocation4 + $0x8] sm:$0xf] %vm748, %v1499
      %1511 = vst.msk [vmem:[#allocation4 + $0x18] sm:$0xf] %vm748, %v1501
      %1512 = vst.msk [vmem:[#allocation4 + $0x28] sm:$0xf] %vm748, %v1503
      %1513 = vst.msk [vmem:[#allocation4 + $0x38] sm:$0xf] %vm748, %v1505
      %v1514 = vld [vmem:[#allocation2 + $0x20] sm:$0xc]
      %v1515 = vld [vmem:[#allocation2 + $0x24] sm:$0xf]
      %v1516 = vld [vmem:[#allocation2 + $0x28] sm:$0xf]
      %v1517 = vld [vmem:[#allocation2 + $0x2c] sm:$0xf]
      %v1518 = vld [vmem:[#allocation2 + $0x30] sm:$0x3]
      %v1524 = vrot.slane %v1514, 6
      %v1525 = vrot.slane %v1524, 4
      %v1526 = vrot.slane %v1515, 6
      %v1527 = vsel %vm591, %v1525, %v1526
      %v1528 = vrot.slane %v1526, 4
      %v1529 = vrot.slane %v1516, 6
      %v1530 = vsel %vm591, %v1528, %v1529
      %v1531 = vrot.slane %v1529, 4
      %v1532 = vrot.slane %v1517, 6
      %v1533 = vsel %vm591, %v1531, %v1532
      %v1534 = vrot.slane %v1532, 4
      %v1535 = vrot.slane %v1518, 6
      %v1536 = vsel %vm591, %v1534, %v1535
      %1541 = vst.msk [vmem:[#allocation4 + $0xc] sm:$0xf] %vm341, %v1527
      %1542 = vst.msk [vmem:[#allocation4 + $0x1c] sm:$0xf] %vm341, %v1530
      %1543 = vst.msk [vmem:[#allocation4 + $0x2c] sm:$0xf] %vm341, %v1533
      %1544 = vst.msk [vmem:[#allocation4 + $0x3c] sm:$0xf] %vm341, %v1536
      %v1545 = vld [vmem:[#allocation4] sm:$0xff]
      %v1546 = vld [vmem:[#allocation4 + $0x8] sm:$0xff]
      %v1547 = vld [vmem:[#allocation4 + $0x10] sm:$0xff]
      %v1548 = vld [vmem:[#allocation4 + $0x18] sm:$0xff]
      %v1549 = vld [vmem:[#allocation4 + $0x20] sm:$0xff]
      %v1550 = vld [vmem:[#allocation4 + $0x28] sm:$0xff]
      %v1551 = vld [vmem:[#allocation4 + $0x30] sm:$0xff]
      %v1552 = vld [vmem:[#allocation4 + $0x38] sm:$0xff]
      %v1553 = vld [vmem:[%s2] sm:$0xf]
      %v1554 = vld [vmem:[%s2 + $0x4] sm:$0xf]
      %v1555 = vld [vmem:[%s2 + $0x8] sm:$0xf]
      %v1556 = vld [vmem:[%s2 + $0xc] sm:$0xf]
      %v1557 = vld [vmem:[%s2 + $0x10] sm:$0xf]
      %v1558 = vld [vmem:[%s2 + $0x14] sm:$0xf]
      %v1559 = vld [vmem:[%s2 + $0x18] sm:$0xf]
      %v1560 = vld [vmem:[%s2 + $0x1c] sm:$0xf]
      %v1561 = vld [vmem:[%s2 + $0x20] sm:$0xf]
      %v1562 = vld [vmem:[%s2 + $0x24] sm:$0xf]
      %v1563 = vld [vmem:[%s2 + $0x28] sm:$0xf]
      %v1564 = vld [vmem:[%s2 + $0x2c] sm:$0xf]
      %v1565 = vld [vmem:[%s2 + $0x30] sm:$0xf]
      %v1566 = vld [vmem:[%s2 + $0x34] sm:$0xf]
      %v1567 = vld [vmem:[%s2 + $0x38] sm:$0xf]
      %v1568 = vld [vmem:[%s2 + $0x3c] sm:$0xf]
      %v1569 = vld [vmem:[%s2 + $0x40] sm:$0xf]
      %v1570 = vld [vmem:[%s2 + $0x44] sm:$0xf]
      %v1571 = vld [vmem:[%s2 + $0x48] sm:$0xf]
      %v1572 = vld [vmem:[%s2 + $0x4c] sm:$0xf]
      %v1573 = vld [vmem:[%s2 + $0x50] sm:$0xf]
      %v1574 = vld [vmem:[%s2 + $0x54] sm:$0xf]
      %v1575 = vld [vmem:[%s2 + $0x58] sm:$0xf]
      %v1576 = vld [vmem:[%s2 + $0x5c] sm:$0xf]
      %v1577 = vld [vmem:[%s2 + $0x60] sm:$0xf]
      %v1578 = vld [vmem:[%s2 + $0x64] sm:$0xf]
      %v1579 = vld [vmem:[%s2 + $0x68] sm:$0xf]
      %v1580 = vld [vmem:[%s2 + $0x6c] sm:$0xf]
      %v1581 = vld [vmem:[%s2 + $0x70] sm:$0xf]
      %v1582 = vld [vmem:[%s2 + $0x74] sm:$0xf]
      %v1583 = vld [vmem:[%s2 + $0x78] sm:$0xf]
      %v1584 = vld [vmem:[%s2 + $0x7c] sm:$0xf]
      %v1585 = vld [vmem:[%s2 + $0x80] sm:$0xf]
      %v1586 = vld [vmem:[%s2 + $0x84] sm:$0xf]
      %v1587 = vld [vmem:[%s2 + $0x88] sm:$0xf]
      %v1588 = vld [vmem:[%s2 + $0x8c] sm:$0xf]
      %v1589 = vld [vmem:[%s2 + $0x90] sm:$0xf]
      %v1590 = vld [vmem:[%s2 + $0x94] sm:$0xf]
      %v1591 = vld [vmem:[%s2 + $0x98] sm:$0xf]
      %v1592 = vld [vmem:[%s2 + $0x9c] sm:$0xf]
      %v1593 = vld [vmem:[%s2 + $0xa0] sm:$0xf]
      %v1594 = vld [vmem:[%s2 + $0xa4] sm:$0xf]
      %v1595 = vld [vmem:[%s2 + $0xa8] sm:$0xf]
      %v1596 = vld [vmem:[%s2 + $0xac] sm:$0xf]
      %v1597 = vld [vmem:[%s2 + $0xb0] sm:$0xf]
      %v1598 = vld [vmem:[%s2 + $0xb4] sm:$0xf]
      %v1599 = vld [vmem:[%s2 + $0xb8] sm:$0xf]
      %v1600 = vld [vmem:[%s2 + $0xbc] sm:$0xf]
      %v1601 = vld [vmem:[%s2 + $0xc0] sm:$0xf]
      %v1602 = vld [vmem:[%s2 + $0xc4] sm:$0xf]
      %v1603 = vld [vmem:[%s3] sm:$0x1]
      %v1605 = vlaneseq
      %v1606 = vshrl.u32 %v1605, 7
      %v1607 = vsub.s32 0, %v1606
      %v1608 = vrot.slane %v1603, %v1607
      %v1618 = vunpack.c.l.b16 %v1545
      %v1619 = vunpack.c.h.b16 %v1545
      %v1620 = vunpack.c.l.b16 %v1546
      %v1621 = vunpack.c.h.b16 %v1546
      %v1622 = vunpack.c.l.b16 %v1547
      %v1623 = vunpack.c.h.b16 %v1547
      %v1624 = vunpack.c.l.b16 %v1548
      %v1625 = vunpack.c.h.b16 %v1548
      %v1626 = vunpack.c.l.b16 %v1549
      %v1627 = vunpack.c.h.b16 %v1549
      %v1628 = vunpack.c.l.b16 %v1550
      %v1629 = vunpack.c.h.b16 %v1550
      %v1630 = vunpack.c.l.b16 %v1551
      %v1631 = vunpack.c.h.b16 %v1551
      %v1632 = vunpack.c.l.b16 %v1552
      %v1633 = vunpack.c.h.b16 %v1552
      %v1634 = vpack.c.b16 %v1622, %v1618
      %v1635 = vpack.c.b16 %v1623, %v1619
      %v1636 = vpack.c.b16 %v1624, %v1620
      %v1637 = vpack.c.b16 %v1625, %v1621
      %v1638 = vpack.c.b16 %v1630, %v1626
      %v1639 = vpack.c.b16 %v1631, %v1627
      %v1640 = vpack.c.b16 %v1632, %v1628
      %v1641 = vpack.c.b16 %v1633, %v1629
      %v1698 = vunpack.c.l.b16 %v1553
      %v1699 = vunpack.c.l.b16 %v1554
      %v1700 = vunpack.c.l.b16 %v1555
      %v1701 = vunpack.c.l.b16 %v1556
      %v1702 = vunpack.c.l.b16 %v1557
      %v1703 = vunpack.c.l.b16 %v1558
      %v1704 = vunpack.c.l.b16 %v1559
      %v1705 = vunpack.c.l.b16 %v1560
      %v1706 = vunpack.c.l.b16 %v1561
      %v1707 = vunpack.c.l.b16 %v1562
      %v1708 = vunpack.c.l.b16 %v1563
      %v1709 = vunpack.c.l.b16 %v1564
      %v1710 = vunpack.c.l.b16 %v1565
      %v1711 = vunpack.c.l.b16 %v1566
      %v1712 = vunpack.c.l.b16 %v1567
      %v1713 = vunpack.c.l.b16 %v1568
      %v1714 = vunpack.c.l.b16 %v1569
      %v1715 = vunpack.c.l.b16 %v1570
      %v1716 = vunpack.c.l.b16 %v1571
      %v1717 = vunpack.c.l.b16 %v1572
      %v1718 = vunpack.c.l.b16 %v1573
      %v1719 = vunpack.c.l.b16 %v1574
      %v1720 = vunpack.c.l.b16 %v1575
      %v1721 = vunpack.c.l.b16 %v1576
      %v1722 = vunpack.c.l.b16 %v1577
      %v1723 = vunpack.c.l.b16 %v1578
      %v1724 = vunpack.c.l.b16 %v1579
      %v1725 = vunpack.c.l.b16 %v1580
      %v1726 = vunpack.c.l.b16 %v1581
      %v1727 = vunpack.c.l.b16 %v1582
      %v1728 = vunpack.c.l.b16 %v1583
      %v1729 = vunpack.c.l.b16 %v1584
      %v1730 = vunpack.c.l.b16 %v1585
      %v1731 = vunpack.c.l.b16 %v1586
      %v1732 = vunpack.c.l.b16 %v1587
      %v1733 = vunpack.c.l.b16 %v1588
      %v1734 = vunpack.c.l.b16 %v1589
      %v1735 = vunpack.c.l.b16 %v1590
      %v1736 = vunpack.c.l.b16 %v1591
      %v1737 = vunpack.c.l.b16 %v1592
      %v1738 = vunpack.c.l.b16 %v1593
      %v1739 = vunpack.c.l.b16 %v1594
      %v1740 = vunpack.c.l.b16 %v1595
      %v1741 = vunpack.c.l.b16 %v1596
      %v1742 = vunpack.c.l.b16 %v1597
      %v1743 = vunpack.c.l.b16 %v1598
      %v1744 = vunpack.c.l.b16 %v1599
      %v1745 = vunpack.c.l.b16 %v1600
      %v1746 = vunpack.c.l.b16 %v1601
      %v1747 = vunpack.c.l.b16 %v1602
      %v1748 = vpack.c.b16 %v1699, %v1698
      %v1749 = vpack.c.b16 %v1701, %v1700
      %v1750 = vpack.c.b16 %v1703, %v1702
      %v1751 = vpack.c.b16 %v1705, %v1704
      %v1752 = vpack.c.b16 %v1707, %v1706
      %v1753 = vpack.c.b16 %v1709, %v1708
      %v1754 = vpack.c.b16 %v1711, %v1710
      %v1755 = vpack.c.b16 %v1713, %v1712
      %v1756 = vpack.c.b16 %v1715, %v1714
      %v1757 = vpack.c.b16 %v1717, %v1716
      %v1758 = vpack.c.b16 %v1719, %v1718
      %v1759 = vpack.c.b16 %v1721, %v1720
      %v1760 = vpack.c.b16 %v1723, %v1722
      %v1761 = vpack.c.b16 %v1725, %v1724
      %v1762 = vpack.c.b16 %v1727, %v1726
      %v1763 = vpack.c.b16 %v1729, %v1728
      %v1764 = vpack.c.b16 %v1731, %v1730
      %v1765 = vpack.c.b16 %v1733, %v1732
      %v1766 = vpack.c.b16 %v1735, %v1734
      %v1767 = vpack.c.b16 %v1737, %v1736
      %v1768 = vpack.c.b16 %v1739, %v1738
      %v1769 = vpack.c.b16 %v1741, %v1740
      %v1770 = vpack.c.b16 %v1743, %v1742
      %v1771 = vpack.c.b16 %v1745, %v1744
      %v1772 = vpack.c.b16 %v1747, %v1746
      %vm1798 = vcmask 130048
      %v1800 = vsel %vm1798, %v1637, 0
      %v1803 = vsel %vm1798, %v1641, 0
      %1805 = vmatprep.subr.bf16.mxu0 0
      %1806 = vmatpush1.bf16.msra.mxu0 %v1755
      %1807 = vmatprep.subr.bf16.mxu0 0
      %1808 = vmatpush1.bf16.msra.mxu0 %v1754
      %1809 = vmatprep.subr.bf16.mxu0 0
      %1810 = vmatpush1.bf16.msra.mxu0 %v1753
      %1811 = vmatprep.subr.bf16.mxu0 0
      %1812 = vmatpush1.bf16.msra.mxu0 %v1752
      %1813 = vmatprep.subr.bf16.mxu0 0
      %1814 = vmatpush1.bf16.msra.mxu0 %v1751
      %1815 = vmatprep.subr.bf16.mxu0 0
      %1816 = vmatpush1.bf16.msra.mxu0 %v1750
      %1817 = vmatprep.subr.bf16.mxu0 0
      %1818 = vmatpush1.bf16.msra.mxu0 %v1749
      %1819 = vmatprep.subr.bf16.mxu0 0
      %1820 = vmatpush1.bf16.msra.mxu0 %v1748
      %1821 = vmatprep.subr.bf16.mxu0 0
      %1822 = vmatpush2.bf16.msra.mxu0 %v1763
      %1823 = vmatprep.subr.bf16.mxu0 0
      %1824 = vmatpush2.bf16.msra.mxu0 %v1762
      %1825 = vmatprep.subr.bf16.mxu0 0
      %1826 = vmatpush2.bf16.msra.mxu0 %v1761
      %1827 = vmatprep.subr.bf16.mxu0 0
      %1828 = vmatpush2.bf16.msra.mxu0 %v1760
      %1829 = vmatprep.subr.bf16.mxu0 0
      %1830 = vmatpush2.bf16.msra.mxu0 %v1759
      %1831 = vmatprep.subr.bf16.mxu0 0
      %1832 = vmatpush2.bf16.msra.mxu0 %v1758
      %1833 = vmatprep.subr.bf16.mxu0 0
      %1834 = vmatpush2.bf16.msra.mxu0 %v1757
      %1835 = vmatprep.subr.bf16.mxu0 0
      %1836 = vmatpush2.bf16.msra.mxu0 %v1756
      %1837 = vmatprep.mubr.bf16.mxu0 %v1635
      %1838 = vmatmul.mubr.bf16.gmra.mxu0 %v1634
      %v1839 = vpop.f32.mrf.mxu0
      %v1840 = vadd.f32 %v1608, %v1839
      %v1841 = vpop.f32.mrf.mxu0
      %v1842 = vpop.f32.mrf.mxu0
      %v1843 = vadd.f32 %v1608, %v1842
      %v1844 = vpop.f32.mrf.mxu0
      %1845 = vmatprep.mubr.bf16.mxu0 %v1639
      %1846 = vmatmul.mubr.bf16.gmra.mxu0 %v1638
      %v1847 = vpop.f32.mrf.mxu0
      %v1848 = vadd.f32 %v1608, %v1847
      %v1849 = vpop.f32.mrf.mxu0
      %v1850 = vpop.f32.mrf.mxu0
      %v1851 = vadd.f32 %v1608, %v1850
      %v1852 = vpop.f32.mrf.mxu0
      %1853 = vdwg.mxu0
      %1854 = vmatprep.subr.bf16.mxu0 0
      %1855 = vmatpush1.bf16.msra.mxu0 %v1771
      %1856 = vmatprep.subr.bf16.mxu0 0
      %1857 = vmatpush1.bf16.msra.mxu0 %v1770
      %1858 = vmatprep.subr.bf16.mxu0 0
      %1859 = vmatpush1.bf16.msra.mxu0 %v1769
      %1860 = vmatprep.subr.bf16.mxu0 0
      %1861 = vmatpush1.bf16.msra.mxu0 %v1768
      %1862 = vmatprep.subr.bf16.mxu0 0
      %1863 = vmatpush1.bf16.msra.mxu0 %v1767
      %1864 = vmatprep.subr.bf16.mxu0 0
      %1865 = vmatpush1.bf16.msra.mxu0 %v1766
      %1866 = vmatprep.subr.bf16.mxu0 0
      %1867 = vmatpush1.bf16.msra.mxu0 %v1765
      %1868 = vmatprep.subr.bf16.mxu0 0
      %1869 = vmatpush1.bf16.msra.mxu0 %v1764
      %1870 = vmatprep.subr.bf16.mxu0 0
      %1871 = vmatpush2.bf16.msra.mxu0 0
      %1872 = vmatprep.subr.bf16.mxu0 0
      %1873 = vmatpush2.bf16.msra.mxu0 0
      %1874 = vmatprep.subr.bf16.mxu0 0
      %1875 = vmatpush2.bf16.msra.mxu0 0
      %1876 = vmatprep.subr.bf16.mxu0 0
      %1877 = vmatpush2.bf16.msra.mxu0 0
      %1878 = vmatprep.subr.bf16.mxu0 0
      %1879 = vmatpush2.bf16.msra.mxu0 0
      %1880 = vmatprep.subr.bf16.mxu0 0
      %1881 = vmatpush2.bf16.msra.mxu0 0
      %1882 = vmatprep.subr.bf16.mxu0 0
      %1883 = vmatpush2.bf16.msra.mxu0 0
      %1884 = vmatprep.subr.bf16.mxu0 0
      %1885 = vmatpush2.bf16.msra.mxu0 %v1772
      %1886 = vmatprep.mubr.bf16.mxu0 %v1800
      %1887 = vmatmul.mubr.bf16.gmra.mxu0 %v1636
      %v1888 = vpop.f32.mrf.mxu0
      %v1889 = vadd.f32 %v1840, %v1888
      %v1890 = vpop.f32.mrf.mxu0
      %v1891 = vpop.f32.mrf.mxu0
      %v1892 = vadd.f32 %v1843, %v1891
      %v1893 = vpop.f32.mrf.mxu0
      %1894 = vmatprep.mubr.bf16.mxu0 %v1803
      %1895 = vmatmul.mubr.bf16.gmra.mxu0 %v1640
      %v1896 = vpop.f32.mrf.mxu0
      %v1897 = vadd.f32 %v1848, %v1896
      %v1898 = vpop.f32.mrf.mxu0
      %v1899 = vpop.f32.mrf.mxu0
      %v1900 = vadd.f32 %v1851, %v1899
      %v1901 = vpop.f32.mrf.mxu0
      %1902 = vdwg.mxu0
      %v1903 = vmul.f32 %v1889, 0.70710677
      %v1904 = vmul.f32 %v1892, 0.70710677
      %v1905 = vmul.f32 %v1897, 0.70710677
      %v1906 = vmul.f32 %v1900, 0.70710677
      %v1907 = vand.u32 2147483647, %v1903
      %v1908 = vand.u32 2147483647, %v1904
      %v1909 = vand.u32 2147483647, %v1905
      %v1910 = vand.u32 2147483647, %v1906
      %v1911 = vmul.f32 %v1907, 0.3275911
      %v1912 = vmul.f32 %v1908, 0.3275911
      %v1913 = vmul.f32 %v1909, 0.3275911
      %v1914 = vmul.f32 %v1910, 0.3275911
      %v1915 = vadd.f32 %v1911, 1.0
      %v1916 = vadd.f32 %v1912, 1.0
      %v1917 = vadd.f32 %v1913, 1.0
      %v1918 = vadd.f32 %v1914, 1.0
      %v1919 = vrcp.pop %v1915
      %v1920 = vrcp.pop %v1916
      %v1921 = vrcp.pop %v1917
      %v1922 = vrcp.pop %v1918
      %v1923 = vmul.f32 %v1919, 1.0614054
      %v1924 = vmul.f32 %v1920, 1.0614054
      %v1925 = vmul.f32 %v1921, 1.0614054
      %v1926 = vmul.f32 %v1922, 1.0614054
      %v1927 = vadd.f32 %v1923, -1.4531521
      %v1928 = vadd.f32 %v1924, -1.4531521
      %v1929 = vadd.f32 %v1925, -1.4531521
      %v1930 = vadd.f32 %v1926, -1.4531521
      %v1931 = vmul.f32 %v1919, %v1927
      %v1932 = vmul.f32 %v1920, %v1928
      %v1933 = vmul.f32 %v1921, %v1929
      %v1934 = vmul.f32 %v1922, %v1930
      %v1935 = vadd.f32 %v1931, 1.4214138
      %v1936 = vadd.f32 %v1932, 1.4214138
      %v1937 = vadd.f32 %v1933, 1.4214138
      %v1938 = vadd.f32 %v1934, 1.4214138
      %v1939 = vmul.f32 %v1919, %v1935
      %v1940 = vmul.f32 %v1920, %v1936
      %v1941 = vmul.f32 %v1921, %v1937
      %v1942 = vmul.f32 %v1922, %v1938
      %v1943 = vadd.f32 %v1939, -0.28449672
      %v1944 = vadd.f32 %v1940, -0.28449672
      %v1945 = vadd.f32 %v1941, -0.28449672
      %v1946 = vadd.f32 %v1942, -0.28449672
      %v1947 = vmul.f32 %v1919, %v1943
      %v1948 = vmul.f32 %v1920, %v1944
      %v1949 = vmul.f32 %v1921, %v1945
      %v1950 = vmul.f32 %v1922, %v1946
      %v1951 = vadd.f32 %v1947, 0.2548296
      %v1952 = vadd.f32 %v1948, 0.2548296
      %v1953 = vadd.f32 %v1949, 0.2548296
      %v1954 = vadd.f32 %v1950, 0.2548296
      %v1955 = vmul.f32 %v1919, %v1951
      %v1956 = vmul.f32 %v1920, %v1952
      %v1957 = vmul.f32 %v1921, %v1953
      %v1958 = vmul.f32 %v1922, %v1954
      %v1959 = vsub.f32 0.0, %v1907
      %v1960 = vsub.f32 0.0, %v1908
      %v1961 = vsub.f32 0.0, %v1909
      %v1962 = vsub.f32 0.0, %v1910
      %v1963 = vmul.f32 %v1959, %v1907
      %v1964 = vmul.f32 %v1960, %v1908
      %v1965 = vmul.f32 %v1961, %v1909
      %v1966 = vmul.f32 %v1962, %v1910
      %v1967 = vmul.f32 %v1963, 1.442695
      %v1968 = vpow.pop %v1967
      %v1969 = vmul.f32 %v1964, 1.442695
      %v1970 = vpow.pop %v1969
      %v1971 = vmul.f32 %v1965, 1.442695
      %v1972 = vpow.pop %v1971
      %v1973 = vmul.f32 %v1966, 1.442695
      %v1974 = vpow.pop %v1973
      %v1975 = vmul.f32 %v1955, %v1968
      %v1976 = vmul.f32 %v1956, %v1970
      %v1977 = vmul.f32 %v1957, %v1972
      %v1978 = vmul.f32 %v1958, %v1974
      %v1979 = vsub.f32 1.0, %v1975
      %v1980 = vsub.f32 1.0, %v1976
      %v1981 = vsub.f32 1.0, %v1977
      %v1982 = vsub.f32 1.0, %v1978
      %vm1983 = vcmp.ge.f32.partialorder %v1903, 0.0
      %vm1984 = vcmp.ge.f32.partialorder %v1904, 0.0
      %vm1985 = vcmp.ge.f32.partialorder %v1905, 0.0
      %vm1986 = vcmp.ge.f32.partialorder %v1906, 0.0
      %v1987 = vsub.f32 0.0, %v1979
      %v1988 = vsub.f32 0.0, %v1980
      %v1989 = vsub.f32 0.0, %v1981
      %v1990 = vsub.f32 0.0, %v1982
      %v1991 = vsel %vm1983, %v1979, %v1987
      %v1992 = vsel %vm1984, %v1980, %v1988
      %v1993 = vsel %vm1985, %v1981, %v1989
      %v1994 = vsel %vm1986, %v1982, %v1990
      %v1995 = vmul.f32 %v1889, 0.5
      %v1996 = vmul.f32 %v1892, 0.5
      %v1997 = vmul.f32 %v1897, 0.5
      %v1998 = vmul.f32 %v1900, 0.5
      %v1999 = vadd.f32 %v1991, 1.0
      %v2000 = vadd.f32 %v1992, 1.0
      %v2001 = vadd.f32 %v1993, 1.0
      %v2002 = vadd.f32 %v1994, 1.0
      %v2003 = vmul.f32 %v1995, %v1999
      %v2004 = vmul.f32 %v1996, %v2000
      %v2005 = vmul.f32 %v1997, %v2001
      %v2006 = vmul.f32 %v1998, %v2002
      %v2007 = vld [vmem:[%s7] sm:$0xff]
      %v2008 = vld [vmem:[%s7 + $0x8] sm:$0xff]
      %v2009 = vld [vmem:[%s7 + $0x10] sm:$0xff]
      %v2010 = vld [vmem:[%s7 + $0x18] sm:$0xff]
      %2012 = vset.pattern.permute.xlu0 0
      %2013 = vperm.xlu0 %2012, %v2007
      %v2014 = vpop.permute.xlu0 %2013
      %2017 = vset.pattern.permute.xlu0 0
      %2018 = vperm.xlu0 %2017, %v2008
      %v2019 = vpop.permute.xlu0 %2018
      %2022 = vset.pattern.permute.xlu0 0
      %2023 = vperm.xlu0 %2022, %v2009
      %v2024 = vpop.permute.xlu0 %2023
      %2027 = vset.pattern.permute.xlu0 0
      %2028 = vperm.xlu0 %2027, %v2010
      %v2029 = vpop.permute.xlu0 %2028
      %v2031 = vmul.f32 %v2003, %v2014
      %v2032 = vmul.f32 %v2004, %v2019
      %v2033 = vmul.f32 %v2005, %v2024
      %v2034 = vmul.f32 %v2006, %v2029
      %vm2035 = vcmask 257024
      %2036 = vst.msk [vmem:[#allocation3] sm:$0xf] %vm2035, 0
      %2037 = vst.msk [vmem:[#allocation3 + $0x4] sm:$0xf] %vm2035, 0
      %2038 = vst.msk [vmem:[#allocation3 + $0x8] sm:$0xf] %vm2035, 0
      %2039 = vst.msk [vmem:[#allocation3 + $0xc] sm:$0xf] %vm2035, 0
      %vm2040 = vcmask 253952
      %2041 = vst.msk [vmem:[#allocation3 + $0x10] sm:$0x1] %vm2040, 0
      %vm2042 = vcmask 257025
      %2043 = vst.msk [vmem:[#allocation3 + $0x20] sm:$0xe] %vm2042, 0
      %2044 = vst.msk [vmem:[#allocation3 + $0x24] sm:$0xf] %vm2035, 0
      %2045 = vst.msk [vmem:[#allocation3 + $0x28] sm:$0xf] %vm2035, 0
      %2046 = vst.msk [vmem:[#allocation3 + $0x2c] sm:$0xf] %vm2035, 0
      %2047 = vst.msk [vmem:[#allocation3 + $0x30] sm:$0xf] %vm2035, 0
      %2048 = vst.msk [vmem:[#allocation3 + $0x34] sm:$0xf] %vm2035, 0
      %v2049 = vpack.c.bf16 %v2032, %v2031
      %v2050 = vpack.c.bf16 %v2034, %v2033
      %v2053 = vunpack.c.l.b16 %v2049
      %v2054 = vunpack.c.h.b16 %v2049
      %v2055 = vunpack.c.l.b16 %v2050
      %v2056 = vunpack.c.h.b16 %v2050
      %v2057 = vpack.c.b16 %v2053, %v2053
      %v2058 = vpack.c.b16 %v2054, %v2054
      %v2059 = vpack.c.b16 %v2055, %v2055
      %v2060 = vpack.c.b16 %v2056, %v2056
      %v2061 = vrot.slane %v2057, 7
      %v2062 = vrot.slane %v2061, 4
      %v2063 = vrot.slane %v2058, 7
      %v2064 = vsel %vm362, %v2062, %v2063
      %v2065 = vrot.slane %v2063, 4
      %v2066 = vrot.slane %v2059, 7
      %v2067 = vsel %vm362, %v2065, %v2066
      %v2068 = vrot.slane %v2066, 4
      %v2069 = vrot.slane %v2060, 7
      %v2070 = vsel %vm362, %v2068, %v2069
      %v2071 = vrot.slane %v2069, 4
      %2077 = vst.msk [vmem:[#allocation3 + $0x10] sm:$0xe] %vm2042, %v2061
      %2078 = vst.msk [vmem:[#allocation3 + $0x14] sm:$0xf] %vm2035, %v2064
      %2079 = vst.msk [vmem:[#allocation3 + $0x18] sm:$0xf] %vm2035, %v2067
      %2080 = vst.msk [vmem:[#allocation3 + $0x1c] sm:$0xf] %vm2035, %v2070
      %2081 = vst.msk [vmem:[#allocation3 + $0x20] sm:$0x1] %vm2040, %v2071
      %v2082 = vld [vmem:[#allocation3] sm:$0xf]
      %v2083 = vld [vmem:[#allocation3 + $0x4] sm:$0xf]
      %v2084 = vld [vmem:[#allocation3 + $0x8] sm:$0xf]
      %v2085 = vld [vmem:[#allocation3 + $0xc] sm:$0xf]
      %2086 = vst.msk [vmem:[#allocation5] sm:$0xf] %vm2035, %v2082
      %2087 = vst.msk [vmem:[#allocation5 + $0x1c] sm:$0xf] %vm2035, %v2083
      %2088 = vst.msk [vmem:[#allocation5 + $0x38] sm:$0xf] %vm2035, %v2084
      %2089 = vst.msk [vmem:[#allocation5 + $0x54] sm:$0xf] %vm2035, %v2085
      %v2090 = vld [vmem:[#allocation3] sm:$0xf]
      %v2091 = vld [vmem:[#allocation3 + $0x4] sm:$0xf]
      %v2092 = vld [vmem:[#allocation3 + $0x8] sm:$0xf]
      %v2093 = vld [vmem:[#allocation3 + $0xc] sm:$0xf]
      %v2094 = vld [vmem:[#allocation3 + $0x10] sm:$0x1]
      %v2096 = vshrl.u32 %v2090, 16
      %v2098 = vrot.slane %v2096, 4
      %v2099 = vshll.u32 %v2090, 16
      %v2101 = vrot.slane %v2099, 5
      %v2102 = vor.u32 %v2098, %v2101
      %v2103 = vrot.slane %v2102, 4
      %v2105 = vshll.u32 %v2091, 16
      %v2107 = vrot.slane %v2105, 5
      %v2108 = vsel %vm404, %v2103, %v2107
      %v2109 = vshrl.u32 %v2091, 16
      %v2111 = vrot.slane %v2109, 4
      %v2112 = vor.u32 %v2111, %v2107
      %v2113 = vrot.slane %v2112, 4
      %v2115 = vshll.u32 %v2092, 16
      %v2117 = vrot.slane %v2115, 5
      %v2118 = vsel %vm404, %v2113, %v2117
      %v2119 = vshrl.u32 %v2092, 16
      %v2121 = vrot.slane %v2119, 4
      %v2122 = vor.u32 %v2121, %v2117
      %v2123 = vrot.slane %v2122, 4
      %v2125 = vshll.u32 %v2093, 16
      %v2127 = vrot.slane %v2125, 5
      %v2128 = vsel %vm404, %v2123, %v2127
      %v2129 = vshrl.u32 %v2093, 16
      %v2131 = vrot.slane %v2129, 4
      %v2132 = vor.u32 %v2131, %v2127
      %v2133 = vrot.slane %v2132, 4
      %v2135 = vshll.u32 %v2094, 16
      %v2137 = vrot.slane %v2135, 5
      %v2138 = vsel %vm404, %v2133, %v2137
      %2139 = vrot.lane.b32.xlu0 %v2108, 32
      %v2140 = vpop.permute.xlu0 %2139
      %2141 = vrot.lane.b32.xlu0 %v2118, 32
      %v2142 = vpop.permute.xlu0 %2141
      %2143 = vrot.lane.b32.xlu0 %v2128, 32
      %v2144 = vpop.permute.xlu0 %2143
      %2145 = vrot.lane.b32.xlu0 %v2138, 32
      %v2146 = vpop.permute.xlu0 %2145
      %vm2151 = vcmask 519424
      %2152 = vst.msk [vmem:[#allocation5] sm:$0xf] %vm2151, %v2140
      %2153 = vst.msk [vmem:[#allocation5 + $0x1c] sm:$0xf] %vm2151, %v2142
      %2154 = vst.msk [vmem:[#allocation5 + $0x38] sm:$0xf] %vm2151, %v2144
      %2155 = vst.msk [vmem:[#allocation5 + $0x54] sm:$0xf] %vm2151, %v2146
      %v2156 = vld [vmem:[#allocation3] sm:$0xe]
      %v2157 = vld [vmem:[#allocation3 + $0x4] sm:$0xf]
      %v2158 = vld [vmem:[#allocation3 + $0x8] sm:$0xf]
      %v2159 = vld [vmem:[#allocation3 + $0xc] sm:$0xf]
      %v2160 = vld [vmem:[#allocation3 + $0x10] sm:$0x1]
      %v2166 = vrot.slane %v2156, 5
      %v2167 = vrot.slane %v2166, 4
      %v2168 = vrot.slane %v2157, 5
      %v2169 = vsel %vm379, %v2167, %v2168
      %v2170 = vrot.slane %v2168, 4
      %v2171 = vrot.slane %v2158, 5
      %v2172 = vsel %vm379, %v2170, %v2171
      %v2173 = vrot.slane %v2171, 4
      %v2174 = vrot.slane %v2159, 5
      %v2175 = vsel %vm379, %v2173, %v2174
      %v2176 = vrot.slane %v2174, 4
      %v2177 = vrot.slane %v2160, 5
      %v2178 = vsel %vm379, %v2176, %v2177
      %2179 = vrot.lane.b32.xlu0 %v2169, 64
      %v2180 = vpop.permute.xlu0 %2179
      %2181 = vrot.lane.b32.xlu0 %v2172, 64
      %v2182 = vpop.permute.xlu0 %2181
      %2183 = vrot.lane.b32.xlu0 %v2175, 64
      %v2184 = vpop.permute.xlu0 %2183
      %2185 = vrot.lane.b32.xlu0 %v2178, 64
      %v2186 = vpop.permute.xlu0 %2185
      %vm2191 = vcmask 781824
      %2192 = vst.msk [vmem:[#allocation5] sm:$0xf] %vm2191, %v2180
      %2193 = vst.msk [vmem:[#allocation5 + $0x1c] sm:$0xf] %vm2191, %v2182
      %2194 = vst.msk [vmem:[#allocation5 + $0x38] sm:$0xf] %vm2191, %v2184
      %2195 = vst.msk [vmem:[#allocation5 + $0x54] sm:$0xf] %vm2191, %v2186
      %v2196 = vld [vmem:[#allocation3] sm:$0xe]
      %v2197 = vld [vmem:[#allocation3 + $0x4] sm:$0xf]
      %v2198 = vld [vmem:[#allocation3 + $0x8] sm:$0xf]
      %v2199 = vld [vmem:[#allocation3 + $0xc] sm:$0xf]
      %v2200 = vld [vmem:[#allocation3 + $0x10] sm:$0x3]
      %v2202 = vshrl.u32 %v2196, 16
      %v2204 = vrot.slane %v2202, 5
      %v2205 = vshll.u32 %v2196, 16
      %v2207 = vrot.slane %v2205, 6
      %v2208 = vor.u32 %v2204, %v2207
      %v2209 = vrot.slane %v2208, 4
      %v2211 = vshrl.u32 %v2197, 16
      %v2213 = vrot.slane %v2211, 5
      %v2214 = vshll.u32 %v2197, 16
      %v2216 = vrot.slane %v2214, 6
      %v2217 = vor.u32 %v2213, %v2216
      %v2218 = vsel %vm513, %v2209, %v2217
      %v2219 = vrot.slane %v2217, 4
      %v2221 = vshrl.u32 %v2198, 16
      %v2223 = vrot.slane %v2221, 5
      %v2224 = vshll.u32 %v2198, 16
      %v2226 = vrot.slane %v2224, 6
      %v2227 = vor.u32 %v2223, %v2226
      %v2228 = vsel %vm513, %v2219, %v2227
      %v2229 = vrot.slane %v2227, 4
      %v2231 = vshrl.u32 %v2199, 16
      %v2233 = vrot.slane %v2231, 5
      %v2234 = vshll.u32 %v2199, 16
      %v2236 = vrot.slane %v2234, 6
      %v2237 = vor.u32 %v2233, %v2236
      %v2238 = vsel %vm513, %v2229, %v2237
      %v2239 = vrot.slane %v2237, 4
      %v2241 = vshrl.u32 %v2200, 16
      %v2243 = vrot.slane %v2241, 5
      %v2244 = vshll.u32 %v2200, 16
      %v2246 = vrot.slane %v2244, 6
      %v2247 = vor.u32 %v2243, %v2246
      %v2248 = vsel %vm513, %v2239, %v2247
      %2249 = vrot.lane.b32.xlu0 %v2218, 96
      %v2250 = vpop.permute.xlu0 %2249
      %2251 = vrot.lane.b32.xlu0 %v2228, 96
      %v2252 = vpop.permute.xlu0 %2251
      %2253 = vrot.lane.b32.xlu0 %v2238, 96
      %v2254 = vpop.permute.xlu0 %2253
      %2255 = vrot.lane.b32.xlu0 %v2248, 96
      %v2256 = vpop.permute.xlu0 %2255
      %vm2261 = vcmask 1044224
      %2262 = vst.msk [vmem:[#allocation5] sm:$0xf] %vm2261, %v2250
      %2263 = vst.msk [vmem:[#allocation5 + $0x1c] sm:$0xf] %vm2261, %v2252
      %2264 = vst.msk [vmem:[#allocation5 + $0x38] sm:$0xf] %vm2261, %v2254
      %2265 = vst.msk [vmem:[#allocation5 + $0x54] sm:$0xf] %vm2261, %v2256
      %v2266 = vld [vmem:[#allocation3] sm:$0xc]
      %v2267 = vld [vmem:[#allocation3 + $0x4] sm:$0xf]
      %v2268 = vld [vmem:[#allocation3 + $0x8] sm:$0xf]
      %v2269 = vld [vmem:[#allocation3 + $0xc] sm:$0xf]
      %v2270 = vld [vmem:[#allocation3 + $0x10] sm:$0x3]
      %v2276 = vrot.slane %v2266, 6
      %v2277 = vrot.slane %v2276, 4
      %v2278 = vrot.slane %v2267, 6
      %v2279 = vsel %vm591, %v2277, %v2278
      %v2280 = vrot.slane %v2278, 4
      %v2281 = vrot.slane %v2268, 6
      %v2282 = vsel %vm591, %v2280, %v2281
      %v2283 = vrot.slane %v2281, 4
      %v2284 = vrot.slane %v2269, 6
      %v2285 = vsel %vm591, %v2283, %v2284
      %v2286 = vrot.slane %v2284, 4
      %v2287 = vrot.slane %v2270, 6
      %v2288 = vsel %vm591, %v2286, %v2287
      %2293 = vst.msk [vmem:[#allocation5 + $0x4] sm:$0xf] %vm2035, %v2279
      %2294 = vst.msk [vmem:[#allocation5 + $0x20] sm:$0xf] %vm2035, %v2282
      %2295 = vst.msk [vmem:[#allocation5 + $0x3c] sm:$0xf] %vm2035, %v2285
      %2296 = vst.msk [vmem:[#allocation5 + $0x58] sm:$0xf] %vm2035, %v2288
      %v2297 = vld [vmem:[#allocation3 + $0x8] sm:$0xf]
      %v2298 = vld [vmem:[#allocation3 + $0xc] sm:$0xf]
      %v2299 = vld [vmem:[#allocation3 + $0x10] sm:$0xf]
      %v2300 = vld [vmem:[#allocation3 + $0x14] sm:$0xf]
      %2305 = vrot.lane.b32.xlu0 %v2297, 32
      %v2306 = vpop.permute.xlu0 %2305
      %2307 = vrot.lane.b32.xlu0 %v2298, 32
      %v2308 = vpop.permute.xlu0 %2307
      %2309 = vrot.lane.b32.xlu0 %v2299, 32
      %v2310 = vpop.permute.xlu0 %2309
      %2311 = vrot.lane.b32.xlu0 %v2300, 32
      %v2312 = vpop.permute.xlu0 %2311
      %2317 = vst.msk [vmem:[#allocation5 + $0x4] sm:$0xf] %vm2151, %v2306
      %2318 = vst.msk [vmem:[#allocation5 + $0x20] sm:$0xf] %vm2151, %v2308
      %2319 = vst.msk [vmem:[#allocation5 + $0x3c] sm:$0xf] %vm2151, %v2310
      %2320 = vst.msk [vmem:[#allocation5 + $0x58] sm:$0xf] %vm2151, %v2312
      %v2321 = vld [vmem:[#allocation3 + $0x8] sm:$0xf]
      %v2322 = vld [vmem:[#allocation3 + $0xc] sm:$0xf]
      %v2323 = vld [vmem:[#allocation3 + $0x10] sm:$0xf]
      %v2324 = vld [vmem:[#allocation3 + $0x14] sm:$0xf]
      %v2325 = vld [vmem:[#allocation3 + $0x18] sm:$0x1]
      %v2327 = vshrl.u32 %v2321, 16
      %v2329 = vrot.slane %v2327, 4
      %v2330 = vshll.u32 %v2321, 16
      %v2332 = vrot.slane %v2330, 5
      %v2333 = vor.u32 %v2329, %v2332
      %v2334 = vrot.slane %v2333, 4
      %v2336 = vshll.u32 %v2322, 16
      %v2338 = vrot.slane %v2336, 5
      %v2339 = vsel %vm404, %v2334, %v2338
      %v2340 = vshrl.u32 %v2322, 16
      %v2342 = vrot.slane %v2340, 4
      %v2343 = vor.u32 %v2342, %v2338
      %v2344 = vrot.slane %v2343, 4
      %v2346 = vshll.u32 %v2323, 16
      %v2348 = vrot.slane %v2346, 5
      %v2349 = vsel %vm404, %v2344, %v2348
      %v2350 = vshrl.u32 %v2323, 16
      %v2352 = vrot.slane %v2350, 4
      %v2353 = vor.u32 %v2352, %v2348
      %v2354 = vrot.slane %v2353, 4
      %v2356 = vshll.u32 %v2324, 16
      %v2358 = vrot.slane %v2356, 5
      %v2359 = vsel %vm404, %v2354, %v2358
      %v2360 = vshrl.u32 %v2324, 16
      %v2362 = vrot.slane %v2360, 4
      %v2363 = vor.u32 %v2362, %v2358
      %v2364 = vrot.slane %v2363, 4
      %v2366 = vshll.u32 %v2325, 16
      %v2368 = vrot.slane %v2366, 5
      %v2369 = vsel %vm404, %v2364, %v2368
      %2370 = vrot.lane.b32.xlu0 %v2339, 64
      %v2371 = vpop.permute.xlu0 %2370
      %2372 = vrot.lane.b32.xlu0 %v2349, 64
      %v2373 = vpop.permute.xlu0 %2372
      %2374 = vrot.lane.b32.xlu0 %v2359, 64
      %v2375 = vpop.permute.xlu0 %2374
      %2376 = vrot.lane.b32.xlu0 %v2369, 64
      %v2377 = vpop.permute.xlu0 %2376
      %2382 = vst.msk [vmem:[#allocation5 + $0x4] sm:$0xf] %vm2191, %v2371
      %2383 = vst.msk [vmem:[#allocation5 + $0x20] sm:$0xf] %vm2191, %v2373
      %2384 = vst.msk [vmem:[#allocation5 + $0x3c] sm:$0xf] %vm2191, %v2375
      %2385 = vst.msk [vmem:[#allocation5 + $0x58] sm:$0xf] %vm2191, %v2377
      %v2386 = vld [vmem:[#allocation3 + $0x8] sm:$0xe]
      %v2387 = vld [vmem:[#allocation3 + $0xc] sm:$0xf]
      %v2388 = vld [vmem:[#allocation3 + $0x10] sm:$0xf]
      %v2389 = vld [vmem:[#allocation3 + $0x14] sm:$0xf]
      %v2390 = vld [vmem:[#allocation3 + $0x18] sm:$0x1]
      %v2396 = vrot.slane %v2386, 5
      %v2397 = vrot.slane %v2396, 4
      %v2398 = vrot.slane %v2387, 5
      %v2399 = vsel %vm379, %v2397, %v2398
      %v2400 = vrot.slane %v2398, 4
      %v2401 = vrot.slane %v2388, 5
      %v2402 = vsel %vm379, %v2400, %v2401
      %v2403 = vrot.slane %v2401, 4
      %v2404 = vrot.slane %v2389, 5
      %v2405 = vsel %vm379, %v2403, %v2404
      %v2406 = vrot.slane %v2404, 4
      %v2407 = vrot.slane %v2390, 5
      %v2408 = vsel %vm379, %v2406, %v2407
      %2409 = vrot.lane.b32.xlu0 %v2399, 96
      %v2410 = vpop.permute.xlu0 %2409
      %2411 = vrot.lane.b32.xlu0 %v2402, 96
      %v2412 = vpop.permute.xlu0 %2411
      %2413 = vrot.lane.b32.xlu0 %v2405, 96
      %v2414 = vpop.permute.xlu0 %2413
      %2415 = vrot.lane.b32.xlu0 %v2408, 96
      %v2416 = vpop.permute.xlu0 %2415
      %2421 = vst.msk [vmem:[#allocation5 + $0x4] sm:$0xf] %vm2261, %v2410
      %2422 = vst.msk [vmem:[#allocation5 + $0x20] sm:$0xf] %vm2261, %v2412
      %2423 = vst.msk [vmem:[#allocation5 + $0x3c] sm:$0xf] %vm2261, %v2414
      %2424 = vst.msk [vmem:[#allocation5 + $0x58] sm:$0xf] %vm2261, %v2416
      %v2425 = vld [vmem:[#allocation3 + $0x8] sm:$0xe]
      %v2426 = vld [vmem:[#allocation3 + $0xc] sm:$0xf]
      %v2427 = vld [vmem:[#allocation3 + $0x10] sm:$0xf]
      %v2428 = vld [vmem:[#allocation3 + $0x14] sm:$0xf]
      %v2429 = vld [vmem:[#allocation3 + $0x18] sm:$0x3]
      %v2431 = vshrl.u32 %v2425, 16
      %v2433 = vrot.slane %v2431, 5
      %v2434 = vshll.u32 %v2425, 16
      %v2436 = vrot.slane %v2434, 6
      %v2437 = vor.u32 %v2433, %v2436
      %v2438 = vrot.slane %v2437, 4
      %v2440 = vshrl.u32 %v2426, 16
      %v2442 = vrot.slane %v2440, 5
      %v2443 = vshll.u32 %v2426, 16
      %v2445 = vrot.slane %v2443, 6
      %v2446 = vor.u32 %v2442, %v2445
      %v2447 = vsel %vm513, %v2438, %v2446
      %v2448 = vrot.slane %v2446, 4
      %v2450 = vshrl.u32 %v2427, 16
      %v2452 = vrot.slane %v2450, 5
      %v2453 = vshll.u32 %v2427, 16
      %v2455 = vrot.slane %v2453, 6
      %v2456 = vor.u32 %v2452, %v2455
      %v2457 = vsel %vm513, %v2448, %v2456
      %v2458 = vrot.slane %v2456, 4
      %v2460 = vshrl.u32 %v2428, 16
      %v2462 = vrot.slane %v2460, 5
      %v2463 = vshll.u32 %v2428, 16
      %v2465 = vrot.slane %v2463, 6
      %v2466 = vor.u32 %v2462, %v2465
      %v2467 = vsel %vm513, %v2458, %v2466
      %v2468 = vrot.slane %v2466, 4
      %v2470 = vshrl.u32 %v2429, 16
      %v2472 = vrot.slane %v2470, 5
      %v2473 = vshll.u32 %v2429, 16
      %v2475 = vrot.slane %v2473, 6
      %v2476 = vor.u32 %v2472, %v2475
      %v2477 = vsel %vm513, %v2468, %v2476
      %2482 = vst.msk [vmem:[#allocation5 + $0x8] sm:$0xf] %vm2035, %v2447
      %2483 = vst.msk [vmem:[#allocation5 + $0x24] sm:$0xf] %vm2035, %v2457
      %2484 = vst.msk [vmem:[#allocation5 + $0x40] sm:$0xf] %vm2035, %v2467
      %2485 = vst.msk [vmem:[#allocation5 + $0x5c] sm:$0xf] %vm2035, %v2477
      %v2486 = vld [vmem:[#allocation3 + $0x8] sm:$0xc]
      %v2487 = vld [vmem:[#allocation3 + $0xc] sm:$0xf]
      %v2488 = vld [vmem:[#allocation3 + $0x10] sm:$0xf]
      %v2489 = vld [vmem:[#allocation3 + $0x14] sm:$0xf]
      %v2490 = vld [vmem:[#allocation3 + $0x18] sm:$0x3]
      %v2496 = vrot.slane %v2486, 6
      %v2497 = vrot.slane %v2496, 4
      %v2498 = vrot.slane %v2487, 6
      %v2499 = vsel %vm591, %v2497, %v2498
      %v2500 = vrot.slane %v2498, 4
      %v2501 = vrot.slane %v2488, 6
      %v2502 = vsel %vm591, %v2500, %v2501
      %v2503 = vrot.slane %v2501, 4
      %v2504 = vrot.slane %v2489, 6
      %v2505 = vsel %vm591, %v2503, %v2504
      %v2506 = vrot.slane %v2504, 4
      %v2507 = vrot.slane %v2490, 6
      %v2508 = vsel %vm591, %v2506, %v2507
      %2509 = vrot.lane.b32.xlu0 %v2499, 32
      %v2510 = vpop.permute.xlu0 %2509
      %2511 = vrot.lane.b32.xlu0 %v2502, 32
      %v2512 = vpop.permute.xlu0 %2511
      %2513 = vrot.lane.b32.xlu0 %v2505, 32
      %v2514 = vpop.permute.xlu0 %2513
      %2515 = vrot.lane.b32.xlu0 %v2508, 32
      %v2516 = vpop.permute.xlu0 %2515
      %2521 = vst.msk [vmem:[#allocation5 + $0x8] sm:$0xf] %vm2151, %v2510
      %2522 = vst.msk [vmem:[#allocation5 + $0x24] sm:$0xf] %vm2151, %v2512
      %2523 = vst.msk [vmem:[#allocation5 + $0x40] sm:$0xf] %vm2151, %v2514
      %2524 = vst.msk [vmem:[#allocation5 + $0x5c] sm:$0xf] %vm2151, %v2516
      %v2525 = vld [vmem:[#allocation3 + $0x10] sm:$0xf]
      %v2526 = vld [vmem:[#allocation3 + $0x14] sm:$0xf]
      %v2527 = vld [vmem:[#allocation3 + $0x18] sm:$0xf]
      %v2528 = vld [vmem:[#allocation3 + $0x1c] sm:$0xf]
      %2533 = vrot.lane.b32.xlu0 %v2525, 64
      %v2534 = vpop.permute.xlu0 %2533
      %2535 = vrot.lane.b32.xlu0 %v2526, 64
      %v2536 = vpop.permute.xlu0 %2535
      %2537 = vrot.lane.b32.xlu0 %v2527, 64
      %v2538 = vpop.permute.xlu0 %2537
      %2539 = vrot.lane.b32.xlu0 %v2528, 64
      %v2540 = vpop.permute.xlu0 %2539
      %2545 = vst.msk [vmem:[#allocation5 + $0x8] sm:$0xf] %vm2191, %v2534
      %2546 = vst.msk [vmem:[#allocation5 + $0x24] sm:$0xf] %vm2191, %v2536
      %2547 = vst.msk [vmem:[#allocation5 + $0x40] sm:$0xf] %vm2191, %v2538
      %2548 = vst.msk [vmem:[#allocation5 + $0x5c] sm:$0xf] %vm2191, %v2540
      %v2549 = vld [vmem:[#allocation3 + $0x10] sm:$0xf]
      %v2550 = vld [vmem:[#allocation3 + $0x14] sm:$0xf]
      %v2551 = vld [vmem:[#allocation3 + $0x18] sm:$0xf]
      %v2552 = vld [vmem:[#allocation3 + $0x1c] sm:$0xf]
      %v2553 = vld [vmem:[#allocation3 + $0x20] sm:$0x1]
      %v2555 = vshrl.u32 %v2549, 16
      %v2557 = vrot.slane %v2555, 4
      %v2558 = vshll.u32 %v2549, 16
      %v2560 = vrot.slane %v2558, 5
      %v2561 = vor.u32 %v2557, %v2560
      %v2562 = vrot.slane %v2561, 4
      %v2564 = vshll.u32 %v2550, 16
      %v2566 = vrot.slane %v2564, 5
      %v2567 = vsel %vm404, %v2562, %v2566
      %v2568 = vshrl.u32 %v2550, 16
      %v2570 = vrot.slane %v2568, 4
      %v2571 = vor.u32 %v2570, %v2566
      %v2572 = vrot.slane %v2571, 4
      %v2574 = vshll.u32 %v2551, 16
      %v2576 = vrot.slane %v2574, 5
      %v2577 = vsel %vm404, %v2572, %v2576
      %v2578 = vshrl.u32 %v2551, 16
      %v2580 = vrot.slane %v2578, 4
      %v2581 = vor.u32 %v2580, %v2576
      %v2582 = vrot.slane %v2581, 4
      %v2584 = vshll.u32 %v2552, 16
      %v2586 = vrot.slane %v2584, 5
      %v2587 = vsel %vm404, %v2582, %v2586
      %v2588 = vshrl.u32 %v2552, 16
      %v2590 = vrot.slane %v2588, 4
      %v2591 = vor.u32 %v2590, %v2586
      %v2592 = vrot.slane %v2591, 4
      %v2594 = vshll.u32 %v2553, 16
      %v2596 = vrot.slane %v2594, 5
      %v2597 = vsel %vm404, %v2592, %v2596
      %2598 = vrot.lane.b32.xlu0 %v2567, 96
      %v2599 = vpop.permute.xlu0 %2598
      %2600 = vrot.lane.b32.xlu0 %v2577, 96
      %v2601 = vpop.permute.xlu0 %2600
      %2602 = vrot.lane.b32.xlu0 %v2587, 96
      %v2603 = vpop.permute.xlu0 %2602
      %2604 = vrot.lane.b32.xlu0 %v2597, 96
      %v2605 = vpop.permute.xlu0 %2604
      %2610 = vst.msk [vmem:[#allocation5 + $0x8] sm:$0xf] %vm2261, %v2599
      %2611 = vst.msk [vmem:[#allocation5 + $0x24] sm:$0xf] %vm2261, %v2601
      %2612 = vst.msk [vmem:[#allocation5 + $0x40] sm:$0xf] %vm2261, %v2603
      %2613 = vst.msk [vmem:[#allocation5 + $0x5c] sm:$0xf] %vm2261, %v2605
      %v2614 = vld [vmem:[#allocation3 + $0x10] sm:$0xe]
      %v2615 = vld [vmem:[#allocation3 + $0x14] sm:$0xf]
      %v2616 = vld [vmem:[#allocation3 + $0x18] sm:$0xf]
      %v2617 = vld [vmem:[#allocation3 + $0x1c] sm:$0xf]
      %v2618 = vld [vmem:[#allocation3 + $0x20] sm:$0x1]
      %v2624 = vrot.slane %v2614, 5
      %v2625 = vrot.slane %v2624, 4
      %v2626 = vrot.slane %v2615, 5
      %v2627 = vsel %vm379, %v2625, %v2626
      %v2628 = vrot.slane %v2626, 4
      %v2629 = vrot.slane %v2616, 5
      %v2630 = vsel %vm379, %v2628, %v2629
      %v2631 = vrot.slane %v2629, 4
      %v2632 = vrot.slane %v2617, 5
      %v2633 = vsel %vm379, %v2631, %v2632
      %v2634 = vrot.slane %v2632, 4
      %v2635 = vrot.slane %v2618, 5
      %v2636 = vsel %vm379, %v2634, %v2635
      %2641 = vst.msk [vmem:[#allocation5 + $0xc] sm:$0xf] %vm2035, %v2627
      %2642 = vst.msk [vmem:[#allocation5 + $0x28] sm:$0xf] %vm2035, %v2630
      %2643 = vst.msk [vmem:[#allocation5 + $0x44] sm:$0xf] %vm2035, %v2633
      %2644 = vst.msk [vmem:[#allocation5 + $0x60] sm:$0xf] %vm2035, %v2636
      %v2645 = vld [vmem:[#allocation3 + $0x10] sm:$0xe]
      %v2646 = vld [vmem:[#allocation3 + $0x14] sm:$0xf]
      %v2647 = vld [vmem:[#allocation3 + $0x18] sm:$0xf]
      %v2648 = vld [vmem:[#allocation3 + $0x1c] sm:$0xf]
      %v2649 = vld [vmem:[#allocation3 + $0x20] sm:$0x3]
      %v2651 = vshrl.u32 %v2645, 16
      %v2653 = vrot.slane %v2651, 5
      %v2654 = vshll.u32 %v2645, 16
      %v2656 = vrot.slane %v2654, 6
      %v2657 = vor.u32 %v2653, %v2656
      %v2658 = vrot.slane %v2657, 4
      %v2660 = vshrl.u32 %v2646, 16
      %v2662 = vrot.slane %v2660, 5
      %v2663 = vshll.u32 %v2646, 16
      %v2665 = vrot.slane %v2663, 6
      %v2666 = vor.u32 %v2662, %v2665
      %v2667 = vsel %vm513, %v2658, %v2666
      %v2668 = vrot.slane %v2666, 4
      %v2670 = vshrl.u32 %v2647, 16
      %v2672 = vrot.slane %v2670, 5
      %v2673 = vshll.u32 %v2647, 16
      %v2675 = vrot.slane %v2673, 6
      %v2676 = vor.u32 %v2672, %v2675
      %v2677 = vsel %vm513, %v2668, %v2676
      %v2678 = vrot.slane %v2676, 4
      %v2680 = vshrl.u32 %v2648, 16
      %v2682 = vrot.slane %v2680, 5
      %v2683 = vshll.u32 %v2648, 16
      %v2685 = vrot.slane %v2683, 6
      %v2686 = vor.u32 %v2682, %v2685
      %v2687 = vsel %vm513, %v2678, %v2686
      %v2688 = vrot.slane %v2686, 4
      %v2690 = vshrl.u32 %v2649, 16
      %v2692 = vrot.slane %v2690, 5
      %v2693 = vshll.u32 %v2649, 16
      %v2695 = vrot.slane %v2693, 6
      %v2696 = vor.u32 %v2692, %v2695
      %v2697 = vsel %vm513, %v2688, %v2696
      %2698 = vrot.lane.b32.xlu0 %v2667, 32
      %v2699 = vpop.permute.xlu0 %2698
      %2700 = vrot.lane.b32.xlu0 %v2677, 32
      %v2701 = vpop.permute.xlu0 %2700
      %2702 = vrot.lane.b32.xlu0 %v2687, 32
      %v2703 = vpop.permute.xlu0 %2702
      %2704 = vrot.lane.b32.xlu0 %v2697, 32
      %v2705 = vpop.permute.xlu0 %2704
      %2710 = vst.msk [vmem:[#allocation5 + $0xc] sm:$0xf] %vm2151, %v2699
      %2711 = vst.msk [vmem:[#allocation5 + $0x28] sm:$0xf] %vm2151, %v2701
      %2712 = vst.msk [vmem:[#allocation5 + $0x44] sm:$0xf] %vm2151, %v2703
      %2713 = vst.msk [vmem:[#allocation5 + $0x60] sm:$0xf] %vm2151, %v2705
      %v2714 = vld [vmem:[#allocation3 + $0x10] sm:$0xc]
      %v2715 = vld [vmem:[#allocation3 + $0x14] sm:$0xf]
      %v2716 = vld [vmem:[#allocation3 + $0x18] sm:$0xf]
      %v2717 = vld [vmem:[#allocation3 + $0x1c] sm:$0xf]
      %v2718 = vld [vmem:[#allocation3 + $0x20] sm:$0x3]
      %v2724 = vrot.slane %v2714, 6
      %v2725 = vrot.slane %v2724, 4
      %v2726 = vrot.slane %v2715, 6
      %v2727 = vsel %vm591, %v2725, %v2726
      %v2728 = vrot.slane %v2726, 4
      %v2729 = vrot.slane %v2716, 6
      %v2730 = vsel %vm591, %v2728, %v2729
      %v2731 = vrot.slane %v2729, 4
      %v2732 = vrot.slane %v2717, 6
      %v2733 = vsel %vm591, %v2731, %v2732
      %v2734 = vrot.slane %v2732, 4
      %v2735 = vrot.slane %v2718, 6
      %v2736 = vsel %vm591, %v2734, %v2735
      %2737 = vrot.lane.b32.xlu0 %v2727, 64
      %v2738 = vpop.permute.xlu0 %2737
      %2739 = vrot.lane.b32.xlu0 %v2730, 64
      %v2740 = vpop.permute.xlu0 %2739
      %2741 = vrot.lane.b32.xlu0 %v2733, 64
      %v2742 = vpop.permute.xlu0 %2741
      %2743 = vrot.lane.b32.xlu0 %v2736, 64
      %v2744 = vpop.permute.xlu0 %2743
      %2749 = vst.msk [vmem:[#allocation5 + $0xc] sm:$0xf] %vm2191, %v2738
      %2750 = vst.msk [vmem:[#allocation5 + $0x28] sm:$0xf] %vm2191, %v2740
      %2751 = vst.msk [vmem:[#allocation5 + $0x44] sm:$0xf] %vm2191, %v2742
      %2752 = vst.msk [vmem:[#allocation5 + $0x60] sm:$0xf] %vm2191, %v2744
      %v2753 = vld [vmem:[#allocation3 + $0x18] sm:$0xf]
      %v2754 = vld [vmem:[#allocation3 + $0x1c] sm:$0xf]
      %v2755 = vld [vmem:[#allocation3 + $0x20] sm:$0xf]
      %v2756 = vld [vmem:[#allocation3 + $0x24] sm:$0xf]
      %2761 = vrot.lane.b32.xlu0 %v2753, 96
      %v2762 = vpop.permute.xlu0 %2761
      %2763 = vrot.lane.b32.xlu0 %v2754, 96
      %v2764 = vpop.permute.xlu0 %2763
      %2765 = vrot.lane.b32.xlu0 %v2755, 96
      %v2766 = vpop.permute.xlu0 %2765
      %2767 = vrot.lane.b32.xlu0 %v2756, 96
      %v2768 = vpop.permute.xlu0 %2767
      %2773 = vst.msk [vmem:[#allocation5 + $0xc] sm:$0xf] %vm2261, %v2762
      %2774 = vst.msk [vmem:[#allocation5 + $0x28] sm:$0xf] %vm2261, %v2764
      %2775 = vst.msk [vmem:[#allocation5 + $0x44] sm:$0xf] %vm2261, %v2766
      %2776 = vst.msk [vmem:[#allocation5 + $0x60] sm:$0xf] %vm2261, %v2768
      %v2777 = vld [vmem:[#allocation3 + $0x18] sm:$0xf]
      %v2778 = vld [vmem:[#allocation3 + $0x1c] sm:$0xf]
      %v2779 = vld [vmem:[#allocation3 + $0x20] sm:$0xf]
      %v2780 = vld [vmem:[#allocation3 + $0x24] sm:$0xf]
      %v2781 = vld [vmem:[#allocation3 + $0x28] sm:$0x1]
      %v2783 = vshrl.u32 %v2777, 16
      %v2785 = vrot.slane %v2783, 4
      %v2786 = vshll.u32 %v2777, 16
      %v2788 = vrot.slane %v2786, 5
      %v2789 = vor.u32 %v2785, %v2788
      %v2790 = vrot.slane %v2789, 4
      %v2792 = vshll.u32 %v2778, 16
      %v2794 = vrot.slane %v2792, 5
      %v2795 = vsel %vm404, %v2790, %v2794
      %v2796 = vshrl.u32 %v2778, 16
      %v2798 = vrot.slane %v2796, 4
      %v2799 = vor.u32 %v2798, %v2794
      %v2800 = vrot.slane %v2799, 4
      %v2802 = vshll.u32 %v2779, 16
      %v2804 = vrot.slane %v2802, 5
      %v2805 = vsel %vm404, %v2800, %v2804
      %v2806 = vshrl.u32 %v2779, 16
      %v2808 = vrot.slane %v2806, 4
      %v2809 = vor.u32 %v2808, %v2804
      %v2810 = vrot.slane %v2809, 4
      %v2812 = vshll.u32 %v2780, 16
      %v2814 = vrot.slane %v2812, 5
      %v2815 = vsel %vm404, %v2810, %v2814
      %v2816 = vshrl.u32 %v2780, 16
      %v2818 = vrot.slane %v2816, 4
      %v2819 = vor.u32 %v2818, %v2814
      %v2820 = vrot.slane %v2819, 4
      %v2822 = vshll.u32 %v2781, 16
      %v2824 = vrot.slane %v2822, 5
      %v2825 = vsel %vm404, %v2820, %v2824
      %2830 = vst.msk [vmem:[#allocation5 + $0x10] sm:$0xf] %vm2035, %v2795
      %2831 = vst.msk [vmem:[#allocation5 + $0x2c] sm:$0xf] %vm2035, %v2805
      %2832 = vst.msk [vmem:[#allocation5 + $0x48] sm:$0xf] %vm2035, %v2815
      %2833 = vst.msk [vmem:[#allocation5 + $0x64] sm:$0xf] %vm2035, %v2825
      %v2834 = vld [vmem:[#allocation3 + $0x18] sm:$0xe]
      %v2835 = vld [vmem:[#allocation3 + $0x1c] sm:$0xf]
      %v2836 = vld [vmem:[#allocation3 + $0x20] sm:$0xf]
      %v2837 = vld [vmem:[#allocation3 + $0x24] sm:$0xf]
      %v2838 = vld [vmem:[#allocation3 + $0x28] sm:$0x1]
      %v2844 = vrot.slane %v2834, 5
      %v2845 = vrot.slane %v2844, 4
      %v2846 = vrot.slane %v2835, 5
      %v2847 = vsel %vm379, %v2845, %v2846
      %v2848 = vrot.slane %v2846, 4
      %v2849 = vrot.slane %v2836, 5
      %v2850 = vsel %vm379, %v2848, %v2849
      %v2851 = vrot.slane %v2849, 4
      %v2852 = vrot.slane %v2837, 5
      %v2853 = vsel %vm379, %v2851, %v2852
      %v2854 = vrot.slane %v2852, 4
      %v2855 = vrot.slane %v2838, 5
      %v2856 = vsel %vm379, %v2854, %v2855
      %2857 = vrot.lane.b32.xlu0 %v2847, 32
      %v2858 = vpop.permute.xlu0 %2857
      %2859 = vrot.lane.b32.xlu0 %v2850, 32
      %v2860 = vpop.permute.xlu0 %2859
      %2861 = vrot.lane.b32.xlu0 %v2853, 32
      %v2862 = vpop.permute.xlu0 %2861
      %2863 = vrot.lane.b32.xlu0 %v2856, 32
      %v2864 = vpop.permute.xlu0 %2863
      %2869 = vst.msk [vmem:[#allocation5 + $0x10] sm:$0xf] %vm2151, %v2858
      %2870 = vst.msk [vmem:[#allocation5 + $0x2c] sm:$0xf] %vm2151, %v2860
      %2871 = vst.msk [vmem:[#allocation5 + $0x48] sm:$0xf] %vm2151, %v2862
      %2872 = vst.msk [vmem:[#allocation5 + $0x64] sm:$0xf] %vm2151, %v2864
      %v2873 = vld [vmem:[#allocation3 + $0x18] sm:$0xe]
      %v2874 = vld [vmem:[#allocation3 + $0x1c] sm:$0xf]
      %v2875 = vld [vmem:[#allocation3 + $0x20] sm:$0xf]
      %v2876 = vld [vmem:[#allocation3 + $0x24] sm:$0xf]
      %v2877 = vld [vmem:[#allocation3 + $0x28] sm:$0x3]
      %v2879 = vshrl.u32 %v2873, 16
      %v2881 = vrot.slane %v2879, 5
      %v2882 = vshll.u32 %v2873, 16
      %v2884 = vrot.slane %v2882, 6
      %v2885 = vor.u32 %v2881, %v2884
      %v2886 = vrot.slane %v2885, 4
      %v2888 = vshrl.u32 %v2874, 16
      %v2890 = vrot.slane %v2888, 5
      %v2891 = vshll.u32 %v2874, 16
      %v2893 = vrot.slane %v2891, 6
      %v2894 = vor.u32 %v2890, %v2893
      %v2895 = vsel %vm513, %v2886, %v2894
      %v2896 = vrot.slane %v2894, 4
      %v2898 = vshrl.u32 %v2875, 16
      %v2900 = vrot.slane %v2898, 5
      %v2901 = vshll.u32 %v2875, 16
      %v2903 = vrot.slane %v2901, 6
      %v2904 = vor.u32 %v2900, %v2903
      %v2905 = vsel %vm513, %v2896, %v2904
      %v2906 = vrot.slane %v2904, 4
      %v2908 = vshrl.u32 %v2876, 16
      %v2910 = vrot.slane %v2908, 5
      %v2911 = vshll.u32 %v2876, 16
      %v2913 = vrot.slane %v2911, 6
      %v2914 = vor.u32 %v2910, %v2913
      %v2915 = vsel %vm513, %v2906, %v2914
      %v2916 = vrot.slane %v2914, 4
      %v2918 = vshrl.u32 %v2877, 16
      %v2920 = vrot.slane %v2918, 5
      %v2921 = vshll.u32 %v2877, 16
      %v2923 = vrot.slane %v2921, 6
      %v2924 = vor.u32 %v2920, %v2923
      %v2925 = vsel %vm513, %v2916, %v2924
      %2926 = vrot.lane.b32.xlu0 %v2895, 64
      %v2927 = vpop.permute.xlu0 %2926
      %2928 = vrot.lane.b32.xlu0 %v2905, 64
      %v2929 = vpop.permute.xlu0 %2928
      %2930 = vrot.lane.b32.xlu0 %v2915, 64
      %v2931 = vpop.permute.xlu0 %2930
      %2932 = vrot.lane.b32.xlu0 %v2925, 64
      %v2933 = vpop.permute.xlu0 %2932
      %2938 = vst.msk [vmem:[#allocation5 + $0x10] sm:$0xf] %vm2191, %v2927
      %2939 = vst.msk [vmem:[#allocation5 + $0x2c] sm:$0xf] %vm2191, %v2929
      %2940 = vst.msk [vmem:[#allocation5 + $0x48] sm:$0xf] %vm2191, %v2931
      %2941 = vst.msk [vmem:[#allocation5 + $0x64] sm:$0xf] %vm2191, %v2933
      %v2942 = vld [vmem:[#allocation3 + $0x18] sm:$0xc]
      %v2943 = vld [vmem:[#allocation3 + $0x1c] sm:$0xf]
      %v2944 = vld [vmem:[#allocation3 + $0x20] sm:$0xf]
      %v2945 = vld [vmem:[#allocation3 + $0x24] sm:$0xf]
      %v2946 = vld [vmem:[#allocation3 + $0x28] sm:$0x3]
      %v2952 = vrot.slane %v2942, 6
      %v2953 = vrot.slane %v2952, 4
      %v2954 = vrot.slane %v2943, 6
      %v2955 = vsel %vm591, %v2953, %v2954
      %v2956 = vrot.slane %v2954, 4
      %v2957 = vrot.slane %v2944, 6
      %v2958 = vsel %vm591, %v2956, %v2957
      %v2959 = vrot.slane %v2957, 4
      %v2960 = vrot.slane %v2945, 6
      %v2961 = vsel %vm591, %v2959, %v2960
      %v2962 = vrot.slane %v2960, 4
      %v2963 = vrot.slane %v2946, 6
      %v2964 = vsel %vm591, %v2962, %v2963
      %2965 = vrot.lane.b32.xlu0 %v2955, 96
      %v2966 = vpop.permute.xlu0 %2965
      %2967 = vrot.lane.b32.xlu0 %v2958, 96
      %v2968 = vpop.permute.xlu0 %2967
      %2969 = vrot.lane.b32.xlu0 %v2961, 96
      %v2970 = vpop.permute.xlu0 %2969
      %2971 = vrot.lane.b32.xlu0 %v2964, 96
      %v2972 = vpop.permute.xlu0 %2971
      %2977 = vst.msk [vmem:[#allocation5 + $0x10] sm:$0xf] %vm2261, %v2966
      %2978 = vst.msk [vmem:[#allocation5 + $0x2c] sm:$0xf] %vm2261, %v2968
      %2979 = vst.msk [vmem:[#allocation5 + $0x48] sm:$0xf] %vm2261, %v2970
      %2980 = vst.msk [vmem:[#allocation5 + $0x64] sm:$0xf] %vm2261, %v2972
      %v2981 = vld [vmem:[#allocation3 + $0x20] sm:$0xf]
      %v2982 = vld [vmem:[#allocation3 + $0x24] sm:$0xf]
      %v2983 = vld [vmem:[#allocation3 + $0x28] sm:$0xf]
      %v2984 = vld [vmem:[#allocation3 + $0x2c] sm:$0xf]
      %2985 = vst.msk [vmem:[#allocation5 + $0x14] sm:$0xf] %vm2035, %v2981
      %2986 = vst.msk [vmem:[#allocation5 + $0x30] sm:$0xf] %vm2035, %v2982
      %2987 = vst.msk [vmem:[#allocation5 + $0x4c] sm:$0xf] %vm2035, %v2983
      %2988 = vst.msk [vmem:[#allocation5 + $0x68] sm:$0xf] %vm2035, %v2984
      %v2989 = vld [vmem:[#allocation3 + $0x20] sm:$0xf]
      %v2990 = vld [vmem:[#allocation3 + $0x24] sm:$0xf]
      %v2991 = vld [vmem:[#allocation3 + $0x28] sm:$0xf]
      %v2992 = vld [vmem:[#allocation3 + $0x2c] sm:$0xf]
      %v2993 = vld [vmem:[#allocation3 + $0x30] sm:$0x1]
      %v2995 = vshrl.u32 %v2989, 16
      %v2997 = vrot.slane %v2995, 4
      %v2998 = vshll.u32 %v2989, 16
      %v3000 = vrot.slane %v2998, 5
      %v3001 = vor.u32 %v2997, %v3000
      %v3002 = vrot.slane %v3001, 4
      %v3004 = vshll.u32 %v2990, 16
      %v3006 = vrot.slane %v3004, 5
      %v3007 = vsel %vm404, %v3002, %v3006
      %v3008 = vshrl.u32 %v2990, 16
      %v3010 = vrot.slane %v3008, 4
      %v3011 = vor.u32 %v3010, %v3006
      %v3012 = vrot.slane %v3011, 4
      %v3014 = vshll.u32 %v2991, 16
      %v3016 = vrot.slane %v3014, 5
      %v3017 = vsel %vm404, %v3012, %v3016
      %v3018 = vshrl.u32 %v2991, 16
      %v3020 = vrot.slane %v3018, 4
      %v3021 = vor.u32 %v3020, %v3016
      %v3022 = vrot.slane %v3021, 4
      %v3024 = vshll.u32 %v2992, 16
      %v3026 = vrot.slane %v3024, 5
      %v3027 = vsel %vm404, %v3022, %v3026
      %v3028 = vshrl.u32 %v2992, 16
      %v3030 = vrot.slane %v3028, 4
      %v3031 = vor.u32 %v3030, %v3026
      %v3032 = vrot.slane %v3031, 4
      %v3034 = vshll.u32 %v2993, 16
      %v3036 = vrot.slane %v3034, 5
      %v3037 = vsel %vm404, %v3032, %v3036
      %3038 = vrot.lane.b32.xlu0 %v3007, 32
      %v3039 = vpop.permute.xlu0 %3038
      %3040 = vrot.lane.b32.xlu0 %v3017, 32
      %v3041 = vpop.permute.xlu0 %3040
      %3042 = vrot.lane.b32.xlu0 %v3027, 32
      %v3043 = vpop.permute.xlu0 %3042
      %3044 = vrot.lane.b32.xlu0 %v3037, 32
      %v3045 = vpop.permute.xlu0 %3044
      %3050 = vst.msk [vmem:[#allocation5 + $0x14] sm:$0xf] %vm2151, %v3039
      %3051 = vst.msk [vmem:[#allocation5 + $0x30] sm:$0xf] %vm2151, %v3041
      %3052 = vst.msk [vmem:[#allocation5 + $0x4c] sm:$0xf] %vm2151, %v3043
      %3053 = vst.msk [vmem:[#allocation5 + $0x68] sm:$0xf] %vm2151, %v3045
      %v3054 = vld [vmem:[#allocation3 + $0x20] sm:$0xe]
      %v3055 = vld [vmem:[#allocation3 + $0x24] sm:$0xf]
      %v3056 = vld [vmem:[#allocation3 + $0x28] sm:$0xf]
      %v3057 = vld [vmem:[#allocation3 + $0x2c] sm:$0xf]
      %v3058 = vld [vmem:[#allocation3 + $0x30] sm:$0x1]
      %v3064 = vrot.slane %v3054, 5
      %v3065 = vrot.slane %v3064, 4
      %v3066 = vrot.slane %v3055, 5
      %v3067 = vsel %vm379, %v3065, %v3066
      %v3068 = vrot.slane %v3066, 4
      %v3069 = vrot.slane %v3056, 5
      %v3070 = vsel %vm379, %v3068, %v3069
      %v3071 = vrot.slane %v3069, 4
      %v3072 = vrot.slane %v3057, 5
      %v3073 = vsel %vm379, %v3071, %v3072
      %v3074 = vrot.slane %v3072, 4
      %v3075 = vrot.slane %v3058, 5
      %v3076 = vsel %vm379, %v3074, %v3075
      %3077 = vrot.lane.b32.xlu0 %v3067, 64
      %v3078 = vpop.permute.xlu0 %3077
      %3079 = vrot.lane.b32.xlu0 %v3070, 64
      %v3080 = vpop.permute.xlu0 %3079
      %3081 = vrot.lane.b32.xlu0 %v3073, 64
      %v3082 = vpop.permute.xlu0 %3081
      %3083 = vrot.lane.b32.xlu0 %v3076, 64
      %v3084 = vpop.permute.xlu0 %3083
      %3089 = vst.msk [vmem:[#allocation5 + $0x14] sm:$0xf] %vm2191, %v3078
      %3090 = vst.msk [vmem:[#allocation5 + $0x30] sm:$0xf] %vm2191, %v3080
      %3091 = vst.msk [vmem:[#allocation5 + $0x4c] sm:$0xf] %vm2191, %v3082
      %3092 = vst.msk [vmem:[#allocation5 + $0x68] sm:$0xf] %vm2191, %v3084
      %v3093 = vld [vmem:[#allocation3 + $0x20] sm:$0xe]
      %v3094 = vld [vmem:[#allocation3 + $0x24] sm:$0xf]
      %v3095 = vld [vmem:[#allocation3 + $0x28] sm:$0xf]
      %v3096 = vld [vmem:[#allocation3 + $0x2c] sm:$0xf]
      %v3097 = vld [vmem:[#allocation3 + $0x30] sm:$0x3]
      %v3099 = vshrl.u32 %v3093, 16
      %v3101 = vrot.slane %v3099, 5
      %v3102 = vshll.u32 %v3093, 16
      %v3104 = vrot.slane %v3102, 6
      %v3105 = vor.u32 %v3101, %v3104
      %v3106 = vrot.slane %v3105, 4
      %v3108 = vshrl.u32 %v3094, 16
      %v3110 = vrot.slane %v3108, 5
      %v3111 = vshll.u32 %v3094, 16
      %v3113 = vrot.slane %v3111, 6
      %v3114 = vor.u32 %v3110, %v3113
      %v3115 = vsel %vm513, %v3106, %v3114
      %v3116 = vrot.slane %v3114, 4
      %v3118 = vshrl.u32 %v3095, 16
      %v3120 = vrot.slane %v3118, 5
      %v3121 = vshll.u32 %v3095, 16
      %v3123 = vrot.slane %v3121, 6
      %v3124 = vor.u32 %v3120, %v3123
      %v3125 = vsel %vm513, %v3116, %v3124
      %v3126 = vrot.slane %v3124, 4
      %v3128 = vshrl.u32 %v3096, 16
      %v3130 = vrot.slane %v3128, 5
      %v3131 = vshll.u32 %v3096, 16
      %v3133 = vrot.slane %v3131, 6
      %v3134 = vor.u32 %v3130, %v3133
      %v3135 = vsel %vm513, %v3126, %v3134
      %v3136 = vrot.slane %v3134, 4
      %v3138 = vshrl.u32 %v3097, 16
      %v3140 = vrot.slane %v3138, 5
      %v3141 = vshll.u32 %v3097, 16
      %v3143 = vrot.slane %v3141, 6
      %v3144 = vor.u32 %v3140, %v3143
      %v3145 = vsel %vm513, %v3136, %v3144
      %3146 = vrot.lane.b32.xlu0 %v3115, 96
      %v3147 = vpop.permute.xlu0 %3146
      %3148 = vrot.lane.b32.xlu0 %v3125, 96
      %v3149 = vpop.permute.xlu0 %3148
      %3150 = vrot.lane.b32.xlu0 %v3135, 96
      %v3151 = vpop.permute.xlu0 %3150
      %3152 = vrot.lane.b32.xlu0 %v3145, 96
      %v3153 = vpop.permute.xlu0 %3152
      %3158 = vst.msk [vmem:[#allocation5 + $0x14] sm:$0xf] %vm2261, %v3147
      %3159 = vst.msk [vmem:[#allocation5 + $0x30] sm:$0xf] %vm2261, %v3149
      %3160 = vst.msk [vmem:[#allocation5 + $0x4c] sm:$0xf] %vm2261, %v3151
      %3161 = vst.msk [vmem:[#allocation5 + $0x68] sm:$0xf] %vm2261, %v3153
      %v3162 = vld [vmem:[#allocation3 + $0x20] sm:$0xc]
      %v3163 = vld [vmem:[#allocation3 + $0x24] sm:$0xf]
      %v3164 = vld [vmem:[#allocation3 + $0x28] sm:$0xf]
      %v3165 = vld [vmem:[#allocation3 + $0x2c] sm:$0xf]
      %v3166 = vld [vmem:[#allocation3 + $0x30] sm:$0x3]
      %v3172 = vrot.slane %v3162, 6
      %v3173 = vrot.slane %v3172, 4
      %v3174 = vrot.slane %v3163, 6
      %v3175 = vsel %vm591, %v3173, %v3174
      %v3176 = vrot.slane %v3174, 4
      %v3177 = vrot.slane %v3164, 6
      %v3178 = vsel %vm591, %v3176, %v3177
      %v3179 = vrot.slane %v3177, 4
      %v3180 = vrot.slane %v3165, 6
      %v3181 = vsel %vm591, %v3179, %v3180
      %v3182 = vrot.slane %v3180, 4
      %v3183 = vrot.slane %v3166, 6
      %v3184 = vsel %vm591, %v3182, %v3183
      %3189 = vst.msk [vmem:[#allocation5 + $0x18] sm:$0xf] %vm2035, %v3175
      %3190 = vst.msk [vmem:[#allocation5 + $0x34] sm:$0xf] %vm2035, %v3178
      %3191 = vst.msk [vmem:[#allocation5 + $0x50] sm:$0xf] %vm2035, %v3181
      %3192 = vst.msk [vmem:[#allocation5 + $0x6c] sm:$0xf] %vm2035, %v3184
      %v3193 = vld [vmem:[#allocation5] sm:$0xff]
      %v3194 = vld [vmem:[#allocation5 + $0x8] sm:$0xff]
      %v3195 = vld [vmem:[#allocation5 + $0x10] sm:$0xff]
      %v3196 = vld [vmem:[#allocation5 + $0x18] sm:$0xf]
      %v3197 = vld [vmem:[#allocation5 + $0x1c] sm:$0xff]
      %v3198 = vld [vmem:[#allocation5 + $0x24] sm:$0xff]
      %v3199 = vld [vmem:[#allocation5 + $0x2c] sm:$0xff]
      %v3200 = vld [vmem:[#allocation5 + $0x34] sm:$0xf]
      %v3201 = vld [vmem:[#allocation5 + $0x38] sm:$0xff]
      %v3202 = vld [vmem:[#allocation5 + $0x40] sm:$0xff]
      %v3203 = vld [vmem:[#allocation5 + $0x48] sm:$0xff]
      %v3204 = vld [vmem:[#allocation5 + $0x50] sm:$0xf]
      %v3205 = vld [vmem:[#allocation5 + $0x54] sm:$0xff]
      %v3206 = vld [vmem:[#allocation5 + $0x5c] sm:$0xff]
      %v3207 = vld [vmem:[#allocation5 + $0x64] sm:$0xff]
      %v3208 = vld [vmem:[#allocation5 + $0x6c] sm:$0xf]
      %v3209 = vld [vmem:[%s4] sm:$0xf]
      %v3210 = vld [vmem:[%s4 + $0x4] sm:$0xf]
      %v3211 = vld [vmem:[%s4 + $0x8] sm:$0xf]
      %v3212 = vld [vmem:[%s4 + $0xc] sm:$0xf]
      %v3213 = vld [vmem:[%s4 + $0x10] sm:$0xf]
      %v3214 = vld [vmem:[%s4 + $0x14] sm:$0xf]
      %v3215 = vld [vmem:[%s4 + $0x18] sm:$0xf]
      %v3216 = vld [vmem:[%s4 + $0x1c] sm:$0xf]
      %v3217 = vld [vmem:[%s4 + $0x20] sm:$0xf]
      %v3218 = vld [vmem:[%s4 + $0x24] sm:$0xf]
      %v3219 = vld [vmem:[%s4 + $0x28] sm:$0xf]
      %v3220 = vld [vmem:[%s4 + $0x2c] sm:$0xf]
      %v3221 = vld [vmem:[%s4 + $0x30] sm:$0xf]
      %v3222 = vld [vmem:[%s4 + $0x34] sm:$0xf]
      %v3223 = vld [vmem:[%s4 + $0x38] sm:$0xf]
      %v3224 = vld [vmem:[%s4 + $0x3c] sm:$0xf]
      %v3225 = vld [vmem:[%s4 + $0x40] sm:$0xf]
      %v3226 = vld [vmem:[%s4 + $0x44] sm:$0xf]
      %v3227 = vld [vmem:[%s4 + $0x48] sm:$0xf]
      %v3228 = vld [vmem:[%s4 + $0x4c] sm:$0xf]
      %v3229 = vld [vmem:[%s4 + $0x50] sm:$0xf]
      %v3230 = vld [vmem:[%s4 + $0x54] sm:$0xf]
      %v3231 = vld [vmem:[%s4 + $0x58] sm:$0xf]
      %v3232 = vld [vmem:[%s4 + $0x5c] sm:$0xf]
      %v3233 = vld [vmem:[%s4 + $0x60] sm:$0xf]
      %v3234 = vld [vmem:[%s4 + $0x64] sm:$0xf]
      %v3235 = vld [vmem:[%s4 + $0x68] sm:$0xf]
      %v3236 = vld [vmem:[%s4 + $0x6c] sm:$0xf]
      %v3237 = vld [vmem:[%s4 + $0x70] sm:$0xf]
      %v3238 = vld [vmem:[%s4 + $0x74] sm:$0xf]
      %v3239 = vld [vmem:[%s4 + $0x78] sm:$0xf]
      %v3240 = vld [vmem:[%s4 + $0x7c] sm:$0xf]
      %v3241 = vld [vmem:[%s4 + $0x80] sm:$0xf]
      %v3242 = vld [vmem:[%s4 + $0x84] sm:$0xf]
      %v3243 = vld [vmem:[%s4 + $0x88] sm:$0xf]
      %v3244 = vld [vmem:[%s4 + $0x8c] sm:$0xf]
      %v3245 = vld [vmem:[%s4 + $0x90] sm:$0xf]
      %v3246 = vld [vmem:[%s4 + $0x94] sm:$0xf]
      %v3247 = vld [vmem:[%s4 + $0x98] sm:$0xf]
      %v3248 = vld [vmem:[%s4 + $0x9c] sm:$0xf]
      %v3249 = vld [vmem:[%s4 + $0xa0] sm:$0xf]
      %v3250 = vld [vmem:[%s4 + $0xa4] sm:$0xf]
      %v3251 = vld [vmem:[%s4 + $0xa8] sm:$0xf]
      %v3252 = vld [vmem:[%s4 + $0xac] sm:$0xf]
      %v3253 = vld [vmem:[%s4 + $0xb0] sm:$0xf]
      %v3254 = vld [vmem:[%s4 + $0xb4] sm:$0xf]
      %v3255 = vld [vmem:[%s4 + $0xb8] sm:$0xf]
      %v3256 = vld [vmem:[%s4 + $0xbc] sm:$0xf]
      %v3257 = vld [vmem:[%s4 + $0xc0] sm:$0xf]
      %v3258 = vld [vmem:[%s4 + $0xc4] sm:$0xf]
      %v3259 = vld [vmem:[%s4 + $0xc8] sm:$0xf]
      %v3260 = vld [vmem:[%s4 + $0xcc] sm:$0xf]
      %v3261 = vld [vmem:[%s4 + $0xd0] sm:$0xf]
      %v3262 = vld [vmem:[%s4 + $0xd4] sm:$0xf]
      %v3263 = vld [vmem:[%s4 + $0xd8] sm:$0xf]
      %v3264 = vld [vmem:[%s4 + $0xdc] sm:$0xf]
      %v3265 = vld [vmem:[%s4 + $0xe0] sm:$0xf]
      %v3266 = vld [vmem:[%s4 + $0xe4] sm:$0xf]
      %v3267 = vld [vmem:[%s4 + $0xe8] sm:$0xf]
      %v3268 = vld [vmem:[%s4 + $0xec] sm:$0xf]
      %v3269 = vld [vmem:[%s4 + $0xf0] sm:$0xf]
      %v3270 = vld [vmem:[%s4 + $0xf4] sm:$0xf]
      %v3271 = vld [vmem:[%s4 + $0xf8] sm:$0xf]
      %v3272 = vld [vmem:[%s4 + $0xfc] sm:$0xf]
      %v3273 = vld [vmem:[%s4 + $0x100] sm:$0xf]
      %v3274 = vld [vmem:[%s4 + $0x104] sm:$0xf]
      %v3275 = vld [vmem:[%s4 + $0x108] sm:$0xf]
      %v3276 = vld [vmem:[%s4 + $0x10c] sm:$0xf]
      %v3277 = vld [vmem:[%s4 + $0x110] sm:$0xf]
      %v3278 = vld [vmem:[%s4 + $0x114] sm:$0xf]
      %v3279 = vld [vmem:[%s4 + $0x118] sm:$0xf]
      %v3280 = vld [vmem:[%s4 + $0x11c] sm:$0xf]
      %v3281 = vld [vmem:[%s4 + $0x120] sm:$0xf]
      %v3282 = vld [vmem:[%s4 + $0x124] sm:$0xf]
      %v3283 = vld [vmem:[%s4 + $0x128] sm:$0xf]
      %v3284 = vld [vmem:[%s4 + $0x12c] sm:$0xf]
      %v3285 = vld [vmem:[%s4 + $0x130] sm:$0xf]
      %v3286 = vld [vmem:[%s4 + $0x134] sm:$0xf]
      %v3287 = vld [vmem:[%s4 + $0x138] sm:$0xf]
      %v3288 = vld [vmem:[%s4 + $0x13c] sm:$0xf]
      %v3289 = vld [vmem:[%s4 + $0x140] sm:$0xf]
      %v3290 = vld [vmem:[%s4 + $0x144] sm:$0xf]
      %v3291 = vld [vmem:[%s4 + $0x148] sm:$0xf]
      %v3292 = vld [vmem:[%s4 + $0x14c] sm:$0xf]
      %v3293 = vld [vmem:[%s4 + $0x150] sm:$0xf]
      %v3294 = vld [vmem:[%s4 + $0x154] sm:$0xf]
      %v3295 = vld [vmem:[%s4 + $0x158] sm:$0xf]
      %v3296 = vld [vmem:[%s4 + $0x15c] sm:$0xf]
      %v3297 = vld [vmem:[%s4 + $0x160] sm:$0xf]
      %v3298 = vld [vmem:[%s4 + $0x164] sm:$0xf]
      %v3299 = vld [vmem:[%s4 + $0x168] sm:$0xf]
      %v3300 = vld [vmem:[%s4 + $0x16c] sm:$0xf]
      %v3301 = vld [vmem:[%s4 + $0x170] sm:$0xf]
      %v3302 = vld [vmem:[%s4 + $0x174] sm:$0xf]
      %v3303 = vld [vmem:[%s4 + $0x178] sm:$0xf]
      %v3304 = vld [vmem:[%s4 + $0x17c] sm:$0xf]
      %v3305 = vld [vmem:[%s4 + $0x180] sm:$0xf]
      %v3306 = vld [vmem:[%s4 + $0x184] sm:$0xf]
      %v3307 = vld [vmem:[%s4 + $0x188] sm:$0xf]
      %v3308 = vld [vmem:[%s4 + $0x18c] sm:$0xf]
      %v3309 = vld [vmem:[%s5] sm:$0x1]
      %v3311 = vlaneseq
      %v3312 = vshrl.u32 %v3311, 7
      %v3313 = vsub.s32 0, %v3312
      %v3314 = vrot.slane %v3309, %v3313
      %v3332 = vunpack.c.l.b16 %v3193
      %v3333 = vunpack.c.h.b16 %v3193
      %v3334 = vunpack.c.l.b16 %v3194
      %v3335 = vunpack.c.h.b16 %v3194
      %v3336 = vunpack.c.l.b16 %v3195
      %v3337 = vunpack.c.h.b16 %v3195
      %v3338 = vunpack.c.l.b16 %v3196
      %v3339 = vunpack.c.l.b16 %v3197
      %v3340 = vunpack.c.h.b16 %v3197
      %v3341 = vunpack.c.l.b16 %v3198
      %v3342 = vunpack.c.h.b16 %v3198
      %v3343 = vunpack.c.l.b16 %v3199
      %v3344 = vunpack.c.h.b16 %v3199
      %v3345 = vunpack.c.l.b16 %v3200
      %v3346 = vunpack.c.l.b16 %v3201
      %v3347 = vunpack.c.h.b16 %v3201
      %v3348 = vunpack.c.l.b16 %v3202
      %v3349 = vunpack.c.h.b16 %v3202
      %v3350 = vunpack.c.l.b16 %v3203
      %v3351 = vunpack.c.h.b16 %v3203
      %v3352 = vunpack.c.l.b16 %v3204
      %v3353 = vunpack.c.l.b16 %v3205
      %v3354 = vunpack.c.h.b16 %v3205
      %v3355 = vunpack.c.l.b16 %v3206
      %v3356 = vunpack.c.h.b16 %v3206
      %v3357 = vunpack.c.l.b16 %v3207
      %v3358 = vunpack.c.h.b16 %v3207
      %v3359 = vunpack.c.l.b16 %v3208
      %v3360 = vpack.c.b16 %v3339, %v3332
      %v3361 = vpack.c.b16 %v3340, %v3333
      %v3362 = vpack.c.b16 %v3341, %v3334
      %v3363 = vpack.c.b16 %v3342, %v3335
      %v3364 = vpack.c.b16 %v3343, %v3336
      %v3365 = vpack.c.b16 %v3344, %v3337
      %v3366 = vpack.c.b16 %v3345, %v3338
      %v3367 = vpack.c.b16 %v3353, %v3346
      %v3368 = vpack.c.b16 %v3354, %v3347
      %v3369 = vpack.c.b16 %v3355, %v3348
      %v3370 = vpack.c.b16 %v3356, %v3349
      %v3371 = vpack.c.b16 %v3357, %v3350
      %v3372 = vpack.c.b16 %v3358, %v3351
      %v3373 = vpack.c.b16 %v3359, %v3352
      %v3486 = vunpack.c.l.b16 %v3209
      %v3487 = vunpack.c.l.b16 %v3210
      %v3488 = vunpack.c.l.b16 %v3211
      %v3489 = vunpack.c.l.b16 %v3212
      %v3490 = vunpack.c.l.b16 %v3213
      %v3491 = vunpack.c.l.b16 %v3214
      %v3492 = vunpack.c.l.b16 %v3215
      %v3493 = vunpack.c.l.b16 %v3216
      %v3494 = vunpack.c.l.b16 %v3217
      %v3495 = vunpack.c.l.b16 %v3218
      %v3496 = vunpack.c.l.b16 %v3219
      %v3497 = vunpack.c.l.b16 %v3220
      %v3498 = vunpack.c.l.b16 %v3221
      %v3499 = vunpack.c.l.b16 %v3222
      %v3500 = vunpack.c.l.b16 %v3223
      %v3501 = vunpack.c.l.b16 %v3224
      %v3502 = vunpack.c.l.b16 %v3225
      %v3503 = vunpack.c.l.b16 %v3226
      %v3504 = vunpack.c.l.b16 %v3227
      %v3505 = vunpack.c.l.b16 %v3228
      %v3506 = vunpack.c.l.b16 %v3229
      %v3507 = vunpack.c.l.b16 %v3230
      %v3508 = vunpack.c.l.b16 %v3231
      %v3509 = vunpack.c.l.b16 %v3232
      %v3510 = vunpack.c.l.b16 %v3233
      %v3511 = vunpack.c.l.b16 %v3234
      %v3512 = vunpack.c.l.b16 %v3235
      %v3513 = vunpack.c.l.b16 %v3236
      %v3514 = vunpack.c.l.b16 %v3237
      %v3515 = vunpack.c.l.b16 %v3238
      %v3516 = vunpack.c.l.b16 %v3239
      %v3517 = vunpack.c.l.b16 %v3240
      %v3518 = vunpack.c.l.b16 %v3241
      %v3519 = vunpack.c.l.b16 %v3242
      %v3520 = vunpack.c.l.b16 %v3243
      %v3521 = vunpack.c.l.b16 %v3244
      %v3522 = vunpack.c.l.b16 %v3245
      %v3523 = vunpack.c.l.b16 %v3246
      %v3524 = vunpack.c.l.b16 %v3247
      %v3525 = vunpack.c.l.b16 %v3248
      %v3526 = vunpack.c.l.b16 %v3249
      %v3527 = vunpack.c.l.b16 %v3250
      %v3528 = vunpack.c.l.b16 %v3251
      %v3529 = vunpack.c.l.b16 %v3252
      %v3530 = vunpack.c.l.b16 %v3253
      %v3531 = vunpack.c.l.b16 %v3254
      %v3532 = vunpack.c.l.b16 %v3255
      %v3533 = vunpack.c.l.b16 %v3256
      %v3534 = vunpack.c.l.b16 %v3257
      %v3535 = vunpack.c.l.b16 %v3258
      %v3536 = vunpack.c.l.b16 %v3259
      %v3537 = vunpack.c.l.b16 %v3260
      %v3538 = vunpack.c.l.b16 %v3261
      %v3539 = vunpack.c.l.b16 %v3262
      %v3540 = vunpack.c.l.b16 %v3263
      %v3541 = vunpack.c.l.b16 %v3264
      %v3542 = vunpack.c.l.b16 %v3265
      %v3543 = vunpack.c.l.b16 %v3266
      %v3544 = vunpack.c.l.b16 %v3267
      %v3545 = vunpack.c.l.b16 %v3268
      %v3546 = vunpack.c.l.b16 %v3269
      %v3547 = vunpack.c.l.b16 %v3270
      %v3548 = vunpack.c.l.b16 %v3271
      %v3549 = vunpack.c.l.b16 %v3272
      %v3550 = vunpack.c.l.b16 %v3273
      %v3551 = vunpack.c.l.b16 %v3274
      %v3552 = vunpack.c.l.b16 %v3275
      %v3553 = vunpack.c.l.b16 %v3276
      %v3554 = vunpack.c.l.b16 %v3277
      %v3555 = vunpack.c.l.b16 %v3278
      %v3556 = vunpack.c.l.b16 %v3279
      %v3557 = vunpack.c.l.b16 %v3280
      %v3558 = vunpack.c.l.b16 %v3281
      %v3559 = vunpack.c.l.b16 %v3282
      %v3560 = vunpack.c.l.b16 %v3283
      %v3561 = vunpack.c.l.b16 %v3284
      %v3562 = vunpack.c.l.b16 %v3285
      %v3563 = vunpack.c.l.b16 %v3286
      %v3564 = vunpack.c.l.b16 %v3287
      %v3565 = vunpack.c.l.b16 %v3288
      %v3566 = vunpack.c.l.b16 %v3289
      %v3567 = vunpack.c.l.b16 %v3290
      %v3568 = vunpack.c.l.b16 %v3291
      %v3569 = vunpack.c.l.b16 %v3292
      %v3570 = vunpack.c.l.b16 %v3293
      %v3571 = vunpack.c.l.b16 %v3294
      %v3572 = vunpack.c.l.b16 %v3295
      %v3573 = vunpack.c.l.b16 %v3296
      %v3574 = vunpack.c.l.b16 %v3297
      %v3575 = vunpack.c.l.b16 %v3298
      %v3576 = vunpack.c.l.b16 %v3299
      %v3577 = vunpack.c.l.b16 %v3300
      %v3578 = vunpack.c.l.b16 %v3301
      %v3579 = vunpack.c.l.b16 %v3302
      %v3580 = vunpack.c.l.b16 %v3303
      %v3581 = vunpack.c.l.b16 %v3304
      %v3582 = vunpack.c.l.b16 %v3305
      %v3583 = vunpack.c.l.b16 %v3306
      %v3584 = vunpack.c.l.b16 %v3307
      %v3585 = vunpack.c.l.b16 %v3308
      %v3586 = vpack.c.b16 %v3487, %v3486
      %v3587 = vpack.c.b16 %v3489, %v3488
      %v3588 = vpack.c.b16 %v3491, %v3490
      %v3589 = vpack.c.b16 %v3493, %v3492
      %v3590 = vpack.c.b16 %v3495, %v3494
      %v3591 = vpack.c.b16 %v3497, %v3496
      %v3592 = vpack.c.b16 %v3499, %v3498
      %v3593 = vpack.c.b16 %v3501, %v3500
      %v3594 = vpack.c.b16 %v3503, %v3502
      %v3595 = vpack.c.b16 %v3505, %v3504
      %v3596 = vpack.c.b16 %v3507, %v3506
      %v3597 = vpack.c.b16 %v3509, %v3508
      %v3598 = vpack.c.b16 %v3511, %v3510
      %v3599 = vpack.c.b16 %v3513, %v3512
      %v3600 = vpack.c.b16 %v3515, %v3514
      %v3601 = vpack.c.b16 %v3517, %v3516
      %v3602 = vpack.c.b16 %v3519, %v3518
      %v3603 = vpack.c.b16 %v3521, %v3520
      %v3604 = vpack.c.b16 %v3523, %v3522
      %v3605 = vpack.c.b16 %v3525, %v3524
      %v3606 = vpack.c.b16 %v3527, %v3526
      %v3607 = vpack.c.b16 %v3529, %v3528
      %v3608 = vpack.c.b16 %v3531, %v3530
      %v3609 = vpack.c.b16 %v3533, %v3532
      %v3610 = vpack.c.b16 %v3535, %v3534
      %v3611 = vpack.c.b16 %v3537, %v3536
      %v3612 = vpack.c.b16 %v3539, %v3538
      %v3613 = vpack.c.b16 %v3541, %v3540
      %v3614 = vpack.c.b16 %v3543, %v3542
      %v3615 = vpack.c.b16 %v3545, %v3544
      %v3616 = vpack.c.b16 %v3547, %v3546
      %v3617 = vpack.c.b16 %v3549, %v3548
      %v3618 = vpack.c.b16 %v3551, %v3550
      %v3619 = vpack.c.b16 %v3553, %v3552
      %v3620 = vpack.c.b16 %v3555, %v3554
      %v3621 = vpack.c.b16 %v3557, %v3556
      %v3622 = vpack.c.b16 %v3559, %v3558
      %v3623 = vpack.c.b16 %v3561, %v3560
      %v3624 = vpack.c.b16 %v3563, %v3562
      %v3625 = vpack.c.b16 %v3565, %v3564
      %v3626 = vpack.c.b16 %v3567, %v3566
      %v3627 = vpack.c.b16 %v3569, %v3568
      %v3628 = vpack.c.b16 %v3571, %v3570
      %v3629 = vpack.c.b16 %v3573, %v3572
      %v3630 = vpack.c.b16 %v3575, %v3574
      %v3631 = vpack.c.b16 %v3577, %v3576
      %v3632 = vpack.c.b16 %v3579, %v3578
      %v3633 = vpack.c.b16 %v3581, %v3580
      %v3634 = vpack.c.b16 %v3583, %v3582
      %v3635 = vpack.c.b16 %v3585, %v3584
      %vm3686 = vcmask 261120
      %v3688 = vsel %vm3686, %v3366, 0
      %v3691 = vsel %vm3686, %v3373, 0
      %3693 = vmatprep.subr.bf16.mxu0 0
      %3694 = vmatpush1.bf16.msra.mxu0 %v3593
      %3695 = vmatprep.subr.bf16.mxu0 0
      %3696 = vmatpush1.bf16.msra.mxu0 %v3592
      %3697 = vmatprep.subr.bf16.mxu0 0
      %3698 = vmatpush1.bf16.msra.mxu0 %v3591
      %3699 = vmatprep.subr.bf16.mxu0 0
      %3700 = vmatpush1.bf16.msra.mxu0 %v3590
      %3701 = vmatprep.subr.bf16.mxu0 0
      %3702 = vmatpush1.bf16.msra.mxu0 %v3589
      %3703 = vmatprep.subr.bf16.mxu0 0
      %3704 = vmatpush1.bf16.msra.mxu0 %v3588
      %3705 = vmatprep.subr.bf16.mxu0 0
      %3706 = vmatpush1.bf16.msra.mxu0 %v3587
      %3707 = vmatprep.subr.bf16.mxu0 0
      %3708 = vmatpush1.bf16.msra.mxu0 %v3586
      %3709 = vmatprep.subr.bf16.mxu0 0
      %3710 = vmatpush2.bf16.msra.mxu0 %v3601
      %3711 = vmatprep.subr.bf16.mxu0 0
      %3712 = vmatpush2.bf16.msra.mxu0 %v3600
      %3713 = vmatprep.subr.bf16.mxu0 0
      %3714 = vmatpush2.bf16.msra.mxu0 %v3599
      %3715 = vmatprep.subr.bf16.mxu0 0
      %3716 = vmatpush2.bf16.msra.mxu0 %v3598
      %3717 = vmatprep.subr.bf16.mxu0 0
      %3718 = vmatpush2.bf16.msra.mxu0 %v3597
      %3719 = vmatprep.subr.bf16.mxu0 0
      %3720 = vmatpush2.bf16.msra.mxu0 %v3596
      %3721 = vmatprep.subr.bf16.mxu0 0
      %3722 = vmatpush2.bf16.msra.mxu0 %v3595
      %3723 = vmatprep.subr.bf16.mxu0 0
      %3724 = vmatpush2.bf16.msra.mxu0 %v3594
      %3725 = vmatprep.mubr.bf16.mxu0 %v3361
      %3726 = vmatmul.mubr.bf16.gmra.mxu0 %v3360
      %v3727 = vpop.f32.mrf.mxu0
      %v3728 = vadd.f32 %v3314, %v3727
      %v3729 = vpop.f32.mrf.mxu0
      %v3730 = vpop.f32.mrf.mxu0
      %v3731 = vadd.f32 %v3314, %v3730
      %v3732 = vpop.f32.mrf.mxu0
      %3733 = vmatprep.mubr.bf16.mxu0 %v3368
      %3734 = vmatmul.mubr.bf16.gmra.mxu0 %v3367
      %v3735 = vpop.f32.mrf.mxu0
      %v3736 = vadd.f32 %v3314, %v3735
      %v3737 = vpop.f32.mrf.mxu0
      %v3738 = vpop.f32.mrf.mxu0
      %v3739 = vadd.f32 %v3314, %v3738
      %v3740 = vpop.f32.mrf.mxu0
      %3741 = vdwg.mxu0
      %3742 = vmatprep.subr.bf16.mxu0 0
      %3743 = vmatpush1.bf16.msra.mxu0 %v3609
      %3744 = vmatprep.subr.bf16.mxu0 0
      %3745 = vmatpush1.bf16.msra.mxu0 %v3608
      %3746 = vmatprep.subr.bf16.mxu0 0
      %3747 = vmatpush1.bf16.msra.mxu0 %v3607
      %3748 = vmatprep.subr.bf16.mxu0 0
      %3749 = vmatpush1.bf16.msra.mxu0 %v3606
      %3750 = vmatprep.subr.bf16.mxu0 0
      %3751 = vmatpush1.bf16.msra.mxu0 %v3605
      %3752 = vmatprep.subr.bf16.mxu0 0
      %3753 = vmatpush1.bf16.msra.mxu0 %v3604
      %3754 = vmatprep.subr.bf16.mxu0 0
      %3755 = vmatpush1.bf16.msra.mxu0 %v3603
      %3756 = vmatprep.subr.bf16.mxu0 0
      %3757 = vmatpush1.bf16.msra.mxu0 %v3602
      %3758 = vmatprep.subr.bf16.mxu0 0
      %3759 = vmatpush2.bf16.msra.mxu0 %v3617
      %3760 = vmatprep.subr.bf16.mxu0 0
      %3761 = vmatpush2.bf16.msra.mxu0 %v3616
      %3762 = vmatprep.subr.bf16.mxu0 0
      %3763 = vmatpush2.bf16.msra.mxu0 %v3615
      %3764 = vmatprep.subr.bf16.mxu0 0
      %3765 = vmatpush2.bf16.msra.mxu0 %v3614
      %3766 = vmatprep.subr.bf16.mxu0 0
      %3767 = vmatpush2.bf16.msra.mxu0 %v3613
      %3768 = vmatprep.subr.bf16.mxu0 0
      %3769 = vmatpush2.bf16.msra.mxu0 %v3612
      %3770 = vmatprep.subr.bf16.mxu0 0
      %3771 = vmatpush2.bf16.msra.mxu0 %v3611
      %3772 = vmatprep.subr.bf16.mxu0 0
      %3773 = vmatpush2.bf16.msra.mxu0 %v3610
      %3774 = vmatprep.mubr.bf16.mxu0 %v3363
      %3775 = vmatmul.mubr.bf16.gmra.mxu0 %v3362
      %v3776 = vpop.f32.mrf.mxu0
      %v3777 = vadd.f32 %v3728, %v3776
      %v3778 = vpop.f32.mrf.mxu0
      %v3779 = vpop.f32.mrf.mxu0
      %v3780 = vadd.f32 %v3731, %v3779
      %v3781 = vpop.f32.mrf.mxu0
      %3782 = vmatprep.mubr.bf16.mxu0 %v3370
      %3783 = vmatmul.mubr.bf16.gmra.mxu0 %v3369
      %v3784 = vpop.f32.mrf.mxu0
      %v3785 = vadd.f32 %v3736, %v3784
      %v3786 = vpop.f32.mrf.mxu0
      %v3787 = vpop.f32.mrf.mxu0
      %v3788 = vadd.f32 %v3739, %v3787
      %v3789 = vpop.f32.mrf.mxu0
      %3790 = vdwg.mxu0
      %3791 = vmatprep.subr.bf16.mxu0 0
      %3792 = vmatpush1.bf16.msra.mxu0 %v3625
      %3793 = vmatprep.subr.bf16.mxu0 0
      %3794 = vmatpush1.bf16.msra.mxu0 %v3624
      %3795 = vmatprep.subr.bf16.mxu0 0
      %3796 = vmatpush1.bf16.msra.mxu0 %v3623
      %3797 = vmatprep.subr.bf16.mxu0 0
      %3798 = vmatpush1.bf16.msra.mxu0 %v3622
      %3799 = vmatprep.subr.bf16.mxu0 0
      %3800 = vmatpush1.bf16.msra.mxu0 %v3621
      %3801 = vmatprep.subr.bf16.mxu0 0
      %3802 = vmatpush1.bf16.msra.mxu0 %v3620
      %3803 = vmatprep.subr.bf16.mxu0 0
      %3804 = vmatpush1.bf16.msra.mxu0 %v3619
      %3805 = vmatprep.subr.bf16.mxu0 0
      %3806 = vmatpush1.bf16.msra.mxu0 %v3618
      %3807 = vmatprep.subr.bf16.mxu0 0
      %3808 = vmatpush2.bf16.msra.mxu0 %v3633
      %3809 = vmatprep.subr.bf16.mxu0 0
      %3810 = vmatpush2.bf16.msra.mxu0 %v3632
      %3811 = vmatprep.subr.bf16.mxu0 0
      %3812 = vmatpush2.bf16.msra.mxu0 %v3631
      %3813 = vmatprep.subr.bf16.mxu0 0
      %3814 = vmatpush2.bf16.msra.mxu0 %v3630
      %3815 = vmatprep.subr.bf16.mxu0 0
      %3816 = vmatpush2.bf16.msra.mxu0 %v3629
      %3817 = vmatprep.subr.bf16.mxu0 0
      %3818 = vmatpush2.bf16.msra.mxu0 %v3628
      %3819 = vmatprep.subr.bf16.mxu0 0
      %3820 = vmatpush2.bf16.msra.mxu0 %v3627
      %3821 = vmatprep.subr.bf16.mxu0 0
      %3822 = vmatpush2.bf16.msra.mxu0 %v3626
      %3823 = vmatprep.mubr.bf16.mxu0 %v3365
      %3824 = vmatmul.mubr.bf16.gmra.mxu0 %v3364
      %v3825 = vpop.f32.mrf.mxu0
      %v3826 = vadd.f32 %v3777, %v3825
      %v3827 = vpop.f32.mrf.mxu0
      %v3828 = vpop.f32.mrf.mxu0
      %v3829 = vadd.f32 %v3780, %v3828
      %v3830 = vpop.f32.mrf.mxu0
      %3831 = vmatprep.mubr.bf16.mxu0 %v3372
      %3832 = vmatmul.mubr.bf16.gmra.mxu0 %v3371
      %v3833 = vpop.f32.mrf.mxu0
      %v3834 = vadd.f32 %v3785, %v3833
      %v3835 = vpop.f32.mrf.mxu0
      %v3836 = vpop.f32.mrf.mxu0
      %v3837 = vadd.f32 %v3788, %v3836
      %v3838 = vpop.f32.mrf.mxu0
      %3839 = vdwg.mxu0
      %3840 = vmatprep.subr.bf16.mxu0 0
      %3841 = vmatpush1.bf16.msra.mxu0 0
      %3842 = vmatprep.subr.bf16.mxu0 0
      %3843 = vmatpush1.bf16.msra.mxu0 0
      %3844 = vmatprep.subr.bf16.mxu0 0
      %3845 = vmatpush1.bf16.msra.mxu0 0
      %3846 = vmatprep.subr.bf16.mxu0 0
      %3847 = vmatpush1.bf16.msra.mxu0 0
      %3848 = vmatprep.subr.bf16.mxu0 0
      %3849 = vmatpush1.bf16.msra.mxu0 0
      %3850 = vmatprep.subr.bf16.mxu0 0
      %3851 = vmatpush1.bf16.msra.mxu0 0
      %3852 = vmatprep.subr.bf16.mxu0 0
      %3853 = vmatpush1.bf16.msra.mxu0 %v3635
      %3854 = vmatprep.subr.bf16.mxu0 0
      %3855 = vmatpush1.bf16.msra.mxu0 %v3634
      %3856 = vmatprep.subr.bf16.mxu0 0
      %3857 = vmatpush2.bf16.msra.mxu0 0
      %3858 = vmatprep.subr.bf16.mxu0 0
      %3859 = vmatpush2.bf16.msra.mxu0 0
      %3860 = vmatprep.subr.bf16.mxu0 0
      %3861 = vmatpush2.bf16.msra.mxu0 0
      %3862 = vmatprep.subr.bf16.mxu0 0
      %3863 = vmatpush2.bf16.msra.mxu0 0
      %3864 = vmatprep.subr.bf16.mxu0 0
      %3865 = vmatpush2.bf16.msra.mxu0 0
      %3866 = vmatprep.subr.bf16.mxu0 0
      %3867 = vmatpush2.bf16.msra.mxu0 0
      %3868 = vmatprep.subr.bf16.mxu0 0
      %3869 = vmatpush2.bf16.msra.mxu0 0
      %3870 = vmatprep.subr.bf16.mxu0 0
      %3871 = vmatpush2.bf16.msra.mxu0 0
      %3872 = vmatprep.mubr.bf16.mxu0 0
      %3873 = vmatmul.mubr.bf16.gmra.mxu0 %v3688
      %v3874 = vpop.f32.mrf.mxu0
      %v3875 = vadd.f32 %v3826, %v3874
      %v3876 = vpop.f32.mrf.mxu0
      %v3877 = vpop.f32.mrf.mxu0
      %v3878 = vadd.f32 %v3829, %v3877
      %v3879 = vpop.f32.mrf.mxu0
      %3880 = vmatprep.mubr.bf16.mxu0 0
      %3881 = vmatmul.mubr.bf16.gmra.mxu0 %v3691
      %v3882 = vpop.f32.mrf.mxu0
      %v3883 = vadd.f32 %v3834, %v3882
      %v3884 = vpop.f32.mrf.mxu0
      %v3885 = vpop.f32.mrf.mxu0
      %v3886 = vadd.f32 %v3837, %v3885
      %v3887 = vpop.f32.mrf.mxu0
      %3888 = vdwg.mxu0
      %vm3891 = vcmask 1043456
      %v3892 = vrot.slane %v3883, 4
      %v3893 = vrot.slane %v3886, 4
      %v3894 = vsel %vm3891, %v3892, %v3893
      %v3897 = vsel %vm3891, %v3878, %v3892
      %v3898 = vld [vmem:[%s331] sm:$0xff]
      %v3899 = vld [vmem:[%s331 + $0x8] sm:$0xff]
      %v3900 = vld [vmem:[%s331 + $0x10] sm:$0xff]
      %v3901 = vld [vmem:[%s334] sm:$0x1]
      %v3903 = vlaneseq
      %v3904 = vshrl.u32 %v3903, 7
      %v3905 = vsub.s32 0, %v3904
      %v3906 = vrot.slane %v3901, %v3905
      %3907 = vset.pattern.permute.xlu0 0
      %3908 = vperm.xlu0 %3907, %v3906
      %v3909 = vpop.permute.xlu0 %3908
      %v3911 = vmul.f32 %v3909, %v3875
      %v3912 = vmul.f32 %v3909, %v3897
      %v3913 = vmul.f32 %v3909, %v3894
      %v3914 = vadd.f32 %v3898, %v3911
      %v3915 = vadd.f32 %v3899, %v3912
      %v3916 = vadd.f32 %v3900, %v3913
      %3917 = vst.msk [vmem:[%s339] sm:$0xff] %vm1798, %v3914
      %3918 = vst.msk [vmem:[%s339 + $0x8] sm:$0xff] %vm1798, %v3915
      %3919 = vst.msk [vmem:[%s339 + $0x10] sm:$0xff] %vm1798, %v3916
      %p3920 = scmp.lt.s32.totalorder %s19, 1
      %s3921 = scalar_select %p3920, %s19, 1
      %s3922 = smul.addr %s3921, 3
      %s3923 = smul.addr %s3922, 8
      %s3924 = scalar_lea.vmem %s8, %s3923
      // Predicated region
      $region53: #{_times_block_core.2} parent=51 // pred_check
        %p3925 = pneg %p220
      $region54: #{_times_block_core.2} parent=51 // pred_check_branch
        %3927 = sbr.rel (%p3925) target = $region56
      $region55: #{_times_block_core.2} parent=51 // pred_region
        _
      $region56: #{_times_block_core.2} parent=51 // pred_fallthru
        _
    $region52: #{_times_block_core.2} parent=5 // pred_fallthru
      _
    %p3928 = scmp.le.s32.totalorder 2, %s14
    // Predicated region
    $region57: #{_times_block_core.2} parent=5 // pred_check
      %p3929 = pneg %p3928
    $region58: #{_times_block_core.2} parent=5 // pred_check_branch
      %3931 = sbr.rel (%p3929) target = $region60
    $region59: #{_times_block_core.2} parent=5 // pred_region
      %s3932 = ssub.s32 %s14, 2
      // Predicated region
      $region61: #{_times_block_core.2} parent=59 // pred_check
        %p3933 = pneg %p226
      $region62: #{_times_block_core.2} parent=59 // pred_check_branch
        %3935 = sbr.rel (%p3933) target = $region64
      $region63: #{_times_block_core.2} parent=59 // pred_region
        %p3936 = scmp.lt.s32.totalorder %s20, 1
        %s3937 = scalar_select %p3936, %s20, 1
        %s3938 = smul.addr %s3937, 3
        %s3939 = smul.addr %s3938, 8
        %s3940 = scalar_lea.vmem %s8, %s3939
      $region64: #{_times_block_core.2} parent=59 // pred_fallthru
        _
    $region60: #{_times_block_core.2} parent=5 // pred_fallthru
      _
  $region6: #{_times_block_core.2} parent=0 // loop_footer
    %s18 = sadd.s32 1, %s14
  $region7: #{_times_block_core.2} parent=0 // loop_footer_branch
    %13 = sbr.rel target = $region3
  $region8: #{_times_block_core.2} parent=0 // loop_exit
    _

// kernel: _times_block_core.3
$region0: #{_times_block_core.3}
  #allocation0 [shape = 'u32[]', space=smem, size = 0x4, offset = 0x4, fixed_abs, tag = 'smem constant byte address 0x4 - core index']
  #allocation1 [shape = 'u32[144,128]{1,0:T(1,128)}', space=vmem, size = 0x12000, scoped, tag = 'internal scratch']
  #allocation2 [shape = 'bf16[104,16]{1,0:T(8,128)(2,1)}', space=vmem, size = 0x6800, scoped, tag = 'scratch operand']
  #allocation3 [shape = 'bf16[104,32]{1,0:T(8,128)(2,1)}', space=vmem, size = 0x6800, scoped, tag = 'scratch operand']
  #allocation4 [shape = 'bf16[64,400]{1,0:T(8,128)(2,1)}', space=vmem, size = 0x10000, scoped, tag = 'scratch operand']
  #allocation5 [shape = 'bf16[64,800]{1,0:T(8,128)(2,1)}', space=vmem, size = 0x1c000, scoped, tag = 'scratch operand']
  %s0 = inlined_call_operand.vmem [shape: bf16[2,24,16], index: 0, kind: input, shape index: {}]
  %s1 = inlined_call_operand.vmem [shape: f32[2,24,16], index: 1, kind: input, shape index: {}, may-alias: {1,8}]
  %s2 = inlined_call_operand.vmem [shape: bf16[400,32], index: 2, kind: input, shape index: {}]
  %s3 = inlined_call_operand.vmem [shape: f32[1,32], index: 3, kind: input, shape index: {}]
  %s4 = inlined_call_operand.vmem [shape: bf16[800,16], index: 4, kind: input, shape index: {}]
  %s5 = inlined_call_operand.vmem [shape: f32[1,16], index: 5, kind: input, shape index: {}]
  %s6 = inlined_call_operand.vmem [shape: f32[2,1,1], index: 6, kind: input, shape index: {}]
  %s7 = inlined_call_operand.vmem [shape: f32[64,1], index: 7, kind: input, shape index: {}]
  %s8 = inlined_call_operand.vmem [shape: f32[2,24,16], index: 8, kind: output, shape index: {}, may-alias: {1,8}]
  %s9 = sld [smem:[#allocation0]]
  $region65: #{_times_block_core.3} parent=0
    _
  %s11 = ssub.s32 1, %s9
  %s12 = scalar_select 0, %s11, %s9
  loop: start=0, step=1, limit=4
  $region2: #{_times_block_core.3} parent=0 // loop_pre_header
    _
  $region3: #{_times_block_core.3} parent=0 // loop_header
    %s14 = sphi 0, %s18
    %p15 = scmp.ge.s32.totalorder %s14, 4
    %s24 = sphi 0, %s26
    %s27 = sphi 0, %s24
    %s28 = sphi 0, %s27
    %s44 = sphi 0, %s28
    %s50 = sphi 0, %s52
    %s53 = sphi 0, %s50
    %s54 = sphi 0, %s53
    %s70 = sphi 0, %s54
    %s74 = sphi 0, %s74
    %s76 = sphi 0, %s74
    %s77 = sphi 0, %s76
    %s91 = sphi 0, %s77
    %s95 = sphi 0, %s95
    %s97 = sphi 0, %s95
    %s98 = sphi 0, %s97
    %s112 = sphi 0, %s98
    %s116 = sphi 0, %s116
    %s118 = sphi 0, %s116
    %s119 = sphi 0, %s118
    %s133 = sphi 0, %s119
    %s137 = sphi 0, %s137
    %s139 = sphi 0, %s137
    %s140 = sphi 0, %s139
    %s154 = sphi 0, %s140
    %s160 = sphi 0, %s162
    %s163 = sphi 0, %s160
    %s164 = sphi 0, %s163
    %s180 = sphi 0, %s164
    %s184 = sphi 0, %s184
    %s186 = sphi 0, %s184
    %s187 = sphi 0, %s186
    %s201 = sphi 0, %s187
    %s207 = sphi 0, %s209
    %s210 = sphi 0, %s207
    %s211 = sphi 0, %s210
    %s227 = sphi 0, %s211
  $region4: #{_times_block_core.3} parent=0 // loop_header_branch
    %17 = sbr.rel (%p15) target = $region8
  $region5: #{_times_block_core.3} parent=0 // loop_body
    %s19 = ssub.s32 %s14, 1
    %s20 = ssub.s32 %s14, 2
    %s21 = sadd.s32 %s14, 1
    %s22 = ssub.s32 %s14, %s21
    %p23 = scmp.eq.s32.totalorder %s22, 0
    %s25 = sadd.s32 %s24, 1
    %s26 = scalar_select %p23, %s24, %s25
    %p29 = pneg %p23
    %p30 = scmp.eq.s32.totalorder %s14, 1
    %p31 = por %p29, %p30
    %p32 = scmp.ne.s32.totalorder %s24, %s27
    %p33 = scmp.eq.s32.totalorder %s14, 0
    %p34 = por %p32, %p33
    %p35 = scmp.ne.s32.totalorder %s24, %s27
    %p36 = scmp.eq.s32.totalorder %s19, 1
    %p37 = por %p35, %p36
    %p38 = scmp.ne.s32.totalorder %s27, %s28
    %p39 = scmp.eq.s32.totalorder %s19, 0
    %p40 = por %p38, %p39
    %p41 = scmp.ne.s32.totalorder %s27, %s28
    %p42 = scmp.eq.s32.totalorder %s20, 1
    %p43 = por %p41, %p42
    %p45 = scmp.ne.s32.totalorder %s28, %s44
    %p46 = scmp.eq.s32.totalorder %s20, 0
    %p47 = por %p45, %p46
    %s48 = ssub.s32 %s14, %s21
    %p49 = scmp.eq.s32.totalorder %s48, 0
    %s51 = sadd.s32 %s50, 1
    %s52 = scalar_select %p49, %s50, %s51
    %p55 = pneg %p49
    %p56 = scmp.eq.s32.totalorder %s14, 1
    %p57 = por %p55, %p56
    %p58 = scmp.ne.s32.totalorder %s50, %s53
    %p59 = scmp.eq.s32.totalorder %s14, 0
    %p60 = por %p58, %p59
    %p61 = scmp.ne.s32.totalorder %s50, %s53
    %p62 = scmp.eq.s32.totalorder %s19, 1
    %p63 = por %p61, %p62
    %p64 = scmp.ne.s32.totalorder %s53, %s54
    %p65 = scmp.eq.s32.totalorder %s19, 0
    %p66 = por %p64, %p65
    %p67 = scmp.ne.s32.totalorder %s53, %s54
    %p68 = scmp.eq.s32.totalorder %s20, 1
    %p69 = por %p67, %p68
    %p71 = scmp.ne.s32.totalorder %s54, %s70
    %p72 = scmp.eq.s32.totalorder %s20, 0
    %p73 = por %p71, %p72
    %s75 = sadd.s32 %s74, 1
    %p78 = scmp.eq.s32.totalorder %s14, 1
    %p79 = scmp.ne.s32.totalorder %s74, %s76
    %p80 = scmp.eq.s32.totalorder %s14, 0
    %p81 = por %p79, %p80
    %p82 = scmp.ne.s32.totalorder %s74, %s76
    %p83 = scmp.eq.s32.totalorder %s19, 1
    %p84 = por %p82, %p83
    %p85 = scmp.ne.s32.totalorder %s76, %s77
    %p86 = scmp.eq.s32.totalorder %s19, 0
    %p87 = por %p85, %p86
    %p88 = scmp.ne.s32.totalorder %s76, %s77
    %p89 = scmp.eq.s32.totalorder %s20, 1
    %p90 = por %p88, %p89
    %p92 = scmp.ne.s32.totalorder %s77, %s91
    %p93 = scmp.eq.s32.totalorder %s20, 0
    %p94 = por %p92, %p93
    %s96 = sadd.s32 %s95, 1
    %p99 = scmp.eq.s32.totalorder %s14, 1
    %p100 = scmp.ne.s32.totalorder %s95, %s97
    %p101 = scmp.eq.s32.totalorder %s14, 0
    %p102 = por %p100, %p101
    %p103 = scmp.ne.s32.totalorder %s95, %s97
    %p104 = scmp.eq.s32.totalorder %s19, 1
    %p105 = por %p103, %p104
    %p106 = scmp.ne.s32.totalorder %s97, %s98
    %p107 = scmp.eq.s32.totalorder %s19, 0
    %p108 = por %p106, %p107
    %p109 = scmp.ne.s32.totalorder %s97, %s98
    %p110 = scmp.eq.s32.totalorder %s20, 1
    %p111 = por %p109, %p110
    %p113 = scmp.ne.s32.totalorder %s98, %s112
    %p114 = scmp.eq.s32.totalorder %s20, 0
    %p115 = por %p113, %p114
    %s117 = sadd.s32 %s116, 1
    %p120 = scmp.eq.s32.totalorder %s14, 1
    %p121 = scmp.ne.s32.totalorder %s116, %s118
    %p122 = scmp.eq.s32.totalorder %s14, 0
    %p123 = por %p121, %p122
    %p124 = scmp.ne.s32.totalorder %s116, %s118
    %p125 = scmp.eq.s32.totalorder %s19, 1
    %p126 = por %p124, %p125
    %p127 = scmp.ne.s32.totalorder %s118, %s119
    %p128 = scmp.eq.s32.totalorder %s19, 0
    %p129 = por %p127, %p128
    %p130 = scmp.ne.s32.totalorder %s118, %s119
    %p131 = scmp.eq.s32.totalorder %s20, 1
    %p132 = por %p130, %p131
    %p134 = scmp.ne.s32.totalorder %s119, %s133
    %p135 = scmp.eq.s32.totalorder %s20, 0
    %p136 = por %p134, %p135
    %s138 = sadd.s32 %s137, 1
    %p141 = scmp.eq.s32.totalorder %s14, 1
    %p142 = scmp.ne.s32.totalorder %s137, %s139
    %p143 = scmp.eq.s32.totalorder %s14, 0
    %p144 = por %p142, %p143
    %p145 = scmp.ne.s32.totalorder %s137, %s139
    %p146 = scmp.eq.s32.totalorder %s19, 1
    %p147 = por %p145, %p146
    %p148 = scmp.ne.s32.totalorder %s139, %s140
    %p149 = scmp.eq.s32.totalorder %s19, 0
    %p150 = por %p148, %p149
    %p151 = scmp.ne.s32.totalorder %s139, %s140
    %p152 = scmp.eq.s32.totalorder %s20, 1
    %p153 = por %p151, %p152
    %p155 = scmp.ne.s32.totalorder %s140, %s154
    %p156 = scmp.eq.s32.totalorder %s20, 0
    %p157 = por %p155, %p156
    %s158 = ssub.s32 %s14, %s21
    %p159 = scmp.eq.s32.totalorder %s158, 0
    %s161 = sadd.s32 %s160, 1
    %s162 = scalar_select %p159, %s160, %s161
    %p165 = pneg %p159
    %p166 = scmp.eq.s32.totalorder %s14, 1
    %p167 = por %p165, %p166
    %p168 = scmp.ne.s32.totalorder %s160, %s163
    %p169 = scmp.eq.s32.totalorder %s14, 0
    %p170 = por %p168, %p169
    %p171 = scmp.ne.s32.totalorder %s160, %s163
    %p172 = scmp.eq.s32.totalorder %s19, 1
    %p173 = por %p171, %p172
    %p174 = scmp.ne.s32.totalorder %s163, %s164
    %p175 = scmp.eq.s32.totalorder %s19, 0
    %p176 = por %p174, %p175
    %p177 = scmp.ne.s32.totalorder %s163, %s164
    %p178 = scmp.eq.s32.totalorder %s20, 1
    %p179 = por %p177, %p178
    %p181 = scmp.ne.s32.totalorder %s164, %s180
    %p182 = scmp.eq.s32.totalorder %s20, 0
    %p183 = por %p181, %p182
    %s185 = sadd.s32 %s184, 1
    %p188 = scmp.eq.s32.totalorder %s14, 1
    %p189 = scmp.ne.s32.totalorder %s184, %s186
    %p190 = scmp.eq.s32.totalorder %s14, 0
    %p191 = por %p189, %p190
    %p192 = scmp.ne.s32.totalorder %s184, %s186
    %p193 = scmp.eq.s32.totalorder %s19, 1
    %p194 = por %p192, %p193
    %p195 = scmp.ne.s32.totalorder %s186, %s187
    %p196 = scmp.eq.s32.totalorder %s19, 0
    %p197 = por %p195, %p196
    %p198 = scmp.ne.s32.totalorder %s186, %s187
    %p199 = scmp.eq.s32.totalorder %s20, 1
    %p200 = por %p198, %p199
    %p202 = scmp.ne.s32.totalorder %s187, %s201
    %p203 = scmp.eq.s32.totalorder %s20, 0
    %p204 = por %p202, %p203
    %s205 = ssub.s32 %s14, %s21
    %p206 = scmp.eq.s32.totalorder %s205, 0
    %s208 = sadd.s32 %s207, 1
    %s209 = scalar_select %p206, %s207, %s208
    %p212 = pneg %p206
    %p213 = scmp.eq.s32.totalorder %s14, 1
    %p214 = por %p212, %p213
    %p215 = scmp.ne.s32.totalorder %s207, %s210
    %p216 = scmp.eq.s32.totalorder %s14, 0
    %p217 = por %p215, %p216
    %p218 = scmp.ne.s32.totalorder %s207, %s210
    %p219 = scmp.eq.s32.totalorder %s19, 1
    %p220 = por %p218, %p219
    %p221 = scmp.ne.s32.totalorder %s210, %s211
    %p222 = scmp.eq.s32.totalorder %s19, 0
    %p223 = por %p221, %p222
    %p224 = scmp.ne.s32.totalorder %s210, %s211
    %p225 = scmp.eq.s32.totalorder %s20, 1
    %p226 = por %p224, %p225
    %p228 = scmp.ne.s32.totalorder %s211, %s227
    %p229 = scmp.eq.s32.totalorder %s20, 0
    %p230 = por %p228, %p229
    %p231 = scmp.le.s32.totalorder 1, %s14
    %p232 = scmp.lt.s32.totalorder %s14, 3
    %p233 = pnand %p231, %p232
    %p234 = pneg %p233
    // Predicated region
    $region9: #{_times_block_core.3} parent=5 // pred_check
      _
    $region10: #{_times_block_core.3} parent=5 // pred_check_branch
      %236 = sbr.rel (%p233) target = $region12
    $region11: #{_times_block_core.3} parent=5 // pred_region
      %s237 = ssub.s32 %s14, 1
      // Predicated region
      $region13: #{_times_block_core.3} parent=11 // pred_check
        %p238 = pneg %p87
      $region14: #{_times_block_core.3} parent=11 // pred_check_branch
        %240 = sbr.rel (%p238) target = $region16
      $region15: #{_times_block_core.3} parent=11 // pred_region
        _
      $region16: #{_times_block_core.3} parent=11 // pred_fallthru
        _
      // Predicated region
      $region17: #{_times_block_core.3} parent=11 // pred_check
        %p241 = pneg %p108
      $region18: #{_times_block_core.3} parent=11 // pred_check_branch
        %243 = sbr.rel (%p241) target = $region20
      $region19: #{_times_block_core.3} parent=11 // pred_region
        _
      $region20: #{_times_block_core.3} parent=11 // pred_fallthru
        _
      // Predicated region
      $region21: #{_times_block_core.3} parent=11 // pred_check
        %p244 = pneg %p129
      $region22: #{_times_block_core.3} parent=11 // pred_check_branch
        %246 = sbr.rel (%p244) target = $region24
      $region23: #{_times_block_core.3} parent=11 // pred_region
        _
      $region24: #{_times_block_core.3} parent=11 // pred_fallthru
        _
      // Predicated region
      $region25: #{_times_block_core.3} parent=11 // pred_check
        %p247 = pneg %p150
      $region26: #{_times_block_core.3} parent=11 // pred_check_branch
        %249 = sbr.rel (%p247) target = $region28
      $region27: #{_times_block_core.3} parent=11 // pred_region
        _
      $region28: #{_times_block_core.3} parent=11 // pred_fallthru
        _
      // Predicated region
      $region29: #{_times_block_core.3} parent=11 // pred_check
        %p250 = pneg %p197
      $region30: #{_times_block_core.3} parent=11 // pred_check_branch
        %252 = sbr.rel (%p250) target = $region32
      $region31: #{_times_block_core.3} parent=11 // pred_region
        _
      $region32: #{_times_block_core.3} parent=11 // pred_fallthru
        _
    $region12: #{_times_block_core.3} parent=5 // pred_fallthru
      _
    %p253 = scmp.lt.s32.totalorder %s14, 2
    // Predicated region
    $region33: #{_times_block_core.3} parent=5 // pred_check
      %p254 = pneg %p253
    $region34: #{_times_block_core.3} parent=5 // pred_check_branch
      %256 = sbr.rel (%p254) target = $region36
    $region35: #{_times_block_core.3} parent=5 // pred_region
      // Predicated region
      $region37: #{_times_block_core.3} parent=35 // pred_check
        %p257 = pneg %p34
      $region38: #{_times_block_core.3} parent=35 // pred_check_branch
        %259 = sbr.rel (%p257) target = $region40
      $region39: #{_times_block_core.3} parent=35 // pred_region
        %p260 = scmp.lt.s32.totalorder %s14, 1
        %s261 = scalar_select %p260, %s14, 1
        %s262 = smul.addr %s261, 3
        %s263 = smul.addr %s262, 4
        %s264 = scalar_lea.vmem %s0, %s263
      $region40: #{_times_block_core.3} parent=35 // pred_fallthru
        _
      // Predicated region
      $region41: #{_times_block_core.3} parent=35 // pred_check
        %p265 = pneg %p60
      $region42: #{_times_block_core.3} parent=35 // pred_check_branch
        %267 = sbr.rel (%p265) target = $region44
      $region43: #{_times_block_core.3} parent=35 // pred_region
        %p268 = scmp.lt.s32.totalorder %s14, 1
        %s269 = scalar_select %p268, %s14, 1
        %s270 = smul.addr %s269, 3
        %s271 = smul.addr %s270, 8
        %s272 = scalar_lea.vmem %s1, %s271
      $region44: #{_times_block_core.3} parent=35 // pred_fallthru
        _
      // Predicated region
      $region45: #{_times_block_core.3} parent=35 // pred_check
        %p273 = pneg %p170
      $region46: #{_times_block_core.3} parent=35 // pred_check_branch
        %275 = sbr.rel (%p273) target = $region48
      $region47: #{_times_block_core.3} parent=35 // pred_region
        %p276 = scmp.lt.s32.totalorder %s14, 1
        %s277 = scalar_select %p276, %s14, 1
        %s278 = scalar_lea.vmem %s6, %s277
      $region48: #{_times_block_core.3} parent=35 // pred_fallthru
        _
    $region36: #{_times_block_core.3} parent=5 // pred_fallthru
      _
    %p279 = scmp.le.s32.totalorder 1, %s14
    %p280 = scmp.lt.s32.totalorder %s14, 3
    %p281 = pnand %p279, %p280
    %p282 = pneg %p281
    // Predicated region
    $region49: #{_times_block_core.3} parent=5 // pred_check
      _
    $region50: #{_times_block_core.3} parent=5 // pred_check_branch
      %284 = sbr.rel (%p281) target = $region52
    $region51: #{_times_block_core.3} parent=5 // pred_region
      %s285 = ssub.s32 %s14, 1
      %p286 = scmp.lt.s32.totalorder %s19, 1
      %s287 = scalar_select %p286, %s19, 1
      %s288 = smul.addr %s287, 3
      %s289 = smul.addr %s288, 4
      %s290 = scalar_lea.vmem %s0, %s289
      %p291 = pneg %p40
      %p292 = pneg %p37
      %p293 = scmp.lt.s32.totalorder %s19, 1
      %s294 = scalar_select %p293, %s19, 1
      %s295 = smul.addr %s294, 3
      %s296 = smul.addr %s295, 8
      %s297 = scalar_lea.vmem %s1, %s296
      %p298 = pneg %p66
      %p299 = pneg %p63
      %p300 = pneg %p87
      %p301 = pneg %p84
      %p302 = pneg %p108
      %p303 = pneg %p105
      %p304 = pneg %p129
      %p305 = pneg %p126
      %p306 = pneg %p150
      %p307 = pneg %p147
      %p308 = scmp.lt.s32.totalorder %s19, 1
      %s309 = scalar_select %p308, %s19, 1
      %s310 = scalar_lea.vmem %s6, %s309
      %p311 = pneg %p176
      %p312 = pneg %p173
      %p313 = pneg %p197
      %p314 = pneg %p194
      %p315 = pneg %p223
      %p316 = pneg %p220
      %p317 = scmp.lt.s32.totalorder %s19, 1
      %s318 = scalar_select %p317, %s19, 1
      %s319 = smul.addr %s318, 3
      %s320 = smul.addr %s319, 8
      %s321 = scalar_lea.vmem %s8, %s320
      %p322 = scmp.lt.s32.totalorder %s19, 1
      %s323 = scalar_select %p322, %s19, 1
      %s324 = smul.addr %s323, 3
      %s325 = smul.addr %s324, 4
      %s326 = scalar_lea.vmem %s0, %s325
      %p327 = scmp.lt.s32.totalorder %s19, 1
      %s328 = scalar_select %p327, %s19, 1
      %s329 = smul.addr %s328, 3
      %s330 = smul.addr %s329, 8
      %s331 = scalar_lea.vmem %s1, %s330
      %p332 = scmp.lt.s32.totalorder %s19, 1
      %s333 = scalar_select %p332, %s19, 1
      %s334 = scalar_lea.vmem %s6, %s333
      %p335 = scmp.lt.s32.totalorder %s19, 1
      %s336 = scalar_select %p335, %s19, 1
      %s337 = smul.addr %s336, 3
      %s338 = smul.addr %s337, 8
      %s339 = scalar_lea.vmem %s8, %s338
      %vm341 = vcmask 125952
      %342 = vst.msk [vmem:[#allocation2] sm:$0xf] %vm341, 0
      %343 = vst.msk [vmem:[#allocation2 + $0x4] sm:$0xf] %vm341, 0
      %344 = vst.msk [vmem:[#allocation2 + $0x8] sm:$0xf] %vm341, 0
      %345 = vst.msk [vmem:[#allocation2 + $0xc] sm:$0xf] %vm341, 0
      %346 = vst.msk [vmem:[#allocation2 + $0x10] sm:$0xf] %vm341, 0
      %347 = vst.msk [vmem:[#allocation2 + $0x14] sm:$0xf] %vm341, 0
      %348 = vst.msk [vmem:[#allocation2 + $0x18] sm:$0xf] %vm341, 0
      %349 = vst.msk [vmem:[#allocation2 + $0x1c] sm:$0xf] %vm341, 0
      %350 = vst.msk [vmem:[#allocation2 + $0x20] sm:$0xf] %vm341, 0
      %351 = vst.msk [vmem:[#allocation2 + $0x24] sm:$0xf] %vm341, 0
      %352 = vst.msk [vmem:[#allocation2 + $0x28] sm:$0xf] %vm341, 0
      %353 = vst.msk [vmem:[#allocation2 + $0x2c] sm:$0xf] %vm341, 0
      %354 = vst.msk [vmem:[#allocation2 + $0x30] sm:$0xf] %vm341, 0
      %v355 = vld [vmem:[%s326] sm:$0x3]
      %v357 = vrot.slane %v355, 7
      %vm359 = vcmask 124929
      %vm360 = vsmask.f32 2304
      %vm361 = vmand %vm359, %vm360
      %v362 = vld [vmem:[#allocation2 + $0x8] sm:$0x6]
      %v363 = vsel %vm361, %v357, %v362
      %364 = vst [vmem:[#allocation2 + $0x8] sm:$0x6] %v363
      %v365 = vld [vmem:[%s326] sm:$0x6]
      %v367 = vshrl.u32 %v365, 16
      %v369 = vrot.slane %v367, 4
      %v370 = vshll.u32 %v365, 16
      %v372 = vrot.slane %v370, 5
      %v373 = vor.u32 %v369, %v372
      %v374 = vrot.slane %v373, 4
      %v376 = vld [vmem:[#allocation2 + $0xc] sm:$0x6]
      %v377 = vsel %vm361, %v374, %v376
      %378 = vst [vmem:[#allocation2 + $0xc] sm:$0x6] %v377
      %v379 = vld [vmem:[%s326] sm:$0x8]
      %v380 = vld [vmem:[%s326 + $0x4] sm:$0x1]
      %vm383 = vcmask 1041408
      %vm384 = vcmask 1045508
      %vm385 = vmor %vm383, %vm384
      %v386 = vrot.slane %v379, 6
      %v387 = vrot.slane %v386, 4
      %v388 = vrot.slane %v380, 6
      %v389 = vsel %vm385, %v387, %v388
      %v391 = vld [vmem:[#allocation2 + $0x10] sm:$0x6]
      %v392 = vsel %vm361, %v389, %v391
      %393 = vst [vmem:[#allocation2 + $0x10] sm:$0x6] %v392
      %v394 = vld [vmem:[%s326 + $0x4] sm:$0x3]
      %v396 = vshrl.u32 %v394, 16
      %v398 = vrot.slane %v396, 7
      %v399 = vshll.u32 %v394, 16
      %v401 = vor.u32 %v398, %v399
      %v403 = vld [vmem:[#allocation2 + $0x14] sm:$0x6]
      %v404 = vsel %vm361, %v401, %v403
      %405 = vst [vmem:[#allocation2 + $0x14] sm:$0x6] %v404
      %v406 = vld [vmem:[%s326 + $0x4] sm:$0xc]
      %v408 = vrot.slane %v406, 5
      %v409 = vrot.slane %v408, 4
      %v411 = vld [vmem:[#allocation2 + $0x18] sm:$0x6]
      %v412 = vsel %vm361, %v409, %v411
      %413 = vst [vmem:[#allocation2 + $0x18] sm:$0x6] %v412
      %v414 = vld [vmem:[%s326 + $0x4] sm:$0x8]
      %v415 = vld [vmem:[%s326 + $0x8] sm:$0x1]
      %vm416 = vsmask.f32 1280
      %vm417 = vsmask.f32 5392
      %vm418 = vmor %vm416, %vm417
      %v420 = vshrl.u32 %v414, 16
      %v422 = vrot.slane %v420, 6
      %v423 = vrot.slane %v422, 4
      %v425 = vshrl.u32 %v415, 16
      %v427 = vrot.slane %v425, 6
      %v428 = vshll.u32 %v415, 16
      %v430 = vrot.slane %v428, 7
      %v431 = vor.u32 %v427, %v430
      %v432 = vsel %vm418, %v423, %v431
      %v434 = vld [vmem:[#allocation2 + $0x1c] sm:$0x6]
      %v435 = vsel %vm361, %v432, %v434
      %436 = vst [vmem:[#allocation2 + $0x1c] sm:$0x6] %v435
      %v437 = vld [vmem:[%s326 + $0x8] sm:$0x6]
      %v438 = vld [vmem:[#allocation2 + $0x20] sm:$0x6]
      %v439 = vsel %vm361, %v437, %v438
      %440 = vst [vmem:[#allocation2 + $0x20] sm:$0x6] %v439
      %v441 = vld [vmem:[%s326 + $0x8] sm:$0xc]
      %v443 = vshrl.u32 %v441, 16
      %v445 = vrot.slane %v443, 5
      %v446 = vshll.u32 %v441, 16
      %v448 = vrot.slane %v446, 6
      %v449 = vor.u32 %v445, %v448
      %v450 = vrot.slane %v449, 4
      %v452 = vld [vmem:[#allocation2 + $0x24] sm:$0x6]
      %v453 = vsel %vm361, %v450, %v452
      %454 = vst [vmem:[#allocation2 + $0x24] sm:$0x6] %v453
      %v455 = vld [vmem:[#allocation2] sm:$0xf]
      %v456 = vld [vmem:[#allocation2 + $0x4] sm:$0xf]
      %v457 = vld [vmem:[#allocation2 + $0x8] sm:$0xf]
      %v458 = vld [vmem:[#allocation2 + $0xc] sm:$0xf]
      %v459 = vld [vmem:[#allocation2 + $0x10] sm:$0xf]
      %v460 = vld [vmem:[#allocation2 + $0x14] sm:$0xf]
      %v461 = vld [vmem:[#allocation2 + $0x18] sm:$0xf]
      %v462 = vld [vmem:[#allocation2 + $0x1c] sm:$0xf]
      %463 = vst.msk [vmem:[#allocation4] sm:$0xf] %vm341, %v455
      %464 = vst.msk [vmem:[#allocation4 + $0x10] sm:$0xf] %vm341, %v456
      %465 = vst.msk [vmem:[#allocation4 + $0x20] sm:$0xf] %vm341, %v457
      %466 = vst.msk [vmem:[#allocation4 + $0x30] sm:$0xf] %vm341, %v458
      %467 = vst.msk [vmem:[#allocation4 + $0x40] sm:$0xf] %vm341, %v459
      %468 = vst.msk [vmem:[#allocation4 + $0x50] sm:$0xf] %vm341, %v460
      %469 = vst.msk [vmem:[#allocation4 + $0x60] sm:$0xf] %vm341, %v461
      %470 = vst.msk [vmem:[#allocation4 + $0x70] sm:$0xf] %vm341, %v462
      %v471 = vld [vmem:[#allocation2] sm:$0xf]
      %v472 = vld [vmem:[#allocation2 + $0x4] sm:$0xf]
      %v473 = vld [vmem:[#allocation2 + $0x8] sm:$0xf]
      %v474 = vld [vmem:[#allocation2 + $0xc] sm:$0xf]
      %v475 = vld [vmem:[#allocation2 + $0x10] sm:$0xf]
      %v476 = vld [vmem:[#allocation2 + $0x14] sm:$0xf]
      %v477 = vld [vmem:[#allocation2 + $0x18] sm:$0xf]
      %v478 = vld [vmem:[#allocation2 + $0x1c] sm:$0xf]
      %v479 = vld [vmem:[#allocation2 + $0x20] sm:$0x1]
      %vm480 = vsmask.f32 3328
      %vm481 = vsmask.f32 7440
      %vm482 = vmor %vm480, %vm481
      %v484 = vshrl.u32 %v471, 16
      %v486 = vrot.slane %v484, 4
      %v487 = vshll.u32 %v471, 16
      %v489 = vrot.slane %v487, 5
      %v490 = vor.u32 %v486, %v489
      %v491 = vrot.slane %v490, 4
      %v493 = vshll.u32 %v472, 16
      %v495 = vrot.slane %v493, 5
      %v496 = vsel %vm482, %v491, %v495
      %v497 = vshrl.u32 %v472, 16
      %v499 = vrot.slane %v497, 4
      %v500 = vor.u32 %v499, %v495
      %v501 = vrot.slane %v500, 4
      %v503 = vshll.u32 %v473, 16
      %v505 = vrot.slane %v503, 5
      %v506 = vsel %vm482, %v501, %v505
      %v507 = vshrl.u32 %v473, 16
      %v509 = vrot.slane %v507, 4
      %v510 = vor.u32 %v509, %v505
      %v511 = vrot.slane %v510, 4
      %v513 = vshll.u32 %v474, 16
      %v515 = vrot.slane %v513, 5
      %v516 = vsel %vm482, %v511, %v515
      %v517 = vshrl.u32 %v474, 16
      %v519 = vrot.slane %v517, 4
      %v520 = vor.u32 %v519, %v515
      %v521 = vrot.slane %v520, 4
      %v523 = vshll.u32 %v475, 16
      %v525 = vrot.slane %v523, 5
      %v526 = vsel %vm482, %v521, %v525
      %v527 = vshrl.u32 %v475, 16
      %v529 = vrot.slane %v527, 4
      %v530 = vor.u32 %v529, %v525
      %v531 = vrot.slane %v530, 4
      %v533 = vshll.u32 %v476, 16
      %v535 = vrot.slane %v533, 5
      %v536 = vsel %vm482, %v531, %v535
      %v537 = vshrl.u32 %v476, 16
      %v539 = vrot.slane %v537, 4
      %v540 = vor.u32 %v539, %v535
      %v541 = vrot.slane %v540, 4
      %v543 = vshll.u32 %v477, 16
      %v545 = vrot.slane %v543, 5
      %v546 = vsel %vm482, %v541, %v545
      %v547 = vshrl.u32 %v477, 16
      %v549 = vrot.slane %v547, 4
      %v550 = vor.u32 %v549, %v545
      %v551 = vrot.slane %v550, 4
      %v553 = vshll.u32 %v478, 16
      %v555 = vrot.slane %v553, 5
      %v556 = vsel %vm482, %v551, %v555
      %v557 = vshrl.u32 %v478, 16
      %v559 = vrot.slane %v557, 4
      %v560 = vor.u32 %v559, %v555
      %v561 = vrot.slane %v560, 4
      %v563 = vshll.u32 %v479, 16
      %v565 = vrot.slane %v563, 5
      %v566 = vsel %vm482, %v561, %v565
      %567 = vrot.lane.b32.xlu0 %v496, 16
      %v568 = vpop.permute.xlu0 %567
      %569 = vrot.lane.b32.xlu0 %v506, 16
      %v570 = vpop.permute.xlu0 %569
      %571 = vrot.lane.b32.xlu0 %v516, 16
      %v572 = vpop.permute.xlu0 %571
      %573 = vrot.lane.b32.xlu0 %v526, 16
      %v574 = vpop.permute.xlu0 %573
      %575 = vrot.lane.b32.xlu0 %v536, 16
      %v576 = vpop.permute.xlu0 %575
      %577 = vrot.lane.b32.xlu0 %v546, 16
      %v578 = vpop.permute.xlu0 %577
      %579 = vrot.lane.b32.xlu0 %v556, 16
      %v580 = vpop.permute.xlu0 %579
      %581 = vrot.lane.b32.xlu0 %v566, 16
      %v582 = vpop.permute.xlu0 %581
      %vm591 = vcmask 257152
      %592 = vst.msk [vmem:[#allocation4] sm:$0xf] %vm591, %v568
      %593 = vst.msk [vmem:[#allocation4 + $0x10] sm:$0xf] %vm591, %v570
      %594 = vst.msk [vmem:[#allocation4 + $0x20] sm:$0xf] %vm591, %v572
      %595 = vst.msk [vmem:[#allocation4 + $0x30] sm:$0xf] %vm591, %v574
      %596 = vst.msk [vmem:[#allocation4 + $0x40] sm:$0xf] %vm591, %v576
      %597 = vst.msk [vmem:[#allocation4 + $0x50] sm:$0xf] %vm591, %v578
      %598 = vst.msk [vmem:[#allocation4 + $0x60] sm:$0xf] %vm591, %v580
      %599 = vst.msk [vmem:[#allocation4 + $0x70] sm:$0xf] %vm591, %v582
      %v600 = vld [vmem:[#allocation2] sm:$0xe]
      %v601 = vld [vmem:[#allocation2 + $0x4] sm:$0xf]
      %v602 = vld [vmem:[#allocation2 + $0x8] sm:$0xf]
      %v603 = vld [vmem:[#allocation2 + $0xc] sm:$0xf]
      %v604 = vld [vmem:[#allocation2 + $0x10] sm:$0xf]
      %v605 = vld [vmem:[#allocation2 + $0x14] sm:$0xf]
      %v606 = vld [vmem:[#allocation2 + $0x18] sm:$0xf]
      %v607 = vld [vmem:[#allocation2 + $0x1c] sm:$0xf]
      %v608 = vld [vmem:[#allocation2 + $0x20] sm:$0x1]
      %vm618 = vcmask 1042432
      %vm619 = vcmask 1046532
      %vm620 = vmor %vm618, %vm619
      %v621 = vrot.slane %v600, 5
      %v622 = vrot.slane %v621, 4
      %v623 = vrot.slane %v601, 5
      %v624 = vsel %vm620, %v622, %v623
      %v625 = vrot.slane %v623, 4
      %v626 = vrot.slane %v602, 5
      %v627 = vsel %vm620, %v625, %v626
      %v628 = vrot.slane %v626, 4
      %v629 = vrot.slane %v603, 5
      %v630 = vsel %vm620, %v628, %v629
      %v631 = vrot.slane %v629, 4
      %v632 = vrot.slane %v604, 5
      %v633 = vsel %vm620, %v631, %v632
      %v634 = vrot.slane %v632, 4
      %v635 = vrot.slane %v605, 5
      %v636 = vsel %vm620, %v634, %v635
      %v637 = vrot.slane %v635, 4
      %v638 = vrot.slane %v606, 5
      %v639 = vsel %vm620, %v637, %v638
      %v640 = vrot.slane %v638, 4
      %v641 = vrot.slane %v607, 5
      %v642 = vsel %vm620, %v640, %v641
      %v643 = vrot.slane %v641, 4
      %v644 = vrot.slane %v608, 5
      %v645 = vsel %vm620, %v643, %v644
      %646 = vrot.lane.b32.xlu0 %v624, 32
      %v647 = vpop.permute.xlu0 %646
      %648 = vrot.lane.b32.xlu0 %v627, 32
      %v649 = vpop.permute.xlu0 %648
      %650 = vrot.lane.b32.xlu0 %v630, 32
      %v651 = vpop.permute.xlu0 %650
      %652 = vrot.lane.b32.xlu0 %v633, 32
      %v653 = vpop.permute.xlu0 %652
      %654 = vrot.lane.b32.xlu0 %v636, 32
      %v655 = vpop.permute.xlu0 %654
      %656 = vrot.lane.b32.xlu0 %v639, 32
      %v657 = vpop.permute.xlu0 %656
      %658 = vrot.lane.b32.xlu0 %v642, 32
      %v659 = vpop.permute.xlu0 %658
      %660 = vrot.lane.b32.xlu0 %v645, 32
      %v661 = vpop.permute.xlu0 %660
      %vm670 = vcmask 388352
      %671 = vst.msk [vmem:[#allocation4] sm:$0xf] %vm670, %v647
      %672 = vst.msk [vmem:[#allocation4 + $0x10] sm:$0xf] %vm670, %v649
      %673 = vst.msk [vmem:[#allocation4 + $0x20] sm:$0xf] %vm670, %v651
      %674 = vst.msk [vmem:[#allocation4 + $0x30] sm:$0xf] %vm670, %v653
      %675 = vst.msk [vmem:[#allocation4 + $0x40] sm:$0xf] %vm670, %v655
      %676 = vst.msk [vmem:[#allocation4 + $0x50] sm:$0xf] %vm670, %v657
      %677 = vst.msk [vmem:[#allocation4 + $0x60] sm:$0xf] %vm670, %v659
      %678 = vst.msk [vmem:[#allocation4 + $0x70] sm:$0xf] %vm670, %v661
      %v679 = vld [vmem:[#allocation2] sm:$0xe]
      %v680 = vld [vmem:[#allocation2 + $0x4] sm:$0xf]
      %v681 = vld [vmem:[#allocation2 + $0x8] sm:$0xf]
      %v682 = vld [vmem:[#allocation2 + $0xc] sm:$0xf]
      %v683 = vld [vmem:[#allocation2 + $0x10] sm:$0xf]
      %v684 = vld [vmem:[#allocation2 + $0x14] sm:$0xf]
      %v685 = vld [vmem:[#allocation2 + $0x18] sm:$0xf]
      %v686 = vld [vmem:[#allocation2 + $0x1c] sm:$0xf]
      %v687 = vld [vmem:[#allocation2 + $0x20] sm:$0x3]
      %vm688 = vsmask.f32 6416
      %vm689 = vmor %vm360, %vm688
      %v691 = vshrl.u32 %v679, 16
      %v693 = vrot.slane %v691, 5
      %v694 = vshll.u32 %v679, 16
      %v696 = vrot.slane %v694, 6
      %v697 = vor.u32 %v693, %v696
      %v698 = vrot.slane %v697, 4
      %v700 = vshrl.u32 %v680, 16
      %v702 = vrot.slane %v700, 5
      %v703 = vshll.u32 %v680, 16
      %v705 = vrot.slane %v703, 6
      %v706 = vor.u32 %v702, %v705
      %v707 = vsel %vm689, %v698, %v706
      %v708 = vrot.slane %v706, 4
      %v710 = vshrl.u32 %v681, 16
      %v712 = vrot.slane %v710, 5
      %v713 = vshll.u32 %v681, 16
      %v715 = vrot.slane %v713, 6
      %v716 = vor.u32 %v712, %v715
      %v717 = vsel %vm689, %v708, %v716
      %v718 = vrot.slane %v716, 4
      %v720 = vshrl.u32 %v682, 16
      %v722 = vrot.slane %v720, 5
      %v723 = vshll.u32 %v682, 16
      %v725 = vrot.slane %v723, 6
      %v726 = vor.u32 %v722, %v725
      %v727 = vsel %vm689, %v718, %v726
      %v728 = vrot.slane %v726, 4
      %v730 = vshrl.u32 %v683, 16
      %v732 = vrot.slane %v730, 5
      %v733 = vshll.u32 %v683, 16
      %v735 = vrot.slane %v733, 6
      %v736 = vor.u32 %v732, %v735
      %v737 = vsel %vm689, %v728, %v736
      %v738 = vrot.slane %v736, 4
      %v740 = vshrl.u32 %v684, 16
      %v742 = vrot.slane %v740, 5
      %v743 = vshll.u32 %v684, 16
      %v745 = vrot.slane %v743, 6
      %v746 = vor.u32 %v742, %v745
      %v747 = vsel %vm689, %v738, %v746
      %v748 = vrot.slane %v746, 4
      %v750 = vshrl.u32 %v685, 16
      %v752 = vrot.slane %v750, 5
      %v753 = vshll.u32 %v685, 16
      %v755 = vrot.slane %v753, 6
      %v756 = vor.u32 %v752, %v755
      %v757 = vsel %vm689, %v748, %v756
      %v758 = vrot.slane %v756, 4
      %v760 = vshrl.u32 %v686, 16
      %v762 = vrot.slane %v760, 5
      %v763 = vshll.u32 %v686, 16
      %v765 = vrot.slane %v763, 6
      %v766 = vor.u32 %v762, %v765
      %v767 = vsel %vm689, %v758, %v766
      %v768 = vrot.slane %v766, 4
      %v770 = vshrl.u32 %v687, 16
      %v772 = vrot.slane %v770, 5
      %v773 = vshll.u32 %v687, 16
      %v775 = vrot.slane %v773, 6
      %v776 = vor.u32 %v772, %v775
      %v777 = vsel %vm689, %v768, %v776
      %778 = vrot.lane.b32.xlu0 %v707, 48
      %v779 = vpop.permute.xlu0 %778
      %780 = vrot.lane.b32.xlu0 %v717, 48
      %v781 = vpop.permute.xlu0 %780
      %782 = vrot.lane.b32.xlu0 %v727, 48
      %v783 = vpop.permute.xlu0 %782
      %784 = vrot.lane.b32.xlu0 %v737, 48
      %v785 = vpop.permute.xlu0 %784
      %786 = vrot.lane.b32.xlu0 %v747, 48
      %v787 = vpop.permute.xlu0 %786
      %788 = vrot.lane.b32.xlu0 %v757, 48
      %v789 = vpop.permute.xlu0 %788
      %790 = vrot.lane.b32.xlu0 %v767, 48
      %v791 = vpop.permute.xlu0 %790
      %792 = vrot.lane.b32.xlu0 %v777, 48
      %v793 = vpop.permute.xlu0 %792
      %vm802 = vcmask 519552
      %803 = vst.msk [vmem:[#allocation4] sm:$0xf] %vm802, %v779
      %804 = vst.msk [vmem:[#allocation4 + $0x10] sm:$0xf] %vm802, %v781
      %805 = vst.msk [vmem:[#allocation4 + $0x20] sm:$0xf] %vm802, %v783
      %806 = vst.msk [vmem:[#allocation4 + $0x30] sm:$0xf] %vm802, %v785
      %807 = vst.msk [vmem:[#allocation4 + $0x40] sm:$0xf] %vm802, %v787
      %808 = vst.msk [vmem:[#allocation4 + $0x50] sm:$0xf] %vm802, %v789
      %809 = vst.msk [vmem:[#allocation4 + $0x60] sm:$0xf] %vm802, %v791
      %810 = vst.msk [vmem:[#allocation4 + $0x70] sm:$0xf] %vm802, %v793
      %v811 = vld [vmem:[#allocation2] sm:$0xc]
      %v812 = vld [vmem:[#allocation2 + $0x4] sm:$0xf]
      %v813 = vld [vmem:[#allocation2 + $0x8] sm:$0xf]
      %v814 = vld [vmem:[#allocation2 + $0xc] sm:$0xf]
      %v815 = vld [vmem:[#allocation2 + $0x10] sm:$0xf]
      %v816 = vld [vmem:[#allocation2 + $0x14] sm:$0xf]
      %v817 = vld [vmem:[#allocation2 + $0x18] sm:$0xf]
      %v818 = vld [vmem:[#allocation2 + $0x1c] sm:$0xf]
      %v819 = vld [vmem:[#allocation2 + $0x20] sm:$0x3]
      %v829 = vrot.slane %v811, 6
      %v830 = vrot.slane %v829, 4
      %v831 = vrot.slane %v812, 6
      %v832 = vsel %vm385, %v830, %v831
      %v833 = vrot.slane %v831, 4
      %v834 = vrot.slane %v813, 6
      %v835 = vsel %vm385, %v833, %v834
      %v836 = vrot.slane %v834, 4
      %v837 = vrot.slane %v814, 6
      %v838 = vsel %vm385, %v836, %v837
      %v839 = vrot.slane %v837, 4
      %v840 = vrot.slane %v815, 6
      %v841 = vsel %vm385, %v839, %v840
      %v842 = vrot.slane %v840, 4
      %v843 = vrot.slane %v816, 6
      %v844 = vsel %vm385, %v842, %v843
      %v845 = vrot.slane %v843, 4
      %v846 = vrot.slane %v817, 6
      %v847 = vsel %vm385, %v845, %v846
      %v848 = vrot.slane %v846, 4
      %v849 = vrot.slane %v818, 6
      %v850 = vsel %vm385, %v848, %v849
      %v851 = vrot.slane %v849, 4
      %v852 = vrot.slane %v819, 6
      %v853 = vsel %vm385, %v851, %v852
      %854 = vrot.lane.b32.xlu0 %v832, 64
      %v855 = vpop.permute.xlu0 %854
      %856 = vrot.lane.b32.xlu0 %v835, 64
      %v857 = vpop.permute.xlu0 %856
      %858 = vrot.lane.b32.xlu0 %v838, 64
      %v859 = vpop.permute.xlu0 %858
      %860 = vrot.lane.b32.xlu0 %v841, 64
      %v861 = vpop.permute.xlu0 %860
      %862 = vrot.lane.b32.xlu0 %v844, 64
      %v863 = vpop.permute.xlu0 %862
      %864 = vrot.lane.b32.xlu0 %v847, 64
      %v865 = vpop.permute.xlu0 %864
      %866 = vrot.lane.b32.xlu0 %v850, 64
      %v867 = vpop.permute.xlu0 %866
      %868 = vrot.lane.b32.xlu0 %v853, 64
      %v869 = vpop.permute.xlu0 %868
      %vm878 = vcmask 650752
      %879 = vst.msk [vmem:[#allocation4] sm:$0xf] %vm878, %v855
      %880 = vst.msk [vmem:[#allocation4 + $0x10] sm:$0xf] %vm878, %v857
      %881 = vst.msk [vmem:[#allocation4 + $0x20] sm:$0xf] %vm878, %v859
      %882 = vst.msk [vmem:[#allocation4 + $0x30] sm:$0xf] %vm878, %v861
      %883 = vst.msk [vmem:[#allocation4 + $0x40] sm:$0xf] %vm878, %v863
      %884 = vst.msk [vmem:[#allocation4 + $0x50] sm:$0xf] %vm878, %v865
      %885 = vst.msk [vmem:[#allocation4 + $0x60] sm:$0xf] %vm878, %v867
      %886 = vst.msk [vmem:[#allocation4 + $0x70] sm:$0xf] %vm878, %v869
      %v887 = vld [vmem:[#allocation2 + $0x4] sm:$0xf]
      %v888 = vld [vmem:[#allocation2 + $0x8] sm:$0xf]
      %v889 = vld [vmem:[#allocation2 + $0xc] sm:$0xf]
      %v890 = vld [vmem:[#allocation2 + $0x10] sm:$0xf]
      %v891 = vld [vmem:[#allocation2 + $0x14] sm:$0xf]
      %v892 = vld [vmem:[#allocation2 + $0x18] sm:$0xf]
      %v893 = vld [vmem:[#allocation2 + $0x1c] sm:$0xf]
      %v894 = vld [vmem:[#allocation2 + $0x20] sm:$0xf]
      %903 = vrot.lane.b32.xlu0 %v887, 80
      %v904 = vpop.permute.xlu0 %903
      %905 = vrot.lane.b32.xlu0 %v888, 80
      %v906 = vpop.permute.xlu0 %905
      %907 = vrot.lane.b32.xlu0 %v889, 80
      %v908 = vpop.permute.xlu0 %907
      %909 = vrot.lane.b32.xlu0 %v890, 80
      %v910 = vpop.permute.xlu0 %909
      %911 = vrot.lane.b32.xlu0 %v891, 80
      %v912 = vpop.permute.xlu0 %911
      %913 = vrot.lane.b32.xlu0 %v892, 80
      %v914 = vpop.permute.xlu0 %913
      %915 = vrot.lane.b32.xlu0 %v893, 80
      %v916 = vpop.permute.xlu0 %915
      %917 = vrot.lane.b32.xlu0 %v894, 80
      %v918 = vpop.permute.xlu0 %917
      %vm927 = vcmask 781952
      %928 = vst.msk [vmem:[#allocation4] sm:$0xf] %vm927, %v904
      %929 = vst.msk [vmem:[#allocation4 + $0x10] sm:$0xf] %vm927, %v906
      %930 = vst.msk [vmem:[#allocation4 + $0x20] sm:$0xf] %vm927, %v908
      %931 = vst.msk [vmem:[#allocation4 + $0x30] sm:$0xf] %vm927, %v910
      %932 = vst.msk [vmem:[#allocation4 + $0x40] sm:$0xf] %vm927, %v912
      %933 = vst.msk [vmem:[#allocation4 + $0x50] sm:$0xf] %vm927, %v914
      %934 = vst.msk [vmem:[#allocation4 + $0x60] sm:$0xf] %vm927, %v916
      %935 = vst.msk [vmem:[#allocation4 + $0x70] sm:$0xf] %vm927, %v918
      %v936 = vld [vmem:[#allocation2 + $0x4] sm:$0xf]
      %v937 = vld [vmem:[#allocation2 + $0x8] sm:$0xf]
      %v938 = vld [vmem:[#allocation2 + $0xc] sm:$0xf]
      %v939 = vld [vmem:[#allocation2 + $0x10] sm:$0xf]
      %v940 = vld [vmem:[#allocation2 + $0x14] sm:$0xf]
      %v941 = vld [vmem:[#allocation2 + $0x18] sm:$0xf]
      %v942 = vld [vmem:[#allocation2 + $0x1c] sm:$0xf]
      %v943 = vld [vmem:[#allocation2 + $0x20] sm:$0xf]
      %v944 = vld [vmem:[#allocation2 + $0x24] sm:$0x1]
      %v946 = vshrl.u32 %v936, 16
      %v948 = vrot.slane %v946, 4
      %v949 = vshll.u32 %v936, 16
      %v951 = vrot.slane %v949, 5
      %v952 = vor.u32 %v948, %v951
      %v953 = vrot.slane %v952, 4
      %v955 = vshll.u32 %v937, 16
      %v957 = vrot.slane %v955, 5
      %v958 = vsel %vm482, %v953, %v957
      %v959 = vshrl.u32 %v937, 16
      %v961 = vrot.slane %v959, 4
      %v962 = vor.u32 %v961, %v957
      %v963 = vrot.slane %v962, 4
      %v965 = vshll.u32 %v938, 16
      %v967 = vrot.slane %v965, 5
      %v968 = vsel %vm482, %v963, %v967
      %v969 = vshrl.u32 %v938, 16
      %v971 = vrot.slane %v969, 4
      %v972 = vor.u32 %v971, %v967
      %v973 = vrot.slane %v972, 4
      %v975 = vshll.u32 %v939, 16
      %v977 = vrot.slane %v975, 5
      %v978 = vsel %vm482, %v973, %v977
      %v979 = vshrl.u32 %v939, 16
      %v981 = vrot.slane %v979, 4
      %v982 = vor.u32 %v981, %v977
      %v983 = vrot.slane %v982, 4
      %v985 = vshll.u32 %v940, 16
      %v987 = vrot.slane %v985, 5
      %v988 = vsel %vm482, %v983, %v987
      %v989 = vshrl.u32 %v940, 16
      %v991 = vrot.slane %v989, 4
      %v992 = vor.u32 %v991, %v987
      %v993 = vrot.slane %v992, 4
      %v995 = vshll.u32 %v941, 16
      %v997 = vrot.slane %v995, 5
      %v998 = vsel %vm482, %v993, %v997
      %v999 = vshrl.u32 %v941, 16
      %v1001 = vrot.slane %v999, 4
      %v1002 = vor.u32 %v1001, %v997
      %v1003 = vrot.slane %v1002, 4
      %v1005 = vshll.u32 %v942, 16
      %v1007 = vrot.slane %v1005, 5
      %v1008 = vsel %vm482, %v1003, %v1007
      %v1009 = vshrl.u32 %v942, 16
      %v1011 = vrot.slane %v1009, 4
      %v1012 = vor.u32 %v1011, %v1007
      %v1013 = vrot.slane %v1012, 4
      %v1015 = vshll.u32 %v943, 16
      %v1017 = vrot.slane %v1015, 5
      %v1018 = vsel %vm482, %v1013, %v1017
      %v1019 = vshrl.u32 %v943, 16
      %v1021 = vrot.slane %v1019, 4
      %v1022 = vor.u32 %v1021, %v1017
      %v1023 = vrot.slane %v1022, 4
      %v1025 = vshll.u32 %v944, 16
      %v1027 = vrot.slane %v1025, 5
      %v1028 = vsel %vm482, %v1023, %v1027
      %1029 = vrot.lane.b32.xlu0 %v958, 96
      %v1030 = vpop.permute.xlu0 %1029
      %1031 = vrot.lane.b32.xlu0 %v968, 96
      %v1032 = vpop.permute.xlu0 %1031
      %1033 = vrot.lane.b32.xlu0 %v978, 96
      %v1034 = vpop.permute.xlu0 %1033
      %1035 = vrot.lane.b32.xlu0 %v988, 96
      %v1036 = vpop.permute.xlu0 %1035
      %1037 = vrot.lane.b32.xlu0 %v998, 96
      %v1038 = vpop.permute.xlu0 %1037
      %1039 = vrot.lane.b32.xlu0 %v1008, 96
      %v1040 = vpop.permute.xlu0 %1039
      %1041 = vrot.lane.b32.xlu0 %v1018, 96
      %v1042 = vpop.permute.xlu0 %1041
      %1043 = vrot.lane.b32.xlu0 %v1028, 96
      %v1044 = vpop.permute.xlu0 %1043
      %vm1053 = vcmask 913152
      %1054 = vst.msk [vmem:[#allocation4] sm:$0xf] %vm1053, %v1030
      %1055 = vst.msk [vmem:[#allocation4 + $0x10] sm:$0xf] %vm1053, %v1032
      %1056 = vst.msk [vmem:[#allocation4 + $0x20] sm:$0xf] %vm1053, %v1034
      %1057 = vst.msk [vmem:[#allocation4 + $0x30] sm:$0xf] %vm1053, %v1036
      %1058 = vst.msk [vmem:[#allocation4 + $0x40] sm:$0xf] %vm1053, %v1038
      %1059 = vst.msk [vmem:[#allocation4 + $0x50] sm:$0xf] %vm1053, %v1040
      %1060 = vst.msk [vmem:[#allocation4 + $0x60] sm:$0xf] %vm1053, %v1042
      %1061 = vst.msk [vmem:[#allocation4 + $0x70] sm:$0xf] %vm1053, %v1044
      %v1062 = vld [vmem:[#allocation2 + $0x4] sm:$0xe]
      %v1063 = vld [vmem:[#allocation2 + $0x8] sm:$0xf]
      %v1064 = vld [vmem:[#allocation2 + $0xc] sm:$0xf]
      %v1065 = vld [vmem:[#allocation2 + $0x10] sm:$0xf]
      %v1066 = vld [vmem:[#allocation2 + $0x14] sm:$0xf]
      %v1067 = vld [vmem:[#allocation2 + $0x18] sm:$0xf]
      %v1068 = vld [vmem:[#allocation2 + $0x1c] sm:$0xf]
      %v1069 = vld [vmem:[#allocation2 + $0x20] sm:$0xf]
      %v1070 = vld [vmem:[#allocation2 + $0x24] sm:$0x1]
      %v1080 = vrot.slane %v1062, 5
      %v1081 = vrot.slane %v1080, 4
      %v1082 = vrot.slane %v1063, 5
      %v1083 = vsel %vm620, %v1081, %v1082
      %v1084 = vrot.slane %v1082, 4
      %v1085 = vrot.slane %v1064, 5
      %v1086 = vsel %vm620, %v1084, %v1085
      %v1087 = vrot.slane %v1085, 4
      %v1088 = vrot.slane %v1065, 5
      %v1089 = vsel %vm620, %v1087, %v1088
      %v1090 = vrot.slane %v1088, 4
      %v1091 = vrot.slane %v1066, 5
      %v1092 = vsel %vm620, %v1090, %v1091
      %v1093 = vrot.slane %v1091, 4
      %v1094 = vrot.slane %v1067, 5
      %v1095 = vsel %vm620, %v1093, %v1094
      %v1096 = vrot.slane %v1094, 4
      %v1097 = vrot.slane %v1068, 5
      %v1098 = vsel %vm620, %v1096, %v1097
      %v1099 = vrot.slane %v1097, 4
      %v1100 = vrot.slane %v1069, 5
      %v1101 = vsel %vm620, %v1099, %v1100
      %v1102 = vrot.slane %v1100, 4
      %v1103 = vrot.slane %v1070, 5
      %v1104 = vsel %vm620, %v1102, %v1103
      %1105 = vrot.lane.b32.xlu0 %v1083, 112
      %v1106 = vpop.permute.xlu0 %1105
      %1107 = vrot.lane.b32.xlu0 %v1086, 112
      %v1108 = vpop.permute.xlu0 %1107
      %1109 = vrot.lane.b32.xlu0 %v1089, 112
      %v1110 = vpop.permute.xlu0 %1109
      %1111 = vrot.lane.b32.xlu0 %v1092, 112
      %v1112 = vpop.permute.xlu0 %1111
      %1113 = vrot.lane.b32.xlu0 %v1095, 112
      %v1114 = vpop.permute.xlu0 %1113
      %1115 = vrot.lane.b32.xlu0 %v1098, 112
      %v1116 = vpop.permute.xlu0 %1115
      %1117 = vrot.lane.b32.xlu0 %v1101, 112
      %v1118 = vpop.permute.xlu0 %1117
      %1119 = vrot.lane.b32.xlu0 %v1104, 112
      %v1120 = vpop.permute.xlu0 %1119
      %vm1129 = vcmask 1044352
      %1130 = vst.msk [vmem:[#allocation4] sm:$0xf] %vm1129, %v1106
      %1131 = vst.msk [vmem:[#allocation4 + $0x10] sm:$0xf] %vm1129, %v1108
      %1132 = vst.msk [vmem:[#allocation4 + $0x20] sm:$0xf] %vm1129, %v1110
      %1133 = vst.msk [vmem:[#allocation4 + $0x30] sm:$0xf] %vm1129, %v1112
      %1134 = vst.msk [vmem:[#allocation4 + $0x40] sm:$0xf] %vm1129, %v1114
      %1135 = vst.msk [vmem:[#allocation4 + $0x50] sm:$0xf] %vm1129, %v1116
      %1136 = vst.msk [vmem:[#allocation4 + $0x60] sm:$0xf] %vm1129, %v1118
      %1137 = vst.msk [vmem:[#allocation4 + $0x70] sm:$0xf] %vm1129, %v1120
      %v1138 = vld [vmem:[#allocation2 + $0x4] sm:$0xe]
      %v1139 = vld [vmem:[#allocation2 + $0x8] sm:$0xf]
      %v1140 = vld [vmem:[#allocation2 + $0xc] sm:$0xf]
      %v1141 = vld [vmem:[#allocation2 + $0x10] sm:$0xf]
      %v1142 = vld [vmem:[#allocation2 + $0x14] sm:$0xf]
      %v1143 = vld [vmem:[#allocation2 + $0x18] sm:$0xf]
      %v1144 = vld [vmem:[#allocation2 + $0x1c] sm:$0xf]
      %v1145 = vld [vmem:[#allocation2 + $0x20] sm:$0xf]
      %v1146 = vld [vmem:[#allocation2 + $0x24] sm:$0x3]
      %v1148 = vshrl.u32 %v1138, 16
      %v1150 = vrot.slane %v1148, 5
      %v1151 = vshll.u32 %v1138, 16
      %v1153 = vrot.slane %v1151, 6
      %v1154 = vor.u32 %v1150, %v1153
      %v1155 = vrot.slane %v1154, 4
      %v1157 = vshrl.u32 %v1139, 16
      %v1159 = vrot.slane %v1157, 5
      %v1160 = vshll.u32 %v1139, 16
      %v1162 = vrot.slane %v1160, 6
      %v1163 = vor.u32 %v1159, %v1162
      %v1164 = vsel %vm689, %v1155, %v1163
      %v1165 = vrot.slane %v1163, 4
      %v1167 = vshrl.u32 %v1140, 16
      %v1169 = vrot.slane %v1167, 5
      %v1170 = vshll.u32 %v1140, 16
      %v1172 = vrot.slane %v1170, 6
      %v1173 = vor.u32 %v1169, %v1172
      %v1174 = vsel %vm689, %v1165, %v1173
      %v1175 = vrot.slane %v1173, 4
      %v1177 = vshrl.u32 %v1141, 16
      %v1179 = vrot.slane %v1177, 5
      %v1180 = vshll.u32 %v1141, 16
      %v1182 = vrot.slane %v1180, 6
      %v1183 = vor.u32 %v1179, %v1182
      %v1184 = vsel %vm689, %v1175, %v1183
      %v1185 = vrot.slane %v1183, 4
      %v1187 = vshrl.u32 %v1142, 16
      %v1189 = vrot.slane %v1187, 5
      %v1190 = vshll.u32 %v1142, 16
      %v1192 = vrot.slane %v1190, 6
      %v1193 = vor.u32 %v1189, %v1192
      %v1194 = vsel %vm689, %v1185, %v1193
      %v1195 = vrot.slane %v1193, 4
      %v1197 = vshrl.u32 %v1143, 16
      %v1199 = vrot.slane %v1197, 5
      %v1200 = vshll.u32 %v1143, 16
      %v1202 = vrot.slane %v1200, 6
      %v1203 = vor.u32 %v1199, %v1202
      %v1204 = vsel %vm689, %v1195, %v1203
      %v1205 = vrot.slane %v1203, 4
      %v1207 = vshrl.u32 %v1144, 16
      %v1209 = vrot.slane %v1207, 5
      %v1210 = vshll.u32 %v1144, 16
      %v1212 = vrot.slane %v1210, 6
      %v1213 = vor.u32 %v1209, %v1212
      %v1214 = vsel %vm689, %v1205, %v1213
      %v1215 = vrot.slane %v1213, 4
      %v1217 = vshrl.u32 %v1145, 16
      %v1219 = vrot.slane %v1217, 5
      %v1220 = vshll.u32 %v1145, 16
      %v1222 = vrot.slane %v1220, 6
      %v1223 = vor.u32 %v1219, %v1222
      %v1224 = vsel %vm689, %v1215, %v1223
      %v1225 = vrot.slane %v1223, 4
      %v1227 = vshrl.u32 %v1146, 16
      %v1229 = vrot.slane %v1227, 5
      %v1230 = vshll.u32 %v1146, 16
      %v1232 = vrot.slane %v1230, 6
      %v1233 = vor.u32 %v1229, %v1232
      %v1234 = vsel %vm689, %v1225, %v1233
      %1243 = vst.msk [vmem:[#allocation4 + $0x4] sm:$0xf] %vm341, %v1164
      %1244 = vst.msk [vmem:[#allocation4 + $0x14] sm:$0xf] %vm341, %v1174
      %1245 = vst.msk [vmem:[#allocation4 + $0x24] sm:$0xf] %vm341, %v1184
      %1246 = vst.msk [vmem:[#allocation4 + $0x34] sm:$0xf] %vm341, %v1194
      %1247 = vst.msk [vmem:[#allocation4 + $0x44] sm:$0xf] %vm341, %v1204
      %1248 = vst.msk [vmem:[#allocation4 + $0x54] sm:$0xf] %vm341, %v1214
      %1249 = vst.msk [vmem:[#allocation4 + $0x64] sm:$0xf] %vm341, %v1224
      %1250 = vst.msk [vmem:[#allocation4 + $0x74] sm:$0xf] %vm341, %v1234
      %v1251 = vld [vmem:[#allocation2 + $0x4] sm:$0xc]
      %v1252 = vld [vmem:[#allocation2 + $0x8] sm:$0xf]
      %v1253 = vld [vmem:[#allocation2 + $0xc] sm:$0xf]
      %v1254 = vld [vmem:[#allocation2 + $0x10] sm:$0xf]
      %v1255 = vld [vmem:[#allocation2 + $0x14] sm:$0xf]
      %v1256 = vld [vmem:[#allocation2 + $0x18] sm:$0xf]
      %v1257 = vld [vmem:[#allocation2 + $0x1c] sm:$0xf]
      %v1258 = vld [vmem:[#allocation2 + $0x20] sm:$0xf]
      %v1259 = vld [vmem:[#allocation2 + $0x24] sm:$0x3]
      %v1269 = vrot.slane %v1251, 6
      %v1270 = vrot.slane %v1269, 4
      %v1271 = vrot.slane %v1252, 6
      %v1272 = vsel %vm385, %v1270, %v1271
      %v1273 = vrot.slane %v1271, 4
      %v1274 = vrot.slane %v1253, 6
      %v1275 = vsel %vm385, %v1273, %v1274
      %v1276 = vrot.slane %v1274, 4
      %v1277 = vrot.slane %v1254, 6
      %v1278 = vsel %vm385, %v1276, %v1277
      %v1279 = vrot.slane %v1277, 4
      %v1280 = vrot.slane %v1255, 6
      %v1281 = vsel %vm385, %v1279, %v1280
      %v1282 = vrot.slane %v1280, 4
      %v1283 = vrot.slane %v1256, 6
      %v1284 = vsel %vm385, %v1282, %v1283
      %v1285 = vrot.slane %v1283, 4
      %v1286 = vrot.slane %v1257, 6
      %v1287 = vsel %vm385, %v1285, %v1286
      %v1288 = vrot.slane %v1286, 4
      %v1289 = vrot.slane %v1258, 6
      %v1290 = vsel %vm385, %v1288, %v1289
      %v1291 = vrot.slane %v1289, 4
      %v1292 = vrot.slane %v1259, 6
      %v1293 = vsel %vm385, %v1291, %v1292
      %1294 = vrot.lane.b32.xlu0 %v1272, 16
      %v1295 = vpop.permute.xlu0 %1294
      %1296 = vrot.lane.b32.xlu0 %v1275, 16
      %v1297 = vpop.permute.xlu0 %1296
      %1298 = vrot.lane.b32.xlu0 %v1278, 16
      %v1299 = vpop.permute.xlu0 %1298
      %1300 = vrot.lane.b32.xlu0 %v1281, 16
      %v1301 = vpop.permute.xlu0 %1300
      %1302 = vrot.lane.b32.xlu0 %v1284, 16
      %v1303 = vpop.permute.xlu0 %1302
      %1304 = vrot.lane.b32.xlu0 %v1287, 16
      %v1305 = vpop.permute.xlu0 %1304
      %1306 = vrot.lane.b32.xlu0 %v1290, 16
      %v1307 = vpop.permute.xlu0 %1306
      %1308 = vrot.lane.b32.xlu0 %v1293, 16
      %v1309 = vpop.permute.xlu0 %1308
      %1318 = vst.msk [vmem:[#allocation4 + $0x4] sm:$0xf] %vm591, %v1295
      %1319 = vst.msk [vmem:[#allocation4 + $0x14] sm:$0xf] %vm591, %v1297
      %1320 = vst.msk [vmem:[#allocation4 + $0x24] sm:$0xf] %vm591, %v1299
      %1321 = vst.msk [vmem:[#allocation4 + $0x34] sm:$0xf] %vm591, %v1301
      %1322 = vst.msk [vmem:[#allocation4 + $0x44] sm:$0xf] %vm591, %v1303
      %1323 = vst.msk [vmem:[#allocation4 + $0x54] sm:$0xf] %vm591, %v1305
      %1324 = vst.msk [vmem:[#allocation4 + $0x64] sm:$0xf] %vm591, %v1307
      %1325 = vst.msk [vmem:[#allocation4 + $0x74] sm:$0xf] %vm591, %v1309
      %v1326 = vld [vmem:[#allocation2 + $0x8] sm:$0xf]
      %v1327 = vld [vmem:[#allocation2 + $0xc] sm:$0xf]
      %v1328 = vld [vmem:[#allocation2 + $0x10] sm:$0xf]
      %v1329 = vld [vmem:[#allocation2 + $0x14] sm:$0xf]
      %v1330 = vld [vmem:[#allocation2 + $0x18] sm:$0xf]
      %v1331 = vld [vmem:[#allocation2 + $0x1c] sm:$0xf]
      %v1332 = vld [vmem:[#allocation2 + $0x20] sm:$0xf]
      %v1333 = vld [vmem:[#allocation2 + $0x24] sm:$0xf]
      %1342 = vrot.lane.b32.xlu0 %v1326, 32
      %v1343 = vpop.permute.xlu0 %1342
      %1344 = vrot.lane.b32.xlu0 %v1327, 32
      %v1345 = vpop.permute.xlu0 %1344
      %1346 = vrot.lane.b32.xlu0 %v1328, 32
      %v1347 = vpop.permute.xlu0 %1346
      %1348 = vrot.lane.b32.xlu0 %v1329, 32
      %v1349 = vpop.permute.xlu0 %1348
      %1350 = vrot.lane.b32.xlu0 %v1330, 32
      %v1351 = vpop.permute.xlu0 %1350
      %1352 = vrot.lane.b32.xlu0 %v1331, 32
      %v1353 = vpop.permute.xlu0 %1352
      %1354 = vrot.lane.b32.xlu0 %v1332, 32
      %v1355 = vpop.permute.xlu0 %1354
      %1356 = vrot.lane.b32.xlu0 %v1333, 32
      %v1357 = vpop.permute.xlu0 %1356
      %1366 = vst.msk [vmem:[#allocation4 + $0x4] sm:$0xf] %vm670, %v1343
      %1367 = vst.msk [vmem:[#allocation4 + $0x14] sm:$0xf] %vm670, %v1345
      %1368 = vst.msk [vmem:[#allocation4 + $0x24] sm:$0xf] %vm670, %v1347
      %1369 = vst.msk [vmem:[#allocation4 + $0x34] sm:$0xf] %vm670, %v1349
      %1370 = vst.msk [vmem:[#allocation4 + $0x44] sm:$0xf] %vm670, %v1351
      %1371 = vst.msk [vmem:[#allocation4 + $0x54] sm:$0xf] %vm670, %v1353
      %1372 = vst.msk [vmem:[#allocation4 + $0x64] sm:$0xf] %vm670, %v1355
      %1373 = vst.msk [vmem:[#allocation4 + $0x74] sm:$0xf] %vm670, %v1357
      %v1374 = vld [vmem:[#allocation2 + $0x8] sm:$0xf]
      %v1375 = vld [vmem:[#allocation2 + $0xc] sm:$0xf]
      %v1376 = vld [vmem:[#allocation2 + $0x10] sm:$0xf]
      %v1377 = vld [vmem:[#allocation2 + $0x14] sm:$0xf]
      %v1378 = vld [vmem:[#allocation2 + $0x18] sm:$0xf]
      %v1379 = vld [vmem:[#allocation2 + $0x1c] sm:$0xf]
      %v1380 = vld [vmem:[#allocation2 + $0x20] sm:$0xf]
      %v1381 = vld [vmem:[#allocation2 + $0x24] sm:$0xf]
      %v1382 = vld [vmem:[#allocation2 + $0x28] sm:$0x1]
      %v1384 = vshrl.u32 %v1374, 16
      %v1386 = vrot.slane %v1384, 4
      %v1387 = vshll.u32 %v1374, 16
      %v1389 = vrot.slane %v1387, 5
      %v1390 = vor.u32 %v1386, %v1389
      %v1391 = vrot.slane %v1390, 4
      %v1393 = vshll.u32 %v1375, 16
      %v1395 = vrot.slane %v1393, 5
      %v1396 = vsel %vm482, %v1391, %v1395
      %v1397 = vshrl.u32 %v1375, 16
      %v1399 = vrot.slane %v1397, 4
      %v1400 = vor.u32 %v1399, %v1395
      %v1401 = vrot.slane %v1400, 4
      %v1403 = vshll.u32 %v1376, 16
      %v1405 = vrot.slane %v1403, 5
      %v1406 = vsel %vm482, %v1401, %v1405
      %v1407 = vshrl.u32 %v1376, 16
      %v1409 = vrot.slane %v1407, 4
      %v1410 = vor.u32 %v1409, %v1405
      %v1411 = vrot.slane %v1410, 4
      %v1413 = vshll.u32 %v1377, 16
      %v1415 = vrot.slane %v1413, 5
      %v1416 = vsel %vm482, %v1411, %v1415
      %v1417 = vshrl.u32 %v1377, 16
      %v1419 = vrot.slane %v1417, 4
      %v1420 = vor.u32 %v1419, %v1415
      %v1421 = vrot.slane %v1420, 4
      %v1423 = vshll.u32 %v1378, 16
      %v1425 = vrot.slane %v1423, 5
      %v1426 = vsel %vm482, %v1421, %v1425
      %v1427 = vshrl.u32 %v1378, 16
      %v1429 = vrot.slane %v1427, 4
      %v1430 = vor.u32 %v1429, %v1425
      %v1431 = vrot.slane %v1430, 4
      %v1433 = vshll.u32 %v1379, 16
      %v1435 = vrot.slane %v1433, 5
      %v1436 = vsel %vm482, %v1431, %v1435
      %v1437 = vshrl.u32 %v1379, 16
      %v1439 = vrot.slane %v1437, 4
      %v1440 = vor.u32 %v1439, %v1435
      %v1441 = vrot.slane %v1440, 4
      %v1443 = vshll.u32 %v1380, 16
      %v1445 = vrot.slane %v1443, 5
      %v1446 = vsel %vm482, %v1441, %v1445
      %v1447 = vshrl.u32 %v1380, 16
      %v1449 = vrot.slane %v1447, 4
      %v1450 = vor.u32 %v1449, %v1445
      %v1451 = vrot.slane %v1450, 4
      %v1453 = vshll.u32 %v1381, 16
      %v1455 = vrot.slane %v1453, 5
      %v1456 = vsel %vm482, %v1451, %v1455
      %v1457 = vshrl.u32 %v1381, 16
      %v1459 = vrot.slane %v1457, 4
      %v1460 = vor.u32 %v1459, %v1455
      %v1461 = vrot.slane %v1460, 4
      %v1463 = vshll.u32 %v1382, 16
      %v1465 = vrot.slane %v1463, 5
      %v1466 = vsel %vm482, %v1461, %v1465
      %1467 = vrot.lane.b32.xlu0 %v1396, 48
      %v1468 = vpop.permute.xlu0 %1467
      %1469 = vrot.lane.b32.xlu0 %v1406, 48
      %v1470 = vpop.permute.xlu0 %1469
      %1471 = vrot.lane.b32.xlu0 %v1416, 48
      %v1472 = vpop.permute.xlu0 %1471
      %1473 = vrot.lane.b32.xlu0 %v1426, 48
      %v1474 = vpop.permute.xlu0 %1473
      %1475 = vrot.lane.b32.xlu0 %v1436, 48
      %v1476 = vpop.permute.xlu0 %1475
      %1477 = vrot.lane.b32.xlu0 %v1446, 48
      %v1478 = vpop.permute.xlu0 %1477
      %1479 = vrot.lane.b32.xlu0 %v1456, 48
      %v1480 = vpop.permute.xlu0 %1479
      %1481 = vrot.lane.b32.xlu0 %v1466, 48
      %v1482 = vpop.permute.xlu0 %1481
      %1491 = vst.msk [vmem:[#allocation4 + $0x4] sm:$0xf] %vm802, %v1468
      %1492 = vst.msk [vmem:[#allocation4 + $0x14] sm:$0xf] %vm802, %v1470
      %1493 = vst.msk [vmem:[#allocation4 + $0x24] sm:$0xf] %vm802, %v1472
      %1494 = vst.msk [vmem:[#allocation4 + $0x34] sm:$0xf] %vm802, %v1474
      %1495 = vst.msk [vmem:[#allocation4 + $0x44] sm:$0xf] %vm802, %v1476
      %1496 = vst.msk [vmem:[#allocation4 + $0x54] sm:$0xf] %vm802, %v1478
      %1497 = vst.msk [vmem:[#allocation4 + $0x64] sm:$0xf] %vm802, %v1480
      %1498 = vst.msk [vmem:[#allocation4 + $0x74] sm:$0xf] %vm802, %v1482
      %v1499 = vld [vmem:[#allocation2 + $0x8] sm:$0xe]
      %v1500 = vld [vmem:[#allocation2 + $0xc] sm:$0xf]
      %v1501 = vld [vmem:[#allocation2 + $0x10] sm:$0xf]
      %v1502 = vld [vmem:[#allocation2 + $0x14] sm:$0xf]
      %v1503 = vld [vmem:[#allocation2 + $0x18] sm:$0xf]
      %v1504 = vld [vmem:[#allocation2 + $0x1c] sm:$0xf]
      %v1505 = vld [vmem:[#allocation2 + $0x20] sm:$0xf]
      %v1506 = vld [vmem:[#allocation2 + $0x24] sm:$0xf]
      %v1507 = vld [vmem:[#allocation2 + $0x28] sm:$0x1]
      %v1517 = vrot.slane %v1499, 5
      %v1518 = vrot.slane %v1517, 4
      %v1519 = vrot.slane %v1500, 5
      %v1520 = vsel %vm620, %v1518, %v1519
      %v1521 = vrot.slane %v1519, 4
      %v1522 = vrot.slane %v1501, 5
      %v1523 = vsel %vm620, %v1521, %v1522
      %v1524 = vrot.slane %v1522, 4
      %v1525 = vrot.slane %v1502, 5
      %v1526 = vsel %vm620, %v1524, %v1525
      %v1527 = vrot.slane %v1525, 4
      %v1528 = vrot.slane %v1503, 5
      %v1529 = vsel %vm620, %v1527, %v1528
      %v1530 = vrot.slane %v1528, 4
      %v1531 = vrot.slane %v1504, 5
      %v1532 = vsel %vm620, %v1530, %v1531
      %v1533 = vrot.slane %v1531, 4
      %v1534 = vrot.slane %v1505, 5
      %v1535 = vsel %vm620, %v1533, %v1534
      %v1536 = vrot.slane %v1534, 4
      %v1537 = vrot.slane %v1506, 5
      %v1538 = vsel %vm620, %v1536, %v1537
      %v1539 = vrot.slane %v1537, 4
      %v1540 = vrot.slane %v1507, 5
      %v1541 = vsel %vm620, %v1539, %v1540
      %1542 = vrot.lane.b32.xlu0 %v1520, 64
      %v1543 = vpop.permute.xlu0 %1542
      %1544 = vrot.lane.b32.xlu0 %v1523, 64
      %v1545 = vpop.permute.xlu0 %1544
      %1546 = vrot.lane.b32.xlu0 %v1526, 64
      %v1547 = vpop.permute.xlu0 %1546
      %1548 = vrot.lane.b32.xlu0 %v1529, 64
      %v1549 = vpop.permute.xlu0 %1548
      %1550 = vrot.lane.b32.xlu0 %v1532, 64
      %v1551 = vpop.permute.xlu0 %1550
      %1552 = vrot.lane.b32.xlu0 %v1535, 64
      %v1553 = vpop.permute.xlu0 %1552
      %1554 = vrot.lane.b32.xlu0 %v1538, 64
      %v1555 = vpop.permute.xlu0 %1554
      %1556 = vrot.lane.b32.xlu0 %v1541, 64
      %v1557 = vpop.permute.xlu0 %1556
      %1566 = vst.msk [vmem:[#allocation4 + $0x4] sm:$0xf] %vm878, %v1543
      %1567 = vst.msk [vmem:[#allocation4 + $0x14] sm:$0xf] %vm878, %v1545
      %1568 = vst.msk [vmem:[#allocation4 + $0x24] sm:$0xf] %vm878, %v1547
      %1569 = vst.msk [vmem:[#allocation4 + $0x34] sm:$0xf] %vm878, %v1549
      %1570 = vst.msk [vmem:[#allocation4 + $0x44] sm:$0xf] %vm878, %v1551
      %1571 = vst.msk [vmem:[#allocation4 + $0x54] sm:$0xf] %vm878, %v1553
      %1572 = vst.msk [vmem:[#allocation4 + $0x64] sm:$0xf] %vm878, %v1555
      %1573 = vst.msk [vmem:[#allocation4 + $0x74] sm:$0xf] %vm878, %v1557
      %v1574 = vld [vmem:[#allocation2 + $0x8] sm:$0xe]
      %v1575 = vld [vmem:[#allocation2 + $0xc] sm:$0xf]
      %v1576 = vld [vmem:[#allocation2 + $0x10] sm:$0xf]
      %v1577 = vld [vmem:[#allocation2 + $0x14] sm:$0xf]
      %v1578 = vld [vmem:[#allocation2 + $0x18] sm:$0xf]
      %v1579 = vld [vmem:[#allocation2 + $0x1c] sm:$0xf]
      %v1580 = vld [vmem:[#allocation2 + $0x20] sm:$0xf]
      %v1581 = vld [vmem:[#allocation2 + $0x24] sm:$0xf]
      %v1582 = vld [vmem:[#allocation2 + $0x28] sm:$0x3]
      %v1584 = vshrl.u32 %v1574, 16
      %v1586 = vrot.slane %v1584, 5
      %v1587 = vshll.u32 %v1574, 16
      %v1589 = vrot.slane %v1587, 6
      %v1590 = vor.u32 %v1586, %v1589
      %v1591 = vrot.slane %v1590, 4
      %v1593 = vshrl.u32 %v1575, 16
      %v1595 = vrot.slane %v1593, 5
      %v1596 = vshll.u32 %v1575, 16
      %v1598 = vrot.slane %v1596, 6
      %v1599 = vor.u32 %v1595, %v1598
      %v1600 = vsel %vm689, %v1591, %v1599
      %v1601 = vrot.slane %v1599, 4
      %v1603 = vshrl.u32 %v1576, 16
      %v1605 = vrot.slane %v1603, 5
      %v1606 = vshll.u32 %v1576, 16
      %v1608 = vrot.slane %v1606, 6
      %v1609 = vor.u32 %v1605, %v1608
      %v1610 = vsel %vm689, %v1601, %v1609
      %v1611 = vrot.slane %v1609, 4
      %v1613 = vshrl.u32 %v1577, 16
      %v1615 = vrot.slane %v1613, 5
      %v1616 = vshll.u32 %v1577, 16
      %v1618 = vrot.slane %v1616, 6
      %v1619 = vor.u32 %v1615, %v1618
      %v1620 = vsel %vm689, %v1611, %v1619
      %v1621 = vrot.slane %v1619, 4
      %v1623 = vshrl.u32 %v1578, 16
      %v1625 = vrot.slane %v1623, 5
      %v1626 = vshll.u32 %v1578, 16
      %v1628 = vrot.slane %v1626, 6
      %v1629 = vor.u32 %v1625, %v1628
      %v1630 = vsel %vm689, %v1621, %v1629
      %v1631 = vrot.slane %v1629, 4
      %v1633 = vshrl.u32 %v1579, 16
      %v1635 = vrot.slane %v1633, 5
      %v1636 = vshll.u32 %v1579, 16
      %v1638 = vrot.slane %v1636, 6
      %v1639 = vor.u32 %v1635, %v1638
      %v1640 = vsel %vm689, %v1631, %v1639
      %v1641 = vrot.slane %v1639, 4
      %v1643 = vshrl.u32 %v1580, 16
      %v1645 = vrot.slane %v1643, 5
      %v1646 = vshll.u32 %v1580, 16
      %v1648 = vrot.slane %v1646, 6
      %v1649 = vor.u32 %v1645, %v1648
      %v1650 = vsel %vm689, %v1641, %v1649
      %v1651 = vrot.slane %v1649, 4
      %v1653 = vshrl.u32 %v1581, 16
      %v1655 = vrot.slane %v1653, 5
      %v1656 = vshll.u32 %v1581, 16
      %v1658 = vrot.slane %v1656, 6
      %v1659 = vor.u32 %v1655, %v1658
      %v1660 = vsel %vm689, %v1651, %v1659
      %v1661 = vrot.slane %v1659, 4
      %v1663 = vshrl.u32 %v1582, 16
      %v1665 = vrot.slane %v1663, 5
      %v1666 = vshll.u32 %v1582, 16
      %v1668 = vrot.slane %v1666, 6
      %v1669 = vor.u32 %v1665, %v1668
      %v1670 = vsel %vm689, %v1661, %v1669
      %1671 = vrot.lane.b32.xlu0 %v1600, 80
      %v1672 = vpop.permute.xlu0 %1671
      %1673 = vrot.lane.b32.xlu0 %v1610, 80
      %v1674 = vpop.permute.xlu0 %1673
      %1675 = vrot.lane.b32.xlu0 %v1620, 80
      %v1676 = vpop.permute.xlu0 %1675
      %1677 = vrot.lane.b32.xlu0 %v1630, 80
      %v1678 = vpop.permute.xlu0 %1677
      %1679 = vrot.lane.b32.xlu0 %v1640, 80
      %v1680 = vpop.permute.xlu0 %1679
      %1681 = vrot.lane.b32.xlu0 %v1650, 80
      %v1682 = vpop.permute.xlu0 %1681
      %1683 = vrot.lane.b32.xlu0 %v1660, 80
      %v1684 = vpop.permute.xlu0 %1683
      %1685 = vrot.lane.b32.xlu0 %v1670, 80
      %v1686 = vpop.permute.xlu0 %1685
      %1695 = vst.msk [vmem:[#allocation4 + $0x4] sm:$0xf] %vm927, %v1672
      %1696 = vst.msk [vmem:[#allocation4 + $0x14] sm:$0xf] %vm927, %v1674
      %1697 = vst.msk [vmem:[#allocation4 + $0x24] sm:$0xf] %vm927, %v1676
      %1698 = vst.msk [vmem:[#allocation4 + $0x34] sm:$0xf] %vm927, %v1678
      %1699 = vst.msk [vmem:[#allocation4 + $0x44] sm:$0xf] %vm927, %v1680
      %1700 = vst.msk [vmem:[#allocation4 + $0x54] sm:$0xf] %vm927, %v1682
      %1701 = vst.msk [vmem:[#allocation4 + $0x64] sm:$0xf] %vm927, %v1684
      %1702 = vst.msk [vmem:[#allocation4 + $0x74] sm:$0xf] %vm927, %v1686
      %v1703 = vld [vmem:[#allocation2 + $0x8] sm:$0xc]
      %v1704 = vld [vmem:[#allocation2 + $0xc] sm:$0xf]
      %v1705 = vld [vmem:[#allocation2 + $0x10] sm:$0xf]
      %v1706 = vld [vmem:[#allocation2 + $0x14] sm:$0xf]
      %v1707 = vld [vmem:[#allocation2 + $0x18] sm:$0xf]
      %v1708 = vld [vmem:[#allocation2 + $0x1c] sm:$0xf]
      %v1709 = vld [vmem:[#allocation2 + $0x20] sm:$0xf]
      %v1710 = vld [vmem:[#allocation2 + $0x24] sm:$0xf]
      %v1711 = vld [vmem:[#allocation2 + $0x28] sm:$0x3]
      %v1721 = vrot.slane %v1703, 6
      %v1722 = vrot.slane %v1721, 4
      %v1723 = vrot.slane %v1704, 6
      %v1724 = vsel %vm385, %v1722, %v1723
      %v1725 = vrot.slane %v1723, 4
      %v1726 = vrot.slane %v1705, 6
      %v1727 = vsel %vm385, %v1725, %v1726
      %v1728 = vrot.slane %v1726, 4
      %v1729 = vrot.slane %v1706, 6
      %v1730 = vsel %vm385, %v1728, %v1729
      %v1731 = vrot.slane %v1729, 4
      %v1732 = vrot.slane %v1707, 6
      %v1733 = vsel %vm385, %v1731, %v1732
      %v1734 = vrot.slane %v1732, 4
      %v1735 = vrot.slane %v1708, 6
      %v1736 = vsel %vm385, %v1734, %v1735
      %v1737 = vrot.slane %v1735, 4
      %v1738 = vrot.slane %v1709, 6
      %v1739 = vsel %vm385, %v1737, %v1738
      %v1740 = vrot.slane %v1738, 4
      %v1741 = vrot.slane %v1710, 6
      %v1742 = vsel %vm385, %v1740, %v1741
      %v1743 = vrot.slane %v1741, 4
      %v1744 = vrot.slane %v1711, 6
      %v1745 = vsel %vm385, %v1743, %v1744
      %1746 = vrot.lane.b32.xlu0 %v1724, 96
      %v1747 = vpop.permute.xlu0 %1746
      %1748 = vrot.lane.b32.xlu0 %v1727, 96
      %v1749 = vpop.permute.xlu0 %1748
      %1750 = vrot.lane.b32.xlu0 %v1730, 96
      %v1751 = vpop.permute.xlu0 %1750
      %1752 = vrot.lane.b32.xlu0 %v1733, 96
      %v1753 = vpop.permute.xlu0 %1752
      %1754 = vrot.lane.b32.xlu0 %v1736, 96
      %v1755 = vpop.permute.xlu0 %1754
      %1756 = vrot.lane.b32.xlu0 %v1739, 96
      %v1757 = vpop.permute.xlu0 %1756
      %1758 = vrot.lane.b32.xlu0 %v1742, 96
      %v1759 = vpop.permute.xlu0 %1758
      %1760 = vrot.lane.b32.xlu0 %v1745, 96
      %v1761 = vpop.permute.xlu0 %1760
      %1770 = vst.msk [vmem:[#allocation4 + $0x4] sm:$0xf] %vm1053, %v1747
      %1771 = vst.msk [vmem:[#allocation4 + $0x14] sm:$0xf] %vm1053, %v1749
      %1772 = vst.msk [vmem:[#allocation4 + $0x24] sm:$0xf] %vm1053, %v1751
      %1773 = vst.msk [vmem:[#allocation4 + $0x34] sm:$0xf] %vm1053, %v1753
      %1774 = vst.msk [vmem:[#allocation4 + $0x44] sm:$0xf] %vm1053, %v1755
      %1775 = vst.msk [vmem:[#allocation4 + $0x54] sm:$0xf] %vm1053, %v1757
      %1776 = vst.msk [vmem:[#allocation4 + $0x64] sm:$0xf] %vm1053, %v1759
      %1777 = vst.msk [vmem:[#allocation4 + $0x74] sm:$0xf] %vm1053, %v1761
      %v1778 = vld [vmem:[#allocation2 + $0xc] sm:$0xf]
      %v1779 = vld [vmem:[#allocation2 + $0x10] sm:$0xf]
      %v1780 = vld [vmem:[#allocation2 + $0x14] sm:$0xf]
      %v1781 = vld [vmem:[#allocation2 + $0x18] sm:$0xf]
      %v1782 = vld [vmem:[#allocation2 + $0x1c] sm:$0xf]
      %v1783 = vld [vmem:[#allocation2 + $0x20] sm:$0xf]
      %v1784 = vld [vmem:[#allocation2 + $0x24] sm:$0xf]
      %v1785 = vld [vmem:[#allocation2 + $0x28] sm:$0xf]
      %1794 = vrot.lane.b32.xlu0 %v1778, 112
      %v1795 = vpop.permute.xlu0 %1794
      %1796 = vrot.lane.b32.xlu0 %v1779, 112
      %v1797 = vpop.permute.xlu0 %1796
      %1798 = vrot.lane.b32.xlu0 %v1780, 112
      %v1799 = vpop.permute.xlu0 %1798
      %1800 = vrot.lane.b32.xlu0 %v1781, 112
      %v1801 = vpop.permute.xlu0 %1800
      %1802 = vrot.lane.b32.xlu0 %v1782, 112
      %v1803 = vpop.permute.xlu0 %1802
      %1804 = vrot.lane.b32.xlu0 %v1783, 112
      %v1805 = vpop.permute.xlu0 %1804
      %1806 = vrot.lane.b32.xlu0 %v1784, 112
      %v1807 = vpop.permute.xlu0 %1806
      %1808 = vrot.lane.b32.xlu0 %v1785, 112
      %v1809 = vpop.permute.xlu0 %1808
      %1818 = vst.msk [vmem:[#allocation4 + $0x4] sm:$0xf] %vm1129, %v1795
      %1819 = vst.msk [vmem:[#allocation4 + $0x14] sm:$0xf] %vm1129, %v1797
      %1820 = vst.msk [vmem:[#allocation4 + $0x24] sm:$0xf] %vm1129, %v1799
      %1821 = vst.msk [vmem:[#allocation4 + $0x34] sm:$0xf] %vm1129, %v1801
      %1822 = vst.msk [vmem:[#allocation4 + $0x44] sm:$0xf] %vm1129, %v1803
      %1823 = vst.msk [vmem:[#allocation4 + $0x54] sm:$0xf] %vm1129, %v1805
      %1824 = vst.msk [vmem:[#allocation4 + $0x64] sm:$0xf] %vm1129, %v1807
      %1825 = vst.msk [vmem:[#allocation4 + $0x74] sm:$0xf] %vm1129, %v1809
      %v1826 = vld [vmem:[#allocation2 + $0xc] sm:$0xf]
      %v1827 = vld [vmem:[#allocation2 + $0x10] sm:$0xf]
      %v1828 = vld [vmem:[#allocation2 + $0x14] sm:$0xf]
      %v1829 = vld [vmem:[#allocation2 + $0x18] sm:$0xf]
      %v1830 = vld [vmem:[#allocation2 + $0x1c] sm:$0xf]
      %v1831 = vld [vmem:[#allocation2 + $0x20] sm:$0xf]
      %v1832 = vld [vmem:[#allocation2 + $0x24] sm:$0xf]
      %v1833 = vld [vmem:[#allocation2 + $0x28] sm:$0xf]
      %v1834 = vld [vmem:[#allocation2 + $0x2c] sm:$0x1]
      %v1836 = vshrl.u32 %v1826, 16
      %v1838 = vrot.slane %v1836, 4
      %v1839 = vshll.u32 %v1826, 16
      %v1841 = vrot.slane %v1839, 5
      %v1842 = vor.u32 %v1838, %v1841
      %v1843 = vrot.slane %v1842, 4
      %v1845 = vshll.u32 %v1827, 16
      %v1847 = vrot.slane %v1845, 5
      %v1848 = vsel %vm482, %v1843, %v1847
      %v1849 = vshrl.u32 %v1827, 16
      %v1851 = vrot.slane %v1849, 4
      %v1852 = vor.u32 %v1851, %v1847
      %v1853 = vrot.slane %v1852, 4
      %v1855 = vshll.u32 %v1828, 16
      %v1857 = vrot.slane %v1855, 5
      %v1858 = vsel %vm482, %v1853, %v1857
      %v1859 = vshrl.u32 %v1828, 16
      %v1861 = vrot.slane %v1859, 4
      %v1862 = vor.u32 %v1861, %v1857
      %v1863 = vrot.slane %v1862, 4
      %v1865 = vshll.u32 %v1829, 16
      %v1867 = vrot.slane %v1865, 5
      %v1868 = vsel %vm482, %v1863, %v1867
      %v1869 = vshrl.u32 %v1829, 16
      %v1871 = vrot.slane %v1869, 4
      %v1872 = vor.u32 %v1871, %v1867
      %v1873 = vrot.slane %v1872, 4
      %v1875 = vshll.u32 %v1830, 16
      %v1877 = vrot.slane %v1875, 5
      %v1878 = vsel %vm482, %v1873, %v1877
      %v1879 = vshrl.u32 %v1830, 16
      %v1881 = vrot.slane %v1879, 4
      %v1882 = vor.u32 %v1881, %v1877
      %v1883 = vrot.slane %v1882, 4
      %v1885 = vshll.u32 %v1831, 16
      %v1887 = vrot.slane %v1885, 5
      %v1888 = vsel %vm482, %v1883, %v1887
      %v1889 = vshrl.u32 %v1831, 16
      %v1891 = vrot.slane %v1889, 4
      %v1892 = vor.u32 %v1891, %v1887
      %v1893 = vrot.slane %v1892, 4
      %v1895 = vshll.u32 %v1832, 16
      %v1897 = vrot.slane %v1895, 5
      %v1898 = vsel %vm482, %v1893, %v1897
      %v1899 = vshrl.u32 %v1832, 16
      %v1901 = vrot.slane %v1899, 4
      %v1902 = vor.u32 %v1901, %v1897
      %v1903 = vrot.slane %v1902, 4
      %v1905 = vshll.u32 %v1833, 16
      %v1907 = vrot.slane %v1905, 5
      %v1908 = vsel %vm482, %v1903, %v1907
      %v1909 = vshrl.u32 %v1833, 16
      %v1911 = vrot.slane %v1909, 4
      %v1912 = vor.u32 %v1911, %v1907
      %v1913 = vrot.slane %v1912, 4
      %v1915 = vshll.u32 %v1834, 16
      %v1917 = vrot.slane %v1915, 5
      %v1918 = vsel %vm482, %v1913, %v1917
      %1927 = vst.msk [vmem:[#allocation4 + $0x8] sm:$0xf] %vm341, %v1848
      %1928 = vst.msk [vmem:[#allocation4 + $0x18] sm:$0xf] %vm341, %v1858
      %1929 = vst.msk [vmem:[#allocation4 + $0x28] sm:$0xf] %vm341, %v1868
      %1930 = vst.msk [vmem:[#allocation4 + $0x38] sm:$0xf] %vm341, %v1878
      %1931 = vst.msk [vmem:[#allocation4 + $0x48] sm:$0xf] %vm341, %v1888
      %1932 = vst.msk [vmem:[#allocation4 + $0x58] sm:$0xf] %vm341, %v1898
      %1933 = vst.msk [vmem:[#allocation4 + $0x68] sm:$0xf] %vm341, %v1908
      %1934 = vst.msk [vmem:[#allocation4 + $0x78] sm:$0xf] %vm341, %v1918
      %v1935 = vld [vmem:[#allocation2 + $0xc] sm:$0xe]
      %v1936 = vld [vmem:[#allocation2 + $0x10] sm:$0xf]
      %v1937 = vld [vmem:[#allocation2 + $0x14] sm:$0xf]
      %v1938 = vld [vmem:[#allocation2 + $0x18] sm:$0xf]
      %v1939 = vld [vmem:[#allocation2 + $0x1c] sm:$0xf]
      %v1940 = vld [vmem:[#allocation2 + $0x20] sm:$0xf]
      %v1941 = vld [vmem:[#allocation2 + $0x24] sm:$0xf]
      %v1942 = vld [vmem:[#allocation2 + $0x28] sm:$0xf]
      %v1943 = vld [vmem:[#allocation2 + $0x2c] sm:$0x1]
      %v1953 = vrot.slane %v1935, 5
      %v1954 = vrot.slane %v1953, 4
      %v1955 = vrot.slane %v1936, 5
      %v1956 = vsel %vm620, %v1954, %v1955
      %v1957 = vrot.slane %v1955, 4
      %v1958 = vrot.slane %v1937, 5
      %v1959 = vsel %vm620, %v1957, %v1958
      %v1960 = vrot.slane %v1958, 4
      %v1961 = vrot.slane %v1938, 5
      %v1962 = vsel %vm620, %v1960, %v1961
      %v1963 = vrot.slane %v1961, 4
      %v1964 = vrot.slane %v1939, 5
      %v1965 = vsel %vm620, %v1963, %v1964
      %v1966 = vrot.slane %v1964, 4
      %v1967 = vrot.slane %v1940, 5
      %v1968 = vsel %vm620, %v1966, %v1967
      %v1969 = vrot.slane %v1967, 4
      %v1970 = vrot.slane %v1941, 5
      %v1971 = vsel %vm620, %v1969, %v1970
      %v1972 = vrot.slane %v1970, 4
      %v1973 = vrot.slane %v1942, 5
      %v1974 = vsel %vm620, %v1972, %v1973
      %v1975 = vrot.slane %v1973, 4
      %v1976 = vrot.slane %v1943, 5
      %v1977 = vsel %vm620, %v1975, %v1976
      %1978 = vrot.lane.b32.xlu0 %v1956, 16
      %v1979 = vpop.permute.xlu0 %1978
      %1980 = vrot.lane.b32.xlu0 %v1959, 16
      %v1981 = vpop.permute.xlu0 %1980
      %1982 = vrot.lane.b32.xlu0 %v1962, 16
      %v1983 = vpop.permute.xlu0 %1982
      %1984 = vrot.lane.b32.xlu0 %v1965, 16
      %v1985 = vpop.permute.xlu0 %1984
      %1986 = vrot.lane.b32.xlu0 %v1968, 16
      %v1987 = vpop.permute.xlu0 %1986
      %1988 = vrot.lane.b32.xlu0 %v1971, 16
      %v1989 = vpop.permute.xlu0 %1988
      %1990 = vrot.lane.b32.xlu0 %v1974, 16
      %v1991 = vpop.permute.xlu0 %1990
      %1992 = vrot.lane.b32.xlu0 %v1977, 16
      %v1993 = vpop.permute.xlu0 %1992
      %2002 = vst.msk [vmem:[#allocation4 + $0x8] sm:$0xf] %vm591, %v1979
      %2003 = vst.msk [vmem:[#allocation4 + $0x18] sm:$0xf] %vm591, %v1981
      %2004 = vst.msk [vmem:[#allocation4 + $0x28] sm:$0xf] %vm591, %v1983
      %2005 = vst.msk [vmem:[#allocation4 + $0x38] sm:$0xf] %vm591, %v1985
      %2006 = vst.msk [vmem:[#allocation4 + $0x48] sm:$0xf] %vm591, %v1987
      %2007 = vst.msk [vmem:[#allocation4 + $0x58] sm:$0xf] %vm591, %v1989
      %2008 = vst.msk [vmem:[#allocation4 + $0x68] sm:$0xf] %vm591, %v1991
      %2009 = vst.msk [vmem:[#allocation4 + $0x78] sm:$0xf] %vm591, %v1993
      %v2010 = vld [vmem:[#allocation2 + $0xc] sm:$0xe]
      %v2011 = vld [vmem:[#allocation2 + $0x10] sm:$0xf]
      %v2012 = vld [vmem:[#allocation2 + $0x14] sm:$0xf]
      %v2013 = vld [vmem:[#allocation2 + $0x18] sm:$0xf]
      %v2014 = vld [vmem:[#allocation2 + $0x1c] sm:$0xf]
      %v2015 = vld [vmem:[#allocation2 + $0x20] sm:$0xf]
      %v2016 = vld [vmem:[#allocation2 + $0x24] sm:$0xf]
      %v2017 = vld [vmem:[#allocation2 + $0x28] sm:$0xf]
      %v2018 = vld [vmem:[#allocation2 + $0x2c] sm:$0x3]
      %v2020 = vshrl.u32 %v2010, 16
      %v2022 = vrot.slane %v2020, 5
      %v2023 = vshll.u32 %v2010, 16
      %v2025 = vrot.slane %v2023, 6
      %v2026 = vor.u32 %v2022, %v2025
      %v2027 = vrot.slane %v2026, 4
      %v2029 = vshrl.u32 %v2011, 16
      %v2031 = vrot.slane %v2029, 5
      %v2032 = vshll.u32 %v2011, 16
      %v2034 = vrot.slane %v2032, 6
      %v2035 = vor.u32 %v2031, %v2034
      %v2036 = vsel %vm689, %v2027, %v2035
      %v2037 = vrot.slane %v2035, 4
      %v2039 = vshrl.u32 %v2012, 16
      %v2041 = vrot.slane %v2039, 5
      %v2042 = vshll.u32 %v2012, 16
      %v2044 = vrot.slane %v2042, 6
      %v2045 = vor.u32 %v2041, %v2044
      %v2046 = vsel %vm689, %v2037, %v2045
      %v2047 = vrot.slane %v2045, 4
      %v2049 = vshrl.u32 %v2013, 16
      %v2051 = vrot.slane %v2049, 5
      %v2052 = vshll.u32 %v2013, 16
      %v2054 = vrot.slane %v2052, 6
      %v2055 = vor.u32 %v2051, %v2054
      %v2056 = vsel %vm689, %v2047, %v2055
      %v2057 = vrot.slane %v2055, 4
      %v2059 = vshrl.u32 %v2014, 16
      %v2061 = vrot.slane %v2059, 5
      %v2062 = vshll.u32 %v2014, 16
      %v2064 = vrot.slane %v2062, 6
      %v2065 = vor.u32 %v2061, %v2064
      %v2066 = vsel %vm689, %v2057, %v2065
      %v2067 = vrot.slane %v2065, 4
      %v2069 = vshrl.u32 %v2015, 16
      %v2071 = vrot.slane %v2069, 5
      %v2072 = vshll.u32 %v2015, 16
      %v2074 = vrot.slane %v2072, 6
      %v2075 = vor.u32 %v2071, %v2074
      %v2076 = vsel %vm689, %v2067, %v2075
      %v2077 = vrot.slane %v2075, 4
      %v2079 = vshrl.u32 %v2016, 16
      %v2081 = vrot.slane %v2079, 5
      %v2082 = vshll.u32 %v2016, 16
      %v2084 = vrot.slane %v2082, 6
      %v2085 = vor.u32 %v2081, %v2084
      %v2086 = vsel %vm689, %v2077, %v2085
      %v2087 = vrot.slane %v2085, 4
      %v2089 = vshrl.u32 %v2017, 16
      %v2091 = vrot.slane %v2089, 5
      %v2092 = vshll.u32 %v2017, 16
      %v2094 = vrot.slane %v2092, 6
      %v2095 = vor.u32 %v2091, %v2094
      %v2096 = vsel %vm689, %v2087, %v2095
      %v2097 = vrot.slane %v2095, 4
      %v2099 = vshrl.u32 %v2018, 16
      %v2101 = vrot.slane %v2099, 5
      %v2102 = vshll.u32 %v2018, 16
      %v2104 = vrot.slane %v2102, 6
      %v2105 = vor.u32 %v2101, %v2104
      %v2106 = vsel %vm689, %v2097, %v2105
      %2107 = vrot.lane.b32.xlu0 %v2036, 32
      %v2108 = vpop.permute.xlu0 %2107
      %2109 = vrot.lane.b32.xlu0 %v2046, 32
      %v2110 = vpop.permute.xlu0 %2109
      %2111 = vrot.lane.b32.xlu0 %v2056, 32
      %v2112 = vpop.permute.xlu0 %2111
      %2113 = vrot.lane.b32.xlu0 %v2066, 32
      %v2114 = vpop.permute.xlu0 %2113
      %2115 = vrot.lane.b32.xlu0 %v2076, 32
      %v2116 = vpop.permute.xlu0 %2115
      %2117 = vrot.lane.b32.xlu0 %v2086, 32
      %v2118 = vpop.permute.xlu0 %2117
      %2119 = vrot.lane.b32.xlu0 %v2096, 32
      %v2120 = vpop.permute.xlu0 %2119
      %2121 = vrot.lane.b32.xlu0 %v2106, 32
      %v2122 = vpop.permute.xlu0 %2121
      %2131 = vst.msk [vmem:[#allocation4 + $0x8] sm:$0xf] %vm670, %v2108
      %2132 = vst.msk [vmem:[#allocation4 + $0x18] sm:$0xf] %vm670, %v2110
      %2133 = vst.msk [vmem:[#allocation4 + $0x28] sm:$0xf] %vm670, %v2112
      %2134 = vst.msk [vmem:[#allocation4 + $0x38] sm:$0xf] %vm670, %v2114
      %2135 = vst.msk [vmem:[#allocation4 + $0x48] sm:$0xf] %vm670, %v2116
      %2136 = vst.msk [vmem:[#allocation4 + $0x58] sm:$0xf] %vm670, %v2118
      %2137 = vst.msk [vmem:[#allocation4 + $0x68] sm:$0xf] %vm670, %v2120
      %2138 = vst.msk [vmem:[#allocation4 + $0x78] sm:$0xf] %vm670, %v2122
      %v2139 = vld [vmem:[#allocation2 + $0xc] sm:$0xc]
      %v2140 = vld [vmem:[#allocation2 + $0x10] sm:$0xf]
      %v2141 = vld [vmem:[#allocation2 + $0x14] sm:$0xf]
      %v2142 = vld [vmem:[#allocation2 + $0x18] sm:$0xf]
      %v2143 = vld [vmem:[#allocation2 + $0x1c] sm:$0xf]
      %v2144 = vld [vmem:[#allocation2 + $0x20] sm:$0xf]
      %v2145 = vld [vmem:[#allocation2 + $0x24] sm:$0xf]
      %v2146 = vld [vmem:[#allocation2 + $0x28] sm:$0xf]
      %v2147 = vld [vmem:[#allocation2 + $0x2c] sm:$0x3]
      %v2157 = vrot.slane %v2139, 6
      %v2158 = vrot.slane %v2157, 4
      %v2159 = vrot.slane %v2140, 6
      %v2160 = vsel %vm385, %v2158, %v2159
      %v2161 = vrot.slane %v2159, 4
      %v2162 = vrot.slane %v2141, 6
      %v2163 = vsel %vm385, %v2161, %v2162
      %v2164 = vrot.slane %v2162, 4
      %v2165 = vrot.slane %v2142, 6
      %v2166 = vsel %vm385, %v2164, %v2165
      %v2167 = vrot.slane %v2165, 4
      %v2168 = vrot.slane %v2143, 6
      %v2169 = vsel %vm385, %v2167, %v2168
      %v2170 = vrot.slane %v2168, 4
      %v2171 = vrot.slane %v2144, 6
      %v2172 = vsel %vm385, %v2170, %v2171
      %v2173 = vrot.slane %v2171, 4
      %v2174 = vrot.slane %v2145, 6
      %v2175 = vsel %vm385, %v2173, %v2174
      %v2176 = vrot.slane %v2174, 4
      %v2177 = vrot.slane %v2146, 6
      %v2178 = vsel %vm385, %v2176, %v2177
      %v2179 = vrot.slane %v2177, 4
      %v2180 = vrot.slane %v2147, 6
      %v2181 = vsel %vm385, %v2179, %v2180
      %2182 = vrot.lane.b32.xlu0 %v2160, 48
      %v2183 = vpop.permute.xlu0 %2182
      %2184 = vrot.lane.b32.xlu0 %v2163, 48
      %v2185 = vpop.permute.xlu0 %2184
      %2186 = vrot.lane.b32.xlu0 %v2166, 48
      %v2187 = vpop.permute.xlu0 %2186
      %2188 = vrot.lane.b32.xlu0 %v2169, 48
      %v2189 = vpop.permute.xlu0 %2188
      %2190 = vrot.lane.b32.xlu0 %v2172, 48
      %v2191 = vpop.permute.xlu0 %2190
      %2192 = vrot.lane.b32.xlu0 %v2175, 48
      %v2193 = vpop.permute.xlu0 %2192
      %2194 = vrot.lane.b32.xlu0 %v2178, 48
      %v2195 = vpop.permute.xlu0 %2194
      %2196 = vrot.lane.b32.xlu0 %v2181, 48
      %v2197 = vpop.permute.xlu0 %2196
      %2206 = vst.msk [vmem:[#allocation4 + $0x8] sm:$0xf] %vm802, %v2183
      %2207 = vst.msk [vmem:[#allocation4 + $0x18] sm:$0xf] %vm802, %v2185
      %2208 = vst.msk [vmem:[#allocation4 + $0x28] sm:$0xf] %vm802, %v2187
      %2209 = vst.msk [vmem:[#allocation4 + $0x38] sm:$0xf] %vm802, %v2189
      %2210 = vst.msk [vmem:[#allocation4 + $0x48] sm:$0xf] %vm802, %v2191
      %2211 = vst.msk [vmem:[#allocation4 + $0x58] sm:$0xf] %vm802, %v2193
      %2212 = vst.msk [vmem:[#allocation4 + $0x68] sm:$0xf] %vm802, %v2195
      %2213 = vst.msk [vmem:[#allocation4 + $0x78] sm:$0xf] %vm802, %v2197
      %v2214 = vld [vmem:[#allocation2 + $0x10] sm:$0xf]
      %v2215 = vld [vmem:[#allocation2 + $0x14] sm:$0xf]
      %v2216 = vld [vmem:[#allocation2 + $0x18] sm:$0xf]
      %v2217 = vld [vmem:[#allocation2 + $0x1c] sm:$0xf]
      %v2218 = vld [vmem:[#allocation2 + $0x20] sm:$0xf]
      %v2219 = vld [vmem:[#allocation2 + $0x24] sm:$0xf]
      %v2220 = vld [vmem:[#allocation2 + $0x28] sm:$0xf]
      %v2221 = vld [vmem:[#allocation2 + $0x2c] sm:$0xf]
      %2230 = vrot.lane.b32.xlu0 %v2214, 64
      %v2231 = vpop.permute.xlu0 %2230
      %2232 = vrot.lane.b32.xlu0 %v2215, 64
      %v2233 = vpop.permute.xlu0 %2232
      %2234 = vrot.lane.b32.xlu0 %v2216, 64
      %v2235 = vpop.permute.xlu0 %2234
      %2236 = vrot.lane.b32.xlu0 %v2217, 64
      %v2237 = vpop.permute.xlu0 %2236
      %2238 = vrot.lane.b32.xlu0 %v2218, 64
      %v2239 = vpop.permute.xlu0 %2238
      %2240 = vrot.lane.b32.xlu0 %v2219, 64
      %v2241 = vpop.permute.xlu0 %2240
      %2242 = vrot.lane.b32.xlu0 %v2220, 64
      %v2243 = vpop.permute.xlu0 %2242
      %2244 = vrot.lane.b32.xlu0 %v2221, 64
      %v2245 = vpop.permute.xlu0 %2244
      %2254 = vst.msk [vmem:[#allocation4 + $0x8] sm:$0xf] %vm878, %v2231
      %2255 = vst.msk [vmem:[#allocation4 + $0x18] sm:$0xf] %vm878, %v2233
      %2256 = vst.msk [vmem:[#allocation4 + $0x28] sm:$0xf] %vm878, %v2235
      %2257 = vst.msk [vmem:[#allocation4 + $0x38] sm:$0xf] %vm878, %v2237
      %2258 = vst.msk [vmem:[#allocation4 + $0x48] sm:$0xf] %vm878, %v2239
      %2259 = vst.msk [vmem:[#allocation4 + $0x58] sm:$0xf] %vm878, %v2241
      %2260 = vst.msk [vmem:[#allocation4 + $0x68] sm:$0xf] %vm878, %v2243
      %2261 = vst.msk [vmem:[#allocation4 + $0x78] sm:$0xf] %vm878, %v2245
      %v2262 = vld [vmem:[#allocation2 + $0x10] sm:$0xf]
      %v2263 = vld [vmem:[#allocation2 + $0x14] sm:$0xf]
      %v2264 = vld [vmem:[#allocation2 + $0x18] sm:$0xf]
      %v2265 = vld [vmem:[#allocation2 + $0x1c] sm:$0xf]
      %v2266 = vld [vmem:[#allocation2 + $0x20] sm:$0xf]
      %v2267 = vld [vmem:[#allocation2 + $0x24] sm:$0xf]
      %v2268 = vld [vmem:[#allocation2 + $0x28] sm:$0xf]
      %v2269 = vld [vmem:[#allocation2 + $0x2c] sm:$0xf]
      %v2270 = vld [vmem:[#allocation2 + $0x30] sm:$0x1]
      %v2272 = vshrl.u32 %v2262, 16
      %v2274 = vrot.slane %v2272, 4
      %v2275 = vshll.u32 %v2262, 16
      %v2277 = vrot.slane %v2275, 5
      %v2278 = vor.u32 %v2274, %v2277
      %v2279 = vrot.slane %v2278, 4
      %v2281 = vshll.u32 %v2263, 16
      %v2283 = vrot.slane %v2281, 5
      %v2284 = vsel %vm482, %v2279, %v2283
      %v2285 = vshrl.u32 %v2263, 16
      %v2287 = vrot.slane %v2285, 4
      %v2288 = vor.u32 %v2287, %v2283
      %v2289 = vrot.slane %v2288, 4
      %v2291 = vshll.u32 %v2264, 16
      %v2293 = vrot.slane %v2291, 5
      %v2294 = vsel %vm482, %v2289, %v2293
      %v2295 = vshrl.u32 %v2264, 16
      %v2297 = vrot.slane %v2295, 4
      %v2298 = vor.u32 %v2297, %v2293
      %v2299 = vrot.slane %v2298, 4
      %v2301 = vshll.u32 %v2265, 16
      %v2303 = vrot.slane %v2301, 5
      %v2304 = vsel %vm482, %v2299, %v2303
      %v2305 = vshrl.u32 %v2265, 16
      %v2307 = vrot.slane %v2305, 4
      %v2308 = vor.u32 %v2307, %v2303
      %v2309 = vrot.slane %v2308, 4
      %v2311 = vshll.u32 %v2266, 16
      %v2313 = vrot.slane %v2311, 5
      %v2314 = vsel %vm482, %v2309, %v2313
      %v2315 = vshrl.u32 %v2266, 16
      %v2317 = vrot.slane %v2315, 4
      %v2318 = vor.u32 %v2317, %v2313
      %v2319 = vrot.slane %v2318, 4
      %v2321 = vshll.u32 %v2267, 16
      %v2323 = vrot.slane %v2321, 5
      %v2324 = vsel %vm482, %v2319, %v2323
      %v2325 = vshrl.u32 %v2267, 16
      %v2327 = vrot.slane %v2325, 4
      %v2328 = vor.u32 %v2327, %v2323
      %v2329 = vrot.slane %v2328, 4
      %v2331 = vshll.u32 %v2268, 16
      %v2333 = vrot.slane %v2331, 5
      %v2334 = vsel %vm482, %v2329, %v2333
      %v2335 = vshrl.u32 %v2268, 16
      %v2337 = vrot.slane %v2335, 4
      %v2338 = vor.u32 %v2337, %v2333
      %v2339 = vrot.slane %v2338, 4
      %v2341 = vshll.u32 %v2269, 16
      %v2343 = vrot.slane %v2341, 5
      %v2344 = vsel %vm482, %v2339, %v2343
      %v2345 = vshrl.u32 %v2269, 16
      %v2347 = vrot.slane %v2345, 4
      %v2348 = vor.u32 %v2347, %v2343
      %v2349 = vrot.slane %v2348, 4
      %v2351 = vshll.u32 %v2270, 16
      %v2353 = vrot.slane %v2351, 5
      %v2354 = vsel %vm482, %v2349, %v2353
      %2355 = vrot.lane.b32.xlu0 %v2284, 80
      %v2356 = vpop.permute.xlu0 %2355
      %2357 = vrot.lane.b32.xlu0 %v2294, 80
      %v2358 = vpop.permute.xlu0 %2357
      %2359 = vrot.lane.b32.xlu0 %v2304, 80
      %v2360 = vpop.permute.xlu0 %2359
      %2361 = vrot.lane.b32.xlu0 %v2314, 80
      %v2362 = vpop.permute.xlu0 %2361
      %2363 = vrot.lane.b32.xlu0 %v2324, 80
      %v2364 = vpop.permute.xlu0 %2363
      %2365 = vrot.lane.b32.xlu0 %v2334, 80
      %v2366 = vpop.permute.xlu0 %2365
      %2367 = vrot.lane.b32.xlu0 %v2344, 80
      %v2368 = vpop.permute.xlu0 %2367
      %2369 = vrot.lane.b32.xlu0 %v2354, 80
      %v2370 = vpop.permute.xlu0 %2369
      %2379 = vst.msk [vmem:[#allocation4 + $0x8] sm:$0xf] %vm927, %v2356
      %2380 = vst.msk [vmem:[#allocation4 + $0x18] sm:$0xf] %vm927, %v2358
      %2381 = vst.msk [vmem:[#allocation4 + $0x28] sm:$0xf] %vm927, %v2360
      %2382 = vst.msk [vmem:[#allocation4 + $0x38] sm:$0xf] %vm927, %v2362
      %2383 = vst.msk [vmem:[#allocation4 + $0x48] sm:$0xf] %vm927, %v2364
      %2384 = vst.msk [vmem:[#allocation4 + $0x58] sm:$0xf] %vm927, %v2366
      %2385 = vst.msk [vmem:[#allocation4 + $0x68] sm:$0xf] %vm927, %v2368
      %2386 = vst.msk [vmem:[#allocation4 + $0x78] sm:$0xf] %vm927, %v2370
      %v2387 = vld [vmem:[#allocation2 + $0x10] sm:$0xe]
      %v2388 = vld [vmem:[#allocation2 + $0x14] sm:$0xf]
      %v2389 = vld [vmem:[#allocation2 + $0x18] sm:$0xf]
      %v2390 = vld [vmem:[#allocation2 + $0x1c] sm:$0xf]
      %v2391 = vld [vmem:[#allocation2 + $0x20] sm:$0xf]
      %v2392 = vld [vmem:[#allocation2 + $0x24] sm:$0xf]
      %v2393 = vld [vmem:[#allocation2 + $0x28] sm:$0xf]
      %v2394 = vld [vmem:[#allocation2 + $0x2c] sm:$0xf]
      %v2395 = vld [vmem:[#allocation2 + $0x30] sm:$0x1]
      %v2405 = vrot.slane %v2387, 5
      %v2406 = vrot.slane %v2405, 4
      %v2407 = vrot.slane %v2388, 5
      %v2408 = vsel %vm620, %v2406, %v2407
      %v2409 = vrot.slane %v2407, 4
      %v2410 = vrot.slane %v2389, 5
      %v2411 = vsel %vm620, %v2409, %v2410
      %v2412 = vrot.slane %v2410, 4
      %v2413 = vrot.slane %v2390, 5
      %v2414 = vsel %vm620, %v2412, %v2413
      %v2415 = vrot.slane %v2413, 4
      %v2416 = vrot.slane %v2391, 5
      %v2417 = vsel %vm620, %v2415, %v2416
      %v2418 = vrot.slane %v2416, 4
      %v2419 = vrot.slane %v2392, 5
      %v2420 = vsel %vm620, %v2418, %v2419
      %v2421 = vrot.slane %v2419, 4
      %v2422 = vrot.slane %v2393, 5
      %v2423 = vsel %vm620, %v2421, %v2422
      %v2424 = vrot.slane %v2422, 4
      %v2425 = vrot.slane %v2394, 5
      %v2426 = vsel %vm620, %v2424, %v2425
      %v2427 = vrot.slane %v2425, 4
      %v2428 = vrot.slane %v2395, 5
      %v2429 = vsel %vm620, %v2427, %v2428
      %2430 = vrot.lane.b32.xlu0 %v2408, 96
      %v2431 = vpop.permute.xlu0 %2430
      %2432 = vrot.lane.b32.xlu0 %v2411, 96
      %v2433 = vpop.permute.xlu0 %2432
      %2434 = vrot.lane.b32.xlu0 %v2414, 96
      %v2435 = vpop.permute.xlu0 %2434
      %2436 = vrot.lane.b32.xlu0 %v2417, 96
      %v2437 = vpop.permute.xlu0 %2436
      %2438 = vrot.lane.b32.xlu0 %v2420, 96
      %v2439 = vpop.permute.xlu0 %2438
      %2440 = vrot.lane.b32.xlu0 %v2423, 96
      %v2441 = vpop.permute.xlu0 %2440
      %2442 = vrot.lane.b32.xlu0 %v2426, 96
      %v2443 = vpop.permute.xlu0 %2442
      %2444 = vrot.lane.b32.xlu0 %v2429, 96
      %v2445 = vpop.permute.xlu0 %2444
      %2454 = vst.msk [vmem:[#allocation4 + $0x8] sm:$0xf] %vm1053, %v2431
      %2455 = vst.msk [vmem:[#allocation4 + $0x18] sm:$0xf] %vm1053, %v2433
      %2456 = vst.msk [vmem:[#allocation4 + $0x28] sm:$0xf] %vm1053, %v2435
      %2457 = vst.msk [vmem:[#allocation4 + $0x38] sm:$0xf] %vm1053, %v2437
      %2458 = vst.msk [vmem:[#allocation4 + $0x48] sm:$0xf] %vm1053, %v2439
      %2459 = vst.msk [vmem:[#allocation4 + $0x58] sm:$0xf] %vm1053, %v2441
      %2460 = vst.msk [vmem:[#allocation4 + $0x68] sm:$0xf] %vm1053, %v2443
      %2461 = vst.msk [vmem:[#allocation4 + $0x78] sm:$0xf] %vm1053, %v2445
      %v2462 = vld [vmem:[#allocation2 + $0x10] sm:$0xe]
      %v2463 = vld [vmem:[#allocation2 + $0x14] sm:$0xf]
      %v2464 = vld [vmem:[#allocation2 + $0x18] sm:$0xf]
      %v2465 = vld [vmem:[#allocation2 + $0x1c] sm:$0xf]
      %v2466 = vld [vmem:[#allocation2 + $0x20] sm:$0xf]
      %v2467 = vld [vmem:[#allocation2 + $0x24] sm:$0xf]
      %v2468 = vld [vmem:[#allocation2 + $0x28] sm:$0xf]
      %v2469 = vld [vmem:[#allocation2 + $0x2c] sm:$0xf]
      %v2470 = vld [vmem:[#allocation2 + $0x30] sm:$0x3]
      %v2472 = vshrl.u32 %v2462, 16
      %v2474 = vrot.slane %v2472, 5
      %v2475 = vshll.u32 %v2462, 16
      %v2477 = vrot.slane %v2475, 6
      %v2478 = vor.u32 %v2474, %v2477
      %v2479 = vrot.slane %v2478, 4
      %v2481 = vshrl.u32 %v2463, 16
      %v2483 = vrot.slane %v2481, 5
      %v2484 = vshll.u32 %v2463, 16
      %v2486 = vrot.slane %v2484, 6
      %v2487 = vor.u32 %v2483, %v2486
      %v2488 = vsel %vm689, %v2479, %v2487
      %v2489 = vrot.slane %v2487, 4
      %v2491 = vshrl.u32 %v2464, 16
      %v2493 = vrot.slane %v2491, 5
      %v2494 = vshll.u32 %v2464, 16
      %v2496 = vrot.slane %v2494, 6
      %v2497 = vor.u32 %v2493, %v2496
      %v2498 = vsel %vm689, %v2489, %v2497
      %v2499 = vrot.slane %v2497, 4
      %v2501 = vshrl.u32 %v2465, 16
      %v2503 = vrot.slane %v2501, 5
      %v2504 = vshll.u32 %v2465, 16
      %v2506 = vrot.slane %v2504, 6
      %v2507 = vor.u32 %v2503, %v2506
      %v2508 = vsel %vm689, %v2499, %v2507
      %v2509 = vrot.slane %v2507, 4
      %v2511 = vshrl.u32 %v2466, 16
      %v2513 = vrot.slane %v2511, 5
      %v2514 = vshll.u32 %v2466, 16
      %v2516 = vrot.slane %v2514, 6
      %v2517 = vor.u32 %v2513, %v2516
      %v2518 = vsel %vm689, %v2509, %v2517
      %v2519 = vrot.slane %v2517, 4
      %v2521 = vshrl.u32 %v2467, 16
      %v2523 = vrot.slane %v2521, 5
      %v2524 = vshll.u32 %v2467, 16
      %v2526 = vrot.slane %v2524, 6
      %v2527 = vor.u32 %v2523, %v2526
      %v2528 = vsel %vm689, %v2519, %v2527
      %v2529 = vrot.slane %v2527, 4
      %v2531 = vshrl.u32 %v2468, 16
      %v2533 = vrot.slane %v2531, 5
      %v2534 = vshll.u32 %v2468, 16
      %v2536 = vrot.slane %v2534, 6
      %v2537 = vor.u32 %v2533, %v2536
      %v2538 = vsel %vm689, %v2529, %v2537
      %v2539 = vrot.slane %v2537, 4
      %v2541 = vshrl.u32 %v2469, 16
      %v2543 = vrot.slane %v2541, 5
      %v2544 = vshll.u32 %v2469, 16
      %v2546 = vrot.slane %v2544, 6
      %v2547 = vor.u32 %v2543, %v2546
      %v2548 = vsel %vm689, %v2539, %v2547
      %v2549 = vrot.slane %v2547, 4
      %v2551 = vshrl.u32 %v2470, 16
      %v2553 = vrot.slane %v2551, 5
      %v2554 = vshll.u32 %v2470, 16
      %v2556 = vrot.slane %v2554, 6
      %v2557 = vor.u32 %v2553, %v2556
      %v2558 = vsel %vm689, %v2549, %v2557
      %2559 = vrot.lane.b32.xlu0 %v2488, 112
      %v2560 = vpop.permute.xlu0 %2559
      %2561 = vrot.lane.b32.xlu0 %v2498, 112
      %v2562 = vpop.permute.xlu0 %2561
      %2563 = vrot.lane.b32.xlu0 %v2508, 112
      %v2564 = vpop.permute.xlu0 %2563
      %2565 = vrot.lane.b32.xlu0 %v2518, 112
      %v2566 = vpop.permute.xlu0 %2565
      %2567 = vrot.lane.b32.xlu0 %v2528, 112
      %v2568 = vpop.permute.xlu0 %2567
      %2569 = vrot.lane.b32.xlu0 %v2538, 112
      %v2570 = vpop.permute.xlu0 %2569
      %2571 = vrot.lane.b32.xlu0 %v2548, 112
      %v2572 = vpop.permute.xlu0 %2571
      %2573 = vrot.lane.b32.xlu0 %v2558, 112
      %v2574 = vpop.permute.xlu0 %2573
      %2583 = vst.msk [vmem:[#allocation4 + $0x8] sm:$0xf] %vm1129, %v2560
      %2584 = vst.msk [vmem:[#allocation4 + $0x18] sm:$0xf] %vm1129, %v2562
      %2585 = vst.msk [vmem:[#allocation4 + $0x28] sm:$0xf] %vm1129, %v2564
      %2586 = vst.msk [vmem:[#allocation4 + $0x38] sm:$0xf] %vm1129, %v2566
      %2587 = vst.msk [vmem:[#allocation4 + $0x48] sm:$0xf] %vm1129, %v2568
      %2588 = vst.msk [vmem:[#allocation4 + $0x58] sm:$0xf] %vm1129, %v2570
      %2589 = vst.msk [vmem:[#allocation4 + $0x68] sm:$0xf] %vm1129, %v2572
      %2590 = vst.msk [vmem:[#allocation4 + $0x78] sm:$0xf] %vm1129, %v2574
      %v2591 = vld [vmem:[#allocation2 + $0x10] sm:$0xc]
      %v2592 = vld [vmem:[#allocation2 + $0x14] sm:$0xf]
      %v2593 = vld [vmem:[#allocation2 + $0x18] sm:$0xf]
      %v2594 = vld [vmem:[#allocation2 + $0x1c] sm:$0xf]
      %v2595 = vld [vmem:[#allocation2 + $0x20] sm:$0xf]
      %v2596 = vld [vmem:[#allocation2 + $0x24] sm:$0xf]
      %v2597 = vld [vmem:[#allocation2 + $0x28] sm:$0xf]
      %v2598 = vld [vmem:[#allocation2 + $0x2c] sm:$0xf]
      %v2599 = vld [vmem:[#allocation2 + $0x30] sm:$0x3]
      %v2609 = vrot.slane %v2591, 6
      %v2610 = vrot.slane %v2609, 4
      %v2611 = vrot.slane %v2592, 6
      %v2612 = vsel %vm385, %v2610, %v2611
      %v2613 = vrot.slane %v2611, 4
      %v2614 = vrot.slane %v2593, 6
      %v2615 = vsel %vm385, %v2613, %v2614
      %v2616 = vrot.slane %v2614, 4
      %v2617 = vrot.slane %v2594, 6
      %v2618 = vsel %vm385, %v2616, %v2617
      %v2619 = vrot.slane %v2617, 4
      %v2620 = vrot.slane %v2595, 6
      %v2621 = vsel %vm385, %v2619, %v2620
      %v2622 = vrot.slane %v2620, 4
      %v2623 = vrot.slane %v2596, 6
      %v2624 = vsel %vm385, %v2622, %v2623
      %v2625 = vrot.slane %v2623, 4
      %v2626 = vrot.slane %v2597, 6
      %v2627 = vsel %vm385, %v2625, %v2626
      %v2628 = vrot.slane %v2626, 4
      %v2629 = vrot.slane %v2598, 6
      %v2630 = vsel %vm385, %v2628, %v2629
      %v2631 = vrot.slane %v2629, 4
      %v2632 = vrot.slane %v2599, 6
      %v2633 = vsel %vm385, %v2631, %v2632
      %2642 = vst.msk [vmem:[#allocation4 + $0xc] sm:$0xf] %vm341, %v2612
      %2643 = vst.msk [vmem:[#allocation4 + $0x1c] sm:$0xf] %vm341, %v2615
      %2644 = vst.msk [vmem:[#allocation4 + $0x2c] sm:$0xf] %vm341, %v2618
      %2645 = vst.msk [vmem:[#allocation4 + $0x3c] sm:$0xf] %vm341, %v2621
      %2646 = vst.msk [vmem:[#allocation4 + $0x4c] sm:$0xf] %vm341, %v2624
      %2647 = vst.msk [vmem:[#allocation4 + $0x5c] sm:$0xf] %vm341, %v2627
      %2648 = vst.msk [vmem:[#allocation4 + $0x6c] sm:$0xf] %vm341, %v2630
      %2649 = vst.msk [vmem:[#allocation4 + $0x7c] sm:$0xf] %vm341, %v2633
      %v2650 = vld [vmem:[#allocation4] sm:$0xff]
      %v2651 = vld [vmem:[#allocation4 + $0x8] sm:$0xff]
      %v2652 = vld [vmem:[#allocation4 + $0x10] sm:$0xff]
      %v2653 = vld [vmem:[#allocation4 + $0x18] sm:$0xff]
      %v2654 = vld [vmem:[#allocation4 + $0x20] sm:$0xff]
      %v2655 = vld [vmem:[#allocation4 + $0x28] sm:$0xff]
      %v2656 = vld [vmem:[#allocation4 + $0x30] sm:$0xff]
      %v2657 = vld [vmem:[#allocation4 + $0x38] sm:$0xff]
      %v2658 = vld [vmem:[#allocation4 + $0x40] sm:$0xff]
      %v2659 = vld [vmem:[#allocation4 + $0x48] sm:$0xff]
      %v2660 = vld [vmem:[#allocation4 + $0x50] sm:$0xff]
      %v2661 = vld [vmem:[#allocation4 + $0x58] sm:$0xff]
      %v2662 = vld [vmem:[#allocation4 + $0x60] sm:$0xff]
      %v2663 = vld [vmem:[#allocation4 + $0x68] sm:$0xff]
      %v2664 = vld [vmem:[#allocation4 + $0x70] sm:$0xff]
      %v2665 = vld [vmem:[#allocation4 + $0x78] sm:$0xff]
      %v2666 = vld [vmem:[%s2] sm:$0xf]
      %v2667 = vld [vmem:[%s2 + $0x4] sm:$0xf]
      %v2668 = vld [vmem:[%s2 + $0x8] sm:$0xf]
      %v2669 = vld [vmem:[%s2 + $0xc] sm:$0xf]
      %v2670 = vld [vmem:[%s2 + $0x10] sm:$0xf]
      %v2671 = vld [vmem:[%s2 + $0x14] sm:$0xf]
      %v2672 = vld [vmem:[%s2 + $0x18] sm:$0xf]
      %v2673 = vld [vmem:[%s2 + $0x1c] sm:$0xf]
      %v2674 = vld [vmem:[%s2 + $0x20] sm:$0xf]
      %v2675 = vld [vmem:[%s2 + $0x24] sm:$0xf]
      %v2676 = vld [vmem:[%s2 + $0x28] sm:$0xf]
      %v2677 = vld [vmem:[%s2 + $0x2c] sm:$0xf]
      %v2678 = vld [vmem:[%s2 + $0x30] sm:$0xf]
      %v2679 = vld [vmem:[%s2 + $0x34] sm:$0xf]
      %v2680 = vld [vmem:[%s2 + $0x38] sm:$0xf]
      %v2681 = vld [vmem:[%s2 + $0x3c] sm:$0xf]
      %v2682 = vld [vmem:[%s2 + $0x40] sm:$0xf]
      %v2683 = vld [vmem:[%s2 + $0x44] sm:$0xf]
      %v2684 = vld [vmem:[%s2 + $0x48] sm:$0xf]
      %v2685 = vld [vmem:[%s2 + $0x4c] sm:$0xf]
      %v2686 = vld [vmem:[%s2 + $0x50] sm:$0xf]
      %v2687 = vld [vmem:[%s2 + $0x54] sm:$0xf]
      %v2688 = vld [vmem:[%s2 + $0x58] sm:$0xf]
      %v2689 = vld [vmem:[%s2 + $0x5c] sm:$0xf]
      %v2690 = vld [vmem:[%s2 + $0x60] sm:$0xf]
      %v2691 = vld [vmem:[%s2 + $0x64] sm:$0xf]
      %v2692 = vld [vmem:[%s2 + $0x68] sm:$0xf]
      %v2693 = vld [vmem:[%s2 + $0x6c] sm:$0xf]
      %v2694 = vld [vmem:[%s2 + $0x70] sm:$0xf]
      %v2695 = vld [vmem:[%s2 + $0x74] sm:$0xf]
      %v2696 = vld [vmem:[%s2 + $0x78] sm:$0xf]
      %v2697 = vld [vmem:[%s2 + $0x7c] sm:$0xf]
      %v2698 = vld [vmem:[%s2 + $0x80] sm:$0xf]
      %v2699 = vld [vmem:[%s2 + $0x84] sm:$0xf]
      %v2700 = vld [vmem:[%s2 + $0x88] sm:$0xf]
      %v2701 = vld [vmem:[%s2 + $0x8c] sm:$0xf]
      %v2702 = vld [vmem:[%s2 + $0x90] sm:$0xf]
      %v2703 = vld [vmem:[%s2 + $0x94] sm:$0xf]
      %v2704 = vld [vmem:[%s2 + $0x98] sm:$0xf]
      %v2705 = vld [vmem:[%s2 + $0x9c] sm:$0xf]
      %v2706 = vld [vmem:[%s2 + $0xa0] sm:$0xf]
      %v2707 = vld [vmem:[%s2 + $0xa4] sm:$0xf]
      %v2708 = vld [vmem:[%s2 + $0xa8] sm:$0xf]
      %v2709 = vld [vmem:[%s2 + $0xac] sm:$0xf]
      %v2710 = vld [vmem:[%s2 + $0xb0] sm:$0xf]
      %v2711 = vld [vmem:[%s2 + $0xb4] sm:$0xf]
      %v2712 = vld [vmem:[%s2 + $0xb8] sm:$0xf]
      %v2713 = vld [vmem:[%s2 + $0xbc] sm:$0xf]
      %v2714 = vld [vmem:[%s2 + $0xc0] sm:$0xf]
      %v2715 = vld [vmem:[%s2 + $0xc4] sm:$0xf]
      %v2716 = vld [vmem:[%s3] sm:$0x1]
      %v2718 = vlaneseq
      %v2719 = vshrl.u32 %v2718, 7
      %v2720 = vsub.s32 0, %v2719
      %v2721 = vrot.slane %v2716, %v2720
      %v2739 = vunpack.c.l.b16 %v2650
      %v2740 = vunpack.c.h.b16 %v2650
      %v2741 = vunpack.c.l.b16 %v2651
      %v2742 = vunpack.c.h.b16 %v2651
      %v2743 = vunpack.c.l.b16 %v2652
      %v2744 = vunpack.c.h.b16 %v2652
      %v2745 = vunpack.c.l.b16 %v2653
      %v2746 = vunpack.c.h.b16 %v2653
      %v2747 = vunpack.c.l.b16 %v2654
      %v2748 = vunpack.c.h.b16 %v2654
      %v2749 = vunpack.c.l.b16 %v2655
      %v2750 = vunpack.c.h.b16 %v2655
      %v2751 = vunpack.c.l.b16 %v2656
      %v2752 = vunpack.c.h.b16 %v2656
      %v2753 = vunpack.c.l.b16 %v2657
      %v2754 = vunpack.c.h.b16 %v2657
      %v2755 = vunpack.c.l.b16 %v2658
      %v2756 = vunpack.c.h.b16 %v2658
      %v2757 = vunpack.c.l.b16 %v2659
      %v2758 = vunpack.c.h.b16 %v2659
      %v2759 = vunpack.c.l.b16 %v2660
      %v2760 = vunpack.c.h.b16 %v2660
      %v2761 = vunpack.c.l.b16 %v2661
      %v2762 = vunpack.c.h.b16 %v2661
      %v2763 = vunpack.c.l.b16 %v2662
      %v2764 = vunpack.c.h.b16 %v2662
      %v2765 = vunpack.c.l.b16 %v2663
      %v2766 = vunpack.c.h.b16 %v2663
      %v2767 = vunpack.c.l.b16 %v2664
      %v2768 = vunpack.c.h.b16 %v2664
      %v2769 = vunpack.c.l.b16 %v2665
      %v2770 = vunpack.c.h.b16 %v2665
      %v2771 = vpack.c.b16 %v2743, %v2739
      %v2772 = vpack.c.b16 %v2744, %v2740
      %v2773 = vpack.c.b16 %v2745, %v2741
      %v2774 = vpack.c.b16 %v2746, %v2742
      %v2775 = vpack.c.b16 %v2751, %v2747
      %v2776 = vpack.c.b16 %v2752, %v2748
      %v2777 = vpack.c.b16 %v2753, %v2749
      %v2778 = vpack.c.b16 %v2754, %v2750
      %v2779 = vpack.c.b16 %v2759, %v2755
      %v2780 = vpack.c.b16 %v2760, %v2756
      %v2781 = vpack.c.b16 %v2761, %v2757
      %v2782 = vpack.c.b16 %v2762, %v2758
      %v2783 = vpack.c.b16 %v2767, %v2763
      %v2784 = vpack.c.b16 %v2768, %v2764
      %v2785 = vpack.c.b16 %v2769, %v2765
      %v2786 = vpack.c.b16 %v2770, %v2766
      %v2849 = vunpack.c.l.b16 %v2666
      %v2850 = vunpack.c.l.b16 %v2667
      %v2851 = vunpack.c.l.b16 %v2668
      %v2852 = vunpack.c.l.b16 %v2669
      %v2853 = vunpack.c.l.b16 %v2670
      %v2854 = vunpack.c.l.b16 %v2671
      %v2855 = vunpack.c.l.b16 %v2672
      %v2856 = vunpack.c.l.b16 %v2673
      %v2857 = vunpack.c.l.b16 %v2674
      %v2858 = vunpack.c.l.b16 %v2675
      %v2859 = vunpack.c.l.b16 %v2676
      %v2860 = vunpack.c.l.b16 %v2677
      %v2861 = vunpack.c.l.b16 %v2678
      %v2862 = vunpack.c.l.b16 %v2679
      %v2863 = vunpack.c.l.b16 %v2680
      %v2864 = vunpack.c.l.b16 %v2681
      %v2865 = vunpack.c.l.b16 %v2682
      %v2866 = vunpack.c.l.b16 %v2683
      %v2867 = vunpack.c.l.b16 %v2684
      %v2868 = vunpack.c.l.b16 %v2685
      %v2869 = vunpack.c.l.b16 %v2686
      %v2870 = vunpack.c.l.b16 %v2687
      %v2871 = vunpack.c.l.b16 %v2688
      %v2872 = vunpack.c.l.b16 %v2689
      %v2873 = vunpack.c.l.b16 %v2690
      %v2874 = vunpack.c.l.b16 %v2691
      %v2875 = vunpack.c.l.b16 %v2692
      %v2876 = vunpack.c.l.b16 %v2693
      %v2877 = vunpack.c.l.b16 %v2694
      %v2878 = vunpack.c.l.b16 %v2695
      %v2879 = vunpack.c.l.b16 %v2696
      %v2880 = vunpack.c.l.b16 %v2697
      %v2881 = vunpack.c.l.b16 %v2698
      %v2882 = vunpack.c.l.b16 %v2699
      %v2883 = vunpack.c.l.b16 %v2700
      %v2884 = vunpack.c.l.b16 %v2701
      %v2885 = vunpack.c.l.b16 %v2702
      %v2886 = vunpack.c.l.b16 %v2703
      %v2887 = vunpack.c.l.b16 %v2704
      %v2888 = vunpack.c.l.b16 %v2705
      %v2889 = vunpack.c.l.b16 %v2706
      %v2890 = vunpack.c.l.b16 %v2707
      %v2891 = vunpack.c.l.b16 %v2708
      %v2892 = vunpack.c.l.b16 %v2709
      %v2893 = vunpack.c.l.b16 %v2710
      %v2894 = vunpack.c.l.b16 %v2711
      %v2895 = vunpack.c.l.b16 %v2712
      %v2896 = vunpack.c.l.b16 %v2713
      %v2897 = vunpack.c.l.b16 %v2714
      %v2898 = vunpack.c.l.b16 %v2715
      %v2899 = vpack.c.b16 %v2850, %v2849
      %v2900 = vpack.c.b16 %v2852, %v2851
      %v2901 = vpack.c.b16 %v2854, %v2853
      %v2902 = vpack.c.b16 %v2856, %v2855
      %v2903 = vpack.c.b16 %v2858, %v2857
      %v2904 = vpack.c.b16 %v2860, %v2859
      %v2905 = vpack.c.b16 %v2862, %v2861
      %v2906 = vpack.c.b16 %v2864, %v2863
      %v2907 = vpack.c.b16 %v2866, %v2865
      %v2908 = vpack.c.b16 %v2868, %v2867
      %v2909 = vpack.c.b16 %v2870, %v2869
      %v2910 = vpack.c.b16 %v2872, %v2871
      %v2911 = vpack.c.b16 %v2874, %v2873
      %v2912 = vpack.c.b16 %v2876, %v2875
      %v2913 = vpack.c.b16 %v2878, %v2877
      %v2914 = vpack.c.b16 %v2880, %v2879
      %v2915 = vpack.c.b16 %v2882, %v2881
      %v2916 = vpack.c.b16 %v2884, %v2883
      %v2917 = vpack.c.b16 %v2886, %v2885
      %v2918 = vpack.c.b16 %v2888, %v2887
      %v2919 = vpack.c.b16 %v2890, %v2889
      %v2920 = vpack.c.b16 %v2892, %v2891
      %v2921 = vpack.c.b16 %v2894, %v2893
      %v2922 = vpack.c.b16 %v2896, %v2895
      %v2923 = vpack.c.b16 %v2898, %v2897
      %vm2949 = vcmask 130048
      %v2951 = vsel %vm2949, %v2774, 0
      %v2954 = vsel %vm2949, %v2778, 0
      %v2957 = vsel %vm2949, %v2782, 0
      %v2960 = vsel %vm2949, %v2786, 0
      %2962 = vmatprep.subr.bf16.mxu0 0
      %2963 = vmatpush1.bf16.msra.mxu0 %v2906
      %2964 = vmatprep.subr.bf16.mxu0 0
      %2965 = vmatpush1.bf16.msra.mxu0 %v2905
      %2966 = vmatprep.subr.bf16.mxu0 0
      %2967 = vmatpush1.bf16.msra.mxu0 %v2904
      %2968 = vmatprep.subr.bf16.mxu0 0
      %2969 = vmatpush1.bf16.msra.mxu0 %v2903
      %2970 = vmatprep.subr.bf16.mxu0 0
      %2971 = vmatpush1.bf16.msra.mxu0 %v2902
      %2972 = vmatprep.subr.bf16.mxu0 0
      %2973 = vmatpush1.bf16.msra.mxu0 %v2901
      %2974 = vmatprep.subr.bf16.mxu0 0
      %2975 = vmatpush1.bf16.msra.mxu0 %v2900
      %2976 = vmatprep.subr.bf16.mxu0 0
      %2977 = vmatpush1.bf16.msra.mxu0 %v2899
      %2978 = vmatprep.subr.bf16.mxu0 0
      %2979 = vmatpush2.bf16.msra.mxu0 %v2914
      %2980 = vmatprep.subr.bf16.mxu0 0
      %2981 = vmatpush2.bf16.msra.mxu0 %v2913
      %2982 = vmatprep.subr.bf16.mxu0 0
      %2983 = vmatpush2.bf16.msra.mxu0 %v2912
      %2984 = vmatprep.subr.bf16.mxu0 0
      %2985 = vmatpush2.bf16.msra.mxu0 %v2911
      %2986 = vmatprep.subr.bf16.mxu0 0
      %2987 = vmatpush2.bf16.msra.mxu0 %v2910
      %2988 = vmatprep.subr.bf16.mxu0 0
      %2989 = vmatpush2.bf16.msra.mxu0 %v2909
      %2990 = vmatprep.subr.bf16.mxu0 0
      %2991 = vmatpush2.bf16.msra.mxu0 %v2908
      %2992 = vmatprep.subr.bf16.mxu0 0
      %2993 = vmatpush2.bf16.msra.mxu0 %v2907
      %2994 = vmatprep.mubr.bf16.mxu0 %v2772
      %2995 = vmatmul.mubr.bf16.gmra.mxu0 %v2771
      %v2996 = vpop.f32.mrf.mxu0
      %v2997 = vadd.f32 %v2721, %v2996
      %v2998 = vpop.f32.mrf.mxu0
      %v2999 = vpop.f32.mrf.mxu0
      %v3000 = vadd.f32 %v2721, %v2999
      %v3001 = vpop.f32.mrf.mxu0
      %3002 = vmatprep.mubr.bf16.mxu0 %v2776
      %3003 = vmatmul.mubr.bf16.gmra.mxu0 %v2775
      %v3004 = vpop.f32.mrf.mxu0
      %v3005 = vadd.f32 %v2721, %v3004
      %v3006 = vpop.f32.mrf.mxu0
      %v3007 = vpop.f32.mrf.mxu0
      %v3008 = vadd.f32 %v2721, %v3007
      %v3009 = vpop.f32.mrf.mxu0
      %3010 = vmatprep.mubr.bf16.mxu0 %v2780
      %3011 = vmatmul.mubr.bf16.gmra.mxu0 %v2779
      %v3012 = vpop.f32.mrf.mxu0
      %v3013 = vadd.f32 %v2721, %v3012
      %v3014 = vpop.f32.mrf.mxu0
      %v3015 = vpop.f32.mrf.mxu0
      %v3016 = vadd.f32 %v2721, %v3015
      %v3017 = vpop.f32.mrf.mxu0
      %3018 = vmatprep.mubr.bf16.mxu0 %v2784
      %3019 = vmatmul.mubr.bf16.gmra.mxu0 %v2783
      %v3020 = vpop.f32.mrf.mxu0
      %v3021 = vadd.f32 %v2721, %v3020
      %v3022 = vpop.f32.mrf.mxu0
      %v3023 = vpop.f32.mrf.mxu0
      %v3024 = vadd.f32 %v2721, %v3023
      %v3025 = vpop.f32.mrf.mxu0
      %3026 = vdwg.mxu0
      %3027 = vmatprep.subr.bf16.mxu0 0
      %3028 = vmatpush1.bf16.msra.mxu0 %v2922
      %3029 = vmatprep.subr.bf16.mxu0 0
      %3030 = vmatpush1.bf16.msra.mxu0 %v2921
      %3031 = vmatprep.subr.bf16.mxu0 0
      %3032 = vmatpush1.bf16.msra.mxu0 %v2920
      %3033 = vmatprep.subr.bf16.mxu0 0
      %3034 = vmatpush1.bf16.msra.mxu0 %v2919
      %3035 = vmatprep.subr.bf16.mxu0 0
      %3036 = vmatpush1.bf16.msra.mxu0 %v2918
      %3037 = vmatprep.subr.bf16.mxu0 0
      %3038 = vmatpush1.bf16.msra.mxu0 %v2917
      %3039 = vmatprep.subr.bf16.mxu0 0
      %3040 = vmatpush1.bf16.msra.mxu0 %v2916
      %3041 = vmatprep.subr.bf16.mxu0 0
      %3042 = vmatpush1.bf16.msra.mxu0 %v2915
      %3043 = vmatprep.subr.bf16.mxu0 0
      %3044 = vmatpush2.bf16.msra.mxu0 0
      %3045 = vmatprep.subr.bf16.mxu0 0
      %3046 = vmatpush2.bf16.msra.mxu0 0
      %3047 = vmatprep.subr.bf16.mxu0 0
      %3048 = vmatpush2.bf16.msra.mxu0 0
      %3049 = vmatprep.subr.bf16.mxu0 0
      %3050 = vmatpush2.bf16.msra.mxu0 0
      %3051 = vmatprep.subr.bf16.mxu0 0
      %3052 = vmatpush2.bf16.msra.mxu0 0
      %3053 = vmatprep.subr.bf16.mxu0 0
      %3054 = vmatpush2.bf16.msra.mxu0 0
      %3055 = vmatprep.subr.bf16.mxu0 0
      %3056 = vmatpush2.bf16.msra.mxu0 0
      %3057 = vmatprep.subr.bf16.mxu0 0
      %3058 = vmatpush2.bf16.msra.mxu0 %v2923
      %3059 = vmatprep.mubr.bf16.mxu0 %v2951
      %3060 = vmatmul.mubr.bf16.gmra.mxu0 %v2773
      %v3061 = vpop.f32.mrf.mxu0
      %v3062 = vadd.f32 %v2997, %v3061
      %v3063 = vpop.f32.mrf.mxu0
      %v3064 = vpop.f32.mrf.mxu0
      %v3065 = vadd.f32 %v3000, %v3064
      %v3066 = vpop.f32.mrf.mxu0
      %3067 = vmatprep.mubr.bf16.mxu0 %v2954
      %3068 = vmatmul.mubr.bf16.gmra.mxu0 %v2777
      %v3069 = vpop.f32.mrf.mxu0
      %v3070 = vadd.f32 %v3005, %v3069
      %v3071 = vpop.f32.mrf.mxu0
      %v3072 = vpop.f32.mrf.mxu0
      %v3073 = vadd.f32 %v3008, %v3072
      %v3074 = vpop.f32.mrf.mxu0
      %3075 = vmatprep.mubr.bf16.mxu0 %v2957
      %3076 = vmatmul.mubr.bf16.gmra.mxu0 %v2781
      %v3077 = vpop.f32.mrf.mxu0
      %v3078 = vadd.f32 %v3013, %v3077
      %v3079 = vpop.f32.mrf.mxu0
      %v3080 = vpop.f32.mrf.mxu0
      %v3081 = vadd.f32 %v3016, %v3080
      %v3082 = vpop.f32.mrf.mxu0
      %3083 = vmatprep.mubr.bf16.mxu0 %v2960
      %3084 = vmatmul.mubr.bf16.gmra.mxu0 %v2785
      %v3085 = vpop.f32.mrf.mxu0
      %v3086 = vadd.f32 %v3021, %v3085
      %v3087 = vpop.f32.mrf.mxu0
      %v3088 = vpop.f32.mrf.mxu0
      %v3089 = vadd.f32 %v3024, %v3088
      %v3090 = vpop.f32.mrf.mxu0
      %3091 = vdwg.mxu0
      %v3092 = vmul.f32 %v3062, 0.70710677
      %v3093 = vmul.f32 %v3065, 0.70710677
      %v3094 = vmul.f32 %v3070, 0.70710677
      %v3095 = vmul.f32 %v3073, 0.70710677
      %v3096 = vmul.f32 %v3078, 0.70710677
      %v3097 = vmul.f32 %v3081, 0.70710677
      %v3098 = vmul.f32 %v3086, 0.70710677
      %v3099 = vmul.f32 %v3089, 0.70710677
      %v3100 = vand.u32 2147483647, %v3092
      %v3101 = vand.u32 2147483647, %v3093
      %v3102 = vand.u32 2147483647, %v3094
      %v3103 = vand.u32 2147483647, %v3095
      %v3104 = vand.u32 2147483647, %v3096
      %v3105 = vand.u32 2147483647, %v3097
      %v3106 = vand.u32 2147483647, %v3098
      %v3107 = vand.u32 2147483647, %v3099
      %v3108 = vmul.f32 %v3100, 0.3275911
      %v3109 = vmul.f32 %v3101, 0.3275911
      %v3110 = vmul.f32 %v3102, 0.3275911
      %v3111 = vmul.f32 %v3103, 0.3275911
      %v3112 = vmul.f32 %v3104, 0.3275911
      %v3113 = vmul.f32 %v3105, 0.3275911
      %v3114 = vmul.f32 %v3106, 0.3275911
      %v3115 = vmul.f32 %v3107, 0.3275911
      %v3116 = vadd.f32 %v3108, 1.0
      %v3117 = vadd.f32 %v3109, 1.0
      %v3118 = vadd.f32 %v3110, 1.0
      %v3119 = vadd.f32 %v3111, 1.0
      %v3120 = vadd.f32 %v3112, 1.0
      %v3121 = vadd.f32 %v3113, 1.0
      %v3122 = vadd.f32 %v3114, 1.0
      %v3123 = vadd.f32 %v3115, 1.0
      %v3124 = vrcp.pop %v3116
      %v3125 = vrcp.pop %v3117
      %v3126 = vrcp.pop %v3118
      %v3127 = vrcp.pop %v3119
      %v3128 = vrcp.pop %v3120
      %v3129 = vrcp.pop %v3121
      %v3130 = vrcp.pop %v3122
      %v3131 = vrcp.pop %v3123
      %v3132 = vmul.f32 %v3124, 1.0614054
      %v3133 = vmul.f32 %v3125, 1.0614054
      %v3134 = vmul.f32 %v3126, 1.0614054
      %v3135 = vmul.f32 %v3127, 1.0614054
      %v3136 = vmul.f32 %v3128, 1.0614054
      %v3137 = vmul.f32 %v3129, 1.0614054
      %v3138 = vmul.f32 %v3130, 1.0614054
      %v3139 = vmul.f32 %v3131, 1.0614054
      %v3140 = vadd.f32 %v3132, -1.4531521
      %v3141 = vadd.f32 %v3133, -1.4531521
      %v3142 = vadd.f32 %v3134, -1.4531521
      %v3143 = vadd.f32 %v3135, -1.4531521
      %v3144 = vadd.f32 %v3136, -1.4531521
      %v3145 = vadd.f32 %v3137, -1.4531521
      %v3146 = vadd.f32 %v3138, -1.4531521
      %v3147 = vadd.f32 %v3139, -1.4531521
      %v3148 = vmul.f32 %v3124, %v3140
      %v3149 = vmul.f32 %v3125, %v3141
      %v3150 = vmul.f32 %v3126, %v3142
      %v3151 = vmul.f32 %v3127, %v3143
      %v3152 = vmul.f32 %v3128, %v3144
      %v3153 = vmul.f32 %v3129, %v3145
      %v3154 = vmul.f32 %v3130, %v3146
      %v3155 = vmul.f32 %v3131, %v3147
      %v3156 = vadd.f32 %v3148, 1.4214138
      %v3157 = vadd.f32 %v3149, 1.4214138
      %v3158 = vadd.f32 %v3150, 1.4214138
      %v3159 = vadd.f32 %v3151, 1.4214138
      %v3160 = vadd.f32 %v3152, 1.4214138
      %v3161 = vadd.f32 %v3153, 1.4214138
      %v3162 = vadd.f32 %v3154, 1.4214138
      %v3163 = vadd.f32 %v3155, 1.4214138
      %v3164 = vmul.f32 %v3124, %v3156
      %v3165 = vmul.f32 %v3125, %v3157
      %v3166 = vmul.f32 %v3126, %v3158
      %v3167 = vmul.f32 %v3127, %v3159
      %v3168 = vmul.f32 %v3128, %v3160
      %v3169 = vmul.f32 %v3129, %v3161
      %v3170 = vmul.f32 %v3130, %v3162
      %v3171 = vmul.f32 %v3131, %v3163
      %v3172 = vadd.f32 %v3164, -0.28449672
      %v3173 = vadd.f32 %v3165, -0.28449672
      %v3174 = vadd.f32 %v3166, -0.28449672
      %v3175 = vadd.f32 %v3167, -0.28449672
      %v3176 = vadd.f32 %v3168, -0.28449672
      %v3177 = vadd.f32 %v3169, -0.28449672
      %v3178 = vadd.f32 %v3170, -0.28449672
      %v3179 = vadd.f32 %v3171, -0.28449672
      %v3180 = vmul.f32 %v3124, %v3172
      %v3181 = vmul.f32 %v3125, %v3173
      %v3182 = vmul.f32 %v3126, %v3174
      %v3183 = vmul.f32 %v3127, %v3175
      %v3184 = vmul.f32 %v3128, %v3176
      %v3185 = vmul.f32 %v3129, %v3177
      %v3186 = vmul.f32 %v3130, %v3178
      %v3187 = vmul.f32 %v3131, %v3179
      %v3188 = vadd.f32 %v3180, 0.2548296
      %v3189 = vadd.f32 %v3181, 0.2548296
      %v3190 = vadd.f32 %v3182, 0.2548296
      %v3191 = vadd.f32 %v3183, 0.2548296
      %v3192 = vadd.f32 %v3184, 0.2548296
      %v3193 = vadd.f32 %v3185, 0.2548296
      %v3194 = vadd.f32 %v3186, 0.2548296
      %v3195 = vadd.f32 %v3187, 0.2548296
      %v3196 = vmul.f32 %v3124, %v3188
      %v3197 = vmul.f32 %v3125, %v3189
      %v3198 = vmul.f32 %v3126, %v3190
      %v3199 = vmul.f32 %v3127, %v3191
      %v3200 = vmul.f32 %v3128, %v3192
      %v3201 = vmul.f32 %v3129, %v3193
      %v3202 = vmul.f32 %v3130, %v3194
      %v3203 = vmul.f32 %v3131, %v3195
      %v3204 = vsub.f32 0.0, %v3100
      %v3205 = vsub.f32 0.0, %v3101
      %v3206 = vsub.f32 0.0, %v3102
      %v3207 = vsub.f32 0.0, %v3103
      %v3208 = vsub.f32 0.0, %v3104
      %v3209 = vsub.f32 0.0, %v3105
      %v3210 = vsub.f32 0.0, %v3106
      %v3211 = vsub.f32 0.0, %v3107
      %v3212 = vmul.f32 %v3204, %v3100
      %v3213 = vmul.f32 %v3205, %v3101
      %v3214 = vmul.f32 %v3206, %v3102
      %v3215 = vmul.f32 %v3207, %v3103
      %v3216 = vmul.f32 %v3208, %v3104
      %v3217 = vmul.f32 %v3209, %v3105
      %v3218 = vmul.f32 %v3210, %v3106
      %v3219 = vmul.f32 %v3211, %v3107
      %v3220 = vmul.f32 %v3212, 1.442695
      %v3221 = vpow.pop %v3220
      %v3222 = vmul.f32 %v3213, 1.442695
      %v3223 = vpow.pop %v3222
      %v3224 = vmul.f32 %v3214, 1.442695
      %v3225 = vpow.pop %v3224
      %v3226 = vmul.f32 %v3215, 1.442695
      %v3227 = vpow.pop %v3226
      %v3228 = vmul.f32 %v3216, 1.442695
      %v3229 = vpow.pop %v3228
      %v3230 = vmul.f32 %v3217, 1.442695
      %v3231 = vpow.pop %v3230
      %v3232 = vmul.f32 %v3218, 1.442695
      %v3233 = vpow.pop %v3232
      %v3234 = vmul.f32 %v3219, 1.442695
      %v3235 = vpow.pop %v3234
      %v3236 = vmul.f32 %v3196, %v3221
      %v3237 = vmul.f32 %v3197, %v3223
      %v3238 = vmul.f32 %v3198, %v3225
      %v3239 = vmul.f32 %v3199, %v3227
      %v3240 = vmul.f32 %v3200, %v3229
      %v3241 = vmul.f32 %v3201, %v3231
      %v3242 = vmul.f32 %v3202, %v3233
      %v3243 = vmul.f32 %v3203, %v3235
      %v3244 = vsub.f32 1.0, %v3236
      %v3245 = vsub.f32 1.0, %v3237
      %v3246 = vsub.f32 1.0, %v3238
      %v3247 = vsub.f32 1.0, %v3239
      %v3248 = vsub.f32 1.0, %v3240
      %v3249 = vsub.f32 1.0, %v3241
      %v3250 = vsub.f32 1.0, %v3242
      %v3251 = vsub.f32 1.0, %v3243
      %vm3252 = vcmp.ge.f32.partialorder %v3092, 0.0
      %vm3253 = vcmp.ge.f32.partialorder %v3093, 0.0
      %vm3254 = vcmp.ge.f32.partialorder %v3094, 0.0
      %vm3255 = vcmp.ge.f32.partialorder %v3095, 0.0
      %vm3256 = vcmp.ge.f32.partialorder %v3096, 0.0
      %vm3257 = vcmp.ge.f32.partialorder %v3097, 0.0
      %vm3258 = vcmp.ge.f32.partialorder %v3098, 0.0
      %vm3259 = vcmp.ge.f32.partialorder %v3099, 0.0
      %v3260 = vsub.f32 0.0, %v3244
      %v3261 = vsub.f32 0.0, %v3245
      %v3262 = vsub.f32 0.0, %v3246
      %v3263 = vsub.f32 0.0, %v3247
      %v3264 = vsub.f32 0.0, %v3248
      %v3265 = vsub.f32 0.0, %v3249
      %v3266 = vsub.f32 0.0, %v3250
      %v3267 = vsub.f32 0.0, %v3251
      %v3268 = vsel %vm3252, %v3244, %v3260
      %v3269 = vsel %vm3253, %v3245, %v3261
      %v3270 = vsel %vm3254, %v3246, %v3262
      %v3271 = vsel %vm3255, %v3247, %v3263
      %v3272 = vsel %vm3256, %v3248, %v3264
      %v3273 = vsel %vm3257, %v3249, %v3265
      %v3274 = vsel %vm3258, %v3250, %v3266
      %v3275 = vsel %vm3259, %v3251, %v3267
      %v3276 = vmul.f32 %v3062, 0.5
      %v3277 = vmul.f32 %v3065, 0.5
      %v3278 = vmul.f32 %v3070, 0.5
      %v3279 = vmul.f32 %v3073, 0.5
      %v3280 = vmul.f32 %v3078, 0.5
      %v3281 = vmul.f32 %v3081, 0.5
      %v3282 = vmul.f32 %v3086, 0.5
      %v3283 = vmul.f32 %v3089, 0.5
      %v3284 = vadd.f32 %v3268, 1.0
      %v3285 = vadd.f32 %v3269, 1.0
      %v3286 = vadd.f32 %v3270, 1.0
      %v3287 = vadd.f32 %v3271, 1.0
      %v3288 = vadd.f32 %v3272, 1.0
      %v3289 = vadd.f32 %v3273, 1.0
      %v3290 = vadd.f32 %v3274, 1.0
      %v3291 = vadd.f32 %v3275, 1.0
      %v3292 = vmul.f32 %v3276, %v3284
      %v3293 = vmul.f32 %v3277, %v3285
      %v3294 = vmul.f32 %v3278, %v3286
      %v3295 = vmul.f32 %v3279, %v3287
      %v3296 = vmul.f32 %v3280, %v3288
      %v3297 = vmul.f32 %v3281, %v3289
      %v3298 = vmul.f32 %v3282, %v3290
      %v3299 = vmul.f32 %v3283, %v3291
      %v3300 = vld [vmem:[%s7] sm:$0xff]
      %v3301 = vld [vmem:[%s7 + $0x8] sm:$0xff]
      %v3302 = vld [vmem:[%s7 + $0x10] sm:$0xff]
      %v3303 = vld [vmem:[%s7 + $0x18] sm:$0xff]
      %v3304 = vld [vmem:[%s7 + $0x20] sm:$0xff]
      %v3305 = vld [vmem:[%s7 + $0x28] sm:$0xff]
      %v3306 = vld [vmem:[%s7 + $0x30] sm:$0xff]
      %v3307 = vld [vmem:[%s7 + $0x38] sm:$0xff]
      %3309 = vset.pattern.permute.xlu0 0
      %3310 = vperm.xlu0 %3309, %v3300
      %v3311 = vpop.permute.xlu0 %3310
      %3314 = vset.pattern.permute.xlu0 0
      %3315 = vperm.xlu0 %3314, %v3301
      %v3316 = vpop.permute.xlu0 %3315
      %3319 = vset.pattern.permute.xlu0 0
      %3320 = vperm.xlu0 %3319, %v3302
      %v3321 = vpop.permute.xlu0 %3320
      %3324 = vset.pattern.permute.xlu0 0
      %3325 = vperm.xlu0 %3324, %v3303
      %v3326 = vpop.permute.xlu0 %3325
      %3329 = vset.pattern.permute.xlu0 0
      %3330 = vperm.xlu0 %3329, %v3304
      %v3331 = vpop.permute.xlu0 %3330
      %3334 = vset.pattern.permute.xlu0 0
      %3335 = vperm.xlu0 %3334, %v3305
      %v3336 = vpop.permute.xlu0 %3335
      %3339 = vset.pattern.permute.xlu0 0
      %3340 = vperm.xlu0 %3339, %v3306
      %v3341 = vpop.permute.xlu0 %3340
      %3344 = vset.pattern.permute.xlu0 0
      %3345 = vperm.xlu0 %3344, %v3307
      %v3346 = vpop.permute.xlu0 %3345
      %v3348 = vmul.f32 %v3292, %v3311
      %v3349 = vmul.f32 %v3293, %v3316
      %v3350 = vmul.f32 %v3294, %v3321
      %v3351 = vmul.f32 %v3295, %v3326
      %v3352 = vmul.f32 %v3296, %v3331
      %v3353 = vmul.f32 %v3297, %v3336
      %v3354 = vmul.f32 %v3298, %v3341
      %v3355 = vmul.f32 %v3299, %v3346
      %vm3356 = vcmask 257024
      %3357 = vst.msk [vmem:[#allocation3] sm:$0xf] %vm3356, 0
      %3358 = vst.msk [vmem:[#allocation3 + $0x4] sm:$0xf] %vm3356, 0
      %vm3359 = vcmask 253952
      %3360 = vst.msk [vmem:[#allocation3 + $0x8] sm:$0x1] %vm3359, 0
      %vm3361 = vcmask 257025
      %3362 = vst.msk [vmem:[#allocation3 + $0x28] sm:$0xe] %vm3361, 0
      %3363 = vst.msk [vmem:[#allocation3 + $0x2c] sm:$0xf] %vm3356, 0
      %3364 = vst.msk [vmem:[#allocation3 + $0x30] sm:$0xf] %vm3356, 0
      %v3365 = vpack.c.bf16 %v3349, %v3348
      %v3366 = vpack.c.bf16 %v3351, %v3350
      %v3367 = vpack.c.bf16 %v3353, %v3352
      %v3368 = vpack.c.bf16 %v3355, %v3354
      %v3373 = vunpack.c.l.b16 %v3365
      %v3374 = vunpack.c.h.b16 %v3365
      %v3375 = vunpack.c.l.b16 %v3366
      %v3376 = vunpack.c.h.b16 %v3366
      %v3377 = vunpack.c.l.b16 %v3367
      %v3378 = vunpack.c.h.b16 %v3367
      %v3379 = vunpack.c.l.b16 %v3368
      %v3380 = vunpack.c.h.b16 %v3368
      %v3381 = vpack.c.b16 %v3373, %v3373
      %v3382 = vpack.c.b16 %v3374, %v3374
      %v3383 = vpack.c.b16 %v3375, %v3375
      %v3384 = vpack.c.b16 %v3376, %v3376
      %v3385 = vpack.c.b16 %v3377, %v3377
      %v3386 = vpack.c.b16 %v3378, %v3378
      %v3387 = vpack.c.b16 %v3379, %v3379
      %v3388 = vpack.c.b16 %v3380, %v3380
      %vm3389 = vcmask 1040384
      %vm3390 = vcmask 1044484
      %vm3391 = vmor %vm3389, %vm3390
      %v3392 = vrot.slane %v3381, 7
      %v3393 = vrot.slane %v3392, 4
      %v3394 = vrot.slane %v3382, 7
      %v3395 = vsel %vm3391, %v3393, %v3394
      %v3396 = vrot.slane %v3394, 4
      %v3397 = vrot.slane %v3383, 7
      %v3398 = vsel %vm3391, %v3396, %v3397
      %v3399 = vrot.slane %v3397, 4
      %v3400 = vrot.slane %v3384, 7
      %v3401 = vsel %vm3391, %v3399, %v3400
      %v3402 = vrot.slane %v3400, 4
      %v3403 = vrot.slane %v3385, 7
      %v3404 = vsel %vm3391, %v3402, %v3403
      %v3405 = vrot.slane %v3403, 4
      %v3406 = vrot.slane %v3386, 7
      %v3407 = vsel %vm3391, %v3405, %v3406
      %v3408 = vrot.slane %v3406, 4
      %v3409 = vrot.slane %v3387, 7
      %v3410 = vsel %vm3391, %v3408, %v3409
      %v3411 = vrot.slane %v3409, 4
      %v3412 = vrot.slane %v3388, 7
      %v3413 = vsel %vm3391, %v3411, %v3412
      %v3414 = vrot.slane %v3412, 4
      %3424 = vst.msk [vmem:[#allocation3 + $0x8] sm:$0xe] %vm3361, %v3392
      %3425 = vst.msk [vmem:[#allocation3 + $0xc] sm:$0xf] %vm3356, %v3395
      %3426 = vst.msk [vmem:[#allocation3 + $0x10] sm:$0xf] %vm3356, %v3398
      %3427 = vst.msk [vmem:[#allocation3 + $0x14] sm:$0xf] %vm3356, %v3401
      %3428 = vst.msk [vmem:[#allocation3 + $0x18] sm:$0xf] %vm3356, %v3404
      %3429 = vst.msk [vmem:[#allocation3 + $0x1c] sm:$0xf] %vm3356, %v3407
      %3430 = vst.msk [vmem:[#allocation3 + $0x20] sm:$0xf] %vm3356, %v3410
      %3431 = vst.msk [vmem:[#allocation3 + $0x24] sm:$0xf] %vm3356, %v3413
      %3432 = vst.msk [vmem:[#allocation3 + $0x28] sm:$0x1] %vm3359, %v3414
      %v3433 = vld [vmem:[#allocation3] sm:$0xf]
      %v3434 = vld [vmem:[#allocation3 + $0x4] sm:$0xf]
      %v3435 = vld [vmem:[#allocation3 + $0x8] sm:$0xf]
      %v3436 = vld [vmem:[#allocation3 + $0xc] sm:$0xf]
      %v3437 = vld [vmem:[#allocation3 + $0x10] sm:$0xf]
      %v3438 = vld [vmem:[#allocation3 + $0x14] sm:$0xf]
      %v3439 = vld [vmem:[#allocation3 + $0x18] sm:$0xf]
      %v3440 = vld [vmem:[#allocation3 + $0x1c] sm:$0xf]
      %3441 = vst.msk [vmem:[#allocation5] sm:$0xf] %vm3356, %v3433
      %3442 = vst.msk [vmem:[#allocation5 + $0x1c] sm:$0xf] %vm3356, %v3434
      %3443 = vst.msk [vmem:[#allocation5 + $0x38] sm:$0xf] %vm3356, %v3435
      %3444 = vst.msk [vmem:[#allocation5 + $0x54] sm:$0xf] %vm3356, %v3436
      %3445 = vst.msk [vmem:[#allocation5 + $0x70] sm:$0xf] %vm3356, %v3437
      %3446 = vst.msk [vmem:[#allocation5 + $0x8c] sm:$0xf] %vm3356, %v3438
      %3447 = vst.msk [vmem:[#allocation5 + $0xa8] sm:$0xf] %vm3356, %v3439
      %3448 = vst.msk [vmem:[#allocation5 + $0xc4] sm:$0xf] %vm3356, %v3440
      %v3449 = vld [vmem:[#allocation3] sm:$0xf]
      %v3450 = vld [vmem:[#allocation3 + $0x4] sm:$0xf]
      %v3451 = vld [vmem:[#allocation3 + $0x8] sm:$0xf]
      %v3452 = vld [vmem:[#allocation3 + $0xc] sm:$0xf]
      %v3453 = vld [vmem:[#allocation3 + $0x10] sm:$0xf]
      %v3454 = vld [vmem:[#allocation3 + $0x14] sm:$0xf]
      %v3455 = vld [vmem:[#allocation3 + $0x18] sm:$0xf]
      %v3456 = vld [vmem:[#allocation3 + $0x1c] sm:$0xf]
      %v3457 = vld [vmem:[#allocation3 + $0x20] sm:$0x1]
      %v3459 = vshrl.u32 %v3449, 16
      %v3461 = vrot.slane %v3459, 4
      %v3462 = vshll.u32 %v3449, 16
      %v3464 = vrot.slane %v3462, 5
      %v3465 = vor.u32 %v3461, %v3464
      %v3466 = vrot.slane %v3465, 4
      %v3468 = vshll.u32 %v3450, 16
      %v3470 = vrot.slane %v3468, 5
      %v3471 = vsel %vm482, %v3466, %v3470
      %v3472 = vshrl.u32 %v3450, 16
      %v3474 = vrot.slane %v3472, 4
      %v3475 = vor.u32 %v3474, %v3470
      %v3476 = vrot.slane %v3475, 4
      %v3478 = vshll.u32 %v3451, 16
      %v3480 = vrot.slane %v3478, 5
      %v3481 = vsel %vm482, %v3476, %v3480
      %v3482 = vshrl.u32 %v3451, 16
      %v3484 = vrot.slane %v3482, 4
      %v3485 = vor.u32 %v3484, %v3480
      %v3486 = vrot.slane %v3485, 4
      %v3488 = vshll.u32 %v3452, 16
      %v3490 = vrot.slane %v3488, 5
      %v3491 = vsel %vm482, %v3486, %v3490
      %v3492 = vshrl.u32 %v3452, 16
      %v3494 = vrot.slane %v3492, 4
      %v3495 = vor.u32 %v3494, %v3490
      %v3496 = vrot.slane %v3495, 4
      %v3498 = vshll.u32 %v3453, 16
      %v3500 = vrot.slane %v3498, 5
      %v3501 = vsel %vm482, %v3496, %v3500
      %v3502 = vshrl.u32 %v3453, 16
      %v3504 = vrot.slane %v3502, 4
      %v3505 = vor.u32 %v3504, %v3500
      %v3506 = vrot.slane %v3505, 4
      %v3508 = vshll.u32 %v3454, 16
      %v3510 = vrot.slane %v3508, 5
      %v3511 = vsel %vm482, %v3506, %v3510
      %v3512 = vshrl.u32 %v3454, 16
      %v3514 = vrot.slane %v3512, 4
      %v3515 = vor.u32 %v3514, %v3510
      %v3516 = vrot.slane %v3515, 4
      %v3518 = vshll.u32 %v3455, 16
      %v3520 = vrot.slane %v3518, 5
      %v3521 = vsel %vm482, %v3516, %v3520
      %v3522 = vshrl.u32 %v3455, 16
      %v3524 = vrot.slane %v3522, 4
      %v3525 = vor.u32 %v3524, %v3520
      %v3526 = vrot.slane %v3525, 4
      %v3528 = vshll.u32 %v3456, 16
      %v3530 = vrot.slane %v3528, 5
      %v3531 = vsel %vm482, %v3526, %v3530
      %v3532 = vshrl.u32 %v3456, 16
      %v3534 = vrot.slane %v3532, 4
      %v3535 = vor.u32 %v3534, %v3530
      %v3536 = vrot.slane %v3535, 4
      %v3538 = vshll.u32 %v3457, 16
      %v3540 = vrot.slane %v3538, 5
      %v3541 = vsel %vm482, %v3536, %v3540
      %3542 = vrot.lane.b32.xlu0 %v3471, 32
      %v3543 = vpop.permute.xlu0 %3542
      %3544 = vrot.lane.b32.xlu0 %v3481, 32
      %v3545 = vpop.permute.xlu0 %3544
      %3546 = vrot.lane.b32.xlu0 %v3491, 32
      %v3547 = vpop.permute.xlu0 %3546
      %3548 = vrot.lane.b32.xlu0 %v3501, 32
      %v3549 = vpop.permute.xlu0 %3548
      %3550 = vrot.lane.b32.xlu0 %v3511, 32
      %v3551 = vpop.permute.xlu0 %3550
      %3552 = vrot.lane.b32.xlu0 %v3521, 32
      %v3553 = vpop.permute.xlu0 %3552
      %3554 = vrot.lane.b32.xlu0 %v3531, 32
      %v3555 = vpop.permute.xlu0 %3554
      %3556 = vrot.lane.b32.xlu0 %v3541, 32
      %v3557 = vpop.permute.xlu0 %3556
      %vm3566 = vcmask 519424
      %3567 = vst.msk [vmem:[#allocation5] sm:$0xf] %vm3566, %v3543
      %3568 = vst.msk [vmem:[#allocation5 + $0x1c] sm:$0xf] %vm3566, %v3545
      %3569 = vst.msk [vmem:[#allocation5 + $0x38] sm:$0xf] %vm3566, %v3547
      %3570 = vst.msk [vmem:[#allocation5 + $0x54] sm:$0xf] %vm3566, %v3549
      %3571 = vst.msk [vmem:[#allocation5 + $0x70] sm:$0xf] %vm3566, %v3551
      %3572 = vst.msk [vmem:[#allocation5 + $0x8c] sm:$0xf] %vm3566, %v3553
      %3573 = vst.msk [vmem:[#allocation5 + $0xa8] sm:$0xf] %vm3566, %v3555
      %3574 = vst.msk [vmem:[#allocation5 + $0xc4] sm:$0xf] %vm3566, %v3557
      %v3575 = vld [vmem:[#allocation3] sm:$0xe]
      %v3576 = vld [vmem:[#allocation3 + $0x4] sm:$0xf]
      %v3577 = vld [vmem:[#allocation3 + $0x8] sm:$0xf]
      %v3578 = vld [vmem:[#allocation3 + $0xc] sm:$0xf]
      %v3579 = vld [vmem:[#allocation3 + $0x10] sm:$0xf]
      %v3580 = vld [vmem:[#allocation3 + $0x14] sm:$0xf]
      %v3581 = vld [vmem:[#allocation3 + $0x18] sm:$0xf]
      %v3582 = vld [vmem:[#allocation3 + $0x1c] sm:$0xf]
      %v3583 = vld [vmem:[#allocation3 + $0x20] sm:$0x1]
      %v3593 = vrot.slane %v3575, 5
      %v3594 = vrot.slane %v3593, 4
      %v3595 = vrot.slane %v3576, 5
      %v3596 = vsel %vm620, %v3594, %v3595
      %v3597 = vrot.slane %v3595, 4
      %v3598 = vrot.slane %v3577, 5
      %v3599 = vsel %vm620, %v3597, %v3598
      %v3600 = vrot.slane %v3598, 4
      %v3601 = vrot.slane %v3578, 5
      %v3602 = vsel %vm620, %v3600, %v3601
      %v3603 = vrot.slane %v3601, 4
      %v3604 = vrot.slane %v3579, 5
      %v3605 = vsel %vm620, %v3603, %v3604
      %v3606 = vrot.slane %v3604, 4
      %v3607 = vrot.slane %v3580, 5
      %v3608 = vsel %vm620, %v3606, %v3607
      %v3609 = vrot.slane %v3607, 4
      %v3610 = vrot.slane %v3581, 5
      %v3611 = vsel %vm620, %v3609, %v3610
      %v3612 = vrot.slane %v3610, 4
      %v3613 = vrot.slane %v3582, 5
      %v3614 = vsel %vm620, %v3612, %v3613
      %v3615 = vrot.slane %v3613, 4
      %v3616 = vrot.slane %v3583, 5
      %v3617 = vsel %vm620, %v3615, %v3616
      %3618 = vrot.lane.b32.xlu0 %v3596, 64
      %v3619 = vpop.permute.xlu0 %3618
      %3620 = vrot.lane.b32.xlu0 %v3599, 64
      %v3621 = vpop.permute.xlu0 %3620
      %3622 = vrot.lane.b32.xlu0 %v3602, 64
      %v3623 = vpop.permute.xlu0 %3622
      %3624 = vrot.lane.b32.xlu0 %v3605, 64
      %v3625 = vpop.permute.xlu0 %3624
      %3626 = vrot.lane.b32.xlu0 %v3608, 64
      %v3627 = vpop.permute.xlu0 %3626
      %3628 = vrot.lane.b32.xlu0 %v3611, 64
      %v3629 = vpop.permute.xlu0 %3628
      %3630 = vrot.lane.b32.xlu0 %v3614, 64
      %v3631 = vpop.permute.xlu0 %3630
      %3632 = vrot.lane.b32.xlu0 %v3617, 64
      %v3633 = vpop.permute.xlu0 %3632
      %vm3642 = vcmask 781824
      %3643 = vst.msk [vmem:[#allocation5] sm:$0xf] %vm3642, %v3619
      %3644 = vst.msk [vmem:[#allocation5 + $0x1c] sm:$0xf] %vm3642, %v3621
      %3645 = vst.msk [vmem:[#allocation5 + $0x38] sm:$0xf] %vm3642, %v3623
      %3646 = vst.msk [vmem:[#allocation5 + $0x54] sm:$0xf] %vm3642, %v3625
      %3647 = vst.msk [vmem:[#allocation5 + $0x70] sm:$0xf] %vm3642, %v3627
      %3648 = vst.msk [vmem:[#allocation5 + $0x8c] sm:$0xf] %vm3642, %v3629
      %3649 = vst.msk [vmem:[#allocation5 + $0xa8] sm:$0xf] %vm3642, %v3631
      %3650 = vst.msk [vmem:[#allocation5 + $0xc4] sm:$0xf] %vm3642, %v3633
      %v3651 = vld [vmem:[#allocation3] sm:$0xe]
      %v3652 = vld [vmem:[#allocation3 + $0x4] sm:$0xf]
      %v3653 = vld [vmem:[#allocation3 + $0x8] sm:$0xf]
      %v3654 = vld [vmem:[#allocation3 + $0xc] sm:$0xf]
      %v3655 = vld [vmem:[#allocation3 + $0x10] sm:$0xf]
      %v3656 = vld [vmem:[#allocation3 + $0x14] sm:$0xf]
      %v3657 = vld [vmem:[#allocation3 + $0x18] sm:$0xf]
      %v3658 = vld [vmem:[#allocation3 + $0x1c] sm:$0xf]
      %v3659 = vld [vmem:[#allocation3 + $0x20] sm:$0x3]
      %v3661 = vshrl.u32 %v3651, 16
      %v3663 = vrot.slane %v3661, 5
      %v3664 = vshll.u32 %v3651, 16
      %v3666 = vrot.slane %v3664, 6
      %v3667 = vor.u32 %v3663, %v3666
      %v3668 = vrot.slane %v3667, 4
      %v3670 = vshrl.u32 %v3652, 16
      %v3672 = vrot.slane %v3670, 5
      %v3673 = vshll.u32 %v3652, 16
      %v3675 = vrot.slane %v3673, 6
      %v3676 = vor.u32 %v3672, %v3675
      %v3677 = vsel %vm689, %v3668, %v3676
      %v3678 = vrot.slane %v3676, 4
      %v3680 = vshrl.u32 %v3653, 16
      %v3682 = vrot.slane %v3680, 5
      %v3683 = vshll.u32 %v3653, 16
      %v3685 = vrot.slane %v3683, 6
      %v3686 = vor.u32 %v3682, %v3685
      %v3687 = vsel %vm689, %v3678, %v3686
      %v3688 = vrot.slane %v3686, 4
      %v3690 = vshrl.u32 %v3654, 16
      %v3692 = vrot.slane %v3690, 5
      %v3693 = vshll.u32 %v3654, 16
      %v3695 = vrot.slane %v3693, 6
      %v3696 = vor.u32 %v3692, %v3695
      %v3697 = vsel %vm689, %v3688, %v3696
      %v3698 = vrot.slane %v3696, 4
      %v3700 = vshrl.u32 %v3655, 16
      %v3702 = vrot.slane %v3700, 5
      %v3703 = vshll.u32 %v3655, 16
      %v3705 = vrot.slane %v3703, 6
      %v3706 = vor.u32 %v3702, %v3705
      %v3707 = vsel %vm689, %v3698, %v3706
      %v3708 = vrot.slane %v3706, 4
      %v3710 = vshrl.u32 %v3656, 16
      %v3712 = vrot.slane %v3710, 5
      %v3713 = vshll.u32 %v3656, 16
      %v3715 = vrot.slane %v3713, 6
      %v3716 = vor.u32 %v3712, %v3715
      %v3717 = vsel %vm689, %v3708, %v3716
      %v3718 = vrot.slane %v3716, 4
      %v3720 = vshrl.u32 %v3657, 16
      %v3722 = vrot.slane %v3720, 5
      %v3723 = vshll.u32 %v3657, 16
      %v3725 = vrot.slane %v3723, 6
      %v3726 = vor.u32 %v3722, %v3725
      %v3727 = vsel %vm689, %v3718, %v3726
      %v3728 = vrot.slane %v3726, 4
      %v3730 = vshrl.u32 %v3658, 16
      %v3732 = vrot.slane %v3730, 5
      %v3733 = vshll.u32 %v3658, 16
      %v3735 = vrot.slane %v3733, 6
      %v3736 = vor.u32 %v3732, %v3735
      %v3737 = vsel %vm689, %v3728, %v3736
      %v3738 = vrot.slane %v3736, 4
      %v3740 = vshrl.u32 %v3659, 16
      %v3742 = vrot.slane %v3740, 5
      %v3743 = vshll.u32 %v3659, 16
      %v3745 = vrot.slane %v3743, 6
      %v3746 = vor.u32 %v3742, %v3745
      %v3747 = vsel %vm689, %v3738, %v3746
      %3748 = vrot.lane.b32.xlu0 %v3677, 96
      %v3749 = vpop.permute.xlu0 %3748
      %3750 = vrot.lane.b32.xlu0 %v3687, 96
      %v3751 = vpop.permute.xlu0 %3750
      %3752 = vrot.lane.b32.xlu0 %v3697, 96
      %v3753 = vpop.permute.xlu0 %3752
      %3754 = vrot.lane.b32.xlu0 %v3707, 96
      %v3755 = vpop.permute.xlu0 %3754
      %3756 = vrot.lane.b32.xlu0 %v3717, 96
      %v3757 = vpop.permute.xlu0 %3756
      %3758 = vrot.lane.b32.xlu0 %v3727, 96
      %v3759 = vpop.permute.xlu0 %3758
      %3760 = vrot.lane.b32.xlu0 %v3737, 96
      %v3761 = vpop.permute.xlu0 %3760
      %3762 = vrot.lane.b32.xlu0 %v3747, 96
      %v3763 = vpop.permute.xlu0 %3762
      %vm3772 = vcmask 1044224
      %3773 = vst.msk [vmem:[#allocation5] sm:$0xf] %vm3772, %v3749
      %3774 = vst.msk [vmem:[#allocation5 + $0x1c] sm:$0xf] %vm3772, %v3751
      %3775 = vst.msk [vmem:[#allocation5 + $0x38] sm:$0xf] %vm3772, %v3753
      %3776 = vst.msk [vmem:[#allocation5 + $0x54] sm:$0xf] %vm3772, %v3755
      %3777 = vst.msk [vmem:[#allocation5 + $0x70] sm:$0xf] %vm3772, %v3757
      %3778 = vst.msk [vmem:[#allocation5 + $0x8c] sm:$0xf] %vm3772, %v3759
      %3779 = vst.msk [vmem:[#allocation5 + $0xa8] sm:$0xf] %vm3772, %v3761
      %3780 = vst.msk [vmem:[#allocation5 + $0xc4] sm:$0xf] %vm3772, %v3763
      %v3781 = vld [vmem:[#allocation3] sm:$0xc]
      %v3782 = vld [vmem:[#allocation3 + $0x4] sm:$0xf]
      %v3783 = vld [vmem:[#allocation3 + $0x8] sm:$0xf]
      %v3784 = vld [vmem:[#allocation3 + $0xc] sm:$0xf]
      %v3785 = vld [vmem:[#allocation3 + $0x10] sm:$0xf]
      %v3786 = vld [vmem:[#allocation3 + $0x14] sm:$0xf]
      %v3787 = vld [vmem:[#allocation3 + $0x18] sm:$0xf]
      %v3788 = vld [vmem:[#allocation3 + $0x1c] sm:$0xf]
      %v3789 = vld [vmem:[#allocation3 + $0x20] sm:$0x3]
      %v3799 = vrot.slane %v3781, 6
      %v3800 = vrot.slane %v3799, 4
      %v3801 = vrot.slane %v3782, 6
      %v3802 = vsel %vm385, %v3800, %v3801
      %v3803 = vrot.slane %v3801, 4
      %v3804 = vrot.slane %v3783, 6
      %v3805 = vsel %vm385, %v3803, %v3804
      %v3806 = vrot.slane %v3804, 4
      %v3807 = vrot.slane %v3784, 6
      %v3808 = vsel %vm385, %v3806, %v3807
      %v3809 = vrot.slane %v3807, 4
      %v3810 = vrot.slane %v3785, 6
      %v3811 = vsel %vm385, %v3809, %v3810
      %v3812 = vrot.slane %v3810, 4
      %v3813 = vrot.slane %v3786, 6
      %v3814 = vsel %vm385, %v3812, %v3813
      %v3815 = vrot.slane %v3813, 4
      %v3816 = vrot.slane %v3787, 6
      %v3817 = vsel %vm385, %v3815, %v3816
      %v3818 = vrot.slane %v3816, 4
      %v3819 = vrot.slane %v3788, 6
      %v3820 = vsel %vm385, %v3818, %v3819
      %v3821 = vrot.slane %v3819, 4
      %v3822 = vrot.slane %v3789, 6
      %v3823 = vsel %vm385, %v3821, %v3822
      %3832 = vst.msk [vmem:[#allocation5 + $0x4] sm:$0xf] %vm3356, %v3802
      %3833 = vst.msk [vmem:[#allocation5 + $0x20] sm:$0xf] %vm3356, %v3805
      %3834 = vst.msk [vmem:[#allocation5 + $0x3c] sm:$0xf] %vm3356, %v3808
      %3835 = vst.msk [vmem:[#allocation5 + $0x58] sm:$0xf] %vm3356, %v3811
      %3836 = vst.msk [vmem:[#allocation5 + $0x74] sm:$0xf] %vm3356, %v3814
      %3837 = vst.msk [vmem:[#allocation5 + $0x90] sm:$0xf] %vm3356, %v3817
      %3838 = vst.msk [vmem:[#allocation5 + $0xac] sm:$0xf] %vm3356, %v3820
      %3839 = vst.msk [vmem:[#allocation5 + $0xc8] sm:$0xf] %vm3356, %v3823
      %v3840 = vld [vmem:[#allocation3 + $0x4] sm:$0xf]
      %v3841 = vld [vmem:[#allocation3 + $0x8] sm:$0xf]
      %v3842 = vld [vmem:[#allocation3 + $0xc] sm:$0xf]
      %v3843 = vld [vmem:[#allocation3 + $0x10] sm:$0xf]
      %v3844 = vld [vmem:[#allocation3 + $0x14] sm:$0xf]
      %v3845 = vld [vmem:[#allocation3 + $0x18] sm:$0xf]
      %v3846 = vld [vmem:[#allocation3 + $0x1c] sm:$0xf]
      %v3847 = vld [vmem:[#allocation3 + $0x20] sm:$0xf]
      %3856 = vrot.lane.b32.xlu0 %v3840, 32
      %v3857 = vpop.permute.xlu0 %3856
      %3858 = vrot.lane.b32.xlu0 %v3841, 32
      %v3859 = vpop.permute.xlu0 %3858
      %3860 = vrot.lane.b32.xlu0 %v3842, 32
      %v3861 = vpop.permute.xlu0 %3860
      %3862 = vrot.lane.b32.xlu0 %v3843, 32
      %v3863 = vpop.permute.xlu0 %3862
      %3864 = vrot.lane.b32.xlu0 %v3844, 32
      %v3865 = vpop.permute.xlu0 %3864
      %3866 = vrot.lane.b32.xlu0 %v3845, 32
      %v3867 = vpop.permute.xlu0 %3866
      %3868 = vrot.lane.b32.xlu0 %v3846, 32
      %v3869 = vpop.permute.xlu0 %3868
      %3870 = vrot.lane.b32.xlu0 %v3847, 32
      %v3871 = vpop.permute.xlu0 %3870
      %3880 = vst.msk [vmem:[#allocation5 + $0x4] sm:$0xf] %vm3566, %v3857
      %3881 = vst.msk [vmem:[#allocation5 + $0x20] sm:$0xf] %vm3566, %v3859
      %3882 = vst.msk [vmem:[#allocation5 + $0x3c] sm:$0xf] %vm3566, %v3861
      %3883 = vst.msk [vmem:[#allocation5 + $0x58] sm:$0xf] %vm3566, %v3863
      %3884 = vst.msk [vmem:[#allocation5 + $0x74] sm:$0xf] %vm3566, %v3865
      %3885 = vst.msk [vmem:[#allocation5 + $0x90] sm:$0xf] %vm3566, %v3867
      %3886 = vst.msk [vmem:[#allocation5 + $0xac] sm:$0xf] %vm3566, %v3869
      %3887 = vst.msk [vmem:[#allocation5 + $0xc8] sm:$0xf] %vm3566, %v3871
      %v3888 = vld [vmem:[#allocation3 + $0x4] sm:$0xf]
      %v3889 = vld [vmem:[#allocation3 + $0x8] sm:$0xf]
      %v3890 = vld [vmem:[#allocation3 + $0xc] sm:$0xf]
      %v3891 = vld [vmem:[#allocation3 + $0x10] sm:$0xf]
      %v3892 = vld [vmem:[#allocation3 + $0x14] sm:$0xf]
      %v3893 = vld [vmem:[#allocation3 + $0x18] sm:$0xf]
      %v3894 = vld [vmem:[#allocation3 + $0x1c] sm:$0xf]
      %v3895 = vld [vmem:[#allocation3 + $0x20] sm:$0xf]
      %v3896 = vld [vmem:[#allocation3 + $0x24] sm:$0x1]
      %v3898 = vshrl.u32 %v3888, 16
      %v3900 = vrot.slane %v3898, 4
      %v3901 = vshll.u32 %v3888, 16
      %v3903 = vrot.slane %v3901, 5
      %v3904 = vor.u32 %v3900, %v3903
      %v3905 = vrot.slane %v3904, 4
      %v3907 = vshll.u32 %v3889, 16
      %v3909 = vrot.slane %v3907, 5
      %v3910 = vsel %vm482, %v3905, %v3909
      %v3911 = vshrl.u32 %v3889, 16
      %v3913 = vrot.slane %v3911, 4
      %v3914 = vor.u32 %v3913, %v3909
      %v3915 = vrot.slane %v3914, 4
      %v3917 = vshll.u32 %v3890, 16
      %v3919 = vrot.slane %v3917, 5
      %v3920 = vsel %vm482, %v3915, %v3919
      %v3921 = vshrl.u32 %v3890, 16
      %v3923 = vrot.slane %v3921, 4
      %v3924 = vor.u32 %v3923, %v3919
      %v3925 = vrot.slane %v3924, 4
      %v3927 = vshll.u32 %v3891, 16
      %v3929 = vrot.slane %v3927, 5
      %v3930 = vsel %vm482, %v3925, %v3929
      %v3931 = vshrl.u32 %v3891, 16
      %v3933 = vrot.slane %v3931, 4
      %v3934 = vor.u32 %v3933, %v3929
      %v3935 = vrot.slane %v3934, 4
      %v3937 = vshll.u32 %v3892, 16
      %v3939 = vrot.slane %v3937, 5
      %v3940 = vsel %vm482, %v3935, %v3939
      %v3941 = vshrl.u32 %v3892, 16
      %v3943 = vrot.slane %v3941, 4
      %v3944 = vor.u32 %v3943, %v3939
      %v3945 = vrot.slane %v3944, 4
      %v3947 = vshll.u32 %v3893, 16
      %v3949 = vrot.slane %v3947, 5
      %v3950 = vsel %vm482, %v3945, %v3949
      %v3951 = vshrl.u32 %v3893, 16
      %v3953 = vrot.slane %v3951, 4
      %v3954 = vor.u32 %v3953, %v3949
      %v3955 = vrot.slane %v3954, 4
      %v3957 = vshll.u32 %v3894, 16
      %v3959 = vrot.slane %v3957, 5
      %v3960 = vsel %vm482, %v3955, %v3959
      %v3961 = vshrl.u32 %v3894, 16
      %v3963 = vrot.slane %v3961, 4
      %v3964 = vor.u32 %v3963, %v3959
      %v3965 = vrot.slane %v3964, 4
      %v3967 = vshll.u32 %v3895, 16
      %v3969 = vrot.slane %v3967, 5
      %v3970 = vsel %vm482, %v3965, %v3969
      %v3971 = vshrl.u32 %v3895, 16
      %v3973 = vrot.slane %v3971, 4
      %v3974 = vor.u32 %v3973, %v3969
      %v3975 = vrot.slane %v3974, 4
      %v3977 = vshll.u32 %v3896, 16
      %v3979 = vrot.slane %v3977, 5
      %v3980 = vsel %vm482, %v3975, %v3979
      %3981 = vrot.lane.b32.xlu0 %v3910, 64
      %v3982 = vpop.permute.xlu0 %3981
      %3983 = vrot.lane.b32.xlu0 %v3920, 64
      %v3984 = vpop.permute.xlu0 %3983
      %3985 = vrot.lane.b32.xlu0 %v3930, 64
      %v3986 = vpop.permute.xlu0 %3985
      %3987 = vrot.lane.b32.xlu0 %v3940, 64
      %v3988 = vpop.permute.xlu0 %3987
      %3989 = vrot.lane.b32.xlu0 %v3950, 64
      %v3990 = vpop.permute.xlu0 %3989
      %3991 = vrot.lane.b32.xlu0 %v3960, 64
      %v3992 = vpop.permute.xlu0 %3991
      %3993 = vrot.lane.b32.xlu0 %v3970, 64
      %v3994 = vpop.permute.xlu0 %3993
      %3995 = vrot.lane.b32.xlu0 %v3980, 64
      %v3996 = vpop.permute.xlu0 %3995
      %4005 = vst.msk [vmem:[#allocation5 + $0x4] sm:$0xf] %vm3642, %v3982
      %4006 = vst.msk [vmem:[#allocation5 + $0x20] sm:$0xf] %vm3642, %v3984
      %4007 = vst.msk [vmem:[#allocation5 + $0x3c] sm:$0xf] %vm3642, %v3986
      %4008 = vst.msk [vmem:[#allocation5 + $0x58] sm:$0xf] %vm3642, %v3988
      %4009 = vst.msk [vmem:[#allocation5 + $0x74] sm:$0xf] %vm3642, %v3990
      %4010 = vst.msk [vmem:[#allocation5 + $0x90] sm:$0xf] %vm3642, %v3992
      %4011 = vst.msk [vmem:[#allocation5 + $0xac] sm:$0xf] %vm3642, %v3994
      %4012 = vst.msk [vmem:[#allocation5 + $0xc8] sm:$0xf] %vm3642, %v3996
      %v4013 = vld [vmem:[#allocation3 + $0x4] sm:$0xe]
      %v4014 = vld [vmem:[#allocation3 + $0x8] sm:$0xf]
      %v4015 = vld [vmem:[#allocation3 + $0xc] sm:$0xf]
      %v4016 = vld [vmem:[#allocation3 + $0x10] sm:$0xf]
      %v4017 = vld [vmem:[#allocation3 + $0x14] sm:$0xf]
      %v4018 = vld [vmem:[#allocation3 + $0x18] sm:$0xf]
      %v4019 = vld [vmem:[#allocation3 + $0x1c] sm:$0xf]
      %v4020 = vld [vmem:[#allocation3 + $0x20] sm:$0xf]
      %v4021 = vld [vmem:[#allocation3 + $0x24] sm:$0x1]
      %v4031 = vrot.slane %v4013, 5
      %v4032 = vrot.slane %v4031, 4
      %v4033 = vrot.slane %v4014, 5
      %v4034 = vsel %vm620, %v4032, %v4033
      %v4035 = vrot.slane %v4033, 4
      %v4036 = vrot.slane %v4015, 5
      %v4037 = vsel %vm620, %v4035, %v4036
      %v4038 = vrot.slane %v4036, 4
      %v4039 = vrot.slane %v4016, 5
      %v4040 = vsel %vm620, %v4038, %v4039
      %v4041 = vrot.slane %v4039, 4
      %v4042 = vrot.slane %v4017, 5
      %v4043 = vsel %vm620, %v4041, %v4042
      %v4044 = vrot.slane %v4042, 4
      %v4045 = vrot.slane %v4018, 5
      %v4046 = vsel %vm620, %v4044, %v4045
      %v4047 = vrot.slane %v4045, 4
      %v4048 = vrot.slane %v4019, 5
      %v4049 = vsel %vm620, %v4047, %v4048
      %v4050 = vrot.slane %v4048, 4
      %v4051 = vrot.slane %v4020, 5
      %v4052 = vsel %vm620, %v4050, %v4051
      %v4053 = vrot.slane %v4051, 4
      %v4054 = vrot.slane %v4021, 5
      %v4055 = vsel %vm620, %v4053, %v4054
      %4056 = vrot.lane.b32.xlu0 %v4034, 96
      %v4057 = vpop.permute.xlu0 %4056
      %4058 = vrot.lane.b32.xlu0 %v4037, 96
      %v4059 = vpop.permute.xlu0 %4058
      %4060 = vrot.lane.b32.xlu0 %v4040, 96
      %v4061 = vpop.permute.xlu0 %4060
      %4062 = vrot.lane.b32.xlu0 %v4043, 96
      %v4063 = vpop.permute.xlu0 %4062
      %4064 = vrot.lane.b32.xlu0 %v4046, 96
      %v4065 = vpop.permute.xlu0 %4064
      %4066 = vrot.lane.b32.xlu0 %v4049, 96
      %v4067 = vpop.permute.xlu0 %4066
      %4068 = vrot.lane.b32.xlu0 %v4052, 96
      %v4069 = vpop.permute.xlu0 %4068
      %4070 = vrot.lane.b32.xlu0 %v4055, 96
      %v4071 = vpop.permute.xlu0 %4070
      %4080 = vst.msk [vmem:[#allocation5 + $0x4] sm:$0xf] %vm3772, %v4057
      %4081 = vst.msk [vmem:[#allocation5 + $0x20] sm:$0xf] %vm3772, %v4059
      %4082 = vst.msk [vmem:[#allocation5 + $0x3c] sm:$0xf] %vm3772, %v4061
      %4083 = vst.msk [vmem:[#allocation5 + $0x58] sm:$0xf] %vm3772, %v4063
      %4084 = vst.msk [vmem:[#allocation5 + $0x74] sm:$0xf] %vm3772, %v4065
      %4085 = vst.msk [vmem:[#allocation5 + $0x90] sm:$0xf] %vm3772, %v4067
      %4086 = vst.msk [vmem:[#allocation5 + $0xac] sm:$0xf] %vm3772, %v4069
      %4087 = vst.msk [vmem:[#allocation5 + $0xc8] sm:$0xf] %vm3772, %v4071
      %v4088 = vld [vmem:[#allocation3 + $0x4] sm:$0xe]
      %v4089 = vld [vmem:[#allocation3 + $0x8] sm:$0xf]
      %v4090 = vld [vmem:[#allocation3 + $0xc] sm:$0xf]
      %v4091 = vld [vmem:[#allocation3 + $0x10] sm:$0xf]
      %v4092 = vld [vmem:[#allocation3 + $0x14] sm:$0xf]
      %v4093 = vld [vmem:[#allocation3 + $0x18] sm:$0xf]
      %v4094 = vld [vmem:[#allocation3 + $0x1c] sm:$0xf]
      %v4095 = vld [vmem:[#allocation3 + $0x20] sm:$0xf]
      %v4096 = vld [vmem:[#allocation3 + $0x24] sm:$0x3]
      %v4098 = vshrl.u32 %v4088, 16
      %v4100 = vrot.slane %v4098, 5
      %v4101 = vshll.u32 %v4088, 16
      %v4103 = vrot.slane %v4101, 6
      %v4104 = vor.u32 %v4100, %v4103
      %v4105 = vrot.slane %v4104, 4
      %v4107 = vshrl.u32 %v4089, 16
      %v4109 = vrot.slane %v4107, 5
      %v4110 = vshll.u32 %v4089, 16
      %v4112 = vrot.slane %v4110, 6
      %v4113 = vor.u32 %v4109, %v4112
      %v4114 = vsel %vm689, %v4105, %v4113
      %v4115 = vrot.slane %v4113, 4
      %v4117 = vshrl.u32 %v4090, 16
      %v4119 = vrot.slane %v4117, 5
      %v4120 = vshll.u32 %v4090, 16
      %v4122 = vrot.slane %v4120, 6
      %v4123 = vor.u32 %v4119, %v4122
      %v4124 = vsel %vm689, %v4115, %v4123
      %v4125 = vrot.slane %v4123, 4
      %v4127 = vshrl.u32 %v4091, 16
      %v4129 = vrot.slane %v4127, 5
      %v4130 = vshll.u32 %v4091, 16
      %v4132 = vrot.slane %v4130, 6
      %v4133 = vor.u32 %v4129, %v4132
      %v4134 = vsel %vm689, %v4125, %v4133
      %v4135 = vrot.slane %v4133, 4
      %v4137 = vshrl.u32 %v4092, 16
      %v4139 = vrot.slane %v4137, 5
      %v4140 = vshll.u32 %v4092, 16
      %v4142 = vrot.slane %v4140, 6
      %v4143 = vor.u32 %v4139, %v4142
      %v4144 = vsel %vm689, %v4135, %v4143
      %v4145 = vrot.slane %v4143, 4
      %v4147 = vshrl.u32 %v4093, 16
      %v4149 = vrot.slane %v4147, 5
      %v4150 = vshll.u32 %v4093, 16
      %v4152 = vrot.slane %v4150, 6
      %v4153 = vor.u32 %v4149, %v4152
      %v4154 = vsel %vm689, %v4145, %v4153
      %v4155 = vrot.slane %v4153, 4
      %v4157 = vshrl.u32 %v4094, 16
      %v4159 = vrot.slane %v4157, 5
      %v4160 = vshll.u32 %v4094, 16
      %v4162 = vrot.slane %v4160, 6
      %v4163 = vor.u32 %v4159, %v4162
      %v4164 = vsel %vm689, %v4155, %v4163
      %v4165 = vrot.slane %v4163, 4
      %v4167 = vshrl.u32 %v4095, 16
      %v4169 = vrot.slane %v4167, 5
      %v4170 = vshll.u32 %v4095, 16
      %v4172 = vrot.slane %v4170, 6
      %v4173 = vor.u32 %v4169, %v4172
      %v4174 = vsel %vm689, %v4165, %v4173
      %v4175 = vrot.slane %v4173, 4
      %v4177 = vshrl.u32 %v4096, 16
      %v4179 = vrot.slane %v4177, 5
      %v4180 = vshll.u32 %v4096, 16
      %v4182 = vrot.slane %v4180, 6
      %v4183 = vor.u32 %v4179, %v4182
      %v4184 = vsel %vm689, %v4175, %v4183
      %4193 = vst.msk [vmem:[#allocation5 + $0x8] sm:$0xf] %vm3356, %v4114
      %4194 = vst.msk [vmem:[#allocation5 + $0x24] sm:$0xf] %vm3356, %v4124
      %4195 = vst.msk [vmem:[#allocation5 + $0x40] sm:$0xf] %vm3356, %v4134
      %4196 = vst.msk [vmem:[#allocation5 + $0x5c] sm:$0xf] %vm3356, %v4144
      %4197 = vst.msk [vmem:[#allocation5 + $0x78] sm:$0xf] %vm3356, %v4154
      %4198 = vst.msk [vmem:[#allocation5 + $0x94] sm:$0xf] %vm3356, %v4164
      %4199 = vst.msk [vmem:[#allocation5 + $0xb0] sm:$0xf] %vm3356, %v4174
      %4200 = vst.msk [vmem:[#allocation5 + $0xcc] sm:$0xf] %vm3356, %v4184
      %v4201 = vld [vmem:[#allocation3 + $0x4] sm:$0xc]
      %v4202 = vld [vmem:[#allocation3 + $0x8] sm:$0xf]
      %v4203 = vld [vmem:[#allocation3 + $0xc] sm:$0xf]
      %v4204 = vld [vmem:[#allocation3 + $0x10] sm:$0xf]
      %v4205 = vld [vmem:[#allocation3 + $0x14] sm:$0xf]
      %v4206 = vld [vmem:[#allocation3 + $0x18] sm:$0xf]
      %v4207 = vld [vmem:[#allocation3 + $0x1c] sm:$0xf]
      %v4208 = vld [vmem:[#allocation3 + $0x20] sm:$0xf]
      %v4209 = vld [vmem:[#allocation3 + $0x24] sm:$0x3]
      %v4219 = vrot.slane %v4201, 6
      %v4220 = vrot.slane %v4219, 4
      %v4221 = vrot.slane %v4202, 6
      %v4222 = vsel %vm385, %v4220, %v4221
      %v4223 = vrot.slane %v4221, 4
      %v4224 = vrot.slane %v4203, 6
      %v4225 = vsel %vm385, %v4223, %v4224
      %v4226 = vrot.slane %v4224, 4
      %v4227 = vrot.slane %v4204, 6
      %v4228 = vsel %vm385, %v4226, %v4227
      %v4229 = vrot.slane %v4227, 4
      %v4230 = vrot.slane %v4205, 6
      %v4231 = vsel %vm385, %v4229, %v4230
      %v4232 = vrot.slane %v4230, 4
      %v4233 = vrot.slane %v4206, 6
      %v4234 = vsel %vm385, %v4232, %v4233
      %v4235 = vrot.slane %v4233, 4
      %v4236 = vrot.slane %v4207, 6
      %v4237 = vsel %vm385, %v4235, %v4236
      %v4238 = vrot.slane %v4236, 4
      %v4239 = vrot.slane %v4208, 6
      %v4240 = vsel %vm385, %v4238, %v4239
      %v4241 = vrot.slane %v4239, 4
      %v4242 = vrot.slane %v4209, 6
      %v4243 = vsel %vm385, %v4241, %v4242
      %4244 = vrot.lane.b32.xlu0 %v4222, 32
      %v4245 = vpop.permute.xlu0 %4244
      %4246 = vrot.lane.b32.xlu0 %v4225, 32
      %v4247 = vpop.permute.xlu0 %4246
      %4248 = vrot.lane.b32.xlu0 %v4228, 32
      %v4249 = vpop.permute.xlu0 %4248
      %4250 = vrot.lane.b32.xlu0 %v4231, 32
      %v4251 = vpop.permute.xlu0 %4250
      %4252 = vrot.lane.b32.xlu0 %v4234, 32
      %v4253 = vpop.permute.xlu0 %4252
      %4254 = vrot.lane.b32.xlu0 %v4237, 32
      %v4255 = vpop.permute.xlu0 %4254
      %4256 = vrot.lane.b32.xlu0 %v4240, 32
      %v4257 = vpop.permute.xlu0 %4256
      %4258 = vrot.lane.b32.xlu0 %v4243, 32
      %v4259 = vpop.permute.xlu0 %4258
      %4268 = vst.msk [vmem:[#allocation5 + $0x8] sm:$0xf] %vm3566, %v4245
      %4269 = vst.msk [vmem:[#allocation5 + $0x24] sm:$0xf] %vm3566, %v4247
      %4270 = vst.msk [vmem:[#allocation5 + $0x40] sm:$0xf] %vm3566, %v4249
      %4271 = vst.msk [vmem:[#allocation5 + $0x5c] sm:$0xf] %vm3566, %v4251
      %4272 = vst.msk [vmem:[#allocation5 + $0x78] sm:$0xf] %vm3566, %v4253
      %4273 = vst.msk [vmem:[#allocation5 + $0x94] sm:$0xf] %vm3566, %v4255
      %4274 = vst.msk [vmem:[#allocation5 + $0xb0] sm:$0xf] %vm3566, %v4257
      %4275 = vst.msk [vmem:[#allocation5 + $0xcc] sm:$0xf] %vm3566, %v4259
      %v4276 = vld [vmem:[#allocation3 + $0x8] sm:$0xf]
      %v4277 = vld [vmem:[#allocation3 + $0xc] sm:$0xf]
      %v4278 = vld [vmem:[#allocation3 + $0x10] sm:$0xf]
      %v4279 = vld [vmem:[#allocation3 + $0x14] sm:$0xf]
      %v4280 = vld [vmem:[#allocation3 + $0x18] sm:$0xf]
      %v4281 = vld [vmem:[#allocation3 + $0x1c] sm:$0xf]
      %v4282 = vld [vmem:[#allocation3 + $0x20] sm:$0xf]
      %v4283 = vld [vmem:[#allocation3 + $0x24] sm:$0xf]
      %4292 = vrot.lane.b32.xlu0 %v4276, 64
      %v4293 = vpop.permute.xlu0 %4292
      %4294 = vrot.lane.b32.xlu0 %v4277, 64
      %v4295 = vpop.permute.xlu0 %4294
      %4296 = vrot.lane.b32.xlu0 %v4278, 64
      %v4297 = vpop.permute.xlu0 %4296
      %4298 = vrot.lane.b32.xlu0 %v4279, 64
      %v4299 = vpop.permute.xlu0 %4298
      %4300 = vrot.lane.b32.xlu0 %v4280, 64
      %v4301 = vpop.permute.xlu0 %4300
      %4302 = vrot.lane.b32.xlu0 %v4281, 64
      %v4303 = vpop.permute.xlu0 %4302
      %4304 = vrot.lane.b32.xlu0 %v4282, 64
      %v4305 = vpop.permute.xlu0 %4304
      %4306 = vrot.lane.b32.xlu0 %v4283, 64
      %v4307 = vpop.permute.xlu0 %4306
      %4316 = vst.msk [vmem:[#allocation5 + $0x8] sm:$0xf] %vm3642, %v4293
      %4317 = vst.msk [vmem:[#allocation5 + $0x24] sm:$0xf] %vm3642, %v4295
      %4318 = vst.msk [vmem:[#allocation5 + $0x40] sm:$0xf] %vm3642, %v4297
      %4319 = vst.msk [vmem:[#allocation5 + $0x5c] sm:$0xf] %vm3642, %v4299
      %4320 = vst.msk [vmem:[#allocation5 + $0x78] sm:$0xf] %vm3642, %v4301
      %4321 = vst.msk [vmem:[#allocation5 + $0x94] sm:$0xf] %vm3642, %v4303
      %4322 = vst.msk [vmem:[#allocation5 + $0xb0] sm:$0xf] %vm3642, %v4305
      %4323 = vst.msk [vmem:[#allocation5 + $0xcc] sm:$0xf] %vm3642, %v4307
      %v4324 = vld [vmem:[#allocation3 + $0x8] sm:$0xf]
      %v4325 = vld [vmem:[#allocation3 + $0xc] sm:$0xf]
      %v4326 = vld [vmem:[#allocation3 + $0x10] sm:$0xf]
      %v4327 = vld [vmem:[#allocation3 + $0x14] sm:$0xf]
      %v4328 = vld [vmem:[#allocation3 + $0x18] sm:$0xf]
      %v4329 = vld [vmem:[#allocation3 + $0x1c] sm:$0xf]
      %v4330 = vld [vmem:[#allocation3 + $0x20] sm:$0xf]
      %v4331 = vld [vmem:[#allocation3 + $0x24] sm:$0xf]
      %v4332 = vld [vmem:[#allocation3 + $0x28] sm:$0x1]
      %v4334 = vshrl.u32 %v4324, 16
      %v4336 = vrot.slane %v4334, 4
      %v4337 = vshll.u32 %v4324, 16
      %v4339 = vrot.slane %v4337, 5
      %v4340 = vor.u32 %v4336, %v4339
      %v4341 = vrot.slane %v4340, 4
      %v4343 = vshll.u32 %v4325, 16
      %v4345 = vrot.slane %v4343, 5
      %v4346 = vsel %vm482, %v4341, %v4345
      %v4347 = vshrl.u32 %v4325, 16
      %v4349 = vrot.slane %v4347, 4
      %v4350 = vor.u32 %v4349, %v4345
      %v4351 = vrot.slane %v4350, 4
      %v4353 = vshll.u32 %v4326, 16
      %v4355 = vrot.slane %v4353, 5
      %v4356 = vsel %vm482, %v4351, %v4355
      %v4357 = vshrl.u32 %v4326, 16
      %v4359 = vrot.slane %v4357, 4
      %v4360 = vor.u32 %v4359, %v4355
      %v4361 = vrot.slane %v4360, 4
      %v4363 = vshll.u32 %v4327, 16
      %v4365 = vrot.slane %v4363, 5
      %v4366 = vsel %vm482, %v4361, %v4365
      %v4367 = vshrl.u32 %v4327, 16
      %v4369 = vrot.slane %v4367, 4
      %v4370 = vor.u32 %v4369, %v4365
      %v4371 = vrot.slane %v4370, 4
      %v4373 = vshll.u32 %v4328, 16
      %v4375 = vrot.slane %v4373, 5
      %v4376 = vsel %vm482, %v4371, %v4375
      %v4377 = vshrl.u32 %v4328, 16
      %v4379 = vrot.slane %v4377, 4
      %v4380 = vor.u32 %v4379, %v4375
      %v4381 = vrot.slane %v4380, 4
      %v4383 = vshll.u32 %v4329, 16
      %v4385 = vrot.slane %v4383, 5
      %v4386 = vsel %vm482, %v4381, %v4385
      %v4387 = vshrl.u32 %v4329, 16
      %v4389 = vrot.slane %v4387, 4
      %v4390 = vor.u32 %v4389, %v4385
      %v4391 = vrot.slane %v4390, 4
      %v4393 = vshll.u32 %v4330, 16
      %v4395 = vrot.slane %v4393, 5
      %v4396 = vsel %vm482, %v4391, %v4395
      %v4397 = vshrl.u32 %v4330, 16
      %v4399 = vrot.slane %v4397, 4
      %v4400 = vor.u32 %v4399, %v4395
      %v4401 = vrot.slane %v4400, 4
      %v4403 = vshll.u32 %v4331, 16
      %v4405 = vrot.slane %v4403, 5
      %v4406 = vsel %vm482, %v4401, %v4405
      %v4407 = vshrl.u32 %v4331, 16
      %v4409 = vrot.slane %v4407, 4
      %v4410 = vor.u32 %v4409, %v4405
      %v4411 = vrot.slane %v4410, 4
      %v4413 = vshll.u32 %v4332, 16
      %v4415 = vrot.slane %v4413, 5
      %v4416 = vsel %vm482, %v4411, %v4415
      %4417 = vrot.lane.b32.xlu0 %v4346, 96
      %v4418 = vpop.permute.xlu0 %4417
      %4419 = vrot.lane.b32.xlu0 %v4356, 96
      %v4420 = vpop.permute.xlu0 %4419
      %4421 = vrot.lane.b32.xlu0 %v4366, 96
      %v4422 = vpop.permute.xlu0 %4421
      %4423 = vrot.lane.b32.xlu0 %v4376, 96
      %v4424 = vpop.permute.xlu0 %4423
      %4425 = vrot.lane.b32.xlu0 %v4386, 96
      %v4426 = vpop.permute.xlu0 %4425
      %4427 = vrot.lane.b32.xlu0 %v4396, 96
      %v4428 = vpop.permute.xlu0 %4427
      %4429 = vrot.lane.b32.xlu0 %v4406, 96
      %v4430 = vpop.permute.xlu0 %4429
      %4431 = vrot.lane.b32.xlu0 %v4416, 96
      %v4432 = vpop.permute.xlu0 %4431
      %4441 = vst.msk [vmem:[#allocation5 + $0x8] sm:$0xf] %vm3772, %v4418
      %4442 = vst.msk [vmem:[#allocation5 + $0x24] sm:$0xf] %vm3772, %v4420
      %4443 = vst.msk [vmem:[#allocation5 + $0x40] sm:$0xf] %vm3772, %v4422
      %4444 = vst.msk [vmem:[#allocation5 + $0x5c] sm:$0xf] %vm3772, %v4424
      %4445 = vst.msk [vmem:[#allocation5 + $0x78] sm:$0xf] %vm3772, %v4426
      %4446 = vst.msk [vmem:[#allocation5 + $0x94] sm:$0xf] %vm3772, %v4428
      %4447 = vst.msk [vmem:[#allocation5 + $0xb0] sm:$0xf] %vm3772, %v4430
      %4448 = vst.msk [vmem:[#allocation5 + $0xcc] sm:$0xf] %vm3772, %v4432
      %v4449 = vld [vmem:[#allocation3 + $0x8] sm:$0xe]
      %v4450 = vld [vmem:[#allocation3 + $0xc] sm:$0xf]
      %v4451 = vld [vmem:[#allocation3 + $0x10] sm:$0xf]
      %v4452 = vld [vmem:[#allocation3 + $0x14] sm:$0xf]
      %v4453 = vld [vmem:[#allocation3 + $0x18] sm:$0xf]
      %v4454 = vld [vmem:[#allocation3 + $0x1c] sm:$0xf]
      %v4455 = vld [vmem:[#allocation3 + $0x20] sm:$0xf]
      %v4456 = vld [vmem:[#allocation3 + $0x24] sm:$0xf]
      %v4457 = vld [vmem:[#allocation3 + $0x28] sm:$0x1]
      %v4467 = vrot.slane %v4449, 5
      %v4468 = vrot.slane %v4467, 4
      %v4469 = vrot.slane %v4450, 5
      %v4470 = vsel %vm620, %v4468, %v4469
      %v4471 = vrot.slane %v4469, 4
      %v4472 = vrot.slane %v4451, 5
      %v4473 = vsel %vm620, %v4471, %v4472
      %v4474 = vrot.slane %v4472, 4
      %v4475 = vrot.slane %v4452, 5
      %v4476 = vsel %vm620, %v4474, %v4475
      %v4477 = vrot.slane %v4475, 4
      %v4478 = vrot.slane %v4453, 5
      %v4479 = vsel %vm620, %v4477, %v4478
      %v4480 = vrot.slane %v4478, 4
      %v4481 = vrot.slane %v4454, 5
      %v4482 = vsel %vm620, %v4480, %v4481
      %v4483 = vrot.slane %v4481, 4
      %v4484 = vrot.slane %v4455, 5
      %v4485 = vsel %vm620, %v4483, %v4484
      %v4486 = vrot.slane %v4484, 4
      %v4487 = vrot.slane %v4456, 5
      %v4488 = vsel %vm620, %v4486, %v4487
      %v4489 = vrot.slane %v4487, 4
      %v4490 = vrot.slane %v4457, 5
      %v4491 = vsel %vm620, %v4489, %v4490
      %4500 = vst.msk [vmem:[#allocation5 + $0xc] sm:$0xf] %vm3356, %v4470
      %4501 = vst.msk [vmem:[#allocation5 + $0x28] sm:$0xf] %vm3356, %v4473
      %4502 = vst.msk [vmem:[#allocation5 + $0x44] sm:$0xf] %vm3356, %v4476
      %4503 = vst.msk [vmem:[#allocation5 + $0x60] sm:$0xf] %vm3356, %v4479
      %4504 = vst.msk [vmem:[#allocation5 + $0x7c] sm:$0xf] %vm3356, %v4482
      %4505 = vst.msk [vmem:[#allocation5 + $0x98] sm:$0xf] %vm3356, %v4485
      %4506 = vst.msk [vmem:[#allocation5 + $0xb4] sm:$0xf] %vm3356, %v4488
      %4507 = vst.msk [vmem:[#allocation5 + $0xd0] sm:$0xf] %vm3356, %v4491
      %v4508 = vld [vmem:[#allocation3 + $0x8] sm:$0xe]
      %v4509 = vld [vmem:[#allocation3 + $0xc] sm:$0xf]
      %v4510 = vld [vmem:[#allocation3 + $0x10] sm:$0xf]
      %v4511 = vld [vmem:[#allocation3 + $0x14] sm:$0xf]
      %v4512 = vld [vmem:[#allocation3 + $0x18] sm:$0xf]
      %v4513 = vld [vmem:[#allocation3 + $0x1c] sm:$0xf]
      %v4514 = vld [vmem:[#allocation3 + $0x20] sm:$0xf]
      %v4515 = vld [vmem:[#allocation3 + $0x24] sm:$0xf]
      %v4516 = vld [vmem:[#allocation3 + $0x28] sm:$0x3]
      %v4518 = vshrl.u32 %v4508, 16
      %v4520 = vrot.slane %v4518, 5
      %v4521 = vshll.u32 %v4508, 16
      %v4523 = vrot.slane %v4521, 6
      %v4524 = vor.u32 %v4520, %v4523
      %v4525 = vrot.slane %v4524, 4
      %v4527 = vshrl.u32 %v4509, 16
      %v4529 = vrot.slane %v4527, 5
      %v4530 = vshll.u32 %v4509, 16
      %v4532 = vrot.slane %v4530, 6
      %v4533 = vor.u32 %v4529, %v4532
      %v4534 = vsel %vm689, %v4525, %v4533
      %v4535 = vrot.slane %v4533, 4
      %v4537 = vshrl.u32 %v4510, 16
      %v4539 = vrot.slane %v4537, 5
      %v4540 = vshll.u32 %v4510, 16
      %v4542 = vrot.slane %v4540, 6
      %v4543 = vor.u32 %v4539, %v4542
      %v4544 = vsel %vm689, %v4535, %v4543
      %v4545 = vrot.slane %v4543, 4
      %v4547 = vshrl.u32 %v4511, 16
      %v4549 = vrot.slane %v4547, 5
      %v4550 = vshll.u32 %v4511, 16
      %v4552 = vrot.slane %v4550, 6
      %v4553 = vor.u32 %v4549, %v4552
      %v4554 = vsel %vm689, %v4545, %v4553
      %v4555 = vrot.slane %v4553, 4
      %v4557 = vshrl.u32 %v4512, 16
      %v4559 = vrot.slane %v4557, 5
      %v4560 = vshll.u32 %v4512, 16
      %v4562 = vrot.slane %v4560, 6
      %v4563 = vor.u32 %v4559, %v4562
      %v4564 = vsel %vm689, %v4555, %v4563
      %v4565 = vrot.slane %v4563, 4
      %v4567 = vshrl.u32 %v4513, 16
      %v4569 = vrot.slane %v4567, 5
      %v4570 = vshll.u32 %v4513, 16
      %v4572 = vrot.slane %v4570, 6
      %v4573 = vor.u32 %v4569, %v4572
      %v4574 = vsel %vm689, %v4565, %v4573
      %v4575 = vrot.slane %v4573, 4
      %v4577 = vshrl.u32 %v4514, 16
      %v4579 = vrot.slane %v4577, 5
      %v4580 = vshll.u32 %v4514, 16
      %v4582 = vrot.slane %v4580, 6
      %v4583 = vor.u32 %v4579, %v4582
      %v4584 = vsel %vm689, %v4575, %v4583
      %v4585 = vrot.slane %v4583, 4
      %v4587 = vshrl.u32 %v4515, 16
      %v4589 = vrot.slane %v4587, 5
      %v4590 = vshll.u32 %v4515, 16
      %v4592 = vrot.slane %v4590, 6
      %v4593 = vor.u32 %v4589, %v4592
      %v4594 = vsel %vm689, %v4585, %v4593
      %v4595 = vrot.slane %v4593, 4
      %v4597 = vshrl.u32 %v4516, 16
      %v4599 = vrot.slane %v4597, 5
      %v4600 = vshll.u32 %v4516, 16
      %v4602 = vrot.slane %v4600, 6
      %v4603 = vor.u32 %v4599, %v4602
      %v4604 = vsel %vm689, %v4595, %v4603
      %4605 = vrot.lane.b32.xlu0 %v4534, 32
      %v4606 = vpop.permute.xlu0 %4605
      %4607 = vrot.lane.b32.xlu0 %v4544, 32
      %v4608 = vpop.permute.xlu0 %4607
      %4609 = vrot.lane.b32.xlu0 %v4554, 32
      %v4610 = vpop.permute.xlu0 %4609
      %4611 = vrot.lane.b32.xlu0 %v4564, 32
      %v4612 = vpop.permute.xlu0 %4611
      %4613 = vrot.lane.b32.xlu0 %v4574, 32
      %v4614 = vpop.permute.xlu0 %4613
      %4615 = vrot.lane.b32.xlu0 %v4584, 32
      %v4616 = vpop.permute.xlu0 %4615
      %4617 = vrot.lane.b32.xlu0 %v4594, 32
      %v4618 = vpop.permute.xlu0 %4617
      %4619 = vrot.lane.b32.xlu0 %v4604, 32
      %v4620 = vpop.permute.xlu0 %4619
      %4629 = vst.msk [vmem:[#allocation5 + $0xc] sm:$0xf] %vm3566, %v4606
      %4630 = vst.msk [vmem:[#allocation5 + $0x28] sm:$0xf] %vm3566, %v4608
      %4631 = vst.msk [vmem:[#allocation5 + $0x44] sm:$0xf] %vm3566, %v4610
      %4632 = vst.msk [vmem:[#allocation5 + $0x60] sm:$0xf] %vm3566, %v4612
      %4633 = vst.msk [vmem:[#allocation5 + $0x7c] sm:$0xf] %vm3566, %v4614
      %4634 = vst.msk [vmem:[#allocation5 + $0x98] sm:$0xf] %vm3566, %v4616
      %4635 = vst.msk [vmem:[#allocation5 + $0xb4] sm:$0xf] %vm3566, %v4618
      %4636 = vst.msk [vmem:[#allocation5 + $0xd0] sm:$0xf] %vm3566, %v4620
      %v4637 = vld [vmem:[#allocation3 + $0x8] sm:$0xc]
      %v4638 = vld [vmem:[#allocation3 + $0xc] sm:$0xf]
      %v4639 = vld [vmem:[#allocation3 + $0x10] sm:$0xf]
      %v4640 = vld [vmem:[#allocation3 + $0x14] sm:$0xf]
      %v4641 = vld [vmem:[#allocation3 + $0x18] sm:$0xf]
      %v4642 = vld [vmem:[#allocation3 + $0x1c] sm:$0xf]
      %v4643 = vld [vmem:[#allocation3 + $0x20] sm:$0xf]
      %v4644 = vld [vmem:[#allocation3 + $0x24] sm:$0xf]
      %v4645 = vld [vmem:[#allocation3 + $0x28] sm:$0x3]
      %v4655 = vrot.slane %v4637, 6
      %v4656 = vrot.slane %v4655, 4
      %v4657 = vrot.slane %v4638, 6
      %v4658 = vsel %vm385, %v4656, %v4657
      %v4659 = vrot.slane %v4657, 4
      %v4660 = vrot.slane %v4639, 6
      %v4661 = vsel %vm385, %v4659, %v4660
      %v4662 = vrot.slane %v4660, 4
      %v4663 = vrot.slane %v4640, 6
      %v4664 = vsel %vm385, %v4662, %v4663
      %v4665 = vrot.slane %v4663, 4
      %v4666 = vrot.slane %v4641, 6
      %v4667 = vsel %vm385, %v4665, %v4666
      %v4668 = vrot.slane %v4666, 4
      %v4669 = vrot.slane %v4642, 6
      %v4670 = vsel %vm385, %v4668, %v4669
      %v4671 = vrot.slane %v4669, 4
      %v4672 = vrot.slane %v4643, 6
      %v4673 = vsel %vm385, %v4671, %v4672
      %v4674 = vrot.slane %v4672, 4
      %v4675 = vrot.slane %v4644, 6
      %v4676 = vsel %vm385, %v4674, %v4675
      %v4677 = vrot.slane %v4675, 4
      %v4678 = vrot.slane %v4645, 6
      %v4679 = vsel %vm385, %v4677, %v4678
      %4680 = vrot.lane.b32.xlu0 %v4658, 64
      %v4681 = vpop.permute.xlu0 %4680
      %4682 = vrot.lane.b32.xlu0 %v4661, 64
      %v4683 = vpop.permute.xlu0 %4682
      %4684 = vrot.lane.b32.xlu0 %v4664, 64
      %v4685 = vpop.permute.xlu0 %4684
      %4686 = vrot.lane.b32.xlu0 %v4667, 64
      %v4687 = vpop.permute.xlu0 %4686
      %4688 = vrot.lane.b32.xlu0 %v4670, 64
      %v4689 = vpop.permute.xlu0 %4688
      %4690 = vrot.lane.b32.xlu0 %v4673, 64
      %v4691 = vpop.permute.xlu0 %4690
      %4692 = vrot.lane.b32.xlu0 %v4676, 64
      %v4693 = vpop.permute.xlu0 %4692
      %4694 = vrot.lane.b32.xlu0 %v4679, 64
      %v4695 = vpop.permute.xlu0 %4694
      %4704 = vst.msk [vmem:[#allocation5 + $0xc] sm:$0xf] %vm3642, %v4681
      %4705 = vst.msk [vmem:[#allocation5 + $0x28] sm:$0xf] %vm3642, %v4683
      %4706 = vst.msk [vmem:[#allocation5 + $0x44] sm:$0xf] %vm3642, %v4685
      %4707 = vst.msk [vmem:[#allocation5 + $0x60] sm:$0xf] %vm3642, %v4687
      %4708 = vst.msk [vmem:[#allocation5 + $0x7c] sm:$0xf] %vm3642, %v4689
      %4709 = vst.msk [vmem:[#allocation5 + $0x98] sm:$0xf] %vm3642, %v4691
      %4710 = vst.msk [vmem:[#allocation5 + $0xb4] sm:$0xf] %vm3642, %v4693
      %4711 = vst.msk [vmem:[#allocation5 + $0xd0] sm:$0xf] %vm3642, %v4695
      %v4712 = vld [vmem:[#allocation3 + $0xc] sm:$0xf]
      %v4713 = vld [vmem:[#allocation3 + $0x10] sm:$0xf]
      %v4714 = vld [vmem:[#allocation3 + $0x14] sm:$0xf]
      %v4715 = vld [vmem:[#allocation3 + $0x18] sm:$0xf]
      %v4716 = vld [vmem:[#allocation3 + $0x1c] sm:$0xf]
      %v4717 = vld [vmem:[#allocation3 + $0x20] sm:$0xf]
      %v4718 = vld [vmem:[#allocation3 + $0x24] sm:$0xf]
      %v4719 = vld [vmem:[#allocation3 + $0x28] sm:$0xf]
      %4728 = vrot.lane.b32.xlu0 %v4712, 96
      %v4729 = vpop.permute.xlu0 %4728
      %4730 = vrot.lane.b32.xlu0 %v4713, 96
      %v4731 = vpop.permute.xlu0 %4730
      %4732 = vrot.lane.b32.xlu0 %v4714, 96
      %v4733 = vpop.permute.xlu0 %4732
      %4734 = vrot.lane.b32.xlu0 %v4715, 96
      %v4735 = vpop.permute.xlu0 %4734
      %4736 = vrot.lane.b32.xlu0 %v4716, 96
      %v4737 = vpop.permute.xlu0 %4736
      %4738 = vrot.lane.b32.xlu0 %v4717, 96
      %v4739 = vpop.permute.xlu0 %4738
      %4740 = vrot.lane.b32.xlu0 %v4718, 96
      %v4741 = vpop.permute.xlu0 %4740
      %4742 = vrot.lane.b32.xlu0 %v4719, 96
      %v4743 = vpop.permute.xlu0 %4742
      %4752 = vst.msk [vmem:[#allocation5 + $0xc] sm:$0xf] %vm3772, %v4729
      %4753 = vst.msk [vmem:[#allocation5 + $0x28] sm:$0xf] %vm3772, %v4731
      %4754 = vst.msk [vmem:[#allocation5 + $0x44] sm:$0xf] %vm3772, %v4733
      %4755 = vst.msk [vmem:[#allocation5 + $0x60] sm:$0xf] %vm3772, %v4735
      %4756 = vst.msk [vmem:[#allocation5 + $0x7c] sm:$0xf] %vm3772, %v4737
      %4757 = vst.msk [vmem:[#allocation5 + $0x98] sm:$0xf] %vm3772, %v4739
      %4758 = vst.msk [vmem:[#allocation5 + $0xb4] sm:$0xf] %vm3772, %v4741
      %4759 = vst.msk [vmem:[#allocation5 + $0xd0] sm:$0xf] %vm3772, %v4743
      %v4760 = vld [vmem:[#allocation3 + $0xc] sm:$0xf]
      %v4761 = vld [vmem:[#allocation3 + $0x10] sm:$0xf]
      %v4762 = vld [vmem:[#allocation3 + $0x14] sm:$0xf]
      %v4763 = vld [vmem:[#allocation3 + $0x18] sm:$0xf]
      %v4764 = vld [vmem:[#allocation3 + $0x1c] sm:$0xf]
      %v4765 = vld [vmem:[#allocation3 + $0x20] sm:$0xf]
      %v4766 = vld [vmem:[#allocation3 + $0x24] sm:$0xf]
      %v4767 = vld [vmem:[#allocation3 + $0x28] sm:$0xf]
      %v4768 = vld [vmem:[#allocation3 + $0x2c] sm:$0x1]
      %v4770 = vshrl.u32 %v4760, 16
      %v4772 = vrot.slane %v4770, 4
      %v4773 = vshll.u32 %v4760, 16
      %v4775 = vrot.slane %v4773, 5
      %v4776 = vor.u32 %v4772, %v4775
      %v4777 = vrot.slane %v4776, 4
      %v4779 = vshll.u32 %v4761, 16
      %v4781 = vrot.slane %v4779, 5
      %v4782 = vsel %vm482, %v4777, %v4781
      %v4783 = vshrl.u32 %v4761, 16
      %v4785 = vrot.slane %v4783, 4
      %v4786 = vor.u32 %v4785, %v4781
      %v4787 = vrot.slane %v4786, 4
      %v4789 = vshll.u32 %v4762, 16
      %v4791 = vrot.slane %v4789, 5
      %v4792 = vsel %vm482, %v4787, %v4791
      %v4793 = vshrl.u32 %v4762, 16
      %v4795 = vrot.slane %v4793, 4
      %v4796 = vor.u32 %v4795, %v4791
      %v4797 = vrot.slane %v4796, 4
      %v4799 = vshll.u32 %v4763, 16
      %v4801 = vrot.slane %v4799, 5
      %v4802 = vsel %vm482, %v4797, %v4801
      %v4803 = vshrl.u32 %v4763, 16
      %v4805 = vrot.slane %v4803, 4
      %v4806 = vor.u32 %v4805, %v4801
      %v4807 = vrot.slane %v4806, 4
      %v4809 = vshll.u32 %v4764, 16
      %v4811 = vrot.slane %v4809, 5
      %v4812 = vsel %vm482, %v4807, %v4811
      %v4813 = vshrl.u32 %v4764, 16
      %v4815 = vrot.slane %v4813, 4
      %v4816 = vor.u32 %v4815, %v4811
      %v4817 = vrot.slane %v4816, 4
      %v4819 = vshll.u32 %v4765, 16
      %v4821 = vrot.slane %v4819, 5
      %v4822 = vsel %vm482, %v4817, %v4821
      %v4823 = vshrl.u32 %v4765, 16
      %v4825 = vrot.slane %v4823, 4
      %v4826 = vor.u32 %v4825, %v4821
      %v4827 = vrot.slane %v4826, 4
      %v4829 = vshll.u32 %v4766, 16
      %v4831 = vrot.slane %v4829, 5
      %v4832 = vsel %vm482, %v4827, %v4831
      %v4833 = vshrl.u32 %v4766, 16
      %v4835 = vrot.slane %v4833, 4
      %v4836 = vor.u32 %v4835, %v4831
      %v4837 = vrot.slane %v4836, 4
      %v4839 = vshll.u32 %v4767, 16
      %v4841 = vrot.slane %v4839, 5
      %v4842 = vsel %vm482, %v4837, %v4841
      %v4843 = vshrl.u32 %v4767, 16
      %v4845 = vrot.slane %v4843, 4
      %v4846 = vor.u32 %v4845, %v4841
      %v4847 = vrot.slane %v4846, 4
      %v4849 = vshll.u32 %v4768, 16
      %v4851 = vrot.slane %v4849, 5
      %v4852 = vsel %vm482, %v4847, %v4851
      %4861 = vst.msk [vmem:[#allocation5 + $0x10] sm:$0xf] %vm3356, %v4782
      %4862 = vst.msk [vmem:[#allocation5 + $0x2c] sm:$0xf] %vm3356, %v4792
      %4863 = vst.msk [vmem:[#allocation5 + $0x48] sm:$0xf] %vm3356, %v4802
      %4864 = vst.msk [vmem:[#allocation5 + $0x64] sm:$0xf] %vm3356, %v4812
      %4865 = vst.msk [vmem:[#allocation5 + $0x80] sm:$0xf] %vm3356, %v4822
      %4866 = vst.msk [vmem:[#allocation5 + $0x9c] sm:$0xf] %vm3356, %v4832
      %4867 = vst.msk [vmem:[#allocation5 + $0xb8] sm:$0xf] %vm3356, %v4842
      %4868 = vst.msk [vmem:[#allocation5 + $0xd4] sm:$0xf] %vm3356, %v4852
      %v4869 = vld [vmem:[#allocation3 + $0xc] sm:$0xe]
      %v4870 = vld [vmem:[#allocation3 + $0x10] sm:$0xf]
      %v4871 = vld [vmem:[#allocation3 + $0x14] sm:$0xf]
      %v4872 = vld [vmem:[#allocation3 + $0x18] sm:$0xf]
      %v4873 = vld [vmem:[#allocation3 + $0x1c] sm:$0xf]
      %v4874 = vld [vmem:[#allocation3 + $0x20] sm:$0xf]
      %v4875 = vld [vmem:[#allocation3 + $0x24] sm:$0xf]
      %v4876 = vld [vmem:[#allocation3 + $0x28] sm:$0xf]
      %v4877 = vld [vmem:[#allocation3 + $0x2c] sm:$0x1]
      %v4887 = vrot.slane %v4869, 5
      %v4888 = vrot.slane %v4887, 4
      %v4889 = vrot.slane %v4870, 5
      %v4890 = vsel %vm620, %v4888, %v4889
      %v4891 = vrot.slane %v4889, 4
      %v4892 = vrot.slane %v4871, 5
      %v4893 = vsel %vm620, %v4891, %v4892
      %v4894 = vrot.slane %v4892, 4
      %v4895 = vrot.slane %v4872, 5
      %v4896 = vsel %vm620, %v4894, %v4895
      %v4897 = vrot.slane %v4895, 4
      %v4898 = vrot.slane %v4873, 5
      %v4899 = vsel %vm620, %v4897, %v4898
      %v4900 = vrot.slane %v4898, 4
      %v4901 = vrot.slane %v4874, 5
      %v4902 = vsel %vm620, %v4900, %v4901
      %v4903 = vrot.slane %v4901, 4
      %v4904 = vrot.slane %v4875, 5
      %v4905 = vsel %vm620, %v4903, %v4904
      %v4906 = vrot.slane %v4904, 4
      %v4907 = vrot.slane %v4876, 5
      %v4908 = vsel %vm620, %v4906, %v4907
      %v4909 = vrot.slane %v4907, 4
      %v4910 = vrot.slane %v4877, 5
      %v4911 = vsel %vm620, %v4909, %v4910
      %4912 = vrot.lane.b32.xlu0 %v4890, 32
      %v4913 = vpop.permute.xlu0 %4912
      %4914 = vrot.lane.b32.xlu0 %v4893, 32
      %v4915 = vpop.permute.xlu0 %4914
      %4916 = vrot.lane.b32.xlu0 %v4896, 32
      %v4917 = vpop.permute.xlu0 %4916
      %4918 = vrot.lane.b32.xlu0 %v4899, 32
      %v4919 = vpop.permute.xlu0 %4918
      %4920 = vrot.lane.b32.xlu0 %v4902, 32
      %v4921 = vpop.permute.xlu0 %4920
      %4922 = vrot.lane.b32.xlu0 %v4905, 32
      %v4923 = vpop.permute.xlu0 %4922
      %4924 = vrot.lane.b32.xlu0 %v4908, 32
      %v4925 = vpop.permute.xlu0 %4924
      %4926 = vrot.lane.b32.xlu0 %v4911, 32
      %v4927 = vpop.permute.xlu0 %4926
      %4936 = vst.msk [vmem:[#allocation5 + $0x10] sm:$0xf] %vm3566, %v4913
      %4937 = vst.msk [vmem:[#allocation5 + $0x2c] sm:$0xf] %vm3566, %v4915
      %4938 = vst.msk [vmem:[#allocation5 + $0x48] sm:$0xf] %vm3566, %v4917
      %4939 = vst.msk [vmem:[#allocation5 + $0x64] sm:$0xf] %vm3566, %v4919
      %4940 = vst.msk [vmem:[#allocation5 + $0x80] sm:$0xf] %vm3566, %v4921
      %4941 = vst.msk [vmem:[#allocation5 + $0x9c] sm:$0xf] %vm3566, %v4923
      %4942 = vst.msk [vmem:[#allocation5 + $0xb8] sm:$0xf] %vm3566, %v4925
      %4943 = vst.msk [vmem:[#allocation5 + $0xd4] sm:$0xf] %vm3566, %v4927
      %v4944 = vld [vmem:[#allocation3 + $0xc] sm:$0xe]
      %v4945 = vld [vmem:[#allocation3 + $0x10] sm:$0xf]
      %v4946 = vld [vmem:[#allocation3 + $0x14] sm:$0xf]
      %v4947 = vld [vmem:[#allocation3 + $0x18] sm:$0xf]
      %v4948 = vld [vmem:[#allocation3 + $0x1c] sm:$0xf]
      %v4949 = vld [vmem:[#allocation3 + $0x20] sm:$0xf]
      %v4950 = vld [vmem:[#allocation3 + $0x24] sm:$0xf]
      %v4951 = vld [vmem:[#allocation3 + $0x28] sm:$0xf]
      %v4952 = vld [vmem:[#allocation3 + $0x2c] sm:$0x3]
      %v4954 = vshrl.u32 %v4944, 16
      %v4956 = vrot.slane %v4954, 5
      %v4957 = vshll.u32 %v4944, 16
      %v4959 = vrot.slane %v4957, 6
      %v4960 = vor.u32 %v4956, %v4959
      %v4961 = vrot.slane %v4960, 4
      %v4963 = vshrl.u32 %v4945, 16
      %v4965 = vrot.slane %v4963, 5
      %v4966 = vshll.u32 %v4945, 16
      %v4968 = vrot.slane %v4966, 6
      %v4969 = vor.u32 %v4965, %v4968
      %v4970 = vsel %vm689, %v4961, %v4969
      %v4971 = vrot.slane %v4969, 4
      %v4973 = vshrl.u32 %v4946, 16
      %v4975 = vrot.slane %v4973, 5
      %v4976 = vshll.u32 %v4946, 16
      %v4978 = vrot.slane %v4976, 6
      %v4979 = vor.u32 %v4975, %v4978
      %v4980 = vsel %vm689, %v4971, %v4979
      %v4981 = vrot.slane %v4979, 4
      %v4983 = vshrl.u32 %v4947, 16
      %v4985 = vrot.slane %v4983, 5
      %v4986 = vshll.u32 %v4947, 16
      %v4988 = vrot.slane %v4986, 6
      %v4989 = vor.u32 %v4985, %v4988
      %v4990 = vsel %vm689, %v4981, %v4989
      %v4991 = vrot.slane %v4989, 4
      %v4993 = vshrl.u32 %v4948, 16
      %v4995 = vrot.slane %v4993, 5
      %v4996 = vshll.u32 %v4948, 16
      %v4998 = vrot.slane %v4996, 6
      %v4999 = vor.u32 %v4995, %v4998
      %v5000 = vsel %vm689, %v4991, %v4999
      %v5001 = vrot.slane %v4999, 4
      %v5003 = vshrl.u32 %v4949, 16
      %v5005 = vrot.slane %v5003, 5
      %v5006 = vshll.u32 %v4949, 16
      %v5008 = vrot.slane %v5006, 6
      %v5009 = vor.u32 %v5005, %v5008
      %v5010 = vsel %vm689, %v5001, %v5009
      %v5011 = vrot.slane %v5009, 4
      %v5013 = vshrl.u32 %v4950, 16
      %v5015 = vrot.slane %v5013, 5
      %v5016 = vshll.u32 %v4950, 16
      %v5018 = vrot.slane %v5016, 6
      %v5019 = vor.u32 %v5015, %v5018
      %v5020 = vsel %vm689, %v5011, %v5019
      %v5021 = vrot.slane %v5019, 4
      %v5023 = vshrl.u32 %v4951, 16
      %v5025 = vrot.slane %v5023, 5
      %v5026 = vshll.u32 %v4951, 16
      %v5028 = vrot.slane %v5026, 6
      %v5029 = vor.u32 %v5025, %v5028
      %v5030 = vsel %vm689, %v5021, %v5029
      %v5031 = vrot.slane %v5029, 4
      %v5033 = vshrl.u32 %v4952, 16
      %v5035 = vrot.slane %v5033, 5
      %v5036 = vshll.u32 %v4952, 16
      %v5038 = vrot.slane %v5036, 6
      %v5039 = vor.u32 %v5035, %v5038
      %v5040 = vsel %vm689, %v5031, %v5039
      %5041 = vrot.lane.b32.xlu0 %v4970, 64
      %v5042 = vpop.permute.xlu0 %5041
      %5043 = vrot.lane.b32.xlu0 %v4980, 64
      %v5044 = vpop.permute.xlu0 %5043
      %5045 = vrot.lane.b32.xlu0 %v4990, 64
      %v5046 = vpop.permute.xlu0 %5045
      %5047 = vrot.lane.b32.xlu0 %v5000, 64
      %v5048 = vpop.permute.xlu0 %5047
      %5049 = vrot.lane.b32.xlu0 %v5010, 64
      %v5050 = vpop.permute.xlu0 %5049
      %5051 = vrot.lane.b32.xlu0 %v5020, 64
      %v5052 = vpop.permute.xlu0 %5051
      %5053 = vrot.lane.b32.xlu0 %v5030, 64
      %v5054 = vpop.permute.xlu0 %5053
      %5055 = vrot.lane.b32.xlu0 %v5040, 64
      %v5056 = vpop.permute.xlu0 %5055
      %5065 = vst.msk [vmem:[#allocation5 + $0x10] sm:$0xf] %vm3642, %v5042
      %5066 = vst.msk [vmem:[#allocation5 + $0x2c] sm:$0xf] %vm3642, %v5044
      %5067 = vst.msk [vmem:[#allocation5 + $0x48] sm:$0xf] %vm3642, %v5046
      %5068 = vst.msk [vmem:[#allocation5 + $0x64] sm:$0xf] %vm3642, %v5048
      %5069 = vst.msk [vmem:[#allocation5 + $0x80] sm:$0xf] %vm3642, %v5050
      %5070 = vst.msk [vmem:[#allocation5 + $0x9c] sm:$0xf] %vm3642, %v5052
      %5071 = vst.msk [vmem:[#allocation5 + $0xb8] sm:$0xf] %vm3642, %v5054
      %5072 = vst.msk [vmem:[#allocation5 + $0xd4] sm:$0xf] %vm3642, %v5056
      %v5073 = vld [vmem:[#allocation3 + $0xc] sm:$0xc]
      %v5074 = vld [vmem:[#allocation3 + $0x10] sm:$0xf]
      %v5075 = vld [vmem:[#allocation3 + $0x14] sm:$0xf]
      %v5076 = vld [vmem:[#allocation3 + $0x18] sm:$0xf]
      %v5077 = vld [vmem:[#allocation3 + $0x1c] sm:$0xf]
      %v5078 = vld [vmem:[#allocation3 + $0x20] sm:$0xf]
      %v5079 = vld [vmem:[#allocation3 + $0x24] sm:$0xf]
      %v5080 = vld [vmem:[#allocation3 + $0x28] sm:$0xf]
      %v5081 = vld [vmem:[#allocation3 + $0x2c] sm:$0x3]
      %v5091 = vrot.slane %v5073, 6
      %v5092 = vrot.slane %v5091, 4
      %v5093 = vrot.slane %v5074, 6
      %v5094 = vsel %vm385, %v5092, %v5093
      %v5095 = vrot.slane %v5093, 4
      %v5096 = vrot.slane %v5075, 6
      %v5097 = vsel %vm385, %v5095, %v5096
      %v5098 = vrot.slane %v5096, 4
      %v5099 = vrot.slane %v5076, 6
      %v5100 = vsel %vm385, %v5098, %v5099
      %v5101 = vrot.slane %v5099, 4
      %v5102 = vrot.slane %v5077, 6
      %v5103 = vsel %vm385, %v5101, %v5102
      %v5104 = vrot.slane %v5102, 4
      %v5105 = vrot.slane %v5078, 6
      %v5106 = vsel %vm385, %v5104, %v5105
      %v5107 = vrot.slane %v5105, 4
      %v5108 = vrot.slane %v5079, 6
      %v5109 = vsel %vm385, %v5107, %v5108
      %v5110 = vrot.slane %v5108, 4
      %v5111 = vrot.slane %v5080, 6
      %v5112 = vsel %vm385, %v5110, %v5111
      %v5113 = vrot.slane %v5111, 4
      %v5114 = vrot.slane %v5081, 6
      %v5115 = vsel %vm385, %v5113, %v5114
      %5116 = vrot.lane.b32.xlu0 %v5094, 96
      %v5117 = vpop.permute.xlu0 %5116
      %5118 = vrot.lane.b32.xlu0 %v5097, 96
      %v5119 = vpop.permute.xlu0 %5118
      %5120 = vrot.lane.b32.xlu0 %v5100, 96
      %v5121 = vpop.permute.xlu0 %5120
      %5122 = vrot.lane.b32.xlu0 %v5103, 96
      %v5123 = vpop.permute.xlu0 %5122
      %5124 = vrot.lane.b32.xlu0 %v5106, 96
      %v5125 = vpop.permute.xlu0 %5124
      %5126 = vrot.lane.b32.xlu0 %v5109, 96
      %v5127 = vpop.permute.xlu0 %5126
      %5128 = vrot.lane.b32.xlu0 %v5112, 96
      %v5129 = vpop.permute.xlu0 %5128
      %5130 = vrot.lane.b32.xlu0 %v5115, 96
      %v5131 = vpop.permute.xlu0 %5130
      %5140 = vst.msk [vmem:[#allocation5 + $0x10] sm:$0xf] %vm3772, %v5117
      %5141 = vst.msk [vmem:[#allocation5 + $0x2c] sm:$0xf] %vm3772, %v5119
      %5142 = vst.msk [vmem:[#allocation5 + $0x48] sm:$0xf] %vm3772, %v5121
      %5143 = vst.msk [vmem:[#allocation5 + $0x64] sm:$0xf] %vm3772, %v5123
      %5144 = vst.msk [vmem:[#allocation5 + $0x80] sm:$0xf] %vm3772, %v5125
      %5145 = vst.msk [vmem:[#allocation5 + $0x9c] sm:$0xf] %vm3772, %v5127
      %5146 = vst.msk [vmem:[#allocation5 + $0xb8] sm:$0xf] %vm3772, %v5129
      %5147 = vst.msk [vmem:[#allocation5 + $0xd4] sm:$0xf] %vm3772, %v5131
      %v5148 = vld [vmem:[#allocation3 + $0x10] sm:$0xf]
      %v5149 = vld [vmem:[#allocation3 + $0x14] sm:$0xf]
      %v5150 = vld [vmem:[#allocation3 + $0x18] sm:$0xf]
      %v5151 = vld [vmem:[#allocation3 + $0x1c] sm:$0xf]
      %v5152 = vld [vmem:[#allocation3 + $0x20] sm:$0xf]
      %v5153 = vld [vmem:[#allocation3 + $0x24] sm:$0xf]
      %v5154 = vld [vmem:[#allocation3 + $0x28] sm:$0xf]
      %v5155 = vld [vmem:[#allocation3 + $0x2c] sm:$0xf]
      %5156 = vst.msk [vmem:[#allocation5 + $0x14] sm:$0xf] %vm3356, %v5148
      %5157 = vst.msk [vmem:[#allocation5 + $0x30] sm:$0xf] %vm3356, %v5149
      %5158 = vst.msk [vmem:[#allocation5 + $0x4c] sm:$0xf] %vm3356, %v5150
      %5159 = vst.msk [vmem:[#allocation5 + $0x68] sm:$0xf] %vm3356, %v5151
      %5160 = vst.msk [vmem:[#allocation5 + $0x84] sm:$0xf] %vm3356, %v5152
      %5161 = vst.msk [vmem:[#allocation5 + $0xa0] sm:$0xf] %vm3356, %v5153
      %5162 = vst.msk [vmem:[#allocation5 + $0xbc] sm:$0xf] %vm3356, %v5154
      %5163 = vst.msk [vmem:[#allocation5 + $0xd8] sm:$0xf] %vm3356, %v5155
      %v5164 = vld [vmem:[#allocation3 + $0x10] sm:$0xf]
      %v5165 = vld [vmem:[#allocation3 + $0x14] sm:$0xf]
      %v5166 = vld [vmem:[#allocation3 + $0x18] sm:$0xf]
      %v5167 = vld [vmem:[#allocation3 + $0x1c] sm:$0xf]
      %v5168 = vld [vmem:[#allocation3 + $0x20] sm:$0xf]
      %v5169 = vld [vmem:[#allocation3 + $0x24] sm:$0xf]
      %v5170 = vld [vmem:[#allocation3 + $0x28] sm:$0xf]
      %v5171 = vld [vmem:[#allocation3 + $0x2c] sm:$0xf]
      %v5172 = vld [vmem:[#allocation3 + $0x30] sm:$0x1]
      %v5174 = vshrl.u32 %v5164, 16
      %v5176 = vrot.slane %v5174, 4
      %v5177 = vshll.u32 %v5164, 16
      %v5179 = vrot.slane %v5177, 5
      %v5180 = vor.u32 %v5176, %v5179
      %v5181 = vrot.slane %v5180, 4
      %v5183 = vshll.u32 %v5165, 16
      %v5185 = vrot.slane %v5183, 5
      %v5186 = vsel %vm482, %v5181, %v5185
      %v5187 = vshrl.u32 %v5165, 16
      %v5189 = vrot.slane %v5187, 4
      %v5190 = vor.u32 %v5189, %v5185
      %v5191 = vrot.slane %v5190, 4
      %v5193 = vshll.u32 %v5166, 16
      %v5195 = vrot.slane %v5193, 5
      %v5196 = vsel %vm482, %v5191, %v5195
      %v5197 = vshrl.u32 %v5166, 16
      %v5199 = vrot.slane %v5197, 4
      %v5200 = vor.u32 %v5199, %v5195
      %v5201 = vrot.slane %v5200, 4
      %v5203 = vshll.u32 %v5167, 16
      %v5205 = vrot.slane %v5203, 5
      %v5206 = vsel %vm482, %v5201, %v5205
      %v5207 = vshrl.u32 %v5167, 16
      %v5209 = vrot.slane %v5207, 4
      %v5210 = vor.u32 %v5209, %v5205
      %v5211 = vrot.slane %v5210, 4
      %v5213 = vshll.u32 %v5168, 16
      %v5215 = vrot.slane %v5213, 5
      %v5216 = vsel %vm482, %v5211, %v5215
      %v5217 = vshrl.u32 %v5168, 16
      %v5219 = vrot.slane %v5217, 4
      %v5220 = vor.u32 %v5219, %v5215
      %v5221 = vrot.slane %v5220, 4
      %v5223 = vshll.u32 %v5169, 16
      %v5225 = vrot.slane %v5223, 5
      %v5226 = vsel %vm482, %v5221, %v5225
      %v5227 = vshrl.u32 %v5169, 16
      %v5229 = vrot.slane %v5227, 4
      %v5230 = vor.u32 %v5229, %v5225
      %v5231 = vrot.slane %v5230, 4
      %v5233 = vshll.u32 %v5170, 16
      %v5235 = vrot.slane %v5233, 5
      %v5236 = vsel %vm482, %v5231, %v5235
      %v5237 = vshrl.u32 %v5170, 16
      %v5239 = vrot.slane %v5237, 4
      %v5240 = vor.u32 %v5239, %v5235
      %v5241 = vrot.slane %v5240, 4
      %v5243 = vshll.u32 %v5171, 16
      %v5245 = vrot.slane %v5243, 5
      %v5246 = vsel %vm482, %v5241, %v5245
      %v5247 = vshrl.u32 %v5171, 16
      %v5249 = vrot.slane %v5247, 4
      %v5250 = vor.u32 %v5249, %v5245
      %v5251 = vrot.slane %v5250, 4
      %v5253 = vshll.u32 %v5172, 16
      %v5255 = vrot.slane %v5253, 5
      %v5256 = vsel %vm482, %v5251, %v5255
      %5257 = vrot.lane.b32.xlu0 %v5186, 32
      %v5258 = vpop.permute.xlu0 %5257
      %5259 = vrot.lane.b32.xlu0 %v5196, 32
      %v5260 = vpop.permute.xlu0 %5259
      %5261 = vrot.lane.b32.xlu0 %v5206, 32
      %v5262 = vpop.permute.xlu0 %5261
      %5263 = vrot.lane.b32.xlu0 %v5216, 32
      %v5264 = vpop.permute.xlu0 %5263
      %5265 = vrot.lane.b32.xlu0 %v5226, 32
      %v5266 = vpop.permute.xlu0 %5265
      %5267 = vrot.lane.b32.xlu0 %v5236, 32
      %v5268 = vpop.permute.xlu0 %5267
      %5269 = vrot.lane.b32.xlu0 %v5246, 32
      %v5270 = vpop.permute.xlu0 %5269
      %5271 = vrot.lane.b32.xlu0 %v5256, 32
      %v5272 = vpop.permute.xlu0 %5271
      %5281 = vst.msk [vmem:[#allocation5 + $0x14] sm:$0xf] %vm3566, %v5258
      %5282 = vst.msk [vmem:[#allocation5 + $0x30] sm:$0xf] %vm3566, %v5260
      %5283 = vst.msk [vmem:[#allocation5 + $0x4c] sm:$0xf] %vm3566, %v5262
      %5284 = vst.msk [vmem:[#allocation5 + $0x68] sm:$0xf] %vm3566, %v5264
      %5285 = vst.msk [vmem:[#allocation5 + $0x84] sm:$0xf] %vm3566, %v5266
      %5286 = vst.msk [vmem:[#allocation5 + $0xa0] sm:$0xf] %vm3566, %v5268
      %5287 = vst.msk [vmem:[#allocation5 + $0xbc] sm:$0xf] %vm3566, %v5270
      %5288 = vst.msk [vmem:[#allocation5 + $0xd8] sm:$0xf] %vm3566, %v5272
      %v5289 = vld [vmem:[#allocation3 + $0x10] sm:$0xe]
      %v5290 = vld [vmem:[#allocation3 + $0x14] sm:$0xf]
      %v5291 = vld [vmem:[#allocation3 + $0x18] sm:$0xf]
      %v5292 = vld [vmem:[#allocation3 + $0x1c] sm:$0xf]
      %v5293 = vld [vmem:[#allocation3 + $0x20] sm:$0xf]
      %v5294 = vld [vmem:[#allocation3 + $0x24] sm:$0xf]
      %v5295 = vld [vmem:[#allocation3 + $0x28] sm:$0xf]
      %v5296 = vld [vmem:[#allocation3 + $0x2c] sm:$0xf]
      %v5297 = vld [vmem:[#allocation3 + $0x30] sm:$0x1]
      %v5307 = vrot.slane %v5289, 5
      %v5308 = vrot.slane %v5307, 4
      %v5309 = vrot.slane %v5290, 5
      %v5310 = vsel %vm620, %v5308, %v5309
      %v5311 = vrot.slane %v5309, 4
      %v5312 = vrot.slane %v5291, 5
      %v5313 = vsel %vm620, %v5311, %v5312
      %v5314 = vrot.slane %v5312, 4
      %v5315 = vrot.slane %v5292, 5
      %v5316 = vsel %vm620, %v5314, %v5315
      %v5317 = vrot.slane %v5315, 4
      %v5318 = vrot.slane %v5293, 5
      %v5319 = vsel %vm620, %v5317, %v5318
      %v5320 = vrot.slane %v5318, 4
      %v5321 = vrot.slane %v5294, 5
      %v5322 = vsel %vm620, %v5320, %v5321
      %v5323 = vrot.slane %v5321, 4
      %v5324 = vrot.slane %v5295, 5
      %v5325 = vsel %vm620, %v5323, %v5324
      %v5326 = vrot.slane %v5324, 4
      %v5327 = vrot.slane %v5296, 5
      %v5328 = vsel %vm620, %v5326, %v5327
      %v5329 = vrot.slane %v5327, 4
      %v5330 = vrot.slane %v5297, 5
      %v5331 = vsel %vm620, %v5329, %v5330
      %5332 = vrot.lane.b32.xlu0 %v5310, 64
      %v5333 = vpop.permute.xlu0 %5332
      %5334 = vrot.lane.b32.xlu0 %v5313, 64
      %v5335 = vpop.permute.xlu0 %5334
      %5336 = vrot.lane.b32.xlu0 %v5316, 64
      %v5337 = vpop.permute.xlu0 %5336
      %5338 = vrot.lane.b32.xlu0 %v5319, 64
      %v5339 = vpop.permute.xlu0 %5338
      %5340 = vrot.lane.b32.xlu0 %v5322, 64
      %v5341 = vpop.permute.xlu0 %5340
      %5342 = vrot.lane.b32.xlu0 %v5325, 64
      %v5343 = vpop.permute.xlu0 %5342
      %5344 = vrot.lane.b32.xlu0 %v5328, 64
      %v5345 = vpop.permute.xlu0 %5344
      %5346 = vrot.lane.b32.xlu0 %v5331, 64
      %v5347 = vpop.permute.xlu0 %5346
      %5356 = vst.msk [vmem:[#allocation5 + $0x14] sm:$0xf] %vm3642, %v5333
      %5357 = vst.msk [vmem:[#allocation5 + $0x30] sm:$0xf] %vm3642, %v5335
      %5358 = vst.msk [vmem:[#allocation5 + $0x4c] sm:$0xf] %vm3642, %v5337
      %5359 = vst.msk [vmem:[#allocation5 + $0x68] sm:$0xf] %vm3642, %v5339
      %5360 = vst.msk [vmem:[#allocation5 + $0x84] sm:$0xf] %vm3642, %v5341
      %5361 = vst.msk [vmem:[#allocation5 + $0xa0] sm:$0xf] %vm3642, %v5343
      %5362 = vst.msk [vmem:[#allocation5 + $0xbc] sm:$0xf] %vm3642, %v5345
      %5363 = vst.msk [vmem:[#allocation5 + $0xd8] sm:$0xf] %vm3642, %v5347
      %v5364 = vld [vmem:[#allocation3 + $0x10] sm:$0xe]
      %v5365 = vld [vmem:[#allocation3 + $0x14] sm:$0xf]
      %v5366 = vld [vmem:[#allocation3 + $0x18] sm:$0xf]
      %v5367 = vld [vmem:[#allocation3 + $0x1c] sm:$0xf]
      %v5368 = vld [vmem:[#allocation3 + $0x20] sm:$0xf]
      %v5369 = vld [vmem:[#allocation3 + $0x24] sm:$0xf]
      %v5370 = vld [vmem:[#allocation3 + $0x28] sm:$0xf]
      %v5371 = vld [vmem:[#allocation3 + $0x2c] sm:$0xf]
      %v5372 = vld [vmem:[#allocation3 + $0x30] sm:$0x3]
      %v5374 = vshrl.u32 %v5364, 16
      %v5376 = vrot.slane %v5374, 5
      %v5377 = vshll.u32 %v5364, 16
      %v5379 = vrot.slane %v5377, 6
      %v5380 = vor.u32 %v5376, %v5379
      %v5381 = vrot.slane %v5380, 4
      %v5383 = vshrl.u32 %v5365, 16
      %v5385 = vrot.slane %v5383, 5
      %v5386 = vshll.u32 %v5365, 16
      %v5388 = vrot.slane %v5386, 6
      %v5389 = vor.u32 %v5385, %v5388
      %v5390 = vsel %vm689, %v5381, %v5389
      %v5391 = vrot.slane %v5389, 4
      %v5393 = vshrl.u32 %v5366, 16
      %v5395 = vrot.slane %v5393, 5
      %v5396 = vshll.u32 %v5366, 16
      %v5398 = vrot.slane %v5396, 6
      %v5399 = vor.u32 %v5395, %v5398
      %v5400 = vsel %vm689, %v5391, %v5399
      %v5401 = vrot.slane %v5399, 4
      %v5403 = vshrl.u32 %v5367, 16
      %v5405 = vrot.slane %v5403, 5
      %v5406 = vshll.u32 %v5367, 16
      %v5408 = vrot.slane %v5406, 6
      %v5409 = vor.u32 %v5405, %v5408
      %v5410 = vsel %vm689, %v5401, %v5409
      %v5411 = vrot.slane %v5409, 4
      %v5413 = vshrl.u32 %v5368, 16
      %v5415 = vrot.slane %v5413, 5
      %v5416 = vshll.u32 %v5368, 16
      %v5418 = vrot.slane %v5416, 6
      %v5419 = vor.u32 %v5415, %v5418
      %v5420 = vsel %vm689, %v5411, %v5419
      %v5421 = vrot.slane %v5419, 4
      %v5423 = vshrl.u32 %v5369, 16
      %v5425 = vrot.slane %v5423, 5
      %v5426 = vshll.u32 %v5369, 16
      %v5428 = vrot.slane %v5426, 6
      %v5429 = vor.u32 %v5425, %v5428
      %v5430 = vsel %vm689, %v5421, %v5429
      %v5431 = vrot.slane %v5429, 4
      %v5433 = vshrl.u32 %v5370, 16
      %v5435 = vrot.slane %v5433, 5
      %v5436 = vshll.u32 %v5370, 16
      %v5438 = vrot.slane %v5436, 6
      %v5439 = vor.u32 %v5435, %v5438
      %v5440 = vsel %vm689, %v5431, %v5439
      %v5441 = vrot.slane %v5439, 4
      %v5443 = vshrl.u32 %v5371, 16
      %v5445 = vrot.slane %v5443, 5
      %v5446 = vshll.u32 %v5371, 16
      %v5448 = vrot.slane %v5446, 6
      %v5449 = vor.u32 %v5445, %v5448
      %v5450 = vsel %vm689, %v5441, %v5449
      %v5451 = vrot.slane %v5449, 4
      %v5453 = vshrl.u32 %v5372, 16
      %v5455 = vrot.slane %v5453, 5
      %v5456 = vshll.u32 %v5372, 16
      %v5458 = vrot.slane %v5456, 6
      %v5459 = vor.u32 %v5455, %v5458
      %v5460 = vsel %vm689, %v5451, %v5459
      %5461 = vrot.lane.b32.xlu0 %v5390, 96
      %v5462 = vpop.permute.xlu0 %5461
      %5463 = vrot.lane.b32.xlu0 %v5400, 96
      %v5464 = vpop.permute.xlu0 %5463
      %5465 = vrot.lane.b32.xlu0 %v5410, 96
      %v5466 = vpop.permute.xlu0 %5465
      %5467 = vrot.lane.b32.xlu0 %v5420, 96
      %v5468 = vpop.permute.xlu0 %5467
      %5469 = vrot.lane.b32.xlu0 %v5430, 96
      %v5470 = vpop.permute.xlu0 %5469
      %5471 = vrot.lane.b32.xlu0 %v5440, 96
      %v5472 = vpop.permute.xlu0 %5471
      %5473 = vrot.lane.b32.xlu0 %v5450, 96
      %v5474 = vpop.permute.xlu0 %5473
      %5475 = vrot.lane.b32.xlu0 %v5460, 96
      %v5476 = vpop.permute.xlu0 %5475
      %5485 = vst.msk [vmem:[#allocation5 + $0x14] sm:$0xf] %vm3772, %v5462
      %5486 = vst.msk [vmem:[#allocation5 + $0x30] sm:$0xf] %vm3772, %v5464
      %5487 = vst.msk [vmem:[#allocation5 + $0x4c] sm:$0xf] %vm3772, %v5466
      %5488 = vst.msk [vmem:[#allocation5 + $0x68] sm:$0xf] %vm3772, %v5468
      %5489 = vst.msk [vmem:[#allocation5 + $0x84] sm:$0xf] %vm3772, %v5470
      %5490 = vst.msk [vmem:[#allocation5 + $0xa0] sm:$0xf] %vm3772, %v5472
      %5491 = vst.msk [vmem:[#allocation5 + $0xbc] sm:$0xf] %vm3772, %v5474
      %5492 = vst.msk [vmem:[#allocation5 + $0xd8] sm:$0xf] %vm3772, %v5476
      %v5493 = vld [vmem:[#allocation3 + $0x10] sm:$0xc]
      %v5494 = vld [vmem:[#allocation3 + $0x14] sm:$0xf]
      %v5495 = vld [vmem:[#allocation3 + $0x18] sm:$0xf]
      %v5496 = vld [vmem:[#allocation3 + $0x1c] sm:$0xf]
      %v5497 = vld [vmem:[#allocation3 + $0x20] sm:$0xf]
      %v5498 = vld [vmem:[#allocation3 + $0x24] sm:$0xf]
      %v5499 = vld [vmem:[#allocation3 + $0x28] sm:$0xf]
      %v5500 = vld [vmem:[#allocation3 + $0x2c] sm:$0xf]
      %v5501 = vld [vmem:[#allocation3 + $0x30] sm:$0x3]
      %v5511 = vrot.slane %v5493, 6
      %v5512 = vrot.slane %v5511, 4
      %v5513 = vrot.slane %v5494, 6
      %v5514 = vsel %vm385, %v5512, %v5513
      %v5515 = vrot.slane %v5513, 4
      %v5516 = vrot.slane %v5495, 6
      %v5517 = vsel %vm385, %v5515, %v5516
      %v5518 = vrot.slane %v5516, 4
      %v5519 = vrot.slane %v5496, 6
      %v5520 = vsel %vm385, %v5518, %v5519
      %v5521 = vrot.slane %v5519, 4
      %v5522 = vrot.slane %v5497, 6
      %v5523 = vsel %vm385, %v5521, %v5522
      %v5524 = vrot.slane %v5522, 4
      %v5525 = vrot.slane %v5498, 6
      %v5526 = vsel %vm385, %v5524, %v5525
      %v5527 = vrot.slane %v5525, 4
      %v5528 = vrot.slane %v5499, 6
      %v5529 = vsel %vm385, %v5527, %v5528
      %v5530 = vrot.slane %v5528, 4
      %v5531 = vrot.slane %v5500, 6
      %v5532 = vsel %vm385, %v5530, %v5531
      %v5533 = vrot.slane %v5531, 4
      %v5534 = vrot.slane %v5501, 6
      %v5535 = vsel %vm385, %v5533, %v5534
      %5544 = vst.msk [vmem:[#allocation5 + $0x18] sm:$0xf] %vm3356, %v5514
      %5545 = vst.msk [vmem:[#allocation5 + $0x34] sm:$0xf] %vm3356, %v5517
      %5546 = vst.msk [vmem:[#allocation5 + $0x50] sm:$0xf] %vm3356, %v5520
      %5547 = vst.msk [vmem:[#allocation5 + $0x6c] sm:$0xf] %vm3356, %v5523
      %5548 = vst.msk [vmem:[#allocation5 + $0x88] sm:$0xf] %vm3356, %v5526
      %5549 = vst.msk [vmem:[#allocation5 + $0xa4] sm:$0xf] %vm3356, %v5529
      %5550 = vst.msk [vmem:[#allocation5 + $0xc0] sm:$0xf] %vm3356, %v5532
      %5551 = vst.msk [vmem:[#allocation5 + $0xdc] sm:$0xf] %vm3356, %v5535
      %v5552 = vld [vmem:[#allocation5] sm:$0xff]
      %v5553 = vld [vmem:[#allocation5 + $0x8] sm:$0xff]
      %v5554 = vld [vmem:[#allocation5 + $0x10] sm:$0xff]
      %v5555 = vld [vmem:[#allocation5 + $0x18] sm:$0xf]
      %v5556 = vld [vmem:[#allocation5 + $0x1c] sm:$0xff]
      %v5557 = vld [vmem:[#allocation5 + $0x24] sm:$0xff]
      %v5558 = vld [vmem:[#allocation5 + $0x2c] sm:$0xff]
      %v5559 = vld [vmem:[#allocation5 + $0x34] sm:$0xf]
      %v5560 = vld [vmem:[#allocation5 + $0x38] sm:$0xff]
      %v5561 = vld [vmem:[#allocation5 + $0x40] sm:$0xff]
      %v5562 = vld [vmem:[#allocation5 + $0x48] sm:$0xff]
      %v5563 = vld [vmem:[#allocation5 + $0x50] sm:$0xf]
      %v5564 = vld [vmem:[#allocation5 + $0x54] sm:$0xff]
      %v5565 = vld [vmem:[#allocation5 + $0x5c] sm:$0xff]
      %v5566 = vld [vmem:[#allocation5 + $0x64] sm:$0xff]
      %v5567 = vld [vmem:[#allocation5 + $0x6c] sm:$0xf]
      %v5568 = vld [vmem:[#allocation5 + $0x70] sm:$0xff]
      %v5569 = vld [vmem:[#allocation5 + $0x78] sm:$0xff]
      %v5570 = vld [vmem:[#allocation5 + $0x80] sm:$0xff]
      %v5571 = vld [vmem:[#allocation5 + $0x88] sm:$0xf]
      %v5572 = vld [vmem:[#allocation5 + $0x8c] sm:$0xff]
      %v5573 = vld [vmem:[#allocation5 + $0x94] sm:$0xff]
      %v5574 = vld [vmem:[#allocation5 + $0x9c] sm:$0xff]
      %v5575 = vld [vmem:[#allocation5 + $0xa4] sm:$0xf]
      %v5576 = vld [vmem:[#allocation5 + $0xa8] sm:$0xff]
      %v5577 = vld [vmem:[#allocation5 + $0xb0] sm:$0xff]
      %v5578 = vld [vmem:[#allocation5 + $0xb8] sm:$0xff]
      %v5579 = vld [vmem:[#allocation5 + $0xc0] sm:$0xf]
      %v5580 = vld [vmem:[#allocation5 + $0xc4] sm:$0xff]
      %v5581 = vld [vmem:[#allocation5 + $0xcc] sm:$0xff]
      %v5582 = vld [vmem:[#allocation5 + $0xd4] sm:$0xff]
      %v5583 = vld [vmem:[#allocation5 + $0xdc] sm:$0xf]
      %v5584 = vld [vmem:[%s4] sm:$0xf]
      %v5585 = vld [vmem:[%s4 + $0x4] sm:$0xf]
      %v5586 = vld [vmem:[%s4 + $0x8] sm:$0xf]
      %v5587 = vld [vmem:[%s4 + $0xc] sm:$0xf]
      %v5588 = vld [vmem:[%s4 + $0x10] sm:$0xf]
      %v5589 = vld [vmem:[%s4 + $0x14] sm:$0xf]
      %v5590 = vld [vmem:[%s4 + $0x18] sm:$0xf]
      %v5591 = vld [vmem:[%s4 + $0x1c] sm:$0xf]
      %v5592 = vld [vmem:[%s4 + $0x20] sm:$0xf]
      %v5593 = vld [vmem:[%s4 + $0x24] sm:$0xf]
      %v5594 = vld [vmem:[%s4 + $0x28] sm:$0xf]
      %v5595 = vld [vmem:[%s4 + $0x2c] sm:$0xf]
      %v5596 = vld [vmem:[%s4 + $0x30] sm:$0xf]
      %v5597 = vld [vmem:[%s4 + $0x34] sm:$0xf]
      %v5598 = vld [vmem:[%s4 + $0x38] sm:$0xf]
      %v5599 = vld [vmem:[%s4 + $0x3c] sm:$0xf]
      %v5600 = vld [vmem:[%s4 + $0x40] sm:$0xf]
      %v5601 = vld [vmem:[%s4 + $0x44] sm:$0xf]
      %v5602 = vld [vmem:[%s4 + $0x48] sm:$0xf]
      %v5603 = vld [vmem:[%s4 + $0x4c] sm:$0xf]
      %v5604 = vld [vmem:[%s4 + $0x50] sm:$0xf]
      %v5605 = vld [vmem:[%s4 + $0x54] sm:$0xf]
      %v5606 = vld [vmem:[%s4 + $0x58] sm:$0xf]
      %v5607 = vld [vmem:[%s4 + $0x5c] sm:$0xf]
      %v5608 = vld [vmem:[%s4 + $0x60] sm:$0xf]
      %v5609 = vld [vmem:[%s4 + $0x64] sm:$0xf]
      %v5610 = vld [vmem:[%s4 + $0x68] sm:$0xf]
      %v5611 = vld [vmem:[%s4 + $0x6c] sm:$0xf]
      %v5612 = vld [vmem:[%s4 + $0x70] sm:$0xf]
      %v5613 = vld [vmem:[%s4 + $0x74] sm:$0xf]
      %v5614 = vld [vmem:[%s4 + $0x78] sm:$0xf]
      %v5615 = vld [vmem:[%s4 + $0x7c] sm:$0xf]
      %v5616 = vld [vmem:[%s4 + $0x80] sm:$0xf]
      %v5617 = vld [vmem:[%s4 + $0x84] sm:$0xf]
      %v5618 = vld [vmem:[%s4 + $0x88] sm:$0xf]
      %v5619 = vld [vmem:[%s4 + $0x8c] sm:$0xf]
      %v5620 = vld [vmem:[%s4 + $0x90] sm:$0xf]
      %v5621 = vld [vmem:[%s4 + $0x94] sm:$0xf]
      %v5622 = vld [vmem:[%s4 + $0x98] sm:$0xf]
      %v5623 = vld [vmem:[%s4 + $0x9c] sm:$0xf]
      %v5624 = vld [vmem:[%s4 + $0xa0] sm:$0xf]
      %v5625 = vld [vmem:[%s4 + $0xa4] sm:$0xf]
      %v5626 = vld [vmem:[%s4 + $0xa8] sm:$0xf]
      %v5627 = vld [vmem:[%s4 + $0xac] sm:$0xf]
      %v5628 = vld [vmem:[%s4 + $0xb0] sm:$0xf]
      %v5629 = vld [vmem:[%s4 + $0xb4] sm:$0xf]
      %v5630 = vld [vmem:[%s4 + $0xb8] sm:$0xf]
      %v5631 = vld [vmem:[%s4 + $0xbc] sm:$0xf]
      %v5632 = vld [vmem:[%s4 + $0xc0] sm:$0xf]
      %v5633 = vld [vmem:[%s4 + $0xc4] sm:$0xf]
      %v5634 = vld [vmem:[%s4 + $0xc8] sm:$0xf]
      %v5635 = vld [vmem:[%s4 + $0xcc] sm:$0xf]
      %v5636 = vld [vmem:[%s4 + $0xd0] sm:$0xf]
      %v5637 = vld [vmem:[%s4 + $0xd4] sm:$0xf]
      %v5638 = vld [vmem:[%s4 + $0xd8] sm:$0xf]
      %v5639 = vld [vmem:[%s4 + $0xdc] sm:$0xf]
      %v5640 = vld [vmem:[%s4 + $0xe0] sm:$0xf]
      %v5641 = vld [vmem:[%s4 + $0xe4] sm:$0xf]
      %v5642 = vld [vmem:[%s4 + $0xe8] sm:$0xf]
      %v5643 = vld [vmem:[%s4 + $0xec] sm:$0xf]
      %v5644 = vld [vmem:[%s4 + $0xf0] sm:$0xf]
      %v5645 = vld [vmem:[%s4 + $0xf4] sm:$0xf]
      %v5646 = vld [vmem:[%s4 + $0xf8] sm:$0xf]
      %v5647 = vld [vmem:[%s4 + $0xfc] sm:$0xf]
      %v5648 = vld [vmem:[%s4 + $0x100] sm:$0xf]
      %v5649 = vld [vmem:[%s4 + $0x104] sm:$0xf]
      %v5650 = vld [vmem:[%s4 + $0x108] sm:$0xf]
      %v5651 = vld [vmem:[%s4 + $0x10c] sm:$0xf]
      %v5652 = vld [vmem:[%s4 + $0x110] sm:$0xf]
      %v5653 = vld [vmem:[%s4 + $0x114] sm:$0xf]
      %v5654 = vld [vmem:[%s4 + $0x118] sm:$0xf]
      %v5655 = vld [vmem:[%s4 + $0x11c] sm:$0xf]
      %v5656 = vld [vmem:[%s4 + $0x120] sm:$0xf]
      %v5657 = vld [vmem:[%s4 + $0x124] sm:$0xf]
      %v5658 = vld [vmem:[%s4 + $0x128] sm:$0xf]
      %v5659 = vld [vmem:[%s4 + $0x12c] sm:$0xf]
      %v5660 = vld [vmem:[%s4 + $0x130] sm:$0xf]
      %v5661 = vld [vmem:[%s4 + $0x134] sm:$0xf]
      %v5662 = vld [vmem:[%s4 + $0x138] sm:$0xf]
      %v5663 = vld [vmem:[%s4 + $0x13c] sm:$0xf]
      %v5664 = vld [vmem:[%s4 + $0x140] sm:$0xf]
      %v5665 = vld [vmem:[%s4 + $0x144] sm:$0xf]
      %v5666 = vld [vmem:[%s4 + $0x148] sm:$0xf]
      %v5667 = vld [vmem:[%s4 + $0x14c] sm:$0xf]
      %v5668 = vld [vmem:[%s4 + $0x150] sm:$0xf]
      %v5669 = vld [vmem:[%s4 + $0x154] sm:$0xf]
      %v5670 = vld [vmem:[%s4 + $0x158] sm:$0xf]
      %v5671 = vld [vmem:[%s4 + $0x15c] sm:$0xf]
      %v5672 = vld [vmem:[%s4 + $0x160] sm:$0xf]
      %v5673 = vld [vmem:[%s4 + $0x164] sm:$0xf]
      %v5674 = vld [vmem:[%s4 + $0x168] sm:$0xf]
      %v5675 = vld [vmem:[%s4 + $0x16c] sm:$0xf]
      %v5676 = vld [vmem:[%s4 + $0x170] sm:$0xf]
      %v5677 = vld [vmem:[%s4 + $0x174] sm:$0xf]
      %v5678 = vld [vmem:[%s4 + $0x178] sm:$0xf]
      %v5679 = vld [vmem:[%s4 + $0x17c] sm:$0xf]
      %v5680 = vld [vmem:[%s4 + $0x180] sm:$0xf]
      %v5681 = vld [vmem:[%s4 + $0x184] sm:$0xf]
      %v5682 = vld [vmem:[%s4 + $0x188] sm:$0xf]
      %v5683 = vld [vmem:[%s4 + $0x18c] sm:$0xf]
      %v5684 = vld [vmem:[%s5] sm:$0x1]
      %v5686 = vlaneseq
      %v5687 = vshrl.u32 %v5686, 7
      %v5688 = vsub.s32 0, %v5687
      %v5689 = vrot.slane %v5684, %v5688
      %v5723 = vunpack.c.l.b16 %v5552
      %v5724 = vunpack.c.h.b16 %v5552
      %v5725 = vunpack.c.l.b16 %v5553
      %v5726 = vunpack.c.h.b16 %v5553
      %v5727 = vunpack.c.l.b16 %v5554
      %v5728 = vunpack.c.h.b16 %v5554
      %v5729 = vunpack.c.l.b16 %v5555
      %v5730 = vunpack.c.l.b16 %v5556
      %v5731 = vunpack.c.h.b16 %v5556
      %v5732 = vunpack.c.l.b16 %v5557
      %v5733 = vunpack.c.h.b16 %v5557
      %v5734 = vunpack.c.l.b16 %v5558
      %v5735 = vunpack.c.h.b16 %v5558
      %v5736 = vunpack.c.l.b16 %v5559
      %v5737 = vunpack.c.l.b16 %v5560
      %v5738 = vunpack.c.h.b16 %v5560
      %v5739 = vunpack.c.l.b16 %v5561
      %v5740 = vunpack.c.h.b16 %v5561
      %v5741 = vunpack.c.l.b16 %v5562
      %v5742 = vunpack.c.h.b16 %v5562
      %v5743 = vunpack.c.l.b16 %v5563
      %v5744 = vunpack.c.l.b16 %v5564
      %v5745 = vunpack.c.h.b16 %v5564
      %v5746 = vunpack.c.l.b16 %v5565
      %v5747 = vunpack.c.h.b16 %v5565
      %v5748 = vunpack.c.l.b16 %v5566
      %v5749 = vunpack.c.h.b16 %v5566
      %v5750 = vunpack.c.l.b16 %v5567
      %v5751 = vunpack.c.l.b16 %v5568
      %v5752 = vunpack.c.h.b16 %v5568
      %v5753 = vunpack.c.l.b16 %v5569
      %v5754 = vunpack.c.h.b16 %v5569
      %v5755 = vunpack.c.l.b16 %v5570
      %v5756 = vunpack.c.h.b16 %v5570
      %v5757 = vunpack.c.l.b16 %v5571
      %v5758 = vunpack.c.l.b16 %v5572
      %v5759 = vunpack.c.h.b16 %v5572
      %v5760 = vunpack.c.l.b16 %v5573
      %v5761 = vunpack.c.h.b16 %v5573
      %v5762 = vunpack.c.l.b16 %v5574
      %v5763 = vunpack.c.h.b16 %v5574
      %v5764 = vunpack.c.l.b16 %v5575
      %v5765 = vunpack.c.l.b16 %v5576
      %v5766 = vunpack.c.h.b16 %v5576
      %v5767 = vunpack.c.l.b16 %v5577
      %v5768 = vunpack.c.h.b16 %v5577
      %v5769 = vunpack.c.l.b16 %v5578
      %v5770 = vunpack.c.h.b16 %v5578
      %v5771 = vunpack.c.l.b16 %v5579
      %v5772 = vunpack.c.l.b16 %v5580
      %v5773 = vunpack.c.h.b16 %v5580
      %v5774 = vunpack.c.l.b16 %v5581
      %v5775 = vunpack.c.h.b16 %v5581
      %v5776 = vunpack.c.l.b16 %v5582
      %v5777 = vunpack.c.h.b16 %v5582
      %v5778 = vunpack.c.l.b16 %v5583
      %v5779 = vpack.c.b16 %v5730, %v5723
      %v5780 = vpack.c.b16 %v5731, %v5724
      %v5781 = vpack.c.b16 %v5732, %v5725
      %v5782 = vpack.c.b16 %v5733, %v5726
      %v5783 = vpack.c.b16 %v5734, %v5727
      %v5784 = vpack.c.b16 %v5735, %v5728
      %v5785 = vpack.c.b16 %v5736, %v5729
      %v5786 = vpack.c.b16 %v5744, %v5737
      %v5787 = vpack.c.b16 %v5745, %v5738
      %v5788 = vpack.c.b16 %v5746, %v5739
      %v5789 = vpack.c.b16 %v5747, %v5740
      %v5790 = vpack.c.b16 %v5748, %v5741
      %v5791 = vpack.c.b16 %v5749, %v5742
      %v5792 = vpack.c.b16 %v5750, %v5743
      %v5793 = vpack.c.b16 %v5758, %v5751
      %v5794 = vpack.c.b16 %v5759, %v5752
      %v5795 = vpack.c.b16 %v5760, %v5753
      %v5796 = vpack.c.b16 %v5761, %v5754
      %v5797 = vpack.c.b16 %v5762, %v5755
      %v5798 = vpack.c.b16 %v5763, %v5756
      %v5799 = vpack.c.b16 %v5764, %v5757
      %v5800 = vpack.c.b16 %v5772, %v5765
      %v5801 = vpack.c.b16 %v5773, %v5766
      %v5802 = vpack.c.b16 %v5774, %v5767
      %v5803 = vpack.c.b16 %v5775, %v5768
      %v5804 = vpack.c.b16 %v5776, %v5769
      %v5805 = vpack.c.b16 %v5777, %v5770
      %v5806 = vpack.c.b16 %v5778, %v5771
      %v5931 = vunpack.c.l.b16 %v5584
      %v5932 = vunpack.c.l.b16 %v5585
      %v5933 = vunpack.c.l.b16 %v5586
      %v5934 = vunpack.c.l.b16 %v5587
      %v5935 = vunpack.c.l.b16 %v5588
      %v5936 = vunpack.c.l.b16 %v5589
      %v5937 = vunpack.c.l.b16 %v5590
      %v5938 = vunpack.c.l.b16 %v5591
      %v5939 = vunpack.c.l.b16 %v5592
      %v5940 = vunpack.c.l.b16 %v5593
      %v5941 = vunpack.c.l.b16 %v5594
      %v5942 = vunpack.c.l.b16 %v5595
      %v5943 = vunpack.c.l.b16 %v5596
      %v5944 = vunpack.c.l.b16 %v5597
      %v5945 = vunpack.c.l.b16 %v5598
      %v5946 = vunpack.c.l.b16 %v5599
      %v5947 = vunpack.c.l.b16 %v5600
      %v5948 = vunpack.c.l.b16 %v5601
      %v5949 = vunpack.c.l.b16 %v5602
      %v5950 = vunpack.c.l.b16 %v5603
      %v5951 = vunpack.c.l.b16 %v5604
      %v5952 = vunpack.c.l.b16 %v5605
      %v5953 = vunpack.c.l.b16 %v5606
      %v5954 = vunpack.c.l.b16 %v5607
      %v5955 = vunpack.c.l.b16 %v5608
      %v5956 = vunpack.c.l.b16 %v5609
      %v5957 = vunpack.c.l.b16 %v5610
      %v5958 = vunpack.c.l.b16 %v5611
      %v5959 = vunpack.c.l.b16 %v5612
      %v5960 = vunpack.c.l.b16 %v5613
      %v5961 = vunpack.c.l.b16 %v5614
      %v5962 = vunpack.c.l.b16 %v5615
      %v5963 = vunpack.c.l.b16 %v5616
      %v5964 = vunpack.c.l.b16 %v5617
      %v5965 = vunpack.c.l.b16 %v5618
      %v5966 = vunpack.c.l.b16 %v5619
      %v5967 = vunpack.c.l.b16 %v5620
      %v5968 = vunpack.c.l.b16 %v5621
      %v5969 = vunpack.c.l.b16 %v5622
      %v5970 = vunpack.c.l.b16 %v5623
      %v5971 = vunpack.c.l.b16 %v5624
      %v5972 = vunpack.c.l.b16 %v5625
      %v5973 = vunpack.c.l.b16 %v5626
      %v5974 = vunpack.c.l.b16 %v5627
      %v5975 = vunpack.c.l.b16 %v5628
      %v5976 = vunpack.c.l.b16 %v5629
      %v5977 = vunpack.c.l.b16 %v5630
      %v5978 = vunpack.c.l.b16 %v5631
      %v5979 = vunpack.c.l.b16 %v5632
      %v5980 = vunpack.c.l.b16 %v5633
      %v5981 = vunpack.c.l.b16 %v5634
      %v5982 = vunpack.c.l.b16 %v5635
      %v5983 = vunpack.c.l.b16 %v5636
      %v5984 = vunpack.c.l.b16 %v5637
      %v5985 = vunpack.c.l.b16 %v5638
      %v5986 = vunpack.c.l.b16 %v5639
      %v5987 = vunpack.c.l.b16 %v5640
      %v5988 = vunpack.c.l.b16 %v5641
      %v5989 = vunpack.c.l.b16 %v5642
      %v5990 = vunpack.c.l.b16 %v5643
      %v5991 = vunpack.c.l.b16 %v5644
      %v5992 = vunpack.c.l.b16 %v5645
      %v5993 = vunpack.c.l.b16 %v5646
      %v5994 = vunpack.c.l.b16 %v5647
      %v5995 = vunpack.c.l.b16 %v5648
      %v5996 = vunpack.c.l.b16 %v5649
      %v5997 = vunpack.c.l.b16 %v5650
      %v5998 = vunpack.c.l.b16 %v5651
      %v5999 = vunpack.c.l.b16 %v5652
      %v6000 = vunpack.c.l.b16 %v5653
      %v6001 = vunpack.c.l.b16 %v5654
      %v6002 = vunpack.c.l.b16 %v5655
      %v6003 = vunpack.c.l.b16 %v5656
      %v6004 = vunpack.c.l.b16 %v5657
      %v6005 = vunpack.c.l.b16 %v5658
      %v6006 = vunpack.c.l.b16 %v5659
      %v6007 = vunpack.c.l.b16 %v5660
      %v6008 = vunpack.c.l.b16 %v5661
      %v6009 = vunpack.c.l.b16 %v5662
      %v6010 = vunpack.c.l.b16 %v5663
      %v6011 = vunpack.c.l.b16 %v5664
      %v6012 = vunpack.c.l.b16 %v5665
      %v6013 = vunpack.c.l.b16 %v5666
      %v6014 = vunpack.c.l.b16 %v5667
      %v6015 = vunpack.c.l.b16 %v5668
      %v6016 = vunpack.c.l.b16 %v5669
      %v6017 = vunpack.c.l.b16 %v5670
      %v6018 = vunpack.c.l.b16 %v5671
      %v6019 = vunpack.c.l.b16 %v5672
      %v6020 = vunpack.c.l.b16 %v5673
      %v6021 = vunpack.c.l.b16 %v5674
      %v6022 = vunpack.c.l.b16 %v5675
      %v6023 = vunpack.c.l.b16 %v5676
      %v6024 = vunpack.c.l.b16 %v5677
      %v6025 = vunpack.c.l.b16 %v5678
      %v6026 = vunpack.c.l.b16 %v5679
      %v6027 = vunpack.c.l.b16 %v5680
      %v6028 = vunpack.c.l.b16 %v5681
      %v6029 = vunpack.c.l.b16 %v5682
      %v6030 = vunpack.c.l.b16 %v5683
      %v6031 = vpack.c.b16 %v5932, %v5931
      %v6032 = vpack.c.b16 %v5934, %v5933
      %v6033 = vpack.c.b16 %v5936, %v5935
      %v6034 = vpack.c.b16 %v5938, %v5937
      %v6035 = vpack.c.b16 %v5940, %v5939
      %v6036 = vpack.c.b16 %v5942, %v5941
      %v6037 = vpack.c.b16 %v5944, %v5943
      %v6038 = vpack.c.b16 %v5946, %v5945
      %v6039 = vpack.c.b16 %v5948, %v5947
      %v6040 = vpack.c.b16 %v5950, %v5949
      %v6041 = vpack.c.b16 %v5952, %v5951
      %v6042 = vpack.c.b16 %v5954, %v5953
      %v6043 = vpack.c.b16 %v5956, %v5955
      %v6044 = vpack.c.b16 %v5958, %v5957
      %v6045 = vpack.c.b16 %v5960, %v5959
      %v6046 = vpack.c.b16 %v5962, %v5961
      %v6047 = vpack.c.b16 %v5964, %v5963
      %v6048 = vpack.c.b16 %v5966, %v5965
      %v6049 = vpack.c.b16 %v5968, %v5967
      %v6050 = vpack.c.b16 %v5970, %v5969
      %v6051 = vpack.c.b16 %v5972, %v5971
      %v6052 = vpack.c.b16 %v5974, %v5973
      %v6053 = vpack.c.b16 %v5976, %v5975
      %v6054 = vpack.c.b16 %v5978, %v5977
      %v6055 = vpack.c.b16 %v5980, %v5979
      %v6056 = vpack.c.b16 %v5982, %v5981
      %v6057 = vpack.c.b16 %v5984, %v5983
      %v6058 = vpack.c.b16 %v5986, %v5985
      %v6059 = vpack.c.b16 %v5988, %v5987
      %v6060 = vpack.c.b16 %v5990, %v5989
      %v6061 = vpack.c.b16 %v5992, %v5991
      %v6062 = vpack.c.b16 %v5994, %v5993
      %v6063 = vpack.c.b16 %v5996, %v5995
      %v6064 = vpack.c.b16 %v5998, %v5997
      %v6065 = vpack.c.b16 %v6000, %v5999
      %v6066 = vpack.c.b16 %v6002, %v6001
      %v6067 = vpack.c.b16 %v6004, %v6003
      %v6068 = vpack.c.b16 %v6006, %v6005
      %v6069 = vpack.c.b16 %v6008, %v6007
      %v6070 = vpack.c.b16 %v6010, %v6009
      %v6071 = vpack.c.b16 %v6012, %v6011
      %v6072 = vpack.c.b16 %v6014, %v6013
      %v6073 = vpack.c.b16 %v6016, %v6015
      %v6074 = vpack.c.b16 %v6018, %v6017
      %v6075 = vpack.c.b16 %v6020, %v6019
      %v6076 = vpack.c.b16 %v6022, %v6021
      %v6077 = vpack.c.b16 %v6024, %v6023
      %v6078 = vpack.c.b16 %v6026, %v6025
      %v6079 = vpack.c.b16 %v6028, %v6027
      %v6080 = vpack.c.b16 %v6030, %v6029
      %vm6131 = vcmask 261120
      %v6133 = vsel %vm6131, %v5785, 0
      %v6136 = vsel %vm6131, %v5792, 0
      %v6139 = vsel %vm6131, %v5799, 0
      %v6142 = vsel %vm6131, %v5806, 0
      %6144 = vmatprep.subr.bf16.mxu0 0
      %6145 = vmatpush1.bf16.msra.mxu0 %v6038
      %6146 = vmatprep.subr.bf16.mxu0 0
      %6147 = vmatpush1.bf16.msra.mxu0 %v6037
      %6148 = vmatprep.subr.bf16.mxu0 0
      %6149 = vmatpush1.bf16.msra.mxu0 %v6036
      %6150 = vmatprep.subr.bf16.mxu0 0
      %6151 = vmatpush1.bf16.msra.mxu0 %v6035
      %6152 = vmatprep.subr.bf16.mxu0 0
      %6153 = vmatpush1.bf16.msra.mxu0 %v6034
      %6154 = vmatprep.subr.bf16.mxu0 0
      %6155 = vmatpush1.bf16.msra.mxu0 %v6033
      %6156 = vmatprep.subr.bf16.mxu0 0
      %6157 = vmatpush1.bf16.msra.mxu0 %v6032
      %6158 = vmatprep.subr.bf16.mxu0 0
      %6159 = vmatpush1.bf16.msra.mxu0 %v6031
      %6160 = vmatprep.subr.bf16.mxu0 0
      %6161 = vmatpush2.bf16.msra.mxu0 %v6046
      %6162 = vmatprep.subr.bf16.mxu0 0
      %6163 = vmatpush2.bf16.msra.mxu0 %v6045
      %6164 = vmatprep.subr.bf16.mxu0 0
      %6165 = vmatpush2.bf16.msra.mxu0 %v6044
      %6166 = vmatprep.subr.bf16.mxu0 0
      %6167 = vmatpush2.bf16.msra.mxu0 %v6043
      %6168 = vmatprep.subr.bf16.mxu0 0
      %6169 = vmatpush2.bf16.msra.mxu0 %v6042
      %6170 = vmatprep.subr.bf16.mxu0 0
      %6171 = vmatpush2.bf16.msra.mxu0 %v6041
      %6172 = vmatprep.subr.bf16.mxu0 0
      %6173 = vmatpush2.bf16.msra.mxu0 %v6040
      %6174 = vmatprep.subr.bf16.mxu0 0
      %6175 = vmatpush2.bf16.msra.mxu0 %v6039
      %6176 = vmatprep.mubr.bf16.mxu0 %v5780
      %6177 = vmatmul.mubr.bf16.gmra.mxu0 %v5779
      %v6178 = vpop.f32.mrf.mxu0
      %v6179 = vadd.f32 %v5689, %v6178
      %v6180 = vpop.f32.mrf.mxu0
      %v6181 = vpop.f32.mrf.mxu0
      %v6182 = vadd.f32 %v5689, %v6181
      %v6183 = vpop.f32.mrf.mxu0
      %6184 = vmatprep.mubr.bf16.mxu0 %v5787
      %6185 = vmatmul.mubr.bf16.gmra.mxu0 %v5786
      %v6186 = vpop.f32.mrf.mxu0
      %v6187 = vadd.f32 %v5689, %v6186
      %v6188 = vpop.f32.mrf.mxu0
      %v6189 = vpop.f32.mrf.mxu0
      %v6190 = vadd.f32 %v5689, %v6189
      %v6191 = vpop.f32.mrf.mxu0
      %6192 = vmatprep.mubr.bf16.mxu0 %v5794
      %6193 = vmatmul.mubr.bf16.gmra.mxu0 %v5793
      %v6194 = vpop.f32.mrf.mxu0
      %v6195 = vadd.f32 %v5689, %v6194
      %v6196 = vpop.f32.mrf.mxu0
      %v6197 = vpop.f32.mrf.mxu0
      %v6198 = vadd.f32 %v5689, %v6197
      %v6199 = vpop.f32.mrf.mxu0
      %6200 = vmatprep.mubr.bf16.mxu0 %v5801
      %6201 = vmatmul.mubr.bf16.gmra.mxu0 %v5800
      %v6202 = vpop.f32.mrf.mxu0
      %v6203 = vadd.f32 %v5689, %v6202
      %v6204 = vpop.f32.mrf.mxu0
      %v6205 = vpop.f32.mrf.mxu0
      %v6206 = vadd.f32 %v5689, %v6205
      %v6207 = vpop.f32.mrf.mxu0
      %6208 = vdwg.mxu0
      %6209 = vmatprep.subr.bf16.mxu0 0
      %6210 = vmatpush1.bf16.msra.mxu0 %v6054
      %6211 = vmatprep.subr.bf16.mxu0 0
      %6212 = vmatpush1.bf16.msra.mxu0 %v6053
      %6213 = vmatprep.subr.bf16.mxu0 0
      %6214 = vmatpush1.bf16.msra.mxu0 %v6052
      %6215 = vmatprep.subr.bf16.mxu0 0
      %6216 = vmatpush1.bf16.msra.mxu0 %v6051
      %6217 = vmatprep.subr.bf16.mxu0 0
      %6218 = vmatpush1.bf16.msra.mxu0 %v6050
      %6219 = vmatprep.subr.bf16.mxu0 0
      %6220 = vmatpush1.bf16.msra.mxu0 %v6049
      %6221 = vmatprep.subr.bf16.mxu0 0
      %6222 = vmatpush1.bf16.msra.mxu0 %v6048
      %6223 = vmatprep.subr.bf16.mxu0 0
      %6224 = vmatpush1.bf16.msra.mxu0 %v6047
      %6225 = vmatprep.subr.bf16.mxu0 0
      %6226 = vmatpush2.bf16.msra.mxu0 %v6062
      %6227 = vmatprep.subr.bf16.mxu0 0
      %6228 = vmatpush2.bf16.msra.mxu0 %v6061
      %6229 = vmatprep.subr.bf16.mxu0 0
      %6230 = vmatpush2.bf16.msra.mxu0 %v6060
      %6231 = vmatprep.subr.bf16.mxu0 0
      %6232 = vmatpush2.bf16.msra.mxu0 %v6059
      %6233 = vmatprep.subr.bf16.mxu0 0
      %6234 = vmatpush2.bf16.msra.mxu0 %v6058
      %6235 = vmatprep.subr.bf16.mxu0 0
      %6236 = vmatpush2.bf16.msra.mxu0 %v6057
      %6237 = vmatprep.subr.bf16.mxu0 0
      %6238 = vmatpush2.bf16.msra.mxu0 %v6056
      %6239 = vmatprep.subr.bf16.mxu0 0
      %6240 = vmatpush2.bf16.msra.mxu0 %v6055
      %6241 = vmatprep.mubr.bf16.mxu0 %v5782
      %6242 = vmatmul.mubr.bf16.gmra.mxu0 %v5781
      %v6243 = vpop.f32.mrf.mxu0
      %v6244 = vadd.f32 %v6179, %v6243
      %v6245 = vpop.f32.mrf.mxu0
      %v6246 = vpop.f32.mrf.mxu0
      %v6247 = vadd.f32 %v6182, %v6246
      %v6248 = vpop.f32.mrf.mxu0
      %6249 = vmatprep.mubr.bf16.mxu0 %v5789
      %6250 = vmatmul.mubr.bf16.gmra.mxu0 %v5788
      %v6251 = vpop.f32.mrf.mxu0
      %v6252 = vadd.f32 %v6187, %v6251
      %v6253 = vpop.f32.mrf.mxu0
      %v6254 = vpop.f32.mrf.mxu0
      %v6255 = vadd.f32 %v6190, %v6254
      %v6256 = vpop.f32.mrf.mxu0
      %6257 = vmatprep.mubr.bf16.mxu0 %v5796
      %6258 = vmatmul.mubr.bf16.gmra.mxu0 %v5795
      %v6259 = vpop.f32.mrf.mxu0
      %v6260 = vadd.f32 %v6195, %v6259
      %v6261 = vpop.f32.mrf.mxu0
      %v6262 = vpop.f32.mrf.mxu0
      %v6263 = vadd.f32 %v6198, %v6262
      %v6264 = vpop.f32.mrf.mxu0
      %6265 = vmatprep.mubr.bf16.mxu0 %v5803
      %6266 = vmatmul.mubr.bf16.gmra.mxu0 %v5802
      %v6267 = vpop.f32.mrf.mxu0
      %v6268 = vadd.f32 %v6203, %v6267
      %v6269 = vpop.f32.mrf.mxu0
      %v6270 = vpop.f32.mrf.mxu0
      %v6271 = vadd.f32 %v6206, %v6270
      %v6272 = vpop.f32.mrf.mxu0
      %6273 = vdwg.mxu0
      %6274 = vmatprep.subr.bf16.mxu0 0
      %6275 = vmatpush1.bf16.msra.mxu0 %v6070
      %6276 = vmatprep.subr.bf16.mxu0 0
      %6277 = vmatpush1.bf16.msra.mxu0 %v6069
      %6278 = vmatprep.subr.bf16.mxu0 0
      %6279 = vmatpush1.bf16.msra.mxu0 %v6068
      %6280 = vmatprep.subr.bf16.mxu0 0
      %6281 = vmatpush1.bf16.msra.mxu0 %v6067
      %6282 = vmatprep.subr.bf16.mxu0 0
      %6283 = vmatpush1.bf16.msra.mxu0 %v6066
      %6284 = vmatprep.subr.bf16.mxu0 0
      %6285 = vmatpush1.bf16.msra.mxu0 %v6065
      %6286 = vmatprep.subr.bf16.mxu0 0
      %6287 = vmatpush1.bf16.msra.mxu0 %v6064
      %6288 = vmatprep.subr.bf16.mxu0 0
      %6289 = vmatpush1.bf16.msra.mxu0 %v6063
      %6290 = vmatprep.subr.bf16.mxu0 0
      %6291 = vmatpush2.bf16.msra.mxu0 %v6078
      %6292 = vmatprep.subr.bf16.mxu0 0
      %6293 = vmatpush2.bf16.msra.mxu0 %v6077
      %6294 = vmatprep.subr.bf16.mxu0 0
      %6295 = vmatpush2.bf16.msra.mxu0 %v6076
      %6296 = vmatprep.subr.bf16.mxu0 0
      %6297 = vmatpush2.bf16.msra.mxu0 %v6075
      %6298 = vmatprep.subr.bf16.mxu0 0
      %6299 = vmatpush2.bf16.msra.mxu0 %v6074
      %6300 = vmatprep.subr.bf16.mxu0 0
      %6301 = vmatpush2.bf16.msra.mxu0 %v6073
      %6302 = vmatprep.subr.bf16.mxu0 0
      %6303 = vmatpush2.bf16.msra.mxu0 %v6072
      %6304 = vmatprep.subr.bf16.mxu0 0
      %6305 = vmatpush2.bf16.msra.mxu0 %v6071
      %6306 = vmatprep.mubr.bf16.mxu0 %v5784
      %6307 = vmatmul.mubr.bf16.gmra.mxu0 %v5783
      %v6308 = vpop.f32.mrf.mxu0
      %v6309 = vadd.f32 %v6244, %v6308
      %v6310 = vpop.f32.mrf.mxu0
      %v6311 = vpop.f32.mrf.mxu0
      %v6312 = vadd.f32 %v6247, %v6311
      %v6313 = vpop.f32.mrf.mxu0
      %6314 = vmatprep.mubr.bf16.mxu0 %v5791
      %6315 = vmatmul.mubr.bf16.gmra.mxu0 %v5790
      %v6316 = vpop.f32.mrf.mxu0
      %v6317 = vadd.f32 %v6252, %v6316
      %v6318 = vpop.f32.mrf.mxu0
      %v6319 = vpop.f32.mrf.mxu0
      %v6320 = vadd.f32 %v6255, %v6319
      %v6321 = vpop.f32.mrf.mxu0
      %6322 = vmatprep.mubr.bf16.mxu0 %v5798
      %6323 = vmatmul.mubr.bf16.gmra.mxu0 %v5797
      %v6324 = vpop.f32.mrf.mxu0
      %v6325 = vadd.f32 %v6260, %v6324
      %v6326 = vpop.f32.mrf.mxu0
      %v6327 = vpop.f32.mrf.mxu0
      %v6328 = vadd.f32 %v6263, %v6327
      %v6329 = vpop.f32.mrf.mxu0
      %6330 = vmatprep.mubr.bf16.mxu0 %v5805
      %6331 = vmatmul.mubr.bf16.gmra.mxu0 %v5804
      %v6332 = vpop.f32.mrf.mxu0
      %v6333 = vadd.f32 %v6268, %v6332
      %v6334 = vpop.f32.mrf.mxu0
      %v6335 = vpop.f32.mrf.mxu0
      %v6336 = vadd.f32 %v6271, %v6335
      %v6337 = vpop.f32.mrf.mxu0
      %6338 = vdwg.mxu0
      %6339 = vmatprep.subr.bf16.mxu0 0
      %6340 = vmatpush1.bf16.msra.mxu0 0
      %6341 = vmatprep.subr.bf16.mxu0 0
      %6342 = vmatpush1.bf16.msra.mxu0 0
      %6343 = vmatprep.subr.bf16.mxu0 0
      %6344 = vmatpush1.bf16.msra.mxu0 0
      %6345 = vmatprep.subr.bf16.mxu0 0
      %6346 = vmatpush1.bf16.msra.mxu0 0
      %6347 = vmatprep.subr.bf16.mxu0 0
      %6348 = vmatpush1.bf16.msra.mxu0 0
      %6349 = vmatprep.subr.bf16.mxu0 0
      %6350 = vmatpush1.bf16.msra.mxu0 0
      %6351 = vmatprep.subr.bf16.mxu0 0
      %6352 = vmatpush1.bf16.msra.mxu0 %v6080
      %6353 = vmatprep.subr.bf16.mxu0 0
      %6354 = vmatpush1.bf16.msra.mxu0 %v6079
      %6355 = vmatprep.subr.bf16.mxu0 0
      %6356 = vmatpush2.bf16.msra.mxu0 0
      %6357 = vmatprep.subr.bf16.mxu0 0
      %6358 = vmatpush2.bf16.msra.mxu0 0
      %6359 = vmatprep.subr.bf16.mxu0 0
      %6360 = vmatpush2.bf16.msra.mxu0 0
      %6361 = vmatprep.subr.bf16.mxu0 0
      %6362 = vmatpush2.bf16.msra.mxu0 0
      %6363 = vmatprep.subr.bf16.mxu0 0
      %6364 = vmatpush2.bf16.msra.mxu0 0
      %6365 = vmatprep.subr.bf16.mxu0 0
      %6366 = vmatpush2.bf16.msra.mxu0 0
      %6367 = vmatprep.subr.bf16.mxu0 0
      %6368 = vmatpush2.bf16.msra.mxu0 0
      %6369 = vmatprep.subr.bf16.mxu0 0
      %6370 = vmatpush2.bf16.msra.mxu0 0
      %6371 = vmatprep.mubr.bf16.mxu0 0
      %6372 = vmatmul.mubr.bf16.gmra.mxu0 %v6133
      %v6373 = vpop.f32.mrf.mxu0
      %v6374 = vadd.f32 %v6309, %v6373
      %v6375 = vpop.f32.mrf.mxu0
      %v6376 = vpop.f32.mrf.mxu0
      %v6377 = vadd.f32 %v6312, %v6376
      %v6378 = vpop.f32.mrf.mxu0
      %6379 = vmatprep.mubr.bf16.mxu0 0
      %6380 = vmatmul.mubr.bf16.gmra.mxu0 %v6136
      %v6381 = vpop.f32.mrf.mxu0
      %v6382 = vadd.f32 %v6317, %v6381
      %v6383 = vpop.f32.mrf.mxu0
      %v6384 = vpop.f32.mrf.mxu0
      %v6385 = vadd.f32 %v6320, %v6384
      %v6386 = vpop.f32.mrf.mxu0
      %6387 = vmatprep.mubr.bf16.mxu0 0
      %6388 = vmatmul.mubr.bf16.gmra.mxu0 %v6139
      %v6389 = vpop.f32.mrf.mxu0
      %v6390 = vadd.f32 %v6325, %v6389
      %v6391 = vpop.f32.mrf.mxu0
      %v6392 = vpop.f32.mrf.mxu0
      %v6393 = vadd.f32 %v6328, %v6392
      %v6394 = vpop.f32.mrf.mxu0
      %6395 = vmatprep.mubr.bf16.mxu0 0
      %6396 = vmatmul.mubr.bf16.gmra.mxu0 %v6142
      %v6397 = vpop.f32.mrf.mxu0
      %v6398 = vadd.f32 %v6333, %v6397
      %v6399 = vpop.f32.mrf.mxu0
      %v6400 = vpop.f32.mrf.mxu0
      %v6401 = vadd.f32 %v6336, %v6400
      %v6402 = vpop.f32.mrf.mxu0
      %6403 = vdwg.mxu0
      %v6405 = vrot.slane %v6377, 5
      %v6408 = vrot.slane %v6382, 2
      %v6411 = vrot.slane %v6385, 7
      %v6414 = vrot.slane %v6390, 4
      %v6417 = vrot.slane %v6393, 1
      %v6420 = vrot.slane %v6398, 6
      %v6423 = vrot.slane %v6401, 3
      %vm6425 = vcmask 1042432
      %v6426 = vsel %vm6425, %v6374, %v6405
      %vm6427 = vcmask 1045504
      %v6428 = vsel %vm6427, %v6426, %v6408
      %vm6429 = vcmask 1040384
      %v6430 = vsel %vm6429, %v6408, %v6411
      %vm6431 = vcmask 1043456
      %v6432 = vsel %vm6431, %v6430, %v6414
      %vm6433 = vcmask 1046528
      %v6434 = vsel %vm6433, %v6432, %v6417
      %vm6435 = vcmask 1041408
      %v6436 = vsel %vm6435, %v6417, %v6420
      %vm6437 = vcmask 1044480
      %v6438 = vsel %vm6437, %v6436, %v6423
      %v6439 = vld [vmem:[%s331] sm:$0xff]
      %v6440 = vld [vmem:[%s331 + $0x8] sm:$0xff]
      %v6441 = vld [vmem:[%s331 + $0x10] sm:$0xff]
      %v6442 = vld [vmem:[%s334] sm:$0x1]
      %v6444 = vlaneseq
      %v6445 = vshrl.u32 %v6444, 7
      %v6446 = vsub.s32 0, %v6445
      %v6447 = vrot.slane %v6442, %v6446
      %6448 = vset.pattern.permute.xlu0 0
      %6449 = vperm.xlu0 %6448, %v6447
      %v6450 = vpop.permute.xlu0 %6449
      %v6452 = vmul.f32 %v6450, %v6428
      %v6453 = vmul.f32 %v6450, %v6434
      %v6454 = vmul.f32 %v6450, %v6438
      %v6455 = vadd.f32 %v6439, %v6452
      %v6456 = vadd.f32 %v6440, %v6453
      %v6457 = vadd.f32 %v6441, %v6454
      %6458 = vst.msk [vmem:[%s339] sm:$0xff] %vm2949, %v6455
      %6459 = vst.msk [vmem:[%s339 + $0x8] sm:$0xff] %vm2949, %v6456
      %6460 = vst.msk [vmem:[%s339 + $0x10] sm:$0xff] %vm2949, %v6457
      %p6461 = scmp.lt.s32.totalorder %s19, 1
      %s6462 = scalar_select %p6461, %s19, 1
      %s6463 = smul.addr %s6462, 3
      %s6464 = smul.addr %s6463, 8
      %s6465 = scalar_lea.vmem %s8, %s6464
      // Predicated region
      $region53: #{_times_block_core.3} parent=51 // pred_check
        %p6466 = pneg %p220
      $region54: #{_times_block_core.3} parent=51 // pred_check_branch
        %6468 = sbr.rel (%p6466) target = $region56
      $region55: #{_times_block_core.3} parent=51 // pred_region
        _
      $region56: #{_times_block_core.3} parent=51 // pred_fallthru
        _
    $region52: #{_times_block_core.3} parent=5 // pred_fallthru
      _
    %p6469 = scmp.le.s32.totalorder 2, %s14
    // Predicated region
    $region57: #{_times_block_core.3} parent=5 // pred_check
      %p6470 = pneg %p6469
    $region58: #{_times_block_core.3} parent=5 // pred_check_branch
      %6472 = sbr.rel (%p6470) target = $region60
    $region59: #{_times_block_core.3} parent=5 // pred_region
      %s6473 = ssub.s32 %s14, 2
      // Predicated region
      $region61: #{_times_block_core.3} parent=59 // pred_check
        %p6474 = pneg %p226
      $region62: #{_times_block_core.3} parent=59 // pred_check_branch
        %6476 = sbr.rel (%p6474) target = $region64
      $region63: #{_times_block_core.3} parent=59 // pred_region
        %p6477 = scmp.lt.s32.totalorder %s20, 1
        %s6478 = scalar_select %p6477, %s20, 1
        %s6479 = smul.addr %s6478, 3
        %s6480 = smul.addr %s6479, 8
        %s6481 = scalar_lea.vmem %s8, %s6480
      $region64: #{_times_block_core.3} parent=59 // pred_fallthru
        _
    $region60: #{_times_block_core.3} parent=5 // pred_fallthru
      _
  $region6: #{_times_block_core.3} parent=0 // loop_footer
    %s18 = sadd.s32 1, %s14
  $region7: #{_times_block_core.3} parent=0 // loop_footer_branch
    %13 = sbr.rel target = $region3
  $region8: #{_times_block_core.3} parent=0 // loop_exit
    _

</llo_original>
